<compile_context>
chip_gen: v7x
topology: tpu7x:2x2x1
jax: 0.10.0
libtpu: 0.0.40
codegen_flags: <defaults>
</compile_context>

<pallas_src>
import functools

import jax
import jax.numpy as jnp
from jax import lax
from jax.experimental import pallas as pl
from jax.experimental.pallas import tpu as pltpu

BN_EPS = 1e-5
HEAD_PAD = 128  # lane-dense padded width of the fused fct/fcq head (6 real cols)


# ----------------------------------------------------------------------------
# Fused kernel: encoder (tiled over N) + decoder + heads
# ----------------------------------------------------------------------------
def _fused_kernel(xyz_ref, enc_w_ref, enc_b_ref,
                  dec_w_hbm, dec_s_ref, dec_t_ref,
                  head_w_hbm, head_b_ref,
                  out_ref,
                  acc_ref, dec_w_vmem, head_w_vmem, dma_sems,
                  *, total_n, n_tile, chunk, n_chunks, mask_tail):
    # xyz_ref:    (B, nt, 3)          current N-tile of the point cloud
    # enc_w_ref:  (3, C)    enc_b_ref: (1, C)
    # dec_w_hbm:  (L, C, C) bf16 in HBM (manual DMA)   dec_s/dec_t: (L, C) f32
    # head_w_hbm: (C, HEAD_PAD) bf16 in HBM (manual DMA) head_b: (1, HEAD_PAD)
    # out_ref:    (B, HEAD_PAD)
    # scratch: acc_ref (B, C) f32, dec_w_vmem (L,C,C), head_w_vmem (C,HEAD_PAD),
    #          dma_sems (2,) DMA semaphores
    n = pl.program_id(0)
    last = pl.num_programs(0) - 1

    @pl.when(n == 0)
    def _init():
        # Kick off the (single-buffered) weight streams so they overlap the
        # encoder loop over all N-tiles.
        pltpu.make_async_copy(dec_w_hbm, dec_w_vmem, dma_sems.at[0]).start()
        pltpu.make_async_copy(head_w_hbm, head_w_vmem, dma_sems.at[1]).start()
        # 0-init is valid: every pooled feature is a max over ReLU outputs >= 0.
        acc_ref[...] = jnp.zeros_like(acc_ref)

    # ---- encoder: per-point shared MLP (3 -> C) + ReLU + running max-pool ----
    w = enc_w_ref[...]        # (3, C)   hoisted
    b_row = enc_b_ref[...]    # (1, C)
    B = acc_ref.shape[0]
    C = acc_ref.shape[1]

    for b in range(B):        # B is small; heavy intermediates are bounded by
                              # the fori_loop below (chunked), not this unroll.
        def chunk_body(ci, carry):
            start = pl.multiple_of(ci * chunk, chunk)
            xb = xyz_ref[b, pl.ds(start, chunk), :]          # (chunk, 3)
            # K=3 contraction on the MXU (Mosaic pads K); VPU only does
            # bias + ReLU (+ optional tail mask) + running max.
            h = jnp.dot(xb, w, preferred_element_type=jnp.float32)  # (chunk, C)
            h = jnp.maximum(h + b_row, 0.0)
            if mask_tail:
                row = (n * n_tile + ci * chunk
                       + lax.broadcasted_iota(jnp.int32, (chunk, 1), 0))
                # Safe: ReLU output >= 0, so forcing invalid rows to 0 cannot
                # change the max over the valid rows.
                h = jnp.where(row < total_n, h, 0.0)
            return jnp.maximum(carry, jnp.max(h, axis=0, keepdims=True))

        m = lax.fori_loop(0, n_chunks, chunk_body,
                          jnp.zeros((1, C), jnp.float32))
        acc_ref[b:b + 1, :] = jnp.maximum(acc_ref[b:b + 1, :], m)

    # ---- decoder + heads, only on the last N-tile ----
    @pl.when(n == last)
    def _finish():
        pltpu.make_async_copy(dec_w_hbm, dec_w_vmem, dma_sems.at[0]).wait()
        pltpu.make_async_copy(head_w_hbm, head_w_vmem, dma_sems.at[1]).wait()
        y = acc_ref[...]                                    # (B, C) f32
        for l in range(dec_w_vmem.shape[0]):                # static, L = 4
            z = jnp.dot(y.astype(dec_w_vmem.dtype), dec_w_vmem[l],
                        preferred_element_type=jnp.float32)
            # fused Linear-bias + BatchNorm(eval) affine + ReLU
            y = jnp.maximum(z * dec_s_ref[l:l + 1, :] + dec_t_ref[l:l + 1, :],
                            0.0)
        # fused fct/fcq head, zero-padded to 128 output lanes (lane-dense store)
        out_ref[...] = (
            jnp.dot(y.astype(head_w_vmem.dtype), head_w_vmem[...],
                    preferred_element_type=jnp.float32)
            + head_b_ref[...]
        )


# ----------------------------------------------------------------------------
# Wrapper
# ----------------------------------------------------------------------------
def _select_config():
    """Generation-aware (n_tile, vmem_limit_bytes)."""
    vmem_bytes = 64 * 1024 * 1024
    try:
        vmem_bytes = int(pltpu.get_tpu_info().vmem_capacity_bytes)
    except Exception:
        pass
    if vmem_bytes >= 100 * 1024 * 1024:        # v5e / v6e: 128 MiB physical VMEM
        return 2048, 96 * 1024 * 1024
    return 1024, 48 * 1024 * 1024              # v7x: 64 MiB physical VMEM


def pose_soe_forward(xyz, params, n_tile=None):
    """xyz: (B, N, 3) float32. Returns (t, q), each (B, 3) float32."""
    B, N, _ = xyz.shape
    C = params["enc_w"].shape[1]
    L = params["dec_ws"].shape[0]

    default_tile, vmem_limit = _select_config()
    if n_tile is None:
        n_tile = default_tile

    if N <= n_tile:
        nt, n_steps = N, 1
        mask_tail = False
    else:
        nt = n_tile
        n_steps = -(-N // nt)
        mask_tail = (N % nt) != 0   # ragged tail tile handled in-kernel

    # Inner chunking of the N-tile (keeps the (chunk, C) intermediate ~1 MiB).
    if nt > 256 and nt % 256 == 0:
        chunk = 256
    else:
        chunk = nt
    n_chunks = nt // chunk

    kernel = functools.partial(
        _fused_kernel, total_n=N, n_tile=nt, chunk=chunk,
        n_chunks=n_chunks, mask_tail=mask_tail)

    out = pl.pallas_call(
        kernel,
        out_shape=jax.ShapeDtypeStruct((B, HEAD_PAD), jnp.float32),
        grid=(n_steps,),
        in_specs=[
            pl.BlockSpec((B, nt, 3), lambda n: (0, n, 0)),   # xyz N-tile
            pl.BlockSpec((3, C), lambda n: (0, 0)),          # enc_w (tiny)
            pl.BlockSpec((1, C), lambda n: (0, 0)),          # enc_b
            pl.BlockSpec(memory_space=pl.ANY),               # decoder weights (HBM)
            pl.BlockSpec((L, C), lambda n: (0, 0)),          # BN scales
            pl.BlockSpec((L, C), lambda n: (0, 0)),          # BN shifts (+bias)
            pl.BlockSpec(memory_space=pl.ANY),               # fused head weight (HBM)
            pl.BlockSpec((1, HEAD_PAD), lambda n: (0, 0)),   # fused head bias
        ],
        out_specs=pl.BlockSpec((B, HEAD_PAD), lambda n: (0, 0)),
        scratch_shapes=[
            pltpu.VMEM((B, C), jnp.float32),                        # max accum
            pltpu.VMEM((L, C, C), params["dec_ws"].dtype),          # dec weights
            pltpu.VMEM((C, HEAD_PAD), params["head_w"].dtype),      # head weight
            pltpu.SemaphoreType.DMA((2,)),                          # weight DMAs
        ],
        compiler_params=pltpu.CompilerParams(
            dimension_semantics=("arbitrary",),
            vmem_limit_bytes=vmem_limit,
        ),
    )(xyz, params["enc_w"], params["enc_b"],
      params["dec_ws"], params["dec_scales"], params["dec_shifts"],
      params["head_w"], params["head_b"])

    t = out[:, 0:3]
    q = out[:, 3:6]
    return t, q


# ----------------------------------------------------------------------------
# Parameter construction (deterministic, torch-like uniform init)
# ----------------------------------------------------------------------------
def _linear_init(key, fan_in, fan_out):
    kw, kb = jax.random.split(key)
    bound = 1.0 / jnp.sqrt(jnp.float32(fan_in))
    w = jax.random.uniform(kw, (fan_in, fan_out), jnp.float32, -bound, bound)
    b = jax.random.uniform(kb, (fan_out,), jnp.float32, -bound, bound)
    return w, b


def make_params(key, hidden=1024):
    keys = jax.random.split(key, 8)

    # encoder final group-all shared MLP: 3 -> hidden
    enc_w, enc_b = _linear_init(keys[0], 3, hidden)

    # decoder: 4 x Linear(hidden, hidden) + BatchNorm1d(hidden) (eval mode)
    dec_ws, dec_scales, dec_shifts = [], [], []
    for i in range(4):
        w, b = _linear_init(keys[1 + i], hidden, hidden)
        gamma = jnp.ones((hidden,), jnp.float32)
        beta = jnp.zeros((hidden,), jnp.float32)
        running_mean = jnp.zeros((hidden,), jnp.float32)
        running_var = jnp.ones((hidden,), jnp.float32)
        s = gamma / jnp.sqrt(running_var + BN_EPS)
        shift = (b - running_mean) * s + beta   # fold linear bias into BN shift
        dec_ws.append(w)
        dec_scales.append(s)
        dec_shifts.append(shift)
    # bf16 weights halve the HBM bytes streamed (decoder is weight-streaming
    # bound); matmuls still accumulate in f32.
    dec_ws = jnp.stack(dec_ws).astype(jnp.bfloat16)   # (4, H, H)
    dec_scales = jnp.stack(dec_scales)                # (4, H) f32
    dec_shifts = jnp.stack(dec_shifts)                # (4, H) f32

    # heads fct (H->3) and fcq (H->3), fused and zero-padded to lane-dense width
    wt, bt = _linear_init(keys[5], hidden, 3)
    wq, bq = _linear_init(keys[6], hidden, 3)
    head_w = jnp.zeros((hidden, HEAD_PAD), jnp.float32)
    head_w = head_w.at[:, 0:3].set(wt).at[:, 3:6].set(wq)
    head_w = head_w.astype(jnp.bfloat16)              # streamed in bf16 too
    head_b = jnp.zeros((HEAD_PAD,), jnp.float32)
    head_b = head_b.at[0:3].set(bt).at[3:6].set(bq)

    return dict(
        enc_w=enc_w,
        enc_b=enc_b[None, :],
        dec_ws=dec_ws,
        dec_scales=dec_scales,
        dec_shifts=dec_shifts,
        head_w=head_w,
        head_b=head_b[None, :],
    )


# ----------------------------------------------------------------------------
if __name__ == "__main__":
    key = jax.random.PRNGKey(0)
    k_xyz, k_params = jax.random.split(key)

    B, N = 2, 64
    xyz = jax.random.normal(k_xyz, (B, N, 3), dtype=jnp.float32)

    params = make_params(k_params, hidden=1024)

    t, q = pose_soe_forward(xyz, params)
    jax.block_until_ready((t, q))

    assert t.shape == (B, 3) and q.shape == (B, 3)
    assert t.dtype == jnp.float32 and q.dtype == jnp.float32
    assert bool(jnp.all(jnp.isfinite(t))) and bool(jnp.all(jnp.isfinite(q)))
    print("KERNEL_OK")
</pallas_src>

<mosaic_0001>
module attributes {stable_mosaic.version = 11 : i64} {
  func.func @_fused_kernel(%arg0: i32, %arg1: memref<2x64x3xf32, #tpu.memory_space<vmem>>, %arg2: memref<3x1024xf32, #tpu.memory_space<vmem>>, %arg3: memref<1x1024xf32, #tpu.memory_space<vmem>>, %arg4: memref<4x1024x1024xbf16, #tpu.memory_space<any>>, %arg5: memref<4x1024xf32, #tpu.memory_space<vmem>>, %arg6: memref<4x1024xf32, #tpu.memory_space<vmem>>, %arg7: memref<1024x128xbf16, #tpu.memory_space<any>>, %arg8: memref<1x128xf32, #tpu.memory_space<vmem>>, %arg9: memref<2x128xf32, #tpu.memory_space<vmem>>, %arg10: memref<2x1024xf32, #tpu.memory_space<vmem>>, %arg11: memref<4x1024x1024xbf16, #tpu.memory_space<vmem>>, %arg12: memref<1024x128xbf16, #tpu.memory_space<vmem>>, %arg13: memref<2x!tpu.dma_semaphore, #tpu.memory_space<semaphore_mem>>) attributes {dimension_semantics = [#tpu.dimension_semantics<arbitrary>], iteration_bounds = array<i64: 1>, scalar_prefetch = 0 : i64, scratch_operands = 4 : i64, tpu.core_type = #tpu.core_type<tc>, window_params = [{transform_indices = @transform_0, window_bounds = array<i64: 2, 64, 3>}, {pipeline_mode = #tpu.pipeline_mode<synchronous>, transform_indices = @transform_1, window_bounds = array<i64: 3, 1024>}, {pipeline_mode = #tpu.pipeline_mode<synchronous>, transform_indices = @transform_2, window_bounds = array<i64: 1, 1024>}, {}, {pipeline_mode = #tpu.pipeline_mode<synchronous>, transform_indices = @transform_4, window_bounds = array<i64: 4, 1024>}, {pipeline_mode = #tpu.pipeline_mode<synchronous>, transform_indices = @transform_5, window_bounds = array<i64: 4, 1024>}, {}, {pipeline_mode = #tpu.pipeline_mode<synchronous>, transform_indices = @transform_7, window_bounds = array<i64: 1, 128>}, {pipeline_mode = #tpu.pipeline_mode<synchronous>, transform_indices = @transform_8, window_bounds = array<i64: 2, 128>}]} {
    %c0_i32 = arith.constant 0 : i32
    %0 = arith.cmpi eq, %arg0, %c0_i32 : i32
    %1 = arith.extui %0 : i1 to i32
    %c0_i32_0 = arith.constant 0 : i32
    %2 = arith.cmpi ne, %1, %c0_i32_0 : i32
    scf.if %2 {
      %c0_i32_28 = arith.constant 0 : i32
      %42 = tpu.memref_slice %arg13[%c0_i32_28] : memref<2x!tpu.dma_semaphore, #tpu.memory_space<semaphore_mem>> -> memref<1x!tpu.dma_semaphore, #tpu.memory_space<semaphore_mem>>
      %43 = tpu.memref_squeeze %42 : memref<1x!tpu.dma_semaphore, #tpu.memory_space<semaphore_mem>> -> memref<!tpu.dma_semaphore, #tpu.memory_space<semaphore_mem>>
      tpu.enqueue_dma source(%arg4 : memref<4x1024x1024xbf16, #tpu.memory_space<any>>) target(%arg11 : memref<4x1024x1024xbf16, #tpu.memory_space<vmem>>) target_semaphore(%43 : memref<!tpu.dma_semaphore, #tpu.memory_space<semaphore_mem>>)
      %c1_i32_29 = arith.constant 1 : i32
      %44 = tpu.memref_slice %arg13[%c1_i32_29] : memref<2x!tpu.dma_semaphore, #tpu.memory_space<semaphore_mem>> -> memref<1x!tpu.dma_semaphore, #tpu.memory_space<semaphore_mem>>
      %45 = tpu.memref_squeeze %44 : memref<1x!tpu.dma_semaphore, #tpu.memory_space<semaphore_mem>> -> memref<!tpu.dma_semaphore, #tpu.memory_space<semaphore_mem>>
      tpu.enqueue_dma source(%arg7 : memref<1024x128xbf16, #tpu.memory_space<any>>) target(%arg12 : memref<1024x128xbf16, #tpu.memory_space<vmem>>) target_semaphore(%45 : memref<!tpu.dma_semaphore, #tpu.memory_space<semaphore_mem>>)
      %cst_30 = arith.constant 0.000000e+00 : f32
      %46 = vector.broadcast %cst_30 : f32 to vector<2x1024xf32>
      %c0_31 = arith.constant 0 : index
      %c0_32 = arith.constant 0 : index
      %47 = vector.load %arg10[%c0_31, %c0_32] : memref<2x1024xf32, #tpu.memory_space<vmem>>, vector<2x1024xf32>
      tpu.vector_store %arg10[%c0_31, %c0_32], %46 {strides = array<i32>} : memref<2x1024xf32, #tpu.memory_space<vmem>>, vector<2x1024xf32>,
    } else {
    }
    %c0 = arith.constant 0 : index
    %c0_1 = arith.constant 0 : index
    %3 = vector.load %arg2[%c0, %c0_1] : memref<3x1024xf32, #tpu.memory_space<vmem>>, vector<3x1024xf32>
    %c0_2 = arith.constant 0 : index
    %c0_3 = arith.constant 0 : index
    %4 = vector.load %arg3[%c0_2, %c0_3] : memref<1x1024xf32, #tpu.memory_space<vmem>>, vector<1x1024xf32>
    %cst = arith.constant 0.000000e+00 : f32
    %5 = vector.broadcast %cst : f32 to vector<1x1024xf32>
    %c0_i32_4 = arith.constant 0 : i32
    %c64_i32 = arith.constant 64 : i32
    %6 = arith.muli %c0_i32_4, %c64_i32 : i32
    %7 = tpu.assume_multiple %6, 64 : i32
    %c0_5 = arith.constant 0 : index
    %8 = arith.index_cast %7 : i32 to index
    %c0_6 = arith.constant 0 : index
    %9 = vector.load %arg1[%c0_5, %8, %c0_6] : memref<2x64x3xf32, #tpu.memory_space<vmem>>, vector<1x64x3xf32>
    %10 = vector.shape_cast %9 : vector<1x64x3xf32> to vector<64x3xf32>
    %cst_7 = arith.constant dense<0.000000e+00> : vector<64x1024xf32>
    %11 = tpu.matmul %10, %3, %cst_7 {dimension_numbers = #tpu.dot_dimension_numbers<[1], [0], [0], [1], [0, 0, 1, 1], [], []>} : vector<64x3xf32>, vector<3x1024xf32>, vector<64x1024xf32> -> vector<64x1024xf32>
    %12 = vector.broadcast %4 : vector<1x1024xf32> to vector<64x1024xf32>
    %13 = arith.addf %11, %12 : vector<64x1024xf32>
    %cst_8 = arith.constant 0.000000e+00 : f32
    %14 = vector.broadcast %cst_8 : f32 to vector<64x1024xf32>
    %15 = arith.maximumf %13, %14 : vector<64x1024xf32>
    %cst_9 = arith.constant dense<0xFF800000> : vector<1024xf32>
    %16 = vector.multi_reduction <maximumf>, %15, %cst_9 [0] : vector<64x1024xf32> to vector<1024xf32>
    %17 = vector.shape_cast %16 : vector<1024xf32> to vector<1x1024xf32>
    %18 = arith.maximumf %5, %17 : vector<1x1024xf32>
    %c1_i32 = arith.constant 1 : i32
    %c0_10 = arith.constant 0 : index
    %c0_11 = arith.constant 0 : index
    %19 = vector.load %arg10[%c0_10, %c0_11] : memref<2x1024xf32, #tpu.memory_space<vmem>>, vector<1x1024xf32>
    %20 = arith.maximumf %19, %18 : vector<1x1024xf32>
    %c0_12 = arith.constant 0 : index
    %c0_13 = arith.constant 0 : index
    %21 = vector.load %arg10[%c0_12, %c0_13] : memref<2x1024xf32, #tpu.memory_space<vmem>>, vector<1x1024xf32>
    tpu.vector_store %arg10[%c0_12, %c0_13], %20 {strides = array<i32>} : memref<2x1024xf32, #tpu.memory_space<vmem>>, vector<1x1024xf32>,
    %cst_14 = arith.constant 0.000000e+00 : f32
    %22 = vector.broadcast %cst_14 : f32 to vector<1x1024xf32>
    %c0_i32_15 = arith.constant 0 : i32
    %c64_i32_16 = arith.constant 64 : i32
    %23 = arith.muli %c0_i32_15, %c64_i32_16 : i32
    %24 = tpu.assume_multiple %23, 64 : i32
    %c1 = arith.constant 1 : index
    %25 = arith.index_cast %24 : i32 to index
    %c0_17 = arith.constant 0 : index
    %26 = vector.load %arg1[%c1, %25, %c0_17] : memref<2x64x3xf32, #tpu.memory_space<vmem>>, vector<1x64x3xf32>
    %27 = vector.shape_cast %26 : vector<1x64x3xf32> to vector<64x3xf32>
    %cst_18 = arith.constant dense<0.000000e+00> : vector<64x1024xf32>
    %28 = tpu.matmul %27, %3, %cst_18 {dimension_numbers = #tpu.dot_dimension_numbers<[1], [0], [0], [1], [0, 0, 1, 1], [], []>} : vector<64x3xf32>, vector<3x1024xf32>, vector<64x1024xf32> -> vector<64x1024xf32>
    %29 = vector.broadcast %4 : vector<1x1024xf32> to vector<64x1024xf32>
    %30 = arith.addf %28, %29 : vector<64x1024xf32>
    %cst_19 = arith.constant 0.000000e+00 : f32
    %31 = vector.broadcast %cst_19 : f32 to vector<64x1024xf32>
    %32 = arith.maximumf %30, %31 : vector<64x1024xf32>
    %cst_20 = arith.constant dense<0xFF800000> : vector<1024xf32>
    %33 = vector.multi_reduction <maximumf>, %32, %cst_20 [0] : vector<64x1024xf32> to vector<1024xf32>
    %34 = vector.shape_cast %33 : vector<1024xf32> to vector<1x1024xf32>
    %35 = arith.maximumf %22, %34 : vector<1x1024xf32>
    %c1_i32_21 = arith.constant 1 : i32
    %c1_22 = arith.constant 1 : index
    %c0_23 = arith.constant 0 : index
    %36 = vector.load %arg10[%c1_22, %c0_23] : memref<2x1024xf32, #tpu.memory_space<vmem>>, vector<1x1024xf32>
    %37 = arith.maximumf %36, %35 : vector<1x1024xf32>
    %c1_24 = arith.constant 1 : index
    %c0_25 = arith.constant 0 : index
    %38 = vector.load %arg10[%c1_24, %c0_25] : memref<2x1024xf32, #tpu.memory_space<vmem>>, vector<1x1024xf32>
    tpu.vector_store %arg10[%c1_24, %c0_25], %37 {strides = array<i32>} : memref<2x1024xf32, #tpu.memory_space<vmem>>, vector<1x1024xf32>,
    %c0_i32_26 = arith.constant 0 : i32
    %39 = arith.cmpi eq, %arg0, %c0_i32_26 : i32
    %40 = arith.extui %39 : i1 to i32
    %c0_i32_27 = arith.constant 0 : i32
    %41 = arith.cmpi ne, %40, %c0_i32_27 : i32
    scf.if %41 {
      %c0_i32_28 = arith.constant 0 : i32
      %42 = tpu.memref_slice %arg13[%c0_i32_28] : memref<2x!tpu.dma_semaphore, #tpu.memory_space<semaphore_mem>> -> memref<1x!tpu.dma_semaphore, #tpu.memory_space<semaphore_mem>>
      %43 = tpu.memref_squeeze %42 : memref<1x!tpu.dma_semaphore, #tpu.memory_space<semaphore_mem>> -> memref<!tpu.dma_semaphore, #tpu.memory_space<semaphore_mem>>
      tpu.wait_dma2 semaphore(%43 : memref<!tpu.dma_semaphore, #tpu.memory_space<semaphore_mem>>) src(%arg4 : memref<4x1024x1024xbf16, #tpu.memory_space<any>>) dst(%arg11 : memref<4x1024x1024xbf16, #tpu.memory_space<vmem>>)
      %c1_i32_29 = arith.constant 1 : i32
      %44 = tpu.memref_slice %arg13[%c1_i32_29] : memref<2x!tpu.dma_semaphore, #tpu.memory_space<semaphore_mem>> -> memref<1x!tpu.dma_semaphore, #tpu.memory_space<semaphore_mem>>
      %45 = tpu.memref_squeeze %44 : memref<1x!tpu.dma_semaphore, #tpu.memory_space<semaphore_mem>> -> memref<!tpu.dma_semaphore, #tpu.memory_space<semaphore_mem>>
      tpu.wait_dma2 semaphore(%45 : memref<!tpu.dma_semaphore, #tpu.memory_space<semaphore_mem>>) src(%arg7 : memref<1024x128xbf16, #tpu.memory_space<any>>) dst(%arg12 : memref<1024x128xbf16, #tpu.memory_space<vmem>>)
      %c0_30 = arith.constant 0 : index
      %c0_31 = arith.constant 0 : index
      %46 = vector.load %arg10[%c0_30, %c0_31] : memref<2x1024xf32, #tpu.memory_space<vmem>>, vector<2x1024xf32>
      %47 = arith.truncf %46 : vector<2x1024xf32> to vector<2x1024xbf16>
      %c0_32 = arith.constant 0 : index
      %c0_33 = arith.constant 0 : index
      %c0_34 = arith.constant 0 : index
      %48 = vector.load %arg11[%c0_32, %c0_33, %c0_34] : memref<4x1024x1024xbf16, #tpu.memory_space<vmem>>, vector<1x1024x1024xbf16>
      %49 = vector.shape_cast %48 : vector<1x1024x1024xbf16> to vector<1024x1024xbf16>
      %cst_35 = arith.constant dense<0.000000e+00> : vector<2x1024xf32>
      %50 = tpu.matmul %47, %49, %cst_35 {dimension_numbers = #tpu.dot_dimension_numbers<[1], [0], [0], [1], [0, 0, 1, 1], [], []>} : vector<2x1024xbf16>, vector<1024x1024xbf16>, vector<2x1024xf32> -> vector<2x1024xf32>
      %c0_36 = arith.constant 0 : index
      %c0_37 = arith.constant 0 : index
      %51 = vector.load %arg5[%c0_36, %c0_37] : memref<4x1024xf32, #tpu.memory_space<vmem>>, vector<1x1024xf32>
      %52 = vector.broadcast %51 : vector<1x1024xf32> to vector<2x1024xf32>
      %53 = arith.mulf %50, %52 : vector<2x1024xf32>
      %c0_38 = arith.constant 0 : index
      %c0_39 = arith.constant 0 : index
      %54 = vector.load %arg6[%c0_38, %c0_39] : memref<4x1024xf32, #tpu.memory_space<vmem>>, vector<1x1024xf32>
      %55 = vector.broadcast %54 : vector<1x1024xf32> to vector<2x1024xf32>
      %56 = arith.addf %53, %55 : vector<2x1024xf32>
      %cst_40 = arith.constant 0.000000e+00 : f32
      %57 = vector.broadcast %cst_40 : f32 to vector<2x1024xf32>
      %58 = arith.maximumf %56, %57 : vector<2x1024xf32>
      %59 = arith.truncf %58 : vector<2x1024xf32> to vector<2x1024xbf16>
      %c1_41 = arith.constant 1 : index
      %c0_42 = arith.constant 0 : index
      %c0_43 = arith.constant 0 : index
      %60 = vector.load %arg11[%c1_41, %c0_42, %c0_43] : memref<4x1024x1024xbf16, #tpu.memory_space<vmem>>, vector<1x1024x1024xbf16>
      %61 = vector.shape_cast %60 : vector<1x1024x1024xbf16> to vector<1024x1024xbf16>
      %cst_44 = arith.constant dense<0.000000e+00> : vector<2x1024xf32>
      %62 = tpu.matmul %59, %61, %cst_44 {dimension_numbers = #tpu.dot_dimension_numbers<[1], [0], [0], [1], [0, 0, 1, 1], [], []>} : vector<2x1024xbf16>, vector<1024x1024xbf16>, vector<2x1024xf32> -> vector<2x1024xf32>
      %c1_45 = arith.constant 1 : index
      %c0_46 = arith.constant 0 : index
      %63 = vector.load %arg5[%c1_45, %c0_46] : memref<4x1024xf32, #tpu.memory_space<vmem>>, vector<1x1024xf32>
      %64 = vector.broadcast %63 : vector<1x1024xf32> to vector<2x1024xf32>
      %65 = arith.mulf %62, %64 : vector<2x1024xf32>
      %c1_47 = arith.constant 1 : index
      %c0_48 = arith.constant 0 : index
      %66 = vector.load %arg6[%c1_47, %c0_48] : memref<4x1024xf32, #tpu.memory_space<vmem>>, vector<1x1024xf32>
      %67 = vector.broadcast %66 : vector<1x1024xf32> to vector<2x1024xf32>
      %68 = arith.addf %65, %67 : vector<2x1024xf32>
      %cst_49 = arith.constant 0.000000e+00 : f32
      %69 = vector.broadcast %cst_49 : f32 to vector<2x1024xf32>
      %70 = arith.maximumf %68, %69 : vector<2x1024xf32>
      %71 = arith.truncf %70 : vector<2x1024xf32> to vector<2x1024xbf16>
      %c2 = arith.constant 2 : index
      %c0_50 = arith.constant 0 : index
      %c0_51 = arith.constant 0 : index
      %72 = vector.load %arg11[%c2, %c0_50, %c0_51] : memref<4x1024x1024xbf16, #tpu.memory_space<vmem>>, vector<1x1024x1024xbf16>
      %73 = vector.shape_cast %72 : vector<1x1024x1024xbf16> to vector<1024x1024xbf16>
      %cst_52 = arith.constant dense<0.000000e+00> : vector<2x1024xf32>
      %74 = tpu.matmul %71, %73, %cst_52 {dimension_numbers = #tpu.dot_dimension_numbers<[1], [0], [0], [1], [0, 0, 1, 1], [], []>} : vector<2x1024xbf16>, vector<1024x1024xbf16>, vector<2x1024xf32> -> vector<2x1024xf32>
      %c2_53 = arith.constant 2 : index
      %c0_54 = arith.constant 0 : index
      %75 = vector.load %arg5[%c2_53, %c0_54] : memref<4x1024xf32, #tpu.memory_space<vmem>>, vector<1x1024xf32>
      %76 = vector.broadcast %75 : vector<1x1024xf32> to vector<2x1024xf32>
      %77 = arith.mulf %74, %76 : vector<2x1024xf32>
      %c2_55 = arith.constant 2 : index
      %c0_56 = arith.constant 0 : index
      %78 = vector.load %arg6[%c2_55, %c0_56] : memref<4x1024xf32, #tpu.memory_space<vmem>>, vector<1x1024xf32>
      %79 = vector.broadcast %78 : vector<1x1024xf32> to vector<2x1024xf32>
      %80 = arith.addf %77, %79 : vector<2x1024xf32>
      %cst_57 = arith.constant 0.000000e+00 : f32
      %81 = vector.broadcast %cst_57 : f32 to vector<2x1024xf32>
      %82 = arith.maximumf %80, %81 : vector<2x1024xf32>
      %83 = arith.truncf %82 : vector<2x1024xf32> to vector<2x1024xbf16>
      %c3 = arith.constant 3 : index
      %c0_58 = arith.constant 0 : index
      %c0_59 = arith.constant 0 : index
      %84 = vector.load %arg11[%c3, %c0_58, %c0_59] : memref<4x1024x1024xbf16, #tpu.memory_space<vmem>>, vector<1x1024x1024xbf16>
      %85 = vector.shape_cast %84 : vector<1x1024x1024xbf16> to vector<1024x1024xbf16>
      %cst_60 = arith.constant dense<0.000000e+00> : vector<2x1024xf32>
      %86 = tpu.matmul %83, %85, %cst_60 {dimension_numbers = #tpu.dot_dimension_numbers<[1], [0], [0], [1], [0, 0, 1, 1], [], []>} : vector<2x1024xbf16>, vector<1024x1024xbf16>, vector<2x1024xf32> -> vector<2x1024xf32>
      %c3_61 = arith.constant 3 : index
      %c0_62 = arith.constant 0 : index
      %87 = vector.load %arg5[%c3_61, %c0_62] : memref<4x1024xf32, #tpu.memory_space<vmem>>, vector<1x1024xf32>
      %88 = vector.broadcast %87 : vector<1x1024xf32> to vector<2x1024xf32>
      %89 = arith.mulf %86, %88 : vector<2x1024xf32>
      %c3_63 = arith.constant 3 : index
      %c0_64 = arith.constant 0 : index
      %90 = vector.load %arg6[%c3_63, %c0_64] : memref<4x1024xf32, #tpu.memory_space<vmem>>, vector<1x1024xf32>
      %91 = vector.broadcast %90 : vector<1x1024xf32> to vector<2x1024xf32>
      %92 = arith.addf %89, %91 : vector<2x1024xf32>
      %cst_65 = arith.constant 0.000000e+00 : f32
      %93 = vector.broadcast %cst_65 : f32 to vector<2x1024xf32>
      %94 = arith.maximumf %92, %93 : vector<2x1024xf32>
      %95 = arith.truncf %94 : vector<2x1024xf32> to vector<2x1024xbf16>
      %c0_66 = arith.constant 0 : index
      %c0_67 = arith.constant 0 : index
      %96 = vector.load %arg12[%c0_66, %c0_67] : memref<1024x128xbf16, #tpu.memory_space<vmem>>, vector<1024x128xbf16>
      %cst_68 = arith.constant dense<0.000000e+00> : vector<2x128xf32>
      %97 = tpu.matmul %95, %96, %cst_68 {dimension_numbers = #tpu.dot_dimension_numbers<[1], [0], [0], [1], [0, 0, 1, 1], [], []>} : vector<2x1024xbf16>, vector<1024x128xbf16>, vector<2x128xf32> -> vector<2x128xf32>
      %c0_69 = arith.constant 0 : index
      %c0_70 = arith.constant 0 : index
      %98 = vector.load %arg8[%c0_69, %c0_70] : memref<1x128xf32, #tpu.memory_space<vmem>>, vector<1x128xf32>
      %99 = vector.broadcast %98 : vector<1x128xf32> to vector<2x128xf32>
      %100 = arith.addf %97, %99 : vector<2x128xf32>
      %c0_71 = arith.constant 0 : index
      %c0_72 = arith.constant 0 : index
      %101 = vector.load %arg9[%c0_71, %c0_72] : memref<2x128xf32, #tpu.memory_space<vmem>>, vector<2x128xf32>
      tpu.vector_store %arg9[%c0_71, %c0_72], %100 {strides = array<i32>} : memref<2x128xf32, #tpu.memory_space<vmem>>, vector<2x128xf32>,
    } else {
    }
    return
  }
  func.func @transform_0(%arg0: i32) -> (i32, i32, i32) {
    %c0_i32 = arith.constant 0 : i32
    %c0_i32_0 = arith.constant 0 : i32
    %c0_i32_1 = arith.constant 0 : i32
    return %c0_i32, %arg0, %c0_i32_0 : i32, i32, i32
  }
  func.func @transform_1(%arg0: i32) -> (i32, i32) {
    %c0_i32 = arith.constant 0 : i32
    %c0_i32_0 = arith.constant 0 : i32
    %c0_i32_1 = arith.constant 0 : i32
    return %c0_i32, %c0_i32_0 : i32, i32
  }
  func.func @transform_2(%arg0: i32) -> (i32, i32) {
    %c0_i32 = arith.constant 0 : i32
    %c0_i32_0 = arith.constant 0 : i32
    %c0_i32_1 = arith.constant 0 : i32
    return %c0_i32, %c0_i32_0 : i32, i32
  }
  func.func @transform_4(%arg0: i32) -> (i32, i32) {
    %c0_i32 = arith.constant 0 : i32
    %c0_i32_0 = arith.constant 0 : i32
    %c0_i32_1 = arith.constant 0 : i32
    return %c0_i32, %c0_i32_0 : i32, i32
  }
  func.func @transform_5(%arg0: i32) -> (i32, i32) {
    %c0_i32 = arith.constant 0 : i32
    %c0_i32_0 = arith.constant 0 : i32
    %c0_i32_1 = arith.constant 0 : i32
    return %c0_i32, %c0_i32_0 : i32, i32
  }
  func.func @transform_7(%arg0: i32) -> (i32, i32) {
    %c0_i32 = arith.constant 0 : i32
    %c0_i32_0 = arith.constant 0 : i32
    %c0_i32_1 = arith.constant 0 : i32
    return %c0_i32, %c0_i32_0 : i32, i32
  }
  func.func @transform_8(%arg0: i32) -> (i32, i32) {
    %c0_i32 = arith.constant 0 : i32
    %c0_i32_0 = arith.constant 0 : i32
    %c0_i32_1 = arith.constant 0 : i32
    return %c0_i32, %c0_i32_0 : i32, i32
  }
}

</mosaic_0001>

<llo_original>
// kernel: tpu_custom_call.1
$region0: #{tpu_custom_call.1}
  #allocation0 [shape = 'u32[]', space=smem, size = 0x4, offset = 0x4, fixed_abs, tag = 'smem constant byte address 0x4 - core index']
  #allocation1 [shape = 'u32[144,128]{1,0:T(1,128)}', space=vmem, size = 0x12000, scoped, tag = 'internal scratch']
  #allocation2 [shape = 'f32[2,1024]{1,0:T(2,128)}', space=vmem, size = 0x2000, scoped, tag = 'scratch operand']
  #allocation3 [shape = 'bf16[4,1024,1024]{2,1,0:T(16,128)(2,1)}', space=vmem, size = 0x800000, scoped, tag = 'scratch operand']
  #allocation4 [shape = 'bf16[1024,128]{1,0:T(16,128)(2,1)}', space=vmem, size = 0x40000, scoped, tag = 'scratch operand']
  #allocation5 [shape = 's32[2]{0}', space=sflag, size = 0x8, scoped, tag = 'scratch operand']
  #allocation16 [shape = 's32[]', space=sflag, size = 0x4, offset = 0, fixed_abs, tag = 'sflag constant byte address 0x0 - dummy sync flag']
  #allocation18 [shape = 's32[]', space=sflag, size = 0x4, offset = 0, fixed_abs, tag = 'sflag constant byte address 0x0 - dummy sync flag']
  #allocation19 [shape = 's32[]', space=sflag, size = 0x4, offset = 0, fixed_abs, tag = 'sflag constant byte address 0x0 - dummy sync flag']
  #allocation20 [shape = 'u32[]', space=smem, size = 0x4, offset = 0x44, fixed_abs, tag = 'smem constant byte address 0x44 - assertion arg 0']
  #allocation21 [shape = 'u32[]', space=smem, size = 0x4, offset = 0x48, fixed_abs, tag = 'smem constant byte address 0x48 - assertion arg 1']
  %s0 = inlined_call_operand.vmem [shape: f32[2,64,3], index: 0, kind: input, shape index: {}]
  %s1 = inlined_call_operand.hbm [shape: f32[3,1024], index: 1, kind: input, shape index: {}]
  %s2 = inlined_call_operand.hbm [shape: f32[1,1024], index: 2, kind: input, shape index: {}]
  %s3 = inlined_call_operand.hbm [shape: bf16[4,1024,1024], index: 3, kind: input, shape index: {}]
  %s4 = inlined_call_operand.hbm [shape: f32[4,1024], index: 4, kind: input, shape index: {}]
  %s5 = inlined_call_operand.hbm [shape: f32[4,1024], index: 5, kind: input, shape index: {}]
  %s6 = inlined_call_operand.hbm [shape: bf16[1024,128], index: 6, kind: input, shape index: {}]
  %s7 = inlined_call_operand.hbm [shape: f32[1,128], index: 7, kind: input, shape index: {}]
  %s8 = inlined_call_operand.hbm [shape: f32[2,128], index: 8, kind: output, shape index: {}]
  %s9 = sld [smem:[#allocation0]]
  $region66: #{tpu_custom_call.1} parent=0
    _
  %s11 = ssub.s32 1, %s9
  %s12 = scalar_select 0, %s11, %s9
  $region1: #{tpu_custom_call.1} parent=0
    #allocation6 [shape = 'u8[16384]{0}', space=vmem, size = 0x4000, scoped, tag = 'input window, operand 1, single buffered']
    #allocation7 [shape = 's32[1]{0}', space=sflag, size = 0x4, scoped, tag = 'scoped memory for tpu_custom_call.1']
    #allocation8 [shape = 's32[1]{0}', space=sflag, size = 0x4, scoped, tag = 'scoped memory for tpu_custom_call.1']
    #allocation9 [shape = 'u8[4096]{0}', space=vmem, size = 0x1000, scoped, tag = 'input window, operand 2, single buffered']
    #allocation10 [shape = 's32[1]{0}', space=sflag, size = 0x4, scoped, tag = 'scoped memory for tpu_custom_call.1']
    #allocation11 [shape = 'u8[16384]{0}', space=vmem, size = 0x4000, scoped, tag = 'input window, operand 4, single buffered']
    #allocation12 [shape = 'u8[16384]{0}', space=vmem, size = 0x4000, scoped, tag = 'input window, operand 5, single buffered']
    #allocation13 [shape = 's32[1]{0}', space=sflag, size = 0x4, scoped, tag = 'scoped memory for tpu_custom_call.1']
    #allocation14 [shape = 'u8[512]{0}', space=vmem, size = 0x400, scoped, tag = 'input window, operand 7, single buffered']
    #allocation15 [shape = 'u8[1024]{0}', space=vmem, size = 0x400, scoped, tag = 'output window, operand 0, single buffered']
    %13 = vsyncpa [#allocation7], 0
    %14 = vsyncpa [#allocation10], 0
    %15 = vsyncpa [#allocation13], 0
    %16 = vsyncpa [#allocation8], 0
    // Predicated region
    $region2: #{tpu_custom_call.1} parent=1 // pred_check
      _
    $region3: #{tpu_custom_call.1} parent=1 // pred_check_branch
      %18 = sbr.rel (0) target = $region5
    $region4: #{tpu_custom_call.1} parent=1 // pred_region
      _
    $region5: #{tpu_custom_call.1} parent=1 // pred_fallthru
      _
    // Predicated region
    $region6: #{tpu_custom_call.1} parent=1 // pred_check
      _
    $region7: #{tpu_custom_call.1} parent=1 // pred_check_branch
      %20 = sbr.rel (0) target = $region9
    $region8: #{tpu_custom_call.1} parent=1 // pred_region
      %s22 = ssub.s32 512, 512
      %23 = vsyncadd [#allocation7], %s22
      %s25 = sshll.u32 [#allocation6], 4
      %s26 = int_to_ptr.vmem [resolvable:$true] %s25
      %28 = dma.hbm_to_vmem [thread:$0]  %s1, 512, %s26, [#allocation7]
    $region9: #{tpu_custom_call.1} parent=1 // pred_fallthru
      _
    // Predicated region
    $region10: #{tpu_custom_call.1} parent=1 // pred_check
      _
    $region11: #{tpu_custom_call.1} parent=1 // pred_check_branch
      %30 = sbr.rel (0) target = $region13
    $region12: #{tpu_custom_call.1} parent=1 // pred_region
      %s32 = ssub.s32 128, 128
      %33 = vsyncadd [#allocation10], %s32
      %s35 = sshll.u32 [#allocation9], 4
      %s36 = int_to_ptr.vmem [resolvable:$true] %s35
      %38 = dma.hbm_to_vmem [thread:$0]  %s2, 128, %s36, [#allocation10]
    $region13: #{tpu_custom_call.1} parent=1 // pred_fallthru
      _
    // Predicated region
    $region14: #{tpu_custom_call.1} parent=1 // pred_check
      _
    $region15: #{tpu_custom_call.1} parent=1 // pred_check_branch
      %40 = sbr.rel (0) target = $region17
    $region16: #{tpu_custom_call.1} parent=1 // pred_region
      %s42 = ssub.s32 512, 512
      %43 = vsyncadd [#allocation10], %s42
      %s45 = sshll.u32 [#allocation11], 4
      %s46 = int_to_ptr.vmem [resolvable:$true] %s45
      %48 = dma.hbm_to_vmem [thread:$0]  %s4, 512, %s46, [#allocation10]
    $region17: #{tpu_custom_call.1} parent=1 // pred_fallthru
      _
    // Predicated region
    $region18: #{tpu_custom_call.1} parent=1 // pred_check
      _
    $region19: #{tpu_custom_call.1} parent=1 // pred_check_branch
      %50 = sbr.rel (0) target = $region21
    $region20: #{tpu_custom_call.1} parent=1 // pred_region
      %s52 = ssub.s32 512, 512
      %53 = vsyncadd [#allocation13], %s52
      %s55 = sshll.u32 [#allocation12], 4
      %s56 = int_to_ptr.vmem [resolvable:$true] %s55
      %58 = dma.hbm_to_vmem [thread:$0]  %s5, 512, %s56, [#allocation13]
    $region21: #{tpu_custom_call.1} parent=1 // pred_fallthru
      _
    // Predicated region
    $region22: #{tpu_custom_call.1} parent=1 // pred_check
      _
    $region23: #{tpu_custom_call.1} parent=1 // pred_check_branch
      %60 = sbr.rel (0) target = $region25
    $region24: #{tpu_custom_call.1} parent=1 // pred_region
      %s62 = ssub.s32 16, 16
      %63 = vsyncadd [#allocation13], %s62
      %s65 = sshll.u32 [#allocation14], 4
      %s66 = int_to_ptr.vmem [resolvable:$true] %s65
      %68 = dma.hbm_to_vmem [thread:$0]  %s7, 16, %s66, [#allocation13]
    $region25: #{tpu_custom_call.1} parent=1 // pred_fallthru
      _
    // Predicated region
    $region26: #{tpu_custom_call.1} parent=1 // pred_check
      _
    $region27: #{tpu_custom_call.1} parent=1 // pred_check_branch
      %70 = sbr.rel (0) target = $region29
    $region28: #{tpu_custom_call.1} parent=1 // pred_region
      %71 = dma.done [#allocation7], 512
    $region29: #{tpu_custom_call.1} parent=1 // pred_fallthru
      _
    // Predicated region
    $region30: #{tpu_custom_call.1} parent=1 // pred_check
      _
    $region31: #{tpu_custom_call.1} parent=1 // pred_check_branch
      %73 = sbr.rel (0) target = $region33
    $region32: #{tpu_custom_call.1} parent=1 // pred_region
      %74 = dma.done [#allocation10], 128
    $region33: #{tpu_custom_call.1} parent=1 // pred_fallthru
      _
    // Predicated region
    $region34: #{tpu_custom_call.1} parent=1 // pred_check
      _
    $region35: #{tpu_custom_call.1} parent=1 // pred_check_branch
      %76 = sbr.rel (0) target = $region37
    $region36: #{tpu_custom_call.1} parent=1 // pred_region
      %77 = dma.done [#allocation10], 512
    $region37: #{tpu_custom_call.1} parent=1 // pred_fallthru
      _
    // Predicated region
    $region38: #{tpu_custom_call.1} parent=1 // pred_check
      _
    $region39: #{tpu_custom_call.1} parent=1 // pred_check_branch
      %79 = sbr.rel (0) target = $region41
    $region40: #{tpu_custom_call.1} parent=1 // pred_region
      %80 = dma.done [#allocation13], 512
    $region41: #{tpu_custom_call.1} parent=1 // pred_fallthru
      _
    // Predicated region
    $region42: #{tpu_custom_call.1} parent=1 // pred_check
      _
    $region43: #{tpu_custom_call.1} parent=1 // pred_check_branch
      %82 = sbr.rel (0) target = $region45
    $region44: #{tpu_custom_call.1} parent=1 // pred_region
      %83 = dma.done [#allocation13], 16
    $region45: #{tpu_custom_call.1} parent=1 // pred_fallthru
      _
    %p85 = scmp.eq.s32.totalorder 0, 0
    // Predicated region
    $region46: #{tpu_custom_call.1} parent=1 // pred_check
      %p86 = pneg %p85
    $region47: #{tpu_custom_call.1} parent=1 // pred_check_branch
      %88 = sbr.rel (%p86) target = $region49
    $region48: #{tpu_custom_call.1} parent=1 // pred_region
      #allocation17 [shape = 'u32[9]{0}', space=smem, size = 0x24, scoped, tag = 'DMA stride descriptor']
      %s90 = sshll.u32 1, 14
      %s91 = sxor.u32 4294967295, %s90
      %s93 = sld [smem:[#allocation0]]
      %s94 = sadd.s32 2, %s93
      %s96 = sshll.u32 7, 26
      %s97 = sxor.u32 4294967295, %s96
      %s98 = sand.u32 0, %s97
      %s99 = sshll.u32 %s94, 26
      %s100 = sor.u32 %s98, %s99
      %s101 = sshll.u32 [#allocation3], 4
      %s102 = int_to_ptr.vmem [resolvable:$true] %s101
      %105 = sst [smem:[#allocation17]] 1024
      %s106 = scalar_lea.smem [#allocation17], 1
      %107 = sst [smem:[%s106]] 1024
      %s108 = scalar_lea.smem [#allocation17], 2
      %109 = sst [smem:[%s108]] 8
      %s110 = scalar_lea.smem [#allocation17], 3
      %111 = sst [smem:[%s110]] 64
      %s112 = scalar_lea.smem [#allocation17], 4
      %113 = sst [smem:[%s112]] 128
      %s114 = scalar_lea.smem [#allocation17], 5
      %115 = sst [smem:[%s114]] 2
      %s116 = scalar_lea.smem [#allocation17], 6
      %117 = sst [smem:[%s116]] 512
      %s118 = scalar_lea.smem [#allocation17], 7
      %119 = sst [smem:[%s118]] 64
      %s120 = scalar_lea.smem [#allocation17], 8
      %121 = sst [smem:[%s120]] 4
      %123 = dma.general %s3, 262144, %s102, [#allocation5], [#allocation16], [#allocation17], %s100, 0
      %s124 = scalar_lea.sflag [#allocation5], 1
      // Predicated region
      $region50: #{tpu_custom_call.1} parent=48 // pred_check
        _
      $region51: #{tpu_custom_call.1} parent=48 // pred_check_branch
        %126 = sbr.rel target = $region53
      $region52: #{tpu_custom_call.1} parent=48 // pred_region
        %127 = sst [smem:[#allocation20]] [#allocation19]
        %128 = sst [smem:[#allocation21]] [#allocation18]
      $region53: #{tpu_custom_call.1} parent=48 // pred_fallthru
        _
      %130 = shalt.err (0)
      %s132 = sshll.u32 [#allocation4], 4
      %s133 = int_to_ptr.vmem [resolvable:$true] %s132
      %135 = dma.hbm_to_vmem [thread:$0]  %s6, 8192, %s133, %s124
      %136 = vst [vmem:[#allocation2] sm:$0xff] 0.0
      %137 = vst [vmem:[#allocation2 + $0x8] sm:$0xff] 0.0
    $region49: #{tpu_custom_call.1} parent=1 // pred_fallthru
      _
    %v138 = vld [vmem:[#allocation6] sm:$0x77]
    %v139 = vld [vmem:[#allocation6 + $0x8] sm:$0x77]
    %v140 = vld [vmem:[#allocation6 + $0x10] sm:$0x77]
    %v141 = vld [vmem:[#allocation6 + $0x18] sm:$0x77]
    %v142 = vld [vmem:[#allocation9] sm:$0xff]
    %v143 = vld [vmem:[%s0] sm:$0xff]
    %v144 = vld [vmem:[%s0 + $0x8] sm:$0xff]
    %v145 = vld [vmem:[%s0 + $0x10] sm:$0xff]
    %v146 = vld [vmem:[%s0 + $0x18] sm:$0xff]
    %v147 = vld [vmem:[%s0 + $0x20] sm:$0xff]
    %v148 = vld [vmem:[%s0 + $0x28] sm:$0xff]
    %v149 = vld [vmem:[%s0 + $0x30] sm:$0xff]
    %v150 = vld [vmem:[%s0 + $0x38] sm:$0xff]
    %v152 = vlaneseq
    %v153 = vshrl.u32 %v152, 7
    %v154 = vsub.s32 0, %v153
    %v155 = vrot.slane %v142, %v154
    %v156 = vlaneseq
    %v157 = vshrl.u32 %v156, 7
    %v158 = vsub.s32 1, %v157
    %v159 = vrot.slane %v142, %v158
    %v160 = vlaneseq
    %v161 = vshrl.u32 %v160, 7
    %v162 = vsub.s32 2, %v161
    %v163 = vrot.slane %v142, %v162
    %v164 = vlaneseq
    %v165 = vshrl.u32 %v164, 7
    %v166 = vsub.s32 3, %v165
    %v167 = vrot.slane %v142, %v166
    %v168 = vlaneseq
    %v169 = vshrl.u32 %v168, 7
    %v170 = vsub.s32 4, %v169
    %v171 = vrot.slane %v142, %v170
    %v172 = vlaneseq
    %v173 = vshrl.u32 %v172, 7
    %v174 = vsub.s32 5, %v173
    %v175 = vrot.slane %v142, %v174
    %v176 = vlaneseq
    %v177 = vshrl.u32 %v176, 7
    %v178 = vsub.s32 6, %v177
    %v179 = vrot.slane %v142, %v178
    %v180 = vlaneseq
    %v181 = vshrl.u32 %v180, 7
    %v182 = vsub.s32 7, %v181
    %v183 = vrot.slane %v142, %v182
    %v196 = vcombine.high %v138, %v138
    %v197 = vcombine.high %v139, %v139
    %v198 = vcombine.high %v140, %v140
    %v199 = vcombine.high %v141, %v141
    %vm200 = vcmask 23552
    %v202 = vsel %vm200, %v143, 0
    %v205 = vsel %vm200, %v144, 0
    %v208 = vsel %vm200, %v145, 0
    %v211 = vsel %vm200, %v146, 0
    %v214 = vsel %vm200, %v147, 0
    %v217 = vsel %vm200, %v148, 0
    %v220 = vsel %vm200, %v149, 0
    %v223 = vsel %vm200, %v150, 0
    %vm225 = vcmask 1042432
    %v226 = vsel %vm225, %v138, 0
    %v228 = vsel %vm225, %v196, 0
    %v230 = vsel %vm225, %v139, 0
    %v232 = vsel %vm225, %v197, 0
    %v234 = vsel %vm225, %v140, 0
    %v236 = vsel %vm225, %v198, 0
    %v238 = vsel %vm225, %v141, 0
    %v240 = vsel %vm225, %v199, 0
    %242 = vmatprep.subr.mxu0 %v228
    %243 = vmatpush1.msra.mxu0 %v226
    %244 = vmatprep.subr.mxu0 0.0
    %245 = vmatpush1.msra.mxu0 0.0
    %246 = vmatprep.subr.mxu0 0.0
    %247 = vmatpush1.msra.mxu0 0.0
    %248 = vmatprep.subr.mxu0 0.0
    %249 = vmatpush1.msra.mxu0 0.0
    %250 = vmatprep.subr.mxu0 0.0
    %251 = vmatpush1.msra.mxu0 0.0
    %252 = vmatprep.subr.mxu0 0.0
    %253 = vmatpush1.msra.mxu0 0.0
    %254 = vmatprep.subr.mxu0 0.0
    %255 = vmatpush1.msra.mxu0 0.0
    %256 = vmatprep.subr.mxu0 0.0
    %257 = vmatpush1.msra.mxu0 0.0
    %258 = vmatprep.subr.mxu0 0.0
    %259 = vmatpush1.msra.mxu0 0.0
    %260 = vmatprep.subr.mxu0 0.0
    %261 = vmatpush1.msra.mxu0 0.0
    %262 = vmatprep.subr.mxu0 0.0
    %263 = vmatpush1.msra.mxu0 0.0
    %264 = vmatprep.subr.mxu0 0.0
    %265 = vmatpush1.msra.mxu0 0.0
    %266 = vmatprep.subr.mxu0 0.0
    %267 = vmatpush1.msra.mxu0 0.0
    %268 = vmatprep.subr.mxu0 0.0
    %269 = vmatpush1.msra.mxu0 0.0
    %270 = vmatprep.subr.mxu0 0.0
    %271 = vmatpush1.msra.mxu0 0.0
    %272 = vmatprep.subr.mxu0 0.0
    %273 = vmatpush1.msra.mxu0 0.0
    %274 = vmatprep.subr.mxu0 0.0
    %275 = vmatpush1.msra.mxu0 0.0
    %276 = vmatprep.subr.mxu0 0.0
    %277 = vmatpush1.msra.mxu0 0.0
    %278 = vmatprep.subr.mxu0 0.0
    %279 = vmatpush1.msra.mxu0 0.0
    %280 = vmatprep.subr.mxu0 0.0
    %281 = vmatpush1.msra.mxu0 0.0
    %282 = vmatprep.subr.mxu0 0.0
    %283 = vmatpush1.msra.mxu0 0.0
    %284 = vmatprep.subr.mxu0 0.0
    %285 = vmatpush1.msra.mxu0 0.0
    %286 = vmatprep.subr.mxu0 0.0
    %287 = vmatpush1.msra.mxu0 0.0
    %288 = vmatprep.subr.mxu0 0.0
    %289 = vmatpush1.msra.mxu0 0.0
    %290 = vmatprep.subr.mxu0 0.0
    %291 = vmatpush1.msra.mxu0 0.0
    %292 = vmatprep.subr.mxu0 0.0
    %293 = vmatpush1.msra.mxu0 0.0
    %294 = vmatprep.subr.mxu0 0.0
    %295 = vmatpush1.msra.mxu0 0.0
    %296 = vmatprep.subr.mxu0 0.0
    %297 = vmatpush1.msra.mxu0 0.0
    %298 = vmatprep.subr.mxu0 0.0
    %299 = vmatpush1.msra.mxu0 0.0
    %300 = vmatprep.subr.mxu0 0.0
    %301 = vmatpush1.msra.mxu0 0.0
    %302 = vmatprep.subr.mxu0 0.0
    %303 = vmatpush1.msra.mxu0 0.0
    %304 = vmatprep.subr.mxu0 0.0
    %305 = vmatpush1.msra.mxu0 0.0
    %306 = vmatprep.mubr.f32.mxu0 0.0
    %307 = vmatmul.mubr.f32.gmra.mrb[0].mxu0 %v202
    %v308 = vpop.f32.mrb[0].mxu0
    %v309 = vadd.f32 %v155, %v308
    %v310 = vpop.f32.mrb[0].mxu0
    %v311 = vadd.f32 %v159, %v310
    %312 = vmatprep.mubr.f32.mxu0 0.0
    %313 = vmatmul.mubr.f32.gmra.mrb[0].mxu0 %v205
    %v314 = vpop.f32.mrb[0].mxu0
    %v315 = vadd.f32 %v155, %v314
    %v316 = vpop.f32.mrb[0].mxu0
    %v317 = vadd.f32 %v159, %v316
    %318 = vmatprep.mubr.f32.mxu0 0.0
    %319 = vmatmul.mubr.f32.gmra.mrb[0].mxu0 %v208
    %v320 = vpop.f32.mrb[0].mxu0
    %v321 = vadd.f32 %v155, %v320
    %v322 = vpop.f32.mrb[0].mxu0
    %v323 = vadd.f32 %v159, %v322
    %324 = vmatprep.mubr.f32.mxu0 0.0
    %325 = vmatmul.mubr.f32.gmra.mrb[0].mxu0 %v211
    %v326 = vpop.f32.mrb[0].mxu0
    %v327 = vadd.f32 %v155, %v326
    %v328 = vpop.f32.mrb[0].mxu0
    %v329 = vadd.f32 %v159, %v328
    %330 = vmatprep.mubr.f32.mxu0 0.0
    %331 = vmatmul.mubr.f32.gmra.mrb[0].mxu0 %v214
    %v332 = vpop.f32.mrb[0].mxu0
    %v333 = vadd.f32 %v155, %v332
    %v334 = vpop.f32.mrb[0].mxu0
    %v335 = vadd.f32 %v159, %v334
    %336 = vmatprep.mubr.f32.mxu0 0.0
    %337 = vmatmul.mubr.f32.gmra.mrb[0].mxu0 %v217
    %v338 = vpop.f32.mrb[0].mxu0
    %v339 = vadd.f32 %v155, %v338
    %v340 = vpop.f32.mrb[0].mxu0
    %v341 = vadd.f32 %v159, %v340
    %342 = vmatprep.mubr.f32.mxu0 0.0
    %343 = vmatmul.mubr.f32.gmra.mrb[0].mxu0 %v220
    %v344 = vpop.f32.mrb[0].mxu0
    %v345 = vadd.f32 %v155, %v344
    %v346 = vpop.f32.mrb[0].mxu0
    %v347 = vadd.f32 %v159, %v346
    %348 = vmatprep.mubr.f32.mxu0 0.0
    %349 = vmatmul.mubr.f32.gmra.mrb[0].mxu0 %v223
    %v350 = vpop.f32.mrb[0].mxu0
    %v351 = vadd.f32 %v155, %v350
    %v352 = vpop.f32.mrb[0].mxu0
    %v353 = vadd.f32 %v159, %v352
    %354 = vdwg.mxu0
    %355 = vmatprep.subr.mxu0 %v232
    %356 = vmatpush1.msra.mxu0 %v230
    %357 = vmatprep.subr.mxu0 0.0
    %358 = vmatpush1.msra.mxu0 0.0
    %359 = vmatprep.subr.mxu0 0.0
    %360 = vmatpush1.msra.mxu0 0.0
    %361 = vmatprep.subr.mxu0 0.0
    %362 = vmatpush1.msra.mxu0 0.0
    %363 = vmatprep.subr.mxu0 0.0
    %364 = vmatpush1.msra.mxu0 0.0
    %365 = vmatprep.subr.mxu0 0.0
    %366 = vmatpush1.msra.mxu0 0.0
    %367 = vmatprep.subr.mxu0 0.0
    %368 = vmatpush1.msra.mxu0 0.0
    %369 = vmatprep.subr.mxu0 0.0
    %370 = vmatpush1.msra.mxu0 0.0
    %371 = vmatprep.subr.mxu0 0.0
    %372 = vmatpush1.msra.mxu0 0.0
    %373 = vmatprep.subr.mxu0 0.0
    %374 = vmatpush1.msra.mxu0 0.0
    %375 = vmatprep.subr.mxu0 0.0
    %376 = vmatpush1.msra.mxu0 0.0
    %377 = vmatprep.subr.mxu0 0.0
    %378 = vmatpush1.msra.mxu0 0.0
    %379 = vmatprep.subr.mxu0 0.0
    %380 = vmatpush1.msra.mxu0 0.0
    %381 = vmatprep.subr.mxu0 0.0
    %382 = vmatpush1.msra.mxu0 0.0
    %383 = vmatprep.subr.mxu0 0.0
    %384 = vmatpush1.msra.mxu0 0.0
    %385 = vmatprep.subr.mxu0 0.0
    %386 = vmatpush1.msra.mxu0 0.0
    %387 = vmatprep.subr.mxu0 0.0
    %388 = vmatpush1.msra.mxu0 0.0
    %389 = vmatprep.subr.mxu0 0.0
    %390 = vmatpush1.msra.mxu0 0.0
    %391 = vmatprep.subr.mxu0 0.0
    %392 = vmatpush1.msra.mxu0 0.0
    %393 = vmatprep.subr.mxu0 0.0
    %394 = vmatpush1.msra.mxu0 0.0
    %395 = vmatprep.subr.mxu0 0.0
    %396 = vmatpush1.msra.mxu0 0.0
    %397 = vmatprep.subr.mxu0 0.0
    %398 = vmatpush1.msra.mxu0 0.0
    %399 = vmatprep.subr.mxu0 0.0
    %400 = vmatpush1.msra.mxu0 0.0
    %401 = vmatprep.subr.mxu0 0.0
    %402 = vmatpush1.msra.mxu0 0.0
    %403 = vmatprep.subr.mxu0 0.0
    %404 = vmatpush1.msra.mxu0 0.0
    %405 = vmatprep.subr.mxu0 0.0
    %406 = vmatpush1.msra.mxu0 0.0
    %407 = vmatprep.subr.mxu0 0.0
    %408 = vmatpush1.msra.mxu0 0.0
    %409 = vmatprep.subr.mxu0 0.0
    %410 = vmatpush1.msra.mxu0 0.0
    %411 = vmatprep.subr.mxu0 0.0
    %412 = vmatpush1.msra.mxu0 0.0
    %413 = vmatprep.subr.mxu0 0.0
    %414 = vmatpush1.msra.mxu0 0.0
    %415 = vmatprep.subr.mxu0 0.0
    %416 = vmatpush1.msra.mxu0 0.0
    %417 = vmatprep.subr.mxu0 0.0
    %418 = vmatpush1.msra.mxu0 0.0
    %419 = vmatprep.mubr.f32.mxu0 0.0
    %420 = vmatmul.mubr.f32.gmra.mrb[0].mxu0 %v202
    %v421 = vpop.f32.mrb[0].mxu0
    %v422 = vadd.f32 %v163, %v421
    %v423 = vpop.f32.mrb[0].mxu0
    %v424 = vadd.f32 %v167, %v423
    %425 = vmatprep.mubr.f32.mxu0 0.0
    %426 = vmatmul.mubr.f32.gmra.mrb[0].mxu0 %v205
    %v427 = vpop.f32.mrb[0].mxu0
    %v428 = vadd.f32 %v163, %v427
    %v429 = vpop.f32.mrb[0].mxu0
    %v430 = vadd.f32 %v167, %v429
    %431 = vmatprep.mubr.f32.mxu0 0.0
    %432 = vmatmul.mubr.f32.gmra.mrb[0].mxu0 %v208
    %v433 = vpop.f32.mrb[0].mxu0
    %v434 = vadd.f32 %v163, %v433
    %v435 = vpop.f32.mrb[0].mxu0
    %v436 = vadd.f32 %v167, %v435
    %437 = vmatprep.mubr.f32.mxu0 0.0
    %438 = vmatmul.mubr.f32.gmra.mrb[0].mxu0 %v211
    %v439 = vpop.f32.mrb[0].mxu0
    %v440 = vadd.f32 %v163, %v439
    %v441 = vpop.f32.mrb[0].mxu0
    %v442 = vadd.f32 %v167, %v441
    %443 = vmatprep.mubr.f32.mxu0 0.0
    %444 = vmatmul.mubr.f32.gmra.mrb[0].mxu0 %v214
    %v445 = vpop.f32.mrb[0].mxu0
    %v446 = vadd.f32 %v163, %v445
    %v447 = vpop.f32.mrb[0].mxu0
    %v448 = vadd.f32 %v167, %v447
    %449 = vmatprep.mubr.f32.mxu0 0.0
    %450 = vmatmul.mubr.f32.gmra.mrb[0].mxu0 %v217
    %v451 = vpop.f32.mrb[0].mxu0
    %v452 = vadd.f32 %v163, %v451
    %v453 = vpop.f32.mrb[0].mxu0
    %v454 = vadd.f32 %v167, %v453
    %455 = vmatprep.mubr.f32.mxu0 0.0
    %456 = vmatmul.mubr.f32.gmra.mrb[0].mxu0 %v220
    %v457 = vpop.f32.mrb[0].mxu0
    %v458 = vadd.f32 %v163, %v457
    %v459 = vpop.f32.mrb[0].mxu0
    %v460 = vadd.f32 %v167, %v459
    %461 = vmatprep.mubr.f32.mxu0 0.0
    %462 = vmatmul.mubr.f32.gmra.mrb[0].mxu0 %v223
    %v463 = vpop.f32.mrb[0].mxu0
    %v464 = vadd.f32 %v163, %v463
    %v465 = vpop.f32.mrb[0].mxu0
    %v466 = vadd.f32 %v167, %v465
    %467 = vdwg.mxu0
    %468 = vmatprep.subr.mxu0 %v236
    %469 = vmatpush1.msra.mxu0 %v234
    %470 = vmatprep.subr.mxu0 0.0
    %471 = vmatpush1.msra.mxu0 0.0
    %472 = vmatprep.subr.mxu0 0.0
    %473 = vmatpush1.msra.mxu0 0.0
    %474 = vmatprep.subr.mxu0 0.0
    %475 = vmatpush1.msra.mxu0 0.0
    %476 = vmatprep.subr.mxu0 0.0
    %477 = vmatpush1.msra.mxu0 0.0
    %478 = vmatprep.subr.mxu0 0.0
    %479 = vmatpush1.msra.mxu0 0.0
    %480 = vmatprep.subr.mxu0 0.0
    %481 = vmatpush1.msra.mxu0 0.0
    %482 = vmatprep.subr.mxu0 0.0
    %483 = vmatpush1.msra.mxu0 0.0
    %484 = vmatprep.subr.mxu0 0.0
    %485 = vmatpush1.msra.mxu0 0.0
    %486 = vmatprep.subr.mxu0 0.0
    %487 = vmatpush1.msra.mxu0 0.0
    %488 = vmatprep.subr.mxu0 0.0
    %489 = vmatpush1.msra.mxu0 0.0
    %490 = vmatprep.subr.mxu0 0.0
    %491 = vmatpush1.msra.mxu0 0.0
    %492 = vmatprep.subr.mxu0 0.0
    %493 = vmatpush1.msra.mxu0 0.0
    %494 = vmatprep.subr.mxu0 0.0
    %495 = vmatpush1.msra.mxu0 0.0
    %496 = vmatprep.subr.mxu0 0.0
    %497 = vmatpush1.msra.mxu0 0.0
    %498 = vmatprep.subr.mxu0 0.0
    %499 = vmatpush1.msra.mxu0 0.0
    %500 = vmatprep.subr.mxu0 0.0
    %501 = vmatpush1.msra.mxu0 0.0
    %502 = vmatprep.subr.mxu0 0.0
    %503 = vmatpush1.msra.mxu0 0.0
    %504 = vmatprep.subr.mxu0 0.0
    %505 = vmatpush1.msra.mxu0 0.0
    %506 = vmatprep.subr.mxu0 0.0
    %507 = vmatpush1.msra.mxu0 0.0
    %508 = vmatprep.subr.mxu0 0.0
    %509 = vmatpush1.msra.mxu0 0.0
    %510 = vmatprep.subr.mxu0 0.0
    %511 = vmatpush1.msra.mxu0 0.0
    %512 = vmatprep.subr.mxu0 0.0
    %513 = vmatpush1.msra.mxu0 0.0
    %514 = vmatprep.subr.mxu0 0.0
    %515 = vmatpush1.msra.mxu0 0.0
    %516 = vmatprep.subr.mxu0 0.0
    %517 = vmatpush1.msra.mxu0 0.0
    %518 = vmatprep.subr.mxu0 0.0
    %519 = vmatpush1.msra.mxu0 0.0
    %520 = vmatprep.subr.mxu0 0.0
    %521 = vmatpush1.msra.mxu0 0.0
    %522 = vmatprep.subr.mxu0 0.0
    %523 = vmatpush1.msra.mxu0 0.0
    %524 = vmatprep.subr.mxu0 0.0
    %525 = vmatpush1.msra.mxu0 0.0
    %526 = vmatprep.subr.mxu0 0.0
    %527 = vmatpush1.msra.mxu0 0.0
    %528 = vmatprep.subr.mxu0 0.0
    %529 = vmatpush1.msra.mxu0 0.0
    %530 = vmatprep.subr.mxu0 0.0
    %531 = vmatpush1.msra.mxu0 0.0
    %532 = vmatprep.mubr.f32.mxu0 0.0
    %533 = vmatmul.mubr.f32.gmra.mrb[0].mxu0 %v202
    %v534 = vpop.f32.mrb[0].mxu0
    %v535 = vadd.f32 %v171, %v534
    %v536 = vpop.f32.mrb[0].mxu0
    %v537 = vadd.f32 %v175, %v536
    %538 = vmatprep.mubr.f32.mxu0 0.0
    %539 = vmatmul.mubr.f32.gmra.mrb[0].mxu0 %v205
    %v540 = vpop.f32.mrb[0].mxu0
    %v541 = vadd.f32 %v171, %v540
    %v542 = vpop.f32.mrb[0].mxu0
    %v543 = vadd.f32 %v175, %v542
    %544 = vmatprep.mubr.f32.mxu0 0.0
    %545 = vmatmul.mubr.f32.gmra.mrb[0].mxu0 %v208
    %v546 = vpop.f32.mrb[0].mxu0
    %v547 = vadd.f32 %v171, %v546
    %v548 = vpop.f32.mrb[0].mxu0
    %v549 = vadd.f32 %v175, %v548
    %550 = vmatprep.mubr.f32.mxu0 0.0
    %551 = vmatmul.mubr.f32.gmra.mrb[0].mxu0 %v211
    %v552 = vpop.f32.mrb[0].mxu0
    %v553 = vadd.f32 %v171, %v552
    %v554 = vpop.f32.mrb[0].mxu0
    %v555 = vadd.f32 %v175, %v554
    %556 = vmatprep.mubr.f32.mxu0 0.0
    %557 = vmatmul.mubr.f32.gmra.mrb[0].mxu0 %v214
    %v558 = vpop.f32.mrb[0].mxu0
    %v559 = vadd.f32 %v171, %v558
    %v560 = vpop.f32.mrb[0].mxu0
    %v561 = vadd.f32 %v175, %v560
    %562 = vmatprep.mubr.f32.mxu0 0.0
    %563 = vmatmul.mubr.f32.gmra.mrb[0].mxu0 %v217
    %v564 = vpop.f32.mrb[0].mxu0
    %v565 = vadd.f32 %v171, %v564
    %v566 = vpop.f32.mrb[0].mxu0
    %v567 = vadd.f32 %v175, %v566
    %568 = vmatprep.mubr.f32.mxu0 0.0
    %569 = vmatmul.mubr.f32.gmra.mrb[0].mxu0 %v220
    %v570 = vpop.f32.mrb[0].mxu0
    %v571 = vadd.f32 %v171, %v570
    %v572 = vpop.f32.mrb[0].mxu0
    %v573 = vadd.f32 %v175, %v572
    %574 = vmatprep.mubr.f32.mxu0 0.0
    %575 = vmatmul.mubr.f32.gmra.mrb[0].mxu0 %v223
    %v576 = vpop.f32.mrb[0].mxu0
    %v577 = vadd.f32 %v171, %v576
    %v578 = vpop.f32.mrb[0].mxu0
    %v579 = vadd.f32 %v175, %v578
    %580 = vdwg.mxu0
    %581 = vmatprep.subr.mxu0 %v240
    %582 = vmatpush1.msra.mxu0 %v238
    %583 = vmatprep.subr.mxu0 0.0
    %584 = vmatpush1.msra.mxu0 0.0
    %585 = vmatprep.subr.mxu0 0.0
    %586 = vmatpush1.msra.mxu0 0.0
    %587 = vmatprep.subr.mxu0 0.0
    %588 = vmatpush1.msra.mxu0 0.0
    %589 = vmatprep.subr.mxu0 0.0
    %590 = vmatpush1.msra.mxu0 0.0
    %591 = vmatprep.subr.mxu0 0.0
    %592 = vmatpush1.msra.mxu0 0.0
    %593 = vmatprep.subr.mxu0 0.0
    %594 = vmatpush1.msra.mxu0 0.0
    %595 = vmatprep.subr.mxu0 0.0
    %596 = vmatpush1.msra.mxu0 0.0
    %597 = vmatprep.subr.mxu0 0.0
    %598 = vmatpush1.msra.mxu0 0.0
    %599 = vmatprep.subr.mxu0 0.0
    %600 = vmatpush1.msra.mxu0 0.0
    %601 = vmatprep.subr.mxu0 0.0
    %602 = vmatpush1.msra.mxu0 0.0
    %603 = vmatprep.subr.mxu0 0.0
    %604 = vmatpush1.msra.mxu0 0.0
    %605 = vmatprep.subr.mxu0 0.0
    %606 = vmatpush1.msra.mxu0 0.0
    %607 = vmatprep.subr.mxu0 0.0
    %608 = vmatpush1.msra.mxu0 0.0
    %609 = vmatprep.subr.mxu0 0.0
    %610 = vmatpush1.msra.mxu0 0.0
    %611 = vmatprep.subr.mxu0 0.0
    %612 = vmatpush1.msra.mxu0 0.0
    %613 = vmatprep.subr.mxu0 0.0
    %614 = vmatpush1.msra.mxu0 0.0
    %615 = vmatprep.subr.mxu0 0.0
    %616 = vmatpush1.msra.mxu0 0.0
    %617 = vmatprep.subr.mxu0 0.0
    %618 = vmatpush1.msra.mxu0 0.0
    %619 = vmatprep.subr.mxu0 0.0
    %620 = vmatpush1.msra.mxu0 0.0
    %621 = vmatprep.subr.mxu0 0.0
    %622 = vmatpush1.msra.mxu0 0.0
    %623 = vmatprep.subr.mxu0 0.0
    %624 = vmatpush1.msra.mxu0 0.0
    %625 = vmatprep.subr.mxu0 0.0
    %626 = vmatpush1.msra.mxu0 0.0
    %627 = vmatprep.subr.mxu0 0.0
    %628 = vmatpush1.msra.mxu0 0.0
    %629 = vmatprep.subr.mxu0 0.0
    %630 = vmatpush1.msra.mxu0 0.0
    %631 = vmatprep.subr.mxu0 0.0
    %632 = vmatpush1.msra.mxu0 0.0
    %633 = vmatprep.subr.mxu0 0.0
    %634 = vmatpush1.msra.mxu0 0.0
    %635 = vmatprep.subr.mxu0 0.0
    %636 = vmatpush1.msra.mxu0 0.0
    %637 = vmatprep.subr.mxu0 0.0
    %638 = vmatpush1.msra.mxu0 0.0
    %639 = vmatprep.subr.mxu0 0.0
    %640 = vmatpush1.msra.mxu0 0.0
    %641 = vmatprep.subr.mxu0 0.0
    %642 = vmatpush1.msra.mxu0 0.0
    %643 = vmatprep.subr.mxu0 0.0
    %644 = vmatpush1.msra.mxu0 0.0
    %645 = vmatprep.mubr.f32.mxu0 0.0
    %646 = vmatmul.mubr.f32.gmra.mrb[0].mxu0 %v202
    %v647 = vpop.f32.mrb[0].mxu0
    %v648 = vadd.f32 %v179, %v647
    %v649 = vpop.f32.mrb[0].mxu0
    %v650 = vadd.f32 %v183, %v649
    %651 = vmatprep.mubr.f32.mxu0 0.0
    %652 = vmatmul.mubr.f32.gmra.mrb[0].mxu0 %v205
    %v653 = vpop.f32.mrb[0].mxu0
    %v654 = vadd.f32 %v179, %v653
    %v655 = vpop.f32.mrb[0].mxu0
    %v656 = vadd.f32 %v183, %v655
    %657 = vmatprep.mubr.f32.mxu0 0.0
    %658 = vmatmul.mubr.f32.gmra.mrb[0].mxu0 %v208
    %v659 = vpop.f32.mrb[0].mxu0
    %v660 = vadd.f32 %v179, %v659
    %v661 = vpop.f32.mrb[0].mxu0
    %v662 = vadd.f32 %v183, %v661
    %663 = vmatprep.mubr.f32.mxu0 0.0
    %664 = vmatmul.mubr.f32.gmra.mrb[0].mxu0 %v211
    %v665 = vpop.f32.mrb[0].mxu0
    %v666 = vadd.f32 %v179, %v665
    %v667 = vpop.f32.mrb[0].mxu0
    %v668 = vadd.f32 %v183, %v667
    %669 = vmatprep.mubr.f32.mxu0 0.0
    %670 = vmatmul.mubr.f32.gmra.mrb[0].mxu0 %v214
    %v671 = vpop.f32.mrb[0].mxu0
    %v672 = vadd.f32 %v179, %v671
    %v673 = vpop.f32.mrb[0].mxu0
    %v674 = vadd.f32 %v183, %v673
    %675 = vmatprep.mubr.f32.mxu0 0.0
    %676 = vmatmul.mubr.f32.gmra.mrb[0].mxu0 %v217
    %v677 = vpop.f32.mrb[0].mxu0
    %v678 = vadd.f32 %v179, %v677
    %v679 = vpop.f32.mrb[0].mxu0
    %v680 = vadd.f32 %v183, %v679
    %681 = vmatprep.mubr.f32.mxu0 0.0
    %682 = vmatmul.mubr.f32.gmra.mrb[0].mxu0 %v220
    %v683 = vpop.f32.mrb[0].mxu0
    %v684 = vadd.f32 %v179, %v683
    %v685 = vpop.f32.mrb[0].mxu0
    %v686 = vadd.f32 %v183, %v685
    %687 = vmatprep.mubr.f32.mxu0 0.0
    %688 = vmatmul.mubr.f32.gmra.mrb[0].mxu0 %v223
    %v689 = vpop.f32.mrb[0].mxu0
    %v690 = vadd.f32 %v179, %v689
    %v691 = vpop.f32.mrb[0].mxu0
    %v692 = vadd.f32 %v183, %v691
    %693 = vdwg.mxu0
    %v694 = vmax.f32 %v309, 0.0
    %v695 = vmax.f32 %v311, 0.0
    %v696 = vmax.f32 %v422, 0.0
    %v697 = vmax.f32 %v424, 0.0
    %v698 = vmax.f32 %v535, 0.0
    %v699 = vmax.f32 %v537, 0.0
    %v700 = vmax.f32 %v648, 0.0
    %v701 = vmax.f32 %v650, 0.0
    %v702 = vmax.f32 %v315, 0.0
    %v703 = vmax.f32 %v317, 0.0
    %v704 = vmax.f32 %v428, 0.0
    %v705 = vmax.f32 %v430, 0.0
    %v706 = vmax.f32 %v541, 0.0
    %v707 = vmax.f32 %v543, 0.0
    %v708 = vmax.f32 %v654, 0.0
    %v709 = vmax.f32 %v656, 0.0
    %v710 = vmax.f32 %v321, 0.0
    %v711 = vmax.f32 %v323, 0.0
    %v712 = vmax.f32 %v434, 0.0
    %v713 = vmax.f32 %v436, 0.0
    %v714 = vmax.f32 %v547, 0.0
    %v715 = vmax.f32 %v549, 0.0
    %v716 = vmax.f32 %v660, 0.0
    %v717 = vmax.f32 %v662, 0.0
    %v718 = vmax.f32 %v327, 0.0
    %v719 = vmax.f32 %v329, 0.0
    %v720 = vmax.f32 %v440, 0.0
    %v721 = vmax.f32 %v442, 0.0
    %v722 = vmax.f32 %v553, 0.0
    %v723 = vmax.f32 %v555, 0.0
    %v724 = vmax.f32 %v666, 0.0
    %v725 = vmax.f32 %v668, 0.0
    %v726 = vmax.f32 %v333, 0.0
    %v727 = vmax.f32 %v335, 0.0
    %v728 = vmax.f32 %v446, 0.0
    %v729 = vmax.f32 %v448, 0.0
    %v730 = vmax.f32 %v559, 0.0
    %v731 = vmax.f32 %v561, 0.0
    %v732 = vmax.f32 %v672, 0.0
    %v733 = vmax.f32 %v674, 0.0
    %v734 = vmax.f32 %v339, 0.0
    %v735 = vmax.f32 %v341, 0.0
    %v736 = vmax.f32 %v452, 0.0
    %v737 = vmax.f32 %v454, 0.0
    %v738 = vmax.f32 %v565, 0.0
    %v739 = vmax.f32 %v567, 0.0
    %v740 = vmax.f32 %v678, 0.0
    %v741 = vmax.f32 %v680, 0.0
    %v742 = vmax.f32 %v345, 0.0
    %v743 = vmax.f32 %v347, 0.0
    %v744 = vmax.f32 %v458, 0.0
    %v745 = vmax.f32 %v460, 0.0
    %v746 = vmax.f32 %v571, 0.0
    %v747 = vmax.f32 %v573, 0.0
    %v748 = vmax.f32 %v684, 0.0
    %v749 = vmax.f32 %v686, 0.0
    %v750 = vmax.f32 %v351, 0.0
    %v751 = vmax.f32 %v353, 0.0
    %v752 = vmax.f32 %v464, 0.0
    %v753 = vmax.f32 %v466, 0.0
    %v754 = vmax.f32 %v577, 0.0
    %v755 = vmax.f32 %v579, 0.0
    %v756 = vmax.f32 %v690, 0.0
    %v757 = vmax.f32 %v692, 0.0
    %v758 = vmax.f32 %v694, %v702
    %v759 = vmax.f32 %v758, %v710
    %v760 = vmax.f32 %v759, %v718
    %v761 = vmax.f32 %v760, %v726
    %v762 = vmax.f32 %v761, %v734
    %v763 = vmax.f32 %v762, %v742
    %v764 = vmax.f32 %v763, %v750
    %v765 = vrot.slane %v764, 4
    %v766 = vmax.f32 %v764, %v765
    %v767 = vrot.slane %v766, 2
    %v768 = vmax.f32 %v766, %v767
    %v769 = vrot.slane %v768, 1
    %v770 = vmax.f32 %v768, %v769
    %v771 = vmax.f32 %v695, %v703
    %v772 = vmax.f32 %v771, %v711
    %v773 = vmax.f32 %v772, %v719
    %v774 = vmax.f32 %v773, %v727
    %v775 = vmax.f32 %v774, %v735
    %v776 = vmax.f32 %v775, %v743
    %v777 = vmax.f32 %v776, %v751
    %v778 = vrot.slane %v777, 4
    %v779 = vmax.f32 %v777, %v778
    %v780 = vrot.slane %v779, 2
    %v781 = vmax.f32 %v779, %v780
    %v782 = vrot.slane %v781, 1
    %v783 = vmax.f32 %v781, %v782
    %v784 = vmax.f32 %v696, %v704
    %v785 = vmax.f32 %v784, %v712
    %v786 = vmax.f32 %v785, %v720
    %v787 = vmax.f32 %v786, %v728
    %v788 = vmax.f32 %v787, %v736
    %v789 = vmax.f32 %v788, %v744
    %v790 = vmax.f32 %v789, %v752
    %v791 = vrot.slane %v790, 4
    %v792 = vmax.f32 %v790, %v791
    %v793 = vrot.slane %v792, 2
    %v794 = vmax.f32 %v792, %v793
    %v795 = vrot.slane %v794, 1
    %v796 = vmax.f32 %v794, %v795
    %v797 = vmax.f32 %v697, %v705
    %v798 = vmax.f32 %v797, %v713
    %v799 = vmax.f32 %v798, %v721
    %v800 = vmax.f32 %v799, %v729
    %v801 = vmax.f32 %v800, %v737
    %v802 = vmax.f32 %v801, %v745
    %v803 = vmax.f32 %v802, %v753
    %v804 = vrot.slane %v803, 4
    %v805 = vmax.f32 %v803, %v804
    %v806 = vrot.slane %v805, 2
    %v807 = vmax.f32 %v805, %v806
    %v808 = vrot.slane %v807, 1
    %v809 = vmax.f32 %v807, %v808
    %v810 = vmax.f32 %v698, %v706
    %v811 = vmax.f32 %v810, %v714
    %v812 = vmax.f32 %v811, %v722
    %v813 = vmax.f32 %v812, %v730
    %v814 = vmax.f32 %v813, %v738
    %v815 = vmax.f32 %v814, %v746
    %v816 = vmax.f32 %v815, %v754
    %v817 = vrot.slane %v816, 4
    %v818 = vmax.f32 %v816, %v817
    %v819 = vrot.slane %v818, 2
    %v820 = vmax.f32 %v818, %v819
    %v821 = vrot.slane %v820, 1
    %v822 = vmax.f32 %v820, %v821
    %v823 = vmax.f32 %v699, %v707
    %v824 = vmax.f32 %v823, %v715
    %v825 = vmax.f32 %v824, %v723
    %v826 = vmax.f32 %v825, %v731
    %v827 = vmax.f32 %v826, %v739
    %v828 = vmax.f32 %v827, %v747
    %v829 = vmax.f32 %v828, %v755
    %v830 = vrot.slane %v829, 4
    %v831 = vmax.f32 %v829, %v830
    %v832 = vrot.slane %v831, 2
    %v833 = vmax.f32 %v831, %v832
    %v834 = vrot.slane %v833, 1
    %v835 = vmax.f32 %v833, %v834
    %v836 = vmax.f32 %v700, %v708
    %v837 = vmax.f32 %v836, %v716
    %v838 = vmax.f32 %v837, %v724
    %v839 = vmax.f32 %v838, %v732
    %v840 = vmax.f32 %v839, %v740
    %v841 = vmax.f32 %v840, %v748
    %v842 = vmax.f32 %v841, %v756
    %v843 = vrot.slane %v842, 4
    %v844 = vmax.f32 %v842, %v843
    %v845 = vrot.slane %v844, 2
    %v846 = vmax.f32 %v844, %v845
    %v847 = vrot.slane %v846, 1
    %v848 = vmax.f32 %v846, %v847
    %v849 = vmax.f32 %v701, %v709
    %v850 = vmax.f32 %v849, %v717
    %v851 = vmax.f32 %v850, %v725
    %v852 = vmax.f32 %v851, %v733
    %v853 = vmax.f32 %v852, %v741
    %v854 = vmax.f32 %v853, %v749
    %v855 = vmax.f32 %v854, %v757
    %v856 = vrot.slane %v855, 4
    %v857 = vmax.f32 %v855, %v856
    %v858 = vrot.slane %v857, 2
    %v859 = vmax.f32 %v857, %v858
    %v860 = vrot.slane %v859, 1
    %v861 = vmax.f32 %v859, %v860
    %v862 = vmax.f32 %v770, 0.0
    %v863 = vmax.f32 %v783, 0.0
    %v864 = vmax.f32 %v796, 0.0
    %v865 = vmax.f32 %v809, 0.0
    %v866 = vmax.f32 %v822, 0.0
    %v867 = vmax.f32 %v835, 0.0
    %v868 = vmax.f32 %v848, 0.0
    %v869 = vmax.f32 %v861, 0.0
    %v870 = vld [vmem:[#allocation2] ss:$2 sm:$0xff]
    %v879 = vcombine.low %v862, %v863
    %v880 = vcombine.low %v864, %v865
    %v881 = vcombine.low %v866, %v867
    %v882 = vcombine.low %v868, %v869
    %v884 = vunpack.c.l.s4 1966171168
    %v885 = vunpack.c.0.s8 %v884
    %v886 = vlaneseq
    %v887 = vshrl.u32 %v886, 7
    %v888 = vsub.s32 %v885, %v887
    %v889 = vrot.slane %v879, %v888
    %v891 = vunpack.c.l.s4 1966171168
    %v892 = vunpack.c.0.s8 %v891
    %v893 = vlaneseq
    %v894 = vshrl.u32 %v893, 7
    %v895 = vsub.s32 %v892, %v894
    %v896 = vrot.slane %v880, %v895
    %v898 = vunpack.c.l.s4 1966171168
    %v899 = vunpack.c.0.s8 %v898
    %v900 = vlaneseq
    %v901 = vshrl.u32 %v900, 7
    %v902 = vsub.s32 %v899, %v901
    %v903 = vrot.slane %v881, %v902
    %v905 = vunpack.c.l.s4 1966171168
    %v906 = vunpack.c.0.s8 %v905
    %v907 = vlaneseq
    %v908 = vshrl.u32 %v907, 7
    %v909 = vsub.s32 %v906, %v908
    %v910 = vrot.slane %v882, %v909
    %v911 = vcombine.low %v889, %v896
    %v912 = vcombine.low %v903, %v910
    %v914 = vunpack.c.l.s4 1966171168
    %v915 = vunpack.c.0.s8 %v914
    %v916 = vlaneseq
    %v917 = vshrl.u32 %v916, 7
    %v918 = vsub.s32 %v915, %v917
    %v919 = vrot.slane %v911, %v918
    %v921 = vunpack.c.l.s4 1966171168
    %v922 = vunpack.c.0.s8 %v921
    %v923 = vlaneseq
    %v924 = vshrl.u32 %v923, 7
    %v925 = vsub.s32 %v922, %v924
    %v926 = vrot.slane %v912, %v925
    %v927 = vcombine.low %v919, %v926
    %v929 = vmax.f32 %v870, %v927
    %930 = vst [vmem:[#allocation2] ss:$2 sm:$0xff] %v929
    %s931 = sadd.s32 0, 64
    %s932 = scalar_lea.vmem %s0, %s931
    %v933 = vld [vmem:[%s932] sm:$0xff]
    %v934 = vld [vmem:[%s932 + $0x8] sm:$0xff]
    %v935 = vld [vmem:[%s932 + $0x10] sm:$0xff]
    %v936 = vld [vmem:[%s932 + $0x18] sm:$0xff]
    %v937 = vld [vmem:[%s932 + $0x20] sm:$0xff]
    %v938 = vld [vmem:[%s932 + $0x28] sm:$0xff]
    %v939 = vld [vmem:[%s932 + $0x30] sm:$0xff]
    %v940 = vld [vmem:[%s932 + $0x38] sm:$0xff]
    %v942 = vsel %vm200, %v933, 0
    %v945 = vsel %vm200, %v934, 0
    %v948 = vsel %vm200, %v935, 0
    %v951 = vsel %vm200, %v936, 0
    %v954 = vsel %vm200, %v937, 0
    %v957 = vsel %vm200, %v938, 0
    %v960 = vsel %vm200, %v939, 0
    %v963 = vsel %vm200, %v940, 0
    %965 = vmatprep.subr.mxu0 %v228
    %966 = vmatpush1.msra.mxu0 %v226
    %967 = vmatprep.subr.mxu0 0.0
    %968 = vmatpush1.msra.mxu0 0.0
    %969 = vmatprep.subr.mxu0 0.0
    %970 = vmatpush1.msra.mxu0 0.0
    %971 = vmatprep.subr.mxu0 0.0
    %972 = vmatpush1.msra.mxu0 0.0
    %973 = vmatprep.subr.mxu0 0.0
    %974 = vmatpush1.msra.mxu0 0.0
    %975 = vmatprep.subr.mxu0 0.0
    %976 = vmatpush1.msra.mxu0 0.0
    %977 = vmatprep.subr.mxu0 0.0
    %978 = vmatpush1.msra.mxu0 0.0
    %979 = vmatprep.subr.mxu0 0.0
    %980 = vmatpush1.msra.mxu0 0.0
    %981 = vmatprep.subr.mxu0 0.0
    %982 = vmatpush1.msra.mxu0 0.0
    %983 = vmatprep.subr.mxu0 0.0
    %984 = vmatpush1.msra.mxu0 0.0
    %985 = vmatprep.subr.mxu0 0.0
    %986 = vmatpush1.msra.mxu0 0.0
    %987 = vmatprep.subr.mxu0 0.0
    %988 = vmatpush1.msra.mxu0 0.0
    %989 = vmatprep.subr.mxu0 0.0
    %990 = vmatpush1.msra.mxu0 0.0
    %991 = vmatprep.subr.mxu0 0.0
    %992 = vmatpush1.msra.mxu0 0.0
    %993 = vmatprep.subr.mxu0 0.0
    %994 = vmatpush1.msra.mxu0 0.0
    %995 = vmatprep.subr.mxu0 0.0
    %996 = vmatpush1.msra.mxu0 0.0
    %997 = vmatprep.subr.mxu0 0.0
    %998 = vmatpush1.msra.mxu0 0.0
    %999 = vmatprep.subr.mxu0 0.0
    %1000 = vmatpush1.msra.mxu0 0.0
    %1001 = vmatprep.subr.mxu0 0.0
    %1002 = vmatpush1.msra.mxu0 0.0
    %1003 = vmatprep.subr.mxu0 0.0
    %1004 = vmatpush1.msra.mxu0 0.0
    %1005 = vmatprep.subr.mxu0 0.0
    %1006 = vmatpush1.msra.mxu0 0.0
    %1007 = vmatprep.subr.mxu0 0.0
    %1008 = vmatpush1.msra.mxu0 0.0
    %1009 = vmatprep.subr.mxu0 0.0
    %1010 = vmatpush1.msra.mxu0 0.0
    %1011 = vmatprep.subr.mxu0 0.0
    %1012 = vmatpush1.msra.mxu0 0.0
    %1013 = vmatprep.subr.mxu0 0.0
    %1014 = vmatpush1.msra.mxu0 0.0
    %1015 = vmatprep.subr.mxu0 0.0
    %1016 = vmatpush1.msra.mxu0 0.0
    %1017 = vmatprep.subr.mxu0 0.0
    %1018 = vmatpush1.msra.mxu0 0.0
    %1019 = vmatprep.subr.mxu0 0.0
    %1020 = vmatpush1.msra.mxu0 0.0
    %1021 = vmatprep.subr.mxu0 0.0
    %1022 = vmatpush1.msra.mxu0 0.0
    %1023 = vmatprep.subr.mxu0 0.0
    %1024 = vmatpush1.msra.mxu0 0.0
    %1025 = vmatprep.subr.mxu0 0.0
    %1026 = vmatpush1.msra.mxu0 0.0
    %1027 = vmatprep.subr.mxu0 0.0
    %1028 = vmatpush1.msra.mxu0 0.0
    %1029 = vmatprep.mubr.f32.mxu0 0.0
    %1030 = vmatmul.mubr.f32.gmra.mrb[0].mxu0 %v942
    %v1031 = vpop.f32.mrb[0].mxu0
    %v1032 = vadd.f32 %v155, %v1031
    %v1033 = vpop.f32.mrb[0].mxu0
    %v1034 = vadd.f32 %v159, %v1033
    %1035 = vmatprep.mubr.f32.mxu0 0.0
    %1036 = vmatmul.mubr.f32.gmra.mrb[0].mxu0 %v945
    %v1037 = vpop.f32.mrb[0].mxu0
    %v1038 = vadd.f32 %v155, %v1037
    %v1039 = vpop.f32.mrb[0].mxu0
    %v1040 = vadd.f32 %v159, %v1039
    %1041 = vmatprep.mubr.f32.mxu0 0.0
    %1042 = vmatmul.mubr.f32.gmra.mrb[0].mxu0 %v948
    %v1043 = vpop.f32.mrb[0].mxu0
    %v1044 = vadd.f32 %v155, %v1043
    %v1045 = vpop.f32.mrb[0].mxu0
    %v1046 = vadd.f32 %v159, %v1045
    %1047 = vmatprep.mubr.f32.mxu0 0.0
    %1048 = vmatmul.mubr.f32.gmra.mrb[0].mxu0 %v951
    %v1049 = vpop.f32.mrb[0].mxu0
    %v1050 = vadd.f32 %v155, %v1049
    %v1051 = vpop.f32.mrb[0].mxu0
    %v1052 = vadd.f32 %v159, %v1051
    %1053 = vmatprep.mubr.f32.mxu0 0.0
    %1054 = vmatmul.mubr.f32.gmra.mrb[0].mxu0 %v954
    %v1055 = vpop.f32.mrb[0].mxu0
    %v1056 = vadd.f32 %v155, %v1055
    %v1057 = vpop.f32.mrb[0].mxu0
    %v1058 = vadd.f32 %v159, %v1057
    %1059 = vmatprep.mubr.f32.mxu0 0.0
    %1060 = vmatmul.mubr.f32.gmra.mrb[0].mxu0 %v957
    %v1061 = vpop.f32.mrb[0].mxu0
    %v1062 = vadd.f32 %v155, %v1061
    %v1063 = vpop.f32.mrb[0].mxu0
    %v1064 = vadd.f32 %v159, %v1063
    %1065 = vmatprep.mubr.f32.mxu0 0.0
    %1066 = vmatmul.mubr.f32.gmra.mrb[0].mxu0 %v960
    %v1067 = vpop.f32.mrb[0].mxu0
    %v1068 = vadd.f32 %v155, %v1067
    %v1069 = vpop.f32.mrb[0].mxu0
    %v1070 = vadd.f32 %v159, %v1069
    %1071 = vmatprep.mubr.f32.mxu0 0.0
    %1072 = vmatmul.mubr.f32.gmra.mrb[0].mxu0 %v963
    %v1073 = vpop.f32.mrb[0].mxu0
    %v1074 = vadd.f32 %v155, %v1073
    %v1075 = vpop.f32.mrb[0].mxu0
    %v1076 = vadd.f32 %v159, %v1075
    %1077 = vdwg.mxu0
    %1078 = vmatprep.subr.mxu0 %v232
    %1079 = vmatpush1.msra.mxu0 %v230
    %1080 = vmatprep.subr.mxu0 0.0
    %1081 = vmatpush1.msra.mxu0 0.0
    %1082 = vmatprep.subr.mxu0 0.0
    %1083 = vmatpush1.msra.mxu0 0.0
    %1084 = vmatprep.subr.mxu0 0.0
    %1085 = vmatpush1.msra.mxu0 0.0
    %1086 = vmatprep.subr.mxu0 0.0
    %1087 = vmatpush1.msra.mxu0 0.0
    %1088 = vmatprep.subr.mxu0 0.0
    %1089 = vmatpush1.msra.mxu0 0.0
    %1090 = vmatprep.subr.mxu0 0.0
    %1091 = vmatpush1.msra.mxu0 0.0
    %1092 = vmatprep.subr.mxu0 0.0
    %1093 = vmatpush1.msra.mxu0 0.0
    %1094 = vmatprep.subr.mxu0 0.0
    %1095 = vmatpush1.msra.mxu0 0.0
    %1096 = vmatprep.subr.mxu0 0.0
    %1097 = vmatpush1.msra.mxu0 0.0
    %1098 = vmatprep.subr.mxu0 0.0
    %1099 = vmatpush1.msra.mxu0 0.0
    %1100 = vmatprep.subr.mxu0 0.0
    %1101 = vmatpush1.msra.mxu0 0.0
    %1102 = vmatprep.subr.mxu0 0.0
    %1103 = vmatpush1.msra.mxu0 0.0
    %1104 = vmatprep.subr.mxu0 0.0
    %1105 = vmatpush1.msra.mxu0 0.0
    %1106 = vmatprep.subr.mxu0 0.0
    %1107 = vmatpush1.msra.mxu0 0.0
    %1108 = vmatprep.subr.mxu0 0.0
    %1109 = vmatpush1.msra.mxu0 0.0
    %1110 = vmatprep.subr.mxu0 0.0
    %1111 = vmatpush1.msra.mxu0 0.0
    %1112 = vmatprep.subr.mxu0 0.0
    %1113 = vmatpush1.msra.mxu0 0.0
    %1114 = vmatprep.subr.mxu0 0.0
    %1115 = vmatpush1.msra.mxu0 0.0
    %1116 = vmatprep.subr.mxu0 0.0
    %1117 = vmatpush1.msra.mxu0 0.0
    %1118 = vmatprep.subr.mxu0 0.0
    %1119 = vmatpush1.msra.mxu0 0.0
    %1120 = vmatprep.subr.mxu0 0.0
    %1121 = vmatpush1.msra.mxu0 0.0
    %1122 = vmatprep.subr.mxu0 0.0
    %1123 = vmatpush1.msra.mxu0 0.0
    %1124 = vmatprep.subr.mxu0 0.0
    %1125 = vmatpush1.msra.mxu0 0.0
    %1126 = vmatprep.subr.mxu0 0.0
    %1127 = vmatpush1.msra.mxu0 0.0
    %1128 = vmatprep.subr.mxu0 0.0
    %1129 = vmatpush1.msra.mxu0 0.0
    %1130 = vmatprep.subr.mxu0 0.0
    %1131 = vmatpush1.msra.mxu0 0.0
    %1132 = vmatprep.subr.mxu0 0.0
    %1133 = vmatpush1.msra.mxu0 0.0
    %1134 = vmatprep.subr.mxu0 0.0
    %1135 = vmatpush1.msra.mxu0 0.0
    %1136 = vmatprep.subr.mxu0 0.0
    %1137 = vmatpush1.msra.mxu0 0.0
    %1138 = vmatprep.subr.mxu0 0.0
    %1139 = vmatpush1.msra.mxu0 0.0
    %1140 = vmatprep.subr.mxu0 0.0
    %1141 = vmatpush1.msra.mxu0 0.0
    %1142 = vmatprep.mubr.f32.mxu0 0.0
    %1143 = vmatmul.mubr.f32.gmra.mrb[0].mxu0 %v942
    %v1144 = vpop.f32.mrb[0].mxu0
    %v1145 = vadd.f32 %v163, %v1144
    %v1146 = vpop.f32.mrb[0].mxu0
    %v1147 = vadd.f32 %v167, %v1146
    %1148 = vmatprep.mubr.f32.mxu0 0.0
    %1149 = vmatmul.mubr.f32.gmra.mrb[0].mxu0 %v945
    %v1150 = vpop.f32.mrb[0].mxu0
    %v1151 = vadd.f32 %v163, %v1150
    %v1152 = vpop.f32.mrb[0].mxu0
    %v1153 = vadd.f32 %v167, %v1152
    %1154 = vmatprep.mubr.f32.mxu0 0.0
    %1155 = vmatmul.mubr.f32.gmra.mrb[0].mxu0 %v948
    %v1156 = vpop.f32.mrb[0].mxu0
    %v1157 = vadd.f32 %v163, %v1156
    %v1158 = vpop.f32.mrb[0].mxu0
    %v1159 = vadd.f32 %v167, %v1158
    %1160 = vmatprep.mubr.f32.mxu0 0.0
    %1161 = vmatmul.mubr.f32.gmra.mrb[0].mxu0 %v951
    %v1162 = vpop.f32.mrb[0].mxu0
    %v1163 = vadd.f32 %v163, %v1162
    %v1164 = vpop.f32.mrb[0].mxu0
    %v1165 = vadd.f32 %v167, %v1164
    %1166 = vmatprep.mubr.f32.mxu0 0.0
    %1167 = vmatmul.mubr.f32.gmra.mrb[0].mxu0 %v954
    %v1168 = vpop.f32.mrb[0].mxu0
    %v1169 = vadd.f32 %v163, %v1168
    %v1170 = vpop.f32.mrb[0].mxu0
    %v1171 = vadd.f32 %v167, %v1170
    %1172 = vmatprep.mubr.f32.mxu0 0.0
    %1173 = vmatmul.mubr.f32.gmra.mrb[0].mxu0 %v957
    %v1174 = vpop.f32.mrb[0].mxu0
    %v1175 = vadd.f32 %v163, %v1174
    %v1176 = vpop.f32.mrb[0].mxu0
    %v1177 = vadd.f32 %v167, %v1176
    %1178 = vmatprep.mubr.f32.mxu0 0.0
    %1179 = vmatmul.mubr.f32.gmra.mrb[0].mxu0 %v960
    %v1180 = vpop.f32.mrb[0].mxu0
    %v1181 = vadd.f32 %v163, %v1180
    %v1182 = vpop.f32.mrb[0].mxu0
    %v1183 = vadd.f32 %v167, %v1182
    %1184 = vmatprep.mubr.f32.mxu0 0.0
    %1185 = vmatmul.mubr.f32.gmra.mrb[0].mxu0 %v963
    %v1186 = vpop.f32.mrb[0].mxu0
    %v1187 = vadd.f32 %v163, %v1186
    %v1188 = vpop.f32.mrb[0].mxu0
    %v1189 = vadd.f32 %v167, %v1188
    %1190 = vdwg.mxu0
    %1191 = vmatprep.subr.mxu0 %v236
    %1192 = vmatpush1.msra.mxu0 %v234
    %1193 = vmatprep.subr.mxu0 0.0
    %1194 = vmatpush1.msra.mxu0 0.0
    %1195 = vmatprep.subr.mxu0 0.0
    %1196 = vmatpush1.msra.mxu0 0.0
    %1197 = vmatprep.subr.mxu0 0.0
    %1198 = vmatpush1.msra.mxu0 0.0
    %1199 = vmatprep.subr.mxu0 0.0
    %1200 = vmatpush1.msra.mxu0 0.0
    %1201 = vmatprep.subr.mxu0 0.0
    %1202 = vmatpush1.msra.mxu0 0.0
    %1203 = vmatprep.subr.mxu0 0.0
    %1204 = vmatpush1.msra.mxu0 0.0
    %1205 = vmatprep.subr.mxu0 0.0
    %1206 = vmatpush1.msra.mxu0 0.0
    %1207 = vmatprep.subr.mxu0 0.0
    %1208 = vmatpush1.msra.mxu0 0.0
    %1209 = vmatprep.subr.mxu0 0.0
    %1210 = vmatpush1.msra.mxu0 0.0
    %1211 = vmatprep.subr.mxu0 0.0
    %1212 = vmatpush1.msra.mxu0 0.0
    %1213 = vmatprep.subr.mxu0 0.0
    %1214 = vmatpush1.msra.mxu0 0.0
    %1215 = vmatprep.subr.mxu0 0.0
    %1216 = vmatpush1.msra.mxu0 0.0
    %1217 = vmatprep.subr.mxu0 0.0
    %1218 = vmatpush1.msra.mxu0 0.0
    %1219 = vmatprep.subr.mxu0 0.0
    %1220 = vmatpush1.msra.mxu0 0.0
    %1221 = vmatprep.subr.mxu0 0.0
    %1222 = vmatpush1.msra.mxu0 0.0
    %1223 = vmatprep.subr.mxu0 0.0
    %1224 = vmatpush1.msra.mxu0 0.0
    %1225 = vmatprep.subr.mxu0 0.0
    %1226 = vmatpush1.msra.mxu0 0.0
    %1227 = vmatprep.subr.mxu0 0.0
    %1228 = vmatpush1.msra.mxu0 0.0
    %1229 = vmatprep.subr.mxu0 0.0
    %1230 = vmatpush1.msra.mxu0 0.0
    %1231 = vmatprep.subr.mxu0 0.0
    %1232 = vmatpush1.msra.mxu0 0.0
    %1233 = vmatprep.subr.mxu0 0.0
    %1234 = vmatpush1.msra.mxu0 0.0
    %1235 = vmatprep.subr.mxu0 0.0
    %1236 = vmatpush1.msra.mxu0 0.0
    %1237 = vmatprep.subr.mxu0 0.0
    %1238 = vmatpush1.msra.mxu0 0.0
    %1239 = vmatprep.subr.mxu0 0.0
    %1240 = vmatpush1.msra.mxu0 0.0
    %1241 = vmatprep.subr.mxu0 0.0
    %1242 = vmatpush1.msra.mxu0 0.0
    %1243 = vmatprep.subr.mxu0 0.0
    %1244 = vmatpush1.msra.mxu0 0.0
    %1245 = vmatprep.subr.mxu0 0.0
    %1246 = vmatpush1.msra.mxu0 0.0
    %1247 = vmatprep.subr.mxu0 0.0
    %1248 = vmatpush1.msra.mxu0 0.0
    %1249 = vmatprep.subr.mxu0 0.0
    %1250 = vmatpush1.msra.mxu0 0.0
    %1251 = vmatprep.subr.mxu0 0.0
    %1252 = vmatpush1.msra.mxu0 0.0
    %1253 = vmatprep.subr.mxu0 0.0
    %1254 = vmatpush1.msra.mxu0 0.0
    %1255 = vmatprep.mubr.f32.mxu0 0.0
    %1256 = vmatmul.mubr.f32.gmra.mrb[0].mxu0 %v942
    %v1257 = vpop.f32.mrb[0].mxu0
    %v1258 = vadd.f32 %v171, %v1257
    %v1259 = vpop.f32.mrb[0].mxu0
    %v1260 = vadd.f32 %v175, %v1259
    %1261 = vmatprep.mubr.f32.mxu0 0.0
    %1262 = vmatmul.mubr.f32.gmra.mrb[0].mxu0 %v945
    %v1263 = vpop.f32.mrb[0].mxu0
    %v1264 = vadd.f32 %v171, %v1263
    %v1265 = vpop.f32.mrb[0].mxu0
    %v1266 = vadd.f32 %v175, %v1265
    %1267 = vmatprep.mubr.f32.mxu0 0.0
    %1268 = vmatmul.mubr.f32.gmra.mrb[0].mxu0 %v948
    %v1269 = vpop.f32.mrb[0].mxu0
    %v1270 = vadd.f32 %v171, %v1269
    %v1271 = vpop.f32.mrb[0].mxu0
    %v1272 = vadd.f32 %v175, %v1271
    %1273 = vmatprep.mubr.f32.mxu0 0.0
    %1274 = vmatmul.mubr.f32.gmra.mrb[0].mxu0 %v951
    %v1275 = vpop.f32.mrb[0].mxu0
    %v1276 = vadd.f32 %v171, %v1275
    %v1277 = vpop.f32.mrb[0].mxu0
    %v1278 = vadd.f32 %v175, %v1277
    %1279 = vmatprep.mubr.f32.mxu0 0.0
    %1280 = vmatmul.mubr.f32.gmra.mrb[0].mxu0 %v954
    %v1281 = vpop.f32.mrb[0].mxu0
    %v1282 = vadd.f32 %v171, %v1281
    %v1283 = vpop.f32.mrb[0].mxu0
    %v1284 = vadd.f32 %v175, %v1283
    %1285 = vmatprep.mubr.f32.mxu0 0.0
    %1286 = vmatmul.mubr.f32.gmra.mrb[0].mxu0 %v957
    %v1287 = vpop.f32.mrb[0].mxu0
    %v1288 = vadd.f32 %v171, %v1287
    %v1289 = vpop.f32.mrb[0].mxu0
    %v1290 = vadd.f32 %v175, %v1289
    %1291 = vmatprep.mubr.f32.mxu0 0.0
    %1292 = vmatmul.mubr.f32.gmra.mrb[0].mxu0 %v960
    %v1293 = vpop.f32.mrb[0].mxu0
    %v1294 = vadd.f32 %v171, %v1293
    %v1295 = vpop.f32.mrb[0].mxu0
    %v1296 = vadd.f32 %v175, %v1295
    %1297 = vmatprep.mubr.f32.mxu0 0.0
    %1298 = vmatmul.mubr.f32.gmra.mrb[0].mxu0 %v963
    %v1299 = vpop.f32.mrb[0].mxu0
    %v1300 = vadd.f32 %v171, %v1299
    %v1301 = vpop.f32.mrb[0].mxu0
    %v1302 = vadd.f32 %v175, %v1301
    %1303 = vdwg.mxu0
    %1304 = vmatprep.subr.mxu0 %v240
    %1305 = vmatpush1.msra.mxu0 %v238
    %1306 = vmatprep.subr.mxu0 0.0
    %1307 = vmatpush1.msra.mxu0 0.0
    %1308 = vmatprep.subr.mxu0 0.0
    %1309 = vmatpush1.msra.mxu0 0.0
    %1310 = vmatprep.subr.mxu0 0.0
    %1311 = vmatpush1.msra.mxu0 0.0
    %1312 = vmatprep.subr.mxu0 0.0
    %1313 = vmatpush1.msra.mxu0 0.0
    %1314 = vmatprep.subr.mxu0 0.0
    %1315 = vmatpush1.msra.mxu0 0.0
    %1316 = vmatprep.subr.mxu0 0.0
    %1317 = vmatpush1.msra.mxu0 0.0
    %1318 = vmatprep.subr.mxu0 0.0
    %1319 = vmatpush1.msra.mxu0 0.0
    %1320 = vmatprep.subr.mxu0 0.0
    %1321 = vmatpush1.msra.mxu0 0.0
    %1322 = vmatprep.subr.mxu0 0.0
    %1323 = vmatpush1.msra.mxu0 0.0
    %1324 = vmatprep.subr.mxu0 0.0
    %1325 = vmatpush1.msra.mxu0 0.0
    %1326 = vmatprep.subr.mxu0 0.0
    %1327 = vmatpush1.msra.mxu0 0.0
    %1328 = vmatprep.subr.mxu0 0.0
    %1329 = vmatpush1.msra.mxu0 0.0
    %1330 = vmatprep.subr.mxu0 0.0
    %1331 = vmatpush1.msra.mxu0 0.0
    %1332 = vmatprep.subr.mxu0 0.0
    %1333 = vmatpush1.msra.mxu0 0.0
    %1334 = vmatprep.subr.mxu0 0.0
    %1335 = vmatpush1.msra.mxu0 0.0
    %1336 = vmatprep.subr.mxu0 0.0
    %1337 = vmatpush1.msra.mxu0 0.0
    %1338 = vmatprep.subr.mxu0 0.0
    %1339 = vmatpush1.msra.mxu0 0.0
    %1340 = vmatprep.subr.mxu0 0.0
    %1341 = vmatpush1.msra.mxu0 0.0
    %1342 = vmatprep.subr.mxu0 0.0
    %1343 = vmatpush1.msra.mxu0 0.0
    %1344 = vmatprep.subr.mxu0 0.0
    %1345 = vmatpush1.msra.mxu0 0.0
    %1346 = vmatprep.subr.mxu0 0.0
    %1347 = vmatpush1.msra.mxu0 0.0
    %1348 = vmatprep.subr.mxu0 0.0
    %1349 = vmatpush1.msra.mxu0 0.0
    %1350 = vmatprep.subr.mxu0 0.0
    %1351 = vmatpush1.msra.mxu0 0.0
    %1352 = vmatprep.subr.mxu0 0.0
    %1353 = vmatpush1.msra.mxu0 0.0
    %1354 = vmatprep.subr.mxu0 0.0
    %1355 = vmatpush1.msra.mxu0 0.0
    %1356 = vmatprep.subr.mxu0 0.0
    %1357 = vmatpush1.msra.mxu0 0.0
    %1358 = vmatprep.subr.mxu0 0.0
    %1359 = vmatpush1.msra.mxu0 0.0
    %1360 = vmatprep.subr.mxu0 0.0
    %1361 = vmatpush1.msra.mxu0 0.0
    %1362 = vmatprep.subr.mxu0 0.0
    %1363 = vmatpush1.msra.mxu0 0.0
    %1364 = vmatprep.subr.mxu0 0.0
    %1365 = vmatpush1.msra.mxu0 0.0
    %1366 = vmatprep.subr.mxu0 0.0
    %1367 = vmatpush1.msra.mxu0 0.0
    %1368 = vmatprep.mubr.f32.mxu0 0.0
    %1369 = vmatmul.mubr.f32.gmra.mrb[0].mxu0 %v942
    %v1370 = vpop.f32.mrb[0].mxu0
    %v1371 = vadd.f32 %v179, %v1370
    %v1372 = vpop.f32.mrb[0].mxu0
    %v1373 = vadd.f32 %v183, %v1372
    %1374 = vmatprep.mubr.f32.mxu0 0.0
    %1375 = vmatmul.mubr.f32.gmra.mrb[0].mxu0 %v945
    %v1376 = vpop.f32.mrb[0].mxu0
    %v1377 = vadd.f32 %v179, %v1376
    %v1378 = vpop.f32.mrb[0].mxu0
    %v1379 = vadd.f32 %v183, %v1378
    %1380 = vmatprep.mubr.f32.mxu0 0.0
    %1381 = vmatmul.mubr.f32.gmra.mrb[0].mxu0 %v948
    %v1382 = vpop.f32.mrb[0].mxu0
    %v1383 = vadd.f32 %v179, %v1382
    %v1384 = vpop.f32.mrb[0].mxu0
    %v1385 = vadd.f32 %v183, %v1384
    %1386 = vmatprep.mubr.f32.mxu0 0.0
    %1387 = vmatmul.mubr.f32.gmra.mrb[0].mxu0 %v951
    %v1388 = vpop.f32.mrb[0].mxu0
    %v1389 = vadd.f32 %v179, %v1388
    %v1390 = vpop.f32.mrb[0].mxu0
    %v1391 = vadd.f32 %v183, %v1390
    %1392 = vmatprep.mubr.f32.mxu0 0.0
    %1393 = vmatmul.mubr.f32.gmra.mrb[0].mxu0 %v954
    %v1394 = vpop.f32.mrb[0].mxu0
    %v1395 = vadd.f32 %v179, %v1394
    %v1396 = vpop.f32.mrb[0].mxu0
    %v1397 = vadd.f32 %v183, %v1396
    %1398 = vmatprep.mubr.f32.mxu0 0.0
    %1399 = vmatmul.mubr.f32.gmra.mrb[0].mxu0 %v957
    %v1400 = vpop.f32.mrb[0].mxu0
    %v1401 = vadd.f32 %v179, %v1400
    %v1402 = vpop.f32.mrb[0].mxu0
    %v1403 = vadd.f32 %v183, %v1402
    %1404 = vmatprep.mubr.f32.mxu0 0.0
    %1405 = vmatmul.mubr.f32.gmra.mrb[0].mxu0 %v960
    %v1406 = vpop.f32.mrb[0].mxu0
    %v1407 = vadd.f32 %v179, %v1406
    %v1408 = vpop.f32.mrb[0].mxu0
    %v1409 = vadd.f32 %v183, %v1408
    %1410 = vmatprep.mubr.f32.mxu0 0.0
    %1411 = vmatmul.mubr.f32.gmra.mrb[0].mxu0 %v963
    %v1412 = vpop.f32.mrb[0].mxu0
    %v1413 = vadd.f32 %v179, %v1412
    %v1414 = vpop.f32.mrb[0].mxu0
    %v1415 = vadd.f32 %v183, %v1414
    %1416 = vdwg.mxu0
    %v1417 = vmax.f32 %v1032, 0.0
    %v1418 = vmax.f32 %v1034, 0.0
    %v1419 = vmax.f32 %v1145, 0.0
    %v1420 = vmax.f32 %v1147, 0.0
    %v1421 = vmax.f32 %v1258, 0.0
    %v1422 = vmax.f32 %v1260, 0.0
    %v1423 = vmax.f32 %v1371, 0.0
    %v1424 = vmax.f32 %v1373, 0.0
    %v1425 = vmax.f32 %v1038, 0.0
    %v1426 = vmax.f32 %v1040, 0.0
    %v1427 = vmax.f32 %v1151, 0.0
    %v1428 = vmax.f32 %v1153, 0.0
    %v1429 = vmax.f32 %v1264, 0.0
    %v1430 = vmax.f32 %v1266, 0.0
    %v1431 = vmax.f32 %v1377, 0.0
    %v1432 = vmax.f32 %v1379, 0.0
    %v1433 = vmax.f32 %v1044, 0.0
    %v1434 = vmax.f32 %v1046, 0.0
    %v1435 = vmax.f32 %v1157, 0.0
    %v1436 = vmax.f32 %v1159, 0.0
    %v1437 = vmax.f32 %v1270, 0.0
    %v1438 = vmax.f32 %v1272, 0.0
    %v1439 = vmax.f32 %v1383, 0.0
    %v1440 = vmax.f32 %v1385, 0.0
    %v1441 = vmax.f32 %v1050, 0.0
    %v1442 = vmax.f32 %v1052, 0.0
    %v1443 = vmax.f32 %v1163, 0.0
    %v1444 = vmax.f32 %v1165, 0.0
    %v1445 = vmax.f32 %v1276, 0.0
    %v1446 = vmax.f32 %v1278, 0.0
    %v1447 = vmax.f32 %v1389, 0.0
    %v1448 = vmax.f32 %v1391, 0.0
    %v1449 = vmax.f32 %v1056, 0.0
    %v1450 = vmax.f32 %v1058, 0.0
    %v1451 = vmax.f32 %v1169, 0.0
    %v1452 = vmax.f32 %v1171, 0.0
    %v1453 = vmax.f32 %v1282, 0.0
    %v1454 = vmax.f32 %v1284, 0.0
    %v1455 = vmax.f32 %v1395, 0.0
    %v1456 = vmax.f32 %v1397, 0.0
    %v1457 = vmax.f32 %v1062, 0.0
    %v1458 = vmax.f32 %v1064, 0.0
    %v1459 = vmax.f32 %v1175, 0.0
    %v1460 = vmax.f32 %v1177, 0.0
    %v1461 = vmax.f32 %v1288, 0.0
    %v1462 = vmax.f32 %v1290, 0.0
    %v1463 = vmax.f32 %v1401, 0.0
    %v1464 = vmax.f32 %v1403, 0.0
    %v1465 = vmax.f32 %v1068, 0.0
    %v1466 = vmax.f32 %v1070, 0.0
    %v1467 = vmax.f32 %v1181, 0.0
    %v1468 = vmax.f32 %v1183, 0.0
    %v1469 = vmax.f32 %v1294, 0.0
    %v1470 = vmax.f32 %v1296, 0.0
    %v1471 = vmax.f32 %v1407, 0.0
    %v1472 = vmax.f32 %v1409, 0.0
    %v1473 = vmax.f32 %v1074, 0.0
    %v1474 = vmax.f32 %v1076, 0.0
    %v1475 = vmax.f32 %v1187, 0.0
    %v1476 = vmax.f32 %v1189, 0.0
    %v1477 = vmax.f32 %v1300, 0.0
    %v1478 = vmax.f32 %v1302, 0.0
    %v1479 = vmax.f32 %v1413, 0.0
    %v1480 = vmax.f32 %v1415, 0.0
    %v1481 = vmax.f32 %v1417, %v1425
    %v1482 = vmax.f32 %v1481, %v1433
    %v1483 = vmax.f32 %v1482, %v1441
    %v1484 = vmax.f32 %v1483, %v1449
    %v1485 = vmax.f32 %v1484, %v1457
    %v1486 = vmax.f32 %v1485, %v1465
    %v1487 = vmax.f32 %v1486, %v1473
    %v1488 = vrot.slane %v1487, 4
    %v1489 = vmax.f32 %v1487, %v1488
    %v1490 = vrot.slane %v1489, 2
    %v1491 = vmax.f32 %v1489, %v1490
    %v1492 = vrot.slane %v1491, 1
    %v1493 = vmax.f32 %v1491, %v1492
    %v1494 = vmax.f32 %v1418, %v1426
    %v1495 = vmax.f32 %v1494, %v1434
    %v1496 = vmax.f32 %v1495, %v1442
    %v1497 = vmax.f32 %v1496, %v1450
    %v1498 = vmax.f32 %v1497, %v1458
    %v1499 = vmax.f32 %v1498, %v1466
    %v1500 = vmax.f32 %v1499, %v1474
    %v1501 = vrot.slane %v1500, 4
    %v1502 = vmax.f32 %v1500, %v1501
    %v1503 = vrot.slane %v1502, 2
    %v1504 = vmax.f32 %v1502, %v1503
    %v1505 = vrot.slane %v1504, 1
    %v1506 = vmax.f32 %v1504, %v1505
    %v1507 = vmax.f32 %v1419, %v1427
    %v1508 = vmax.f32 %v1507, %v1435
    %v1509 = vmax.f32 %v1508, %v1443
    %v1510 = vmax.f32 %v1509, %v1451
    %v1511 = vmax.f32 %v1510, %v1459
    %v1512 = vmax.f32 %v1511, %v1467
    %v1513 = vmax.f32 %v1512, %v1475
    %v1514 = vrot.slane %v1513, 4
    %v1515 = vmax.f32 %v1513, %v1514
    %v1516 = vrot.slane %v1515, 2
    %v1517 = vmax.f32 %v1515, %v1516
    %v1518 = vrot.slane %v1517, 1
    %v1519 = vmax.f32 %v1517, %v1518
    %v1520 = vmax.f32 %v1420, %v1428
    %v1521 = vmax.f32 %v1520, %v1436
    %v1522 = vmax.f32 %v1521, %v1444
    %v1523 = vmax.f32 %v1522, %v1452
    %v1524 = vmax.f32 %v1523, %v1460
    %v1525 = vmax.f32 %v1524, %v1468
    %v1526 = vmax.f32 %v1525, %v1476
    %v1527 = vrot.slane %v1526, 4
    %v1528 = vmax.f32 %v1526, %v1527
    %v1529 = vrot.slane %v1528, 2
    %v1530 = vmax.f32 %v1528, %v1529
    %v1531 = vrot.slane %v1530, 1
    %v1532 = vmax.f32 %v1530, %v1531
    %v1533 = vmax.f32 %v1421, %v1429
    %v1534 = vmax.f32 %v1533, %v1437
    %v1535 = vmax.f32 %v1534, %v1445
    %v1536 = vmax.f32 %v1535, %v1453
    %v1537 = vmax.f32 %v1536, %v1461
    %v1538 = vmax.f32 %v1537, %v1469
    %v1539 = vmax.f32 %v1538, %v1477
    %v1540 = vrot.slane %v1539, 4
    %v1541 = vmax.f32 %v1539, %v1540
    %v1542 = vrot.slane %v1541, 2
    %v1543 = vmax.f32 %v1541, %v1542
    %v1544 = vrot.slane %v1543, 1
    %v1545 = vmax.f32 %v1543, %v1544
    %v1546 = vmax.f32 %v1422, %v1430
    %v1547 = vmax.f32 %v1546, %v1438
    %v1548 = vmax.f32 %v1547, %v1446
    %v1549 = vmax.f32 %v1548, %v1454
    %v1550 = vmax.f32 %v1549, %v1462
    %v1551 = vmax.f32 %v1550, %v1470
    %v1552 = vmax.f32 %v1551, %v1478
    %v1553 = vrot.slane %v1552, 4
    %v1554 = vmax.f32 %v1552, %v1553
    %v1555 = vrot.slane %v1554, 2
    %v1556 = vmax.f32 %v1554, %v1555
    %v1557 = vrot.slane %v1556, 1
    %v1558 = vmax.f32 %v1556, %v1557
    %v1559 = vmax.f32 %v1423, %v1431
    %v1560 = vmax.f32 %v1559, %v1439
    %v1561 = vmax.f32 %v1560, %v1447
    %v1562 = vmax.f32 %v1561, %v1455
    %v1563 = vmax.f32 %v1562, %v1463
    %v1564 = vmax.f32 %v1563, %v1471
    %v1565 = vmax.f32 %v1564, %v1479
    %v1566 = vrot.slane %v1565, 4
    %v1567 = vmax.f32 %v1565, %v1566
    %v1568 = vrot.slane %v1567, 2
    %v1569 = vmax.f32 %v1567, %v1568
    %v1570 = vrot.slane %v1569, 1
    %v1571 = vmax.f32 %v1569, %v1570
    %v1572 = vmax.f32 %v1424, %v1432
    %v1573 = vmax.f32 %v1572, %v1440
    %v1574 = vmax.f32 %v1573, %v1448
    %v1575 = vmax.f32 %v1574, %v1456
    %v1576 = vmax.f32 %v1575, %v1464
    %v1577 = vmax.f32 %v1576, %v1472
    %v1578 = vmax.f32 %v1577, %v1480
    %v1579 = vrot.slane %v1578, 4
    %v1580 = vmax.f32 %v1578, %v1579
    %v1581 = vrot.slane %v1580, 2
    %v1582 = vmax.f32 %v1580, %v1581
    %v1583 = vrot.slane %v1582, 1
    %v1584 = vmax.f32 %v1582, %v1583
    %v1585 = vmax.f32 %v1493, 0.0
    %v1586 = vmax.f32 %v1506, 0.0
    %v1587 = vmax.f32 %v1519, 0.0
    %v1588 = vmax.f32 %v1532, 0.0
    %v1589 = vmax.f32 %v1545, 0.0
    %v1590 = vmax.f32 %v1558, 0.0
    %v1591 = vmax.f32 %v1571, 0.0
    %v1592 = vmax.f32 %v1584, 0.0
    %s1593 = scalar_lea.vmem [#allocation2], 1
    %v1594 = vld [vmem:[%s1593] ss:$2 sm:$0xff]
    %v1603 = vcombine.low %v1585, %v1586
    %v1604 = vcombine.low %v1587, %v1588
    %v1605 = vcombine.low %v1589, %v1590
    %v1606 = vcombine.low %v1591, %v1592
    %v1608 = vunpack.c.l.s4 1966171168
    %v1609 = vunpack.c.0.s8 %v1608
    %v1610 = vlaneseq
    %v1611 = vshrl.u32 %v1610, 7
    %v1612 = vsub.s32 %v1609, %v1611
    %v1613 = vrot.slane %v1603, %v1612
    %v1615 = vunpack.c.l.s4 1966171168
    %v1616 = vunpack.c.0.s8 %v1615
    %v1617 = vlaneseq
    %v1618 = vshrl.u32 %v1617, 7
    %v1619 = vsub.s32 %v1616, %v1618
    %v1620 = vrot.slane %v1604, %v1619
    %v1622 = vunpack.c.l.s4 1966171168
    %v1623 = vunpack.c.0.s8 %v1622
    %v1624 = vlaneseq
    %v1625 = vshrl.u32 %v1624, 7
    %v1626 = vsub.s32 %v1623, %v1625
    %v1627 = vrot.slane %v1605, %v1626
    %v1629 = vunpack.c.l.s4 1966171168
    %v1630 = vunpack.c.0.s8 %v1629
    %v1631 = vlaneseq
    %v1632 = vshrl.u32 %v1631, 7
    %v1633 = vsub.s32 %v1630, %v1632
    %v1634 = vrot.slane %v1606, %v1633
    %v1635 = vcombine.low %v1613, %v1620
    %v1636 = vcombine.low %v1627, %v1634
    %v1638 = vunpack.c.l.s4 1966171168
    %v1639 = vunpack.c.0.s8 %v1638
    %v1640 = vlaneseq
    %v1641 = vshrl.u32 %v1640, 7
    %v1642 = vsub.s32 %v1639, %v1641
    %v1643 = vrot.slane %v1635, %v1642
    %v1645 = vunpack.c.l.s4 1966171168
    %v1646 = vunpack.c.0.s8 %v1645
    %v1647 = vlaneseq
    %v1648 = vshrl.u32 %v1647, 7
    %v1649 = vsub.s32 %v1646, %v1648
    %v1650 = vrot.slane %v1636, %v1649
    %v1651 = vcombine.low %v1643, %v1650
    %v1653 = vmax.f32 %v1594, %v1651
    %1654 = vst [vmem:[%s1593] ss:$2 sm:$0xff] %v1653
    // Predicated region
    $region54: #{tpu_custom_call.1} parent=1 // pred_check
      %p1655 = pneg %p85
    $region55: #{tpu_custom_call.1} parent=1 // pred_check_branch
      %1657 = sbr.rel (%p1655) target = $region57
    $region56: #{tpu_custom_call.1} parent=1 // pred_region
      %s1658 = smul.u32 4, 4
      %s1659 = smul.u32 %s1658, 128
      %s1660 = smul.u32 %s1659, 8
      %s1661 = sshll.u32 %s1660, 4
      %1662 = dma.done [#allocation5], %s1661
      %s1663 = scalar_lea.sflag [#allocation5], 1
      %s1664 = smul.u32 4, 128
      %s1665 = smul.u32 %s1664, 1
      %s1666 = sshll.u32 %s1665, 4
      %1667 = dma.done %s1663, %s1666
      %v1668 = vld [vmem:[#allocation2] sm:$0xff]
      %v1669 = vld [vmem:[#allocation2 + $0x8] sm:$0xff]
      %v1672 = vcombine.high %v1668, %v1668
      %v1674 = vunpack.c.l.s4 1983009808
      %v1675 = vunpack.c.0.s8 %v1674
      %v1676 = vlaneseq
      %v1677 = vshrl.u32 %v1676, 7
      %v1678 = vsub.s32 %v1675, %v1677
      %v1679 = vrot.slane %v1668, %v1678
      %v1681 = vunpack.c.l.s4 1983009808
      %v1682 = vunpack.c.0.s8 %v1681
      %v1683 = vlaneseq
      %v1684 = vshrl.u32 %v1683, 7
      %v1685 = vsub.s32 %v1682, %v1684
      %v1686 = vrot.slane %v1672, %v1685
      %v1687 = vcombine.high %v1679, %v1679
      %v1688 = vcombine.high %v1686, %v1686
      %v1689 = vcombine.high %v1669, %v1669
      %v1691 = vunpack.c.l.s4 1983009808
      %v1692 = vunpack.c.0.s8 %v1691
      %v1693 = vlaneseq
      %v1694 = vshrl.u32 %v1693, 7
      %v1695 = vsub.s32 %v1692, %v1694
      %v1696 = vrot.slane %v1669, %v1695
      %v1698 = vunpack.c.l.s4 1983009808
      %v1699 = vunpack.c.0.s8 %v1698
      %v1700 = vlaneseq
      %v1701 = vshrl.u32 %v1700, 7
      %v1702 = vsub.s32 %v1699, %v1701
      %v1703 = vrot.slane %v1689, %v1702
      %v1704 = vcombine.high %v1696, %v1696
      %v1705 = vcombine.high %v1703, %v1703
      %v1714 = vpack.c.bf16 %v1679, %v1679
      %v1715 = vpack.c.bf16 %v1687, %v1687
      %v1716 = vpack.c.bf16 %v1686, %v1686
      %v1717 = vpack.c.bf16 %v1688, %v1688
      %v1718 = vpack.c.bf16 %v1696, %v1696
      %v1719 = vpack.c.bf16 %v1704, %v1704
      %v1720 = vpack.c.bf16 %v1703, %v1703
      %v1721 = vpack.c.bf16 %v1705, %v1705
      %v1722 = vld [vmem:[#allocation3] sm:$0xff]
      %v1723 = vld [vmem:[#allocation3 + $0x8] sm:$0xff]
      %v1724 = vld [vmem:[#allocation3 + $0x10] sm:$0xff]
      %v1725 = vld [vmem:[#allocation3 + $0x18] sm:$0xff]
      %v1726 = vld [vmem:[#allocation3 + $0x20] sm:$0xff]
      %v1727 = vld [vmem:[#allocation3 + $0x28] sm:$0xff]
      %v1728 = vld [vmem:[#allocation3 + $0x30] sm:$0xff]
      %v1729 = vld [vmem:[#allocation3 + $0x38] sm:$0xff]
      %v1730 = vld [vmem:[#allocation3 + $0x40] sm:$0xff]
      %v1731 = vld [vmem:[#allocation3 + $0x48] sm:$0xff]
      %v1732 = vld [vmem:[#allocation3 + $0x50] sm:$0xff]
      %v1733 = vld [vmem:[#allocation3 + $0x58] sm:$0xff]
      %v1734 = vld [vmem:[#allocation3 + $0x60] sm:$0xff]
      %v1735 = vld [vmem:[#allocation3 + $0x68] sm:$0xff]
      %v1736 = vld [vmem:[#allocation3 + $0x70] sm:$0xff]
      %v1737 = vld [vmem:[#allocation3 + $0x78] sm:$0xff]
      %v1738 = vld [vmem:[#allocation3 + $0x80] sm:$0xff]
      %v1739 = vld [vmem:[#allocation3 + $0x88] sm:$0xff]
      %v1740 = vld [vmem:[#allocation3 + $0x90] sm:$0xff]
      %v1741 = vld [vmem:[#allocation3 + $0x98] sm:$0xff]
      %v1742 = vld [vmem:[#allocation3 + $0xa0] sm:$0xff]
      %v1743 = vld [vmem:[#allocation3 + $0xa8] sm:$0xff]
      %v1744 = vld [vmem:[#allocation3 + $0xb0] sm:$0xff]
      %v1745 = vld [vmem:[#allocation3 + $0xb8] sm:$0xff]
      %v1746 = vld [vmem:[#allocation3 + $0xc0] sm:$0xff]
      %v1747 = vld [vmem:[#allocation3 + $0xc8] sm:$0xff]
      %v1748 = vld [vmem:[#allocation3 + $0xd0] sm:$0xff]
      %v1749 = vld [vmem:[#allocation3 + $0xd8] sm:$0xff]
      %v1750 = vld [vmem:[#allocation3 + $0xe0] sm:$0xff]
      %v1751 = vld [vmem:[#allocation3 + $0xe8] sm:$0xff]
      %v1752 = vld [vmem:[#allocation3 + $0xf0] sm:$0xff]
      %v1753 = vld [vmem:[#allocation3 + $0xf8] sm:$0xff]
      %v1754 = vld [vmem:[#allocation3 + $0x100] sm:$0xff]
      %v1755 = vld [vmem:[#allocation3 + $0x108] sm:$0xff]
      %v1756 = vld [vmem:[#allocation3 + $0x110] sm:$0xff]
      %v1757 = vld [vmem:[#allocation3 + $0x118] sm:$0xff]
      %v1758 = vld [vmem:[#allocation3 + $0x120] sm:$0xff]
      %v1759 = vld [vmem:[#allocation3 + $0x128] sm:$0xff]
      %v1760 = vld [vmem:[#allocation3 + $0x130] sm:$0xff]
      %v1761 = vld [vmem:[#allocation3 + $0x138] sm:$0xff]
      %v1762 = vld [vmem:[#allocation3 + $0x140] sm:$0xff]
      %v1763 = vld [vmem:[#allocation3 + $0x148] sm:$0xff]
      %v1764 = vld [vmem:[#allocation3 + $0x150] sm:$0xff]
      %v1765 = vld [vmem:[#allocation3 + $0x158] sm:$0xff]
      %v1766 = vld [vmem:[#allocation3 + $0x160] sm:$0xff]
      %v1767 = vld [vmem:[#allocation3 + $0x168] sm:$0xff]
      %v1768 = vld [vmem:[#allocation3 + $0x170] sm:$0xff]
      %v1769 = vld [vmem:[#allocation3 + $0x178] sm:$0xff]
      %v1770 = vld [vmem:[#allocation3 + $0x180] sm:$0xff]
      %v1771 = vld [vmem:[#allocation3 + $0x188] sm:$0xff]
      %v1772 = vld [vmem:[#allocation3 + $0x190] sm:$0xff]
      %v1773 = vld [vmem:[#allocation3 + $0x198] sm:$0xff]
      %v1774 = vld [vmem:[#allocation3 + $0x1a0] sm:$0xff]
      %v1775 = vld [vmem:[#allocation3 + $0x1a8] sm:$0xff]
      %v1776 = vld [vmem:[#allocation3 + $0x1b0] sm:$0xff]
      %v1777 = vld [vmem:[#allocation3 + $0x1b8] sm:$0xff]
      %v1778 = vld [vmem:[#allocation3 + $0x1c0] sm:$0xff]
      %v1779 = vld [vmem:[#allocation3 + $0x1c8] sm:$0xff]
      %v1780 = vld [vmem:[#allocation3 + $0x1d0] sm:$0xff]
      %v1781 = vld [vmem:[#allocation3 + $0x1d8] sm:$0xff]
      %v1782 = vld [vmem:[#allocation3 + $0x1e0] sm:$0xff]
      %v1783 = vld [vmem:[#allocation3 + $0x1e8] sm:$0xff]
      %v1784 = vld [vmem:[#allocation3 + $0x1f0] sm:$0xff]
      %v1785 = vld [vmem:[#allocation3 + $0x1f8] sm:$0xff]
      %v1786 = vld [vmem:[#allocation3 + $0x200] sm:$0xff]
      %v1787 = vld [vmem:[#allocation3 + $0x208] sm:$0xff]
      %v1788 = vld [vmem:[#allocation3 + $0x210] sm:$0xff]
      %v1789 = vld [vmem:[#allocation3 + $0x218] sm:$0xff]
      %v1790 = vld [vmem:[#allocation3 + $0x220] sm:$0xff]
      %v1791 = vld [vmem:[#allocation3 + $0x228] sm:$0xff]
      %v1792 = vld [vmem:[#allocation3 + $0x230] sm:$0xff]
      %v1793 = vld [vmem:[#allocation3 + $0x238] sm:$0xff]
      %v1794 = vld [vmem:[#allocation3 + $0x240] sm:$0xff]
      %v1795 = vld [vmem:[#allocation3 + $0x248] sm:$0xff]
      %v1796 = vld [vmem:[#allocation3 + $0x250] sm:$0xff]
      %v1797 = vld [vmem:[#allocation3 + $0x258] sm:$0xff]
      %v1798 = vld [vmem:[#allocation3 + $0x260] sm:$0xff]
      %v1799 = vld [vmem:[#allocation3 + $0x268] sm:$0xff]
      %v1800 = vld [vmem:[#allocation3 + $0x270] sm:$0xff]
      %v1801 = vld [vmem:[#allocation3 + $0x278] sm:$0xff]
      %v1802 = vld [vmem:[#allocation3 + $0x280] sm:$0xff]
      %v1803 = vld [vmem:[#allocation3 + $0x288] sm:$0xff]
      %v1804 = vld [vmem:[#allocation3 + $0x290] sm:$0xff]
      %v1805 = vld [vmem:[#allocation3 + $0x298] sm:$0xff]
      %v1806 = vld [vmem:[#allocation3 + $0x2a0] sm:$0xff]
      %v1807 = vld [vmem:[#allocation3 + $0x2a8] sm:$0xff]
      %v1808 = vld [vmem:[#allocation3 + $0x2b0] sm:$0xff]
      %v1809 = vld [vmem:[#allocation3 + $0x2b8] sm:$0xff]
      %v1810 = vld [vmem:[#allocation3 + $0x2c0] sm:$0xff]
      %v1811 = vld [vmem:[#allocation3 + $0x2c8] sm:$0xff]
      %v1812 = vld [vmem:[#allocation3 + $0x2d0] sm:$0xff]
      %v1813 = vld [vmem:[#allocation3 + $0x2d8] sm:$0xff]
      %v1814 = vld [vmem:[#allocation3 + $0x2e0] sm:$0xff]
      %v1815 = vld [vmem:[#allocation3 + $0x2e8] sm:$0xff]
      %v1816 = vld [vmem:[#allocation3 + $0x2f0] sm:$0xff]
      %v1817 = vld [vmem:[#allocation3 + $0x2f8] sm:$0xff]
      %v1818 = vld [vmem:[#allocation3 + $0x300] sm:$0xff]
      %v1819 = vld [vmem:[#allocation3 + $0x308] sm:$0xff]
      %v1820 = vld [vmem:[#allocation3 + $0x310] sm:$0xff]
      %v1821 = vld [vmem:[#allocation3 + $0x318] sm:$0xff]
      %v1822 = vld [vmem:[#allocation3 + $0x320] sm:$0xff]
      %v1823 = vld [vmem:[#allocation3 + $0x328] sm:$0xff]
      %v1824 = vld [vmem:[#allocation3 + $0x330] sm:$0xff]
      %v1825 = vld [vmem:[#allocation3 + $0x338] sm:$0xff]
      %v1826 = vld [vmem:[#allocation3 + $0x340] sm:$0xff]
      %v1827 = vld [vmem:[#allocation3 + $0x348] sm:$0xff]
      %v1828 = vld [vmem:[#allocation3 + $0x350] sm:$0xff]
      %v1829 = vld [vmem:[#allocation3 + $0x358] sm:$0xff]
      %v1830 = vld [vmem:[#allocation3 + $0x360] sm:$0xff]
      %v1831 = vld [vmem:[#allocation3 + $0x368] sm:$0xff]
      %v1832 = vld [vmem:[#allocation3 + $0x370] sm:$0xff]
      %v1833 = vld [vmem:[#allocation3 + $0x378] sm:$0xff]
      %v1834 = vld [vmem:[#allocation3 + $0x380] sm:$0xff]
      %v1835 = vld [vmem:[#allocation3 + $0x388] sm:$0xff]
      %v1836 = vld [vmem:[#allocation3 + $0x390] sm:$0xff]
      %v1837 = vld [vmem:[#allocation3 + $0x398] sm:$0xff]
      %v1838 = vld [vmem:[#allocation3 + $0x3a0] sm:$0xff]
      %v1839 = vld [vmem:[#allocation3 + $0x3a8] sm:$0xff]
      %v1840 = vld [vmem:[#allocation3 + $0x3b0] sm:$0xff]
      %v1841 = vld [vmem:[#allocation3 + $0x3b8] sm:$0xff]
      %v1842 = vld [vmem:[#allocation3 + $0x3c0] sm:$0xff]
      %v1843 = vld [vmem:[#allocation3 + $0x3c8] sm:$0xff]
      %v1844 = vld [vmem:[#allocation3 + $0x3d0] sm:$0xff]
      %v1845 = vld [vmem:[#allocation3 + $0x3d8] sm:$0xff]
      %v1846 = vld [vmem:[#allocation3 + $0x3e0] sm:$0xff]
      %v1847 = vld [vmem:[#allocation3 + $0x3e8] sm:$0xff]
      %v1848 = vld [vmem:[#allocation3 + $0x3f0] sm:$0xff]
      %v1849 = vld [vmem:[#allocation3 + $0x3f8] sm:$0xff]
      %v1850 = vld [vmem:[#allocation3 + $0x400] sm:$0xff]
      %v1851 = vld [vmem:[#allocation3 + $0x408] sm:$0xff]
      %v1852 = vld [vmem:[#allocation3 + $0x410] sm:$0xff]
      %v1853 = vld [vmem:[#allocation3 + $0x418] sm:$0xff]
      %v1854 = vld [vmem:[#allocation3 + $0x420] sm:$0xff]
      %v1855 = vld [vmem:[#allocation3 + $0x428] sm:$0xff]
      %v1856 = vld [vmem:[#allocation3 + $0x430] sm:$0xff]
      %v1857 = vld [vmem:[#allocation3 + $0x438] sm:$0xff]
      %v1858 = vld [vmem:[#allocation3 + $0x440] sm:$0xff]
      %v1859 = vld [vmem:[#allocation3 + $0x448] sm:$0xff]
      %v1860 = vld [vmem:[#allocation3 + $0x450] sm:$0xff]
      %v1861 = vld [vmem:[#allocation3 + $0x458] sm:$0xff]
      %v1862 = vld [vmem:[#allocation3 + $0x460] sm:$0xff]
      %v1863 = vld [vmem:[#allocation3 + $0x468] sm:$0xff]
      %v1864 = vld [vmem:[#allocation3 + $0x470] sm:$0xff]
      %v1865 = vld [vmem:[#allocation3 + $0x478] sm:$0xff]
      %v1866 = vld [vmem:[#allocation3 + $0x480] sm:$0xff]
      %v1867 = vld [vmem:[#allocation3 + $0x488] sm:$0xff]
      %v1868 = vld [vmem:[#allocation3 + $0x490] sm:$0xff]
      %v1869 = vld [vmem:[#allocation3 + $0x498] sm:$0xff]
      %v1870 = vld [vmem:[#allocation3 + $0x4a0] sm:$0xff]
      %v1871 = vld [vmem:[#allocation3 + $0x4a8] sm:$0xff]
      %v1872 = vld [vmem:[#allocation3 + $0x4b0] sm:$0xff]
      %v1873 = vld [vmem:[#allocation3 + $0x4b8] sm:$0xff]
      %v1874 = vld [vmem:[#allocation3 + $0x4c0] sm:$0xff]
      %v1875 = vld [vmem:[#allocation3 + $0x4c8] sm:$0xff]
      %v1876 = vld [vmem:[#allocation3 + $0x4d0] sm:$0xff]
      %v1877 = vld [vmem:[#allocation3 + $0x4d8] sm:$0xff]
      %v1878 = vld [vmem:[#allocation3 + $0x4e0] sm:$0xff]
      %v1879 = vld [vmem:[#allocation3 + $0x4e8] sm:$0xff]
      %v1880 = vld [vmem:[#allocation3 + $0x4f0] sm:$0xff]
      %v1881 = vld [vmem:[#allocation3 + $0x4f8] sm:$0xff]
      %v1882 = vld [vmem:[#allocation3 + $0x500] sm:$0xff]
      %v1883 = vld [vmem:[#allocation3 + $0x508] sm:$0xff]
      %v1884 = vld [vmem:[#allocation3 + $0x510] sm:$0xff]
      %v1885 = vld [vmem:[#allocation3 + $0x518] sm:$0xff]
      %v1886 = vld [vmem:[#allocation3 + $0x520] sm:$0xff]
      %v1887 = vld [vmem:[#allocation3 + $0x528] sm:$0xff]
      %v1888 = vld [vmem:[#allocation3 + $0x530] sm:$0xff]
      %v1889 = vld [vmem:[#allocation3 + $0x538] sm:$0xff]
      %v1890 = vld [vmem:[#allocation3 + $0x540] sm:$0xff]
      %v1891 = vld [vmem:[#allocation3 + $0x548] sm:$0xff]
      %v1892 = vld [vmem:[#allocation3 + $0x550] sm:$0xff]
      %v1893 = vld [vmem:[#allocation3 + $0x558] sm:$0xff]
      %v1894 = vld [vmem:[#allocation3 + $0x560] sm:$0xff]
      %v1895 = vld [vmem:[#allocation3 + $0x568] sm:$0xff]
      %v1896 = vld [vmem:[#allocation3 + $0x570] sm:$0xff]
      %v1897 = vld [vmem:[#allocation3 + $0x578] sm:$0xff]
      %v1898 = vld [vmem:[#allocation3 + $0x580] sm:$0xff]
      %v1899 = vld [vmem:[#allocation3 + $0x588] sm:$0xff]
      %v1900 = vld [vmem:[#allocation3 + $0x590] sm:$0xff]
      %v1901 = vld [vmem:[#allocation3 + $0x598] sm:$0xff]
      %v1902 = vld [vmem:[#allocation3 + $0x5a0] sm:$0xff]
      %v1903 = vld [vmem:[#allocation3 + $0x5a8] sm:$0xff]
      %v1904 = vld [vmem:[#allocation3 + $0x5b0] sm:$0xff]
      %v1905 = vld [vmem:[#allocation3 + $0x5b8] sm:$0xff]
      %v1906 = vld [vmem:[#allocation3 + $0x5c0] sm:$0xff]
      %v1907 = vld [vmem:[#allocation3 + $0x5c8] sm:$0xff]
      %v1908 = vld [vmem:[#allocation3 + $0x5d0] sm:$0xff]
      %v1909 = vld [vmem:[#allocation3 + $0x5d8] sm:$0xff]
      %v1910 = vld [vmem:[#allocation3 + $0x5e0] sm:$0xff]
      %v1911 = vld [vmem:[#allocation3 + $0x5e8] sm:$0xff]
      %v1912 = vld [vmem:[#allocation3 + $0x5f0] sm:$0xff]
      %v1913 = vld [vmem:[#allocation3 + $0x5f8] sm:$0xff]
      %v1914 = vld [vmem:[#allocation3 + $0x600] sm:$0xff]
      %v1915 = vld [vmem:[#allocation3 + $0x608] sm:$0xff]
      %v1916 = vld [vmem:[#allocation3 + $0x610] sm:$0xff]
      %v1917 = vld [vmem:[#allocation3 + $0x618] sm:$0xff]
      %v1918 = vld [vmem:[#allocation3 + $0x620] sm:$0xff]
      %v1919 = vld [vmem:[#allocation3 + $0x628] sm:$0xff]
      %v1920 = vld [vmem:[#allocation3 + $0x630] sm:$0xff]
      %v1921 = vld [vmem:[#allocation3 + $0x638] sm:$0xff]
      %v1922 = vld [vmem:[#allocation3 + $0x640] sm:$0xff]
      %v1923 = vld [vmem:[#allocation3 + $0x648] sm:$0xff]
      %v1924 = vld [vmem:[#allocation3 + $0x650] sm:$0xff]
      %v1925 = vld [vmem:[#allocation3 + $0x658] sm:$0xff]
      %v1926 = vld [vmem:[#allocation3 + $0x660] sm:$0xff]
      %v1927 = vld [vmem:[#allocation3 + $0x668] sm:$0xff]
      %v1928 = vld [vmem:[#allocation3 + $0x670] sm:$0xff]
      %v1929 = vld [vmem:[#allocation3 + $0x678] sm:$0xff]
      %v1930 = vld [vmem:[#allocation3 + $0x680] sm:$0xff]
      %v1931 = vld [vmem:[#allocation3 + $0x688] sm:$0xff]
      %v1932 = vld [vmem:[#allocation3 + $0x690] sm:$0xff]
      %v1933 = vld [vmem:[#allocation3 + $0x698] sm:$0xff]
      %v1934 = vld [vmem:[#allocation3 + $0x6a0] sm:$0xff]
      %v1935 = vld [vmem:[#allocation3 + $0x6a8] sm:$0xff]
      %v1936 = vld [vmem:[#allocation3 + $0x6b0] sm:$0xff]
      %v1937 = vld [vmem:[#allocation3 + $0x6b8] sm:$0xff]
      %v1938 = vld [vmem:[#allocation3 + $0x6c0] sm:$0xff]
      %v1939 = vld [vmem:[#allocation3 + $0x6c8] sm:$0xff]
      %v1940 = vld [vmem:[#allocation3 + $0x6d0] sm:$0xff]
      %v1941 = vld [vmem:[#allocation3 + $0x6d8] sm:$0xff]
      %v1942 = vld [vmem:[#allocation3 + $0x6e0] sm:$0xff]
      %v1943 = vld [vmem:[#allocation3 + $0x6e8] sm:$0xff]
      %v1944 = vld [vmem:[#allocation3 + $0x6f0] sm:$0xff]
      %v1945 = vld [vmem:[#allocation3 + $0x6f8] sm:$0xff]
      %v1946 = vld [vmem:[#allocation3 + $0x700] sm:$0xff]
      %v1947 = vld [vmem:[#allocation3 + $0x708] sm:$0xff]
      %v1948 = vld [vmem:[#allocation3 + $0x710] sm:$0xff]
      %v1949 = vld [vmem:[#allocation3 + $0x718] sm:$0xff]
      %v1950 = vld [vmem:[#allocation3 + $0x720] sm:$0xff]
      %v1951 = vld [vmem:[#allocation3 + $0x728] sm:$0xff]
      %v1952 = vld [vmem:[#allocation3 + $0x730] sm:$0xff]
      %v1953 = vld [vmem:[#allocation3 + $0x738] sm:$0xff]
      %v1954 = vld [vmem:[#allocation3 + $0x740] sm:$0xff]
      %v1955 = vld [vmem:[#allocation3 + $0x748] sm:$0xff]
      %v1956 = vld [vmem:[#allocation3 + $0x750] sm:$0xff]
      %v1957 = vld [vmem:[#allocation3 + $0x758] sm:$0xff]
      %v1958 = vld [vmem:[#allocation3 + $0x760] sm:$0xff]
      %v1959 = vld [vmem:[#allocation3 + $0x768] sm:$0xff]
      %v1960 = vld [vmem:[#allocation3 + $0x770] sm:$0xff]
      %v1961 = vld [vmem:[#allocation3 + $0x778] sm:$0xff]
      %v1962 = vld [vmem:[#allocation3 + $0x780] sm:$0xff]
      %v1963 = vld [vmem:[#allocation3 + $0x788] sm:$0xff]
      %v1964 = vld [vmem:[#allocation3 + $0x790] sm:$0xff]
      %v1965 = vld [vmem:[#allocation3 + $0x798] sm:$0xff]
      %v1966 = vld [vmem:[#allocation3 + $0x7a0] sm:$0xff]
      %v1967 = vld [vmem:[#allocation3 + $0x7a8] sm:$0xff]
      %v1968 = vld [vmem:[#allocation3 + $0x7b0] sm:$0xff]
      %v1969 = vld [vmem:[#allocation3 + $0x7b8] sm:$0xff]
      %v1970 = vld [vmem:[#allocation3 + $0x7c0] sm:$0xff]
      %v1971 = vld [vmem:[#allocation3 + $0x7c8] sm:$0xff]
      %v1972 = vld [vmem:[#allocation3 + $0x7d0] sm:$0xff]
      %v1973 = vld [vmem:[#allocation3 + $0x7d8] sm:$0xff]
      %v1974 = vld [vmem:[#allocation3 + $0x7e0] sm:$0xff]
      %v1975 = vld [vmem:[#allocation3 + $0x7e8] sm:$0xff]
      %v1976 = vld [vmem:[#allocation3 + $0x7f0] sm:$0xff]
      %v1977 = vld [vmem:[#allocation3 + $0x7f8] sm:$0xff]
      %v1978 = vld [vmem:[#allocation3 + $0x800] sm:$0xff]
      %v1979 = vld [vmem:[#allocation3 + $0x808] sm:$0xff]
      %v1980 = vld [vmem:[#allocation3 + $0x810] sm:$0xff]
      %v1981 = vld [vmem:[#allocation3 + $0x818] sm:$0xff]
      %v1982 = vld [vmem:[#allocation3 + $0x820] sm:$0xff]
      %v1983 = vld [vmem:[#allocation3 + $0x828] sm:$0xff]
      %v1984 = vld [vmem:[#allocation3 + $0x830] sm:$0xff]
      %v1985 = vld [vmem:[#allocation3 + $0x838] sm:$0xff]
      %v1986 = vld [vmem:[#allocation3 + $0x840] sm:$0xff]
      %v1987 = vld [vmem:[#allocation3 + $0x848] sm:$0xff]
      %v1988 = vld [vmem:[#allocation3 + $0x850] sm:$0xff]
      %v1989 = vld [vmem:[#allocation3 + $0x858] sm:$0xff]
      %v1990 = vld [vmem:[#allocation3 + $0x860] sm:$0xff]
      %v1991 = vld [vmem:[#allocation3 + $0x868] sm:$0xff]
      %v1992 = vld [vmem:[#allocation3 + $0x870] sm:$0xff]
      %v1993 = vld [vmem:[#allocation3 + $0x878] sm:$0xff]
      %v1994 = vld [vmem:[#allocation3 + $0x880] sm:$0xff]
      %v1995 = vld [vmem:[#allocation3 + $0x888] sm:$0xff]
      %v1996 = vld [vmem:[#allocation3 + $0x890] sm:$0xff]
      %v1997 = vld [vmem:[#allocation3 + $0x898] sm:$0xff]
      %v1998 = vld [vmem:[#allocation3 + $0x8a0] sm:$0xff]
      %v1999 = vld [vmem:[#allocation3 + $0x8a8] sm:$0xff]
      %v2000 = vld [vmem:[#allocation3 + $0x8b0] sm:$0xff]
      %v2001 = vld [vmem:[#allocation3 + $0x8b8] sm:$0xff]
      %v2002 = vld [vmem:[#allocation3 + $0x8c0] sm:$0xff]
      %v2003 = vld [vmem:[#allocation3 + $0x8c8] sm:$0xff]
      %v2004 = vld [vmem:[#allocation3 + $0x8d0] sm:$0xff]
      %v2005 = vld [vmem:[#allocation3 + $0x8d8] sm:$0xff]
      %v2006 = vld [vmem:[#allocation3 + $0x8e0] sm:$0xff]
      %v2007 = vld [vmem:[#allocation3 + $0x8e8] sm:$0xff]
      %v2008 = vld [vmem:[#allocation3 + $0x8f0] sm:$0xff]
      %v2009 = vld [vmem:[#allocation3 + $0x8f8] sm:$0xff]
      %v2010 = vld [vmem:[#allocation3 + $0x900] sm:$0xff]
      %v2011 = vld [vmem:[#allocation3 + $0x908] sm:$0xff]
      %v2012 = vld [vmem:[#allocation3 + $0x910] sm:$0xff]
      %v2013 = vld [vmem:[#allocation3 + $0x918] sm:$0xff]
      %v2014 = vld [vmem:[#allocation3 + $0x920] sm:$0xff]
      %v2015 = vld [vmem:[#allocation3 + $0x928] sm:$0xff]
      %v2016 = vld [vmem:[#allocation3 + $0x930] sm:$0xff]
      %v2017 = vld [vmem:[#allocation3 + $0x938] sm:$0xff]
      %v2018 = vld [vmem:[#allocation3 + $0x940] sm:$0xff]
      %v2019 = vld [vmem:[#allocation3 + $0x948] sm:$0xff]
      %v2020 = vld [vmem:[#allocation3 + $0x950] sm:$0xff]
      %v2021 = vld [vmem:[#allocation3 + $0x958] sm:$0xff]
      %v2022 = vld [vmem:[#allocation3 + $0x960] sm:$0xff]
      %v2023 = vld [vmem:[#allocation3 + $0x968] sm:$0xff]
      %v2024 = vld [vmem:[#allocation3 + $0x970] sm:$0xff]
      %v2025 = vld [vmem:[#allocation3 + $0x978] sm:$0xff]
      %v2026 = vld [vmem:[#allocation3 + $0x980] sm:$0xff]
      %v2027 = vld [vmem:[#allocation3 + $0x988] sm:$0xff]
      %v2028 = vld [vmem:[#allocation3 + $0x990] sm:$0xff]
      %v2029 = vld [vmem:[#allocation3 + $0x998] sm:$0xff]
      %v2030 = vld [vmem:[#allocation3 + $0x9a0] sm:$0xff]
      %v2031 = vld [vmem:[#allocation3 + $0x9a8] sm:$0xff]
      %v2032 = vld [vmem:[#allocation3 + $0x9b0] sm:$0xff]
      %v2033 = vld [vmem:[#allocation3 + $0x9b8] sm:$0xff]
      %v2034 = vld [vmem:[#allocation3 + $0x9c0] sm:$0xff]
      %v2035 = vld [vmem:[#allocation3 + $0x9c8] sm:$0xff]
      %v2036 = vld [vmem:[#allocation3 + $0x9d0] sm:$0xff]
      %v2037 = vld [vmem:[#allocation3 + $0x9d8] sm:$0xff]
      %v2038 = vld [vmem:[#allocation3 + $0x9e0] sm:$0xff]
      %v2039 = vld [vmem:[#allocation3 + $0x9e8] sm:$0xff]
      %v2040 = vld [vmem:[#allocation3 + $0x9f0] sm:$0xff]
      %v2041 = vld [vmem:[#allocation3 + $0x9f8] sm:$0xff]
      %v2042 = vld [vmem:[#allocation3 + $0xa00] sm:$0xff]
      %v2043 = vld [vmem:[#allocation3 + $0xa08] sm:$0xff]
      %v2044 = vld [vmem:[#allocation3 + $0xa10] sm:$0xff]
      %v2045 = vld [vmem:[#allocation3 + $0xa18] sm:$0xff]
      %v2046 = vld [vmem:[#allocation3 + $0xa20] sm:$0xff]
      %v2047 = vld [vmem:[#allocation3 + $0xa28] sm:$0xff]
      %v2048 = vld [vmem:[#allocation3 + $0xa30] sm:$0xff]
      %v2049 = vld [vmem:[#allocation3 + $0xa38] sm:$0xff]
      %v2050 = vld [vmem:[#allocation3 + $0xa40] sm:$0xff]
      %v2051 = vld [vmem:[#allocation3 + $0xa48] sm:$0xff]
      %v2052 = vld [vmem:[#allocation3 + $0xa50] sm:$0xff]
      %v2053 = vld [vmem:[#allocation3 + $0xa58] sm:$0xff]
      %v2054 = vld [vmem:[#allocation3 + $0xa60] sm:$0xff]
      %v2055 = vld [vmem:[#allocation3 + $0xa68] sm:$0xff]
      %v2056 = vld [vmem:[#allocation3 + $0xa70] sm:$0xff]
      %v2057 = vld [vmem:[#allocation3 + $0xa78] sm:$0xff]
      %v2058 = vld [vmem:[#allocation3 + $0xa80] sm:$0xff]
      %v2059 = vld [vmem:[#allocation3 + $0xa88] sm:$0xff]
      %v2060 = vld [vmem:[#allocation3 + $0xa90] sm:$0xff]
      %v2061 = vld [vmem:[#allocation3 + $0xa98] sm:$0xff]
      %v2062 = vld [vmem:[#allocation3 + $0xaa0] sm:$0xff]
      %v2063 = vld [vmem:[#allocation3 + $0xaa8] sm:$0xff]
      %v2064 = vld [vmem:[#allocation3 + $0xab0] sm:$0xff]
      %v2065 = vld [vmem:[#allocation3 + $0xab8] sm:$0xff]
      %v2066 = vld [vmem:[#allocation3 + $0xac0] sm:$0xff]
      %v2067 = vld [vmem:[#allocation3 + $0xac8] sm:$0xff]
      %v2068 = vld [vmem:[#allocation3 + $0xad0] sm:$0xff]
      %v2069 = vld [vmem:[#allocation3 + $0xad8] sm:$0xff]
      %v2070 = vld [vmem:[#allocation3 + $0xae0] sm:$0xff]
      %v2071 = vld [vmem:[#allocation3 + $0xae8] sm:$0xff]
      %v2072 = vld [vmem:[#allocation3 + $0xaf0] sm:$0xff]
      %v2073 = vld [vmem:[#allocation3 + $0xaf8] sm:$0xff]
      %v2074 = vld [vmem:[#allocation3 + $0xb00] sm:$0xff]
      %v2075 = vld [vmem:[#allocation3 + $0xb08] sm:$0xff]
      %v2076 = vld [vmem:[#allocation3 + $0xb10] sm:$0xff]
      %v2077 = vld [vmem:[#allocation3 + $0xb18] sm:$0xff]
      %v2078 = vld [vmem:[#allocation3 + $0xb20] sm:$0xff]
      %v2079 = vld [vmem:[#allocation3 + $0xb28] sm:$0xff]
      %v2080 = vld [vmem:[#allocation3 + $0xb30] sm:$0xff]
      %v2081 = vld [vmem:[#allocation3 + $0xb38] sm:$0xff]
      %v2082 = vld [vmem:[#allocation3 + $0xb40] sm:$0xff]
      %v2083 = vld [vmem:[#allocation3 + $0xb48] sm:$0xff]
      %v2084 = vld [vmem:[#allocation3 + $0xb50] sm:$0xff]
      %v2085 = vld [vmem:[#allocation3 + $0xb58] sm:$0xff]
      %v2086 = vld [vmem:[#allocation3 + $0xb60] sm:$0xff]
      %v2087 = vld [vmem:[#allocation3 + $0xb68] sm:$0xff]
      %v2088 = vld [vmem:[#allocation3 + $0xb70] sm:$0xff]
      %v2089 = vld [vmem:[#allocation3 + $0xb78] sm:$0xff]
      %v2090 = vld [vmem:[#allocation3 + $0xb80] sm:$0xff]
      %v2091 = vld [vmem:[#allocation3 + $0xb88] sm:$0xff]
      %v2092 = vld [vmem:[#allocation3 + $0xb90] sm:$0xff]
      %v2093 = vld [vmem:[#allocation3 + $0xb98] sm:$0xff]
      %v2094 = vld [vmem:[#allocation3 + $0xba0] sm:$0xff]
      %v2095 = vld [vmem:[#allocation3 + $0xba8] sm:$0xff]
      %v2096 = vld [vmem:[#allocation3 + $0xbb0] sm:$0xff]
      %v2097 = vld [vmem:[#allocation3 + $0xbb8] sm:$0xff]
      %v2098 = vld [vmem:[#allocation3 + $0xbc0] sm:$0xff]
      %v2099 = vld [vmem:[#allocation3 + $0xbc8] sm:$0xff]
      %v2100 = vld [vmem:[#allocation3 + $0xbd0] sm:$0xff]
      %v2101 = vld [vmem:[#allocation3 + $0xbd8] sm:$0xff]
      %v2102 = vld [vmem:[#allocation3 + $0xbe0] sm:$0xff]
      %v2103 = vld [vmem:[#allocation3 + $0xbe8] sm:$0xff]
      %v2104 = vld [vmem:[#allocation3 + $0xbf0] sm:$0xff]
      %v2105 = vld [vmem:[#allocation3 + $0xbf8] sm:$0xff]
      %v2106 = vld [vmem:[#allocation3 + $0xc00] sm:$0xff]
      %v2107 = vld [vmem:[#allocation3 + $0xc08] sm:$0xff]
      %v2108 = vld [vmem:[#allocation3 + $0xc10] sm:$0xff]
      %v2109 = vld [vmem:[#allocation3 + $0xc18] sm:$0xff]
      %v2110 = vld [vmem:[#allocation3 + $0xc20] sm:$0xff]
      %v2111 = vld [vmem:[#allocation3 + $0xc28] sm:$0xff]
      %v2112 = vld [vmem:[#allocation3 + $0xc30] sm:$0xff]
      %v2113 = vld [vmem:[#allocation3 + $0xc38] sm:$0xff]
      %v2114 = vld [vmem:[#allocation3 + $0xc40] sm:$0xff]
      %v2115 = vld [vmem:[#allocation3 + $0xc48] sm:$0xff]
      %v2116 = vld [vmem:[#allocation3 + $0xc50] sm:$0xff]
      %v2117 = vld [vmem:[#allocation3 + $0xc58] sm:$0xff]
      %v2118 = vld [vmem:[#allocation3 + $0xc60] sm:$0xff]
      %v2119 = vld [vmem:[#allocation3 + $0xc68] sm:$0xff]
      %v2120 = vld [vmem:[#allocation3 + $0xc70] sm:$0xff]
      %v2121 = vld [vmem:[#allocation3 + $0xc78] sm:$0xff]
      %v2122 = vld [vmem:[#allocation3 + $0xc80] sm:$0xff]
      %v2123 = vld [vmem:[#allocation3 + $0xc88] sm:$0xff]
      %v2124 = vld [vmem:[#allocation3 + $0xc90] sm:$0xff]
      %v2125 = vld [vmem:[#allocation3 + $0xc98] sm:$0xff]
      %v2126 = vld [vmem:[#allocation3 + $0xca0] sm:$0xff]
      %v2127 = vld [vmem:[#allocation3 + $0xca8] sm:$0xff]
      %v2128 = vld [vmem:[#allocation3 + $0xcb0] sm:$0xff]
      %v2129 = vld [vmem:[#allocation3 + $0xcb8] sm:$0xff]
      %v2130 = vld [vmem:[#allocation3 + $0xcc0] sm:$0xff]
      %v2131 = vld [vmem:[#allocation3 + $0xcc8] sm:$0xff]
      %v2132 = vld [vmem:[#allocation3 + $0xcd0] sm:$0xff]
      %v2133 = vld [vmem:[#allocation3 + $0xcd8] sm:$0xff]
      %v2134 = vld [vmem:[#allocation3 + $0xce0] sm:$0xff]
      %v2135 = vld [vmem:[#allocation3 + $0xce8] sm:$0xff]
      %v2136 = vld [vmem:[#allocation3 + $0xcf0] sm:$0xff]
      %v2137 = vld [vmem:[#allocation3 + $0xcf8] sm:$0xff]
      %v2138 = vld [vmem:[#allocation3 + $0xd00] sm:$0xff]
      %v2139 = vld [vmem:[#allocation3 + $0xd08] sm:$0xff]
      %v2140 = vld [vmem:[#allocation3 + $0xd10] sm:$0xff]
      %v2141 = vld [vmem:[#allocation3 + $0xd18] sm:$0xff]
      %v2142 = vld [vmem:[#allocation3 + $0xd20] sm:$0xff]
      %v2143 = vld [vmem:[#allocation3 + $0xd28] sm:$0xff]
      %v2144 = vld [vmem:[#allocation3 + $0xd30] sm:$0xff]
      %v2145 = vld [vmem:[#allocation3 + $0xd38] sm:$0xff]
      %v2146 = vld [vmem:[#allocation3 + $0xd40] sm:$0xff]
      %v2147 = vld [vmem:[#allocation3 + $0xd48] sm:$0xff]
      %v2148 = vld [vmem:[#allocation3 + $0xd50] sm:$0xff]
      %v2149 = vld [vmem:[#allocation3 + $0xd58] sm:$0xff]
      %v2150 = vld [vmem:[#allocation3 + $0xd60] sm:$0xff]
      %v2151 = vld [vmem:[#allocation3 + $0xd68] sm:$0xff]
      %v2152 = vld [vmem:[#allocation3 + $0xd70] sm:$0xff]
      %v2153 = vld [vmem:[#allocation3 + $0xd78] sm:$0xff]
      %v2154 = vld [vmem:[#allocation3 + $0xd80] sm:$0xff]
      %v2155 = vld [vmem:[#allocation3 + $0xd88] sm:$0xff]
      %v2156 = vld [vmem:[#allocation3 + $0xd90] sm:$0xff]
      %v2157 = vld [vmem:[#allocation3 + $0xd98] sm:$0xff]
      %v2158 = vld [vmem:[#allocation3 + $0xda0] sm:$0xff]
      %v2159 = vld [vmem:[#allocation3 + $0xda8] sm:$0xff]
      %v2160 = vld [vmem:[#allocation3 + $0xdb0] sm:$0xff]
      %v2161 = vld [vmem:[#allocation3 + $0xdb8] sm:$0xff]
      %v2162 = vld [vmem:[#allocation3 + $0xdc0] sm:$0xff]
      %v2163 = vld [vmem:[#allocation3 + $0xdc8] sm:$0xff]
      %v2164 = vld [vmem:[#allocation3 + $0xdd0] sm:$0xff]
      %v2165 = vld [vmem:[#allocation3 + $0xdd8] sm:$0xff]
      %v2166 = vld [vmem:[#allocation3 + $0xde0] sm:$0xff]
      %v2167 = vld [vmem:[#allocation3 + $0xde8] sm:$0xff]
      %v2168 = vld [vmem:[#allocation3 + $0xdf0] sm:$0xff]
      %v2169 = vld [vmem:[#allocation3 + $0xdf8] sm:$0xff]
      %v2170 = vld [vmem:[#allocation3 + $0xe00] sm:$0xff]
      %v2171 = vld [vmem:[#allocation3 + $0xe08] sm:$0xff]
      %v2172 = vld [vmem:[#allocation3 + $0xe10] sm:$0xff]
      %v2173 = vld [vmem:[#allocation3 + $0xe18] sm:$0xff]
      %v2174 = vld [vmem:[#allocation3 + $0xe20] sm:$0xff]
      %v2175 = vld [vmem:[#allocation3 + $0xe28] sm:$0xff]
      %v2176 = vld [vmem:[#allocation3 + $0xe30] sm:$0xff]
      %v2177 = vld [vmem:[#allocation3 + $0xe38] sm:$0xff]
      %v2178 = vld [vmem:[#allocation3 + $0xe40] sm:$0xff]
      %v2179 = vld [vmem:[#allocation3 + $0xe48] sm:$0xff]
      %v2180 = vld [vmem:[#allocation3 + $0xe50] sm:$0xff]
      %v2181 = vld [vmem:[#allocation3 + $0xe58] sm:$0xff]
      %v2182 = vld [vmem:[#allocation3 + $0xe60] sm:$0xff]
      %v2183 = vld [vmem:[#allocation3 + $0xe68] sm:$0xff]
      %v2184 = vld [vmem:[#allocation3 + $0xe70] sm:$0xff]
      %v2185 = vld [vmem:[#allocation3 + $0xe78] sm:$0xff]
      %v2186 = vld [vmem:[#allocation3 + $0xe80] sm:$0xff]
      %v2187 = vld [vmem:[#allocation3 + $0xe88] sm:$0xff]
      %v2188 = vld [vmem:[#allocation3 + $0xe90] sm:$0xff]
      %v2189 = vld [vmem:[#allocation3 + $0xe98] sm:$0xff]
      %v2190 = vld [vmem:[#allocation3 + $0xea0] sm:$0xff]
      %v2191 = vld [vmem:[#allocation3 + $0xea8] sm:$0xff]
      %v2192 = vld [vmem:[#allocation3 + $0xeb0] sm:$0xff]
      %v2193 = vld [vmem:[#allocation3 + $0xeb8] sm:$0xff]
      %v2194 = vld [vmem:[#allocation3 + $0xec0] sm:$0xff]
      %v2195 = vld [vmem:[#allocation3 + $0xec8] sm:$0xff]
      %v2196 = vld [vmem:[#allocation3 + $0xed0] sm:$0xff]
      %v2197 = vld [vmem:[#allocation3 + $0xed8] sm:$0xff]
      %v2198 = vld [vmem:[#allocation3 + $0xee0] sm:$0xff]
      %v2199 = vld [vmem:[#allocation3 + $0xee8] sm:$0xff]
      %v2200 = vld [vmem:[#allocation3 + $0xef0] sm:$0xff]
      %v2201 = vld [vmem:[#allocation3 + $0xef8] sm:$0xff]
      %v2202 = vld [vmem:[#allocation3 + $0xf00] sm:$0xff]
      %v2203 = vld [vmem:[#allocation3 + $0xf08] sm:$0xff]
      %v2204 = vld [vmem:[#allocation3 + $0xf10] sm:$0xff]
      %v2205 = vld [vmem:[#allocation3 + $0xf18] sm:$0xff]
      %v2206 = vld [vmem:[#allocation3 + $0xf20] sm:$0xff]
      %v2207 = vld [vmem:[#allocation3 + $0xf28] sm:$0xff]
      %v2208 = vld [vmem:[#allocation3 + $0xf30] sm:$0xff]
      %v2209 = vld [vmem:[#allocation3 + $0xf38] sm:$0xff]
      %v2210 = vld [vmem:[#allocation3 + $0xf40] sm:$0xff]
      %v2211 = vld [vmem:[#allocation3 + $0xf48] sm:$0xff]
      %v2212 = vld [vmem:[#allocation3 + $0xf50] sm:$0xff]
      %v2213 = vld [vmem:[#allocation3 + $0xf58] sm:$0xff]
      %v2214 = vld [vmem:[#allocation3 + $0xf60] sm:$0xff]
      %v2215 = vld [vmem:[#allocation3 + $0xf68] sm:$0xff]
      %v2216 = vld [vmem:[#allocation3 + $0xf70] sm:$0xff]
      %v2217 = vld [vmem:[#allocation3 + $0xf78] sm:$0xff]
      %v2218 = vld [vmem:[#allocation3 + $0xf80] sm:$0xff]
      %v2219 = vld [vmem:[#allocation3 + $0xf88] sm:$0xff]
      %v2220 = vld [vmem:[#allocation3 + $0xf90] sm:$0xff]
      %v2221 = vld [vmem:[#allocation3 + $0xf98] sm:$0xff]
      %v2222 = vld [vmem:[#allocation3 + $0xfa0] sm:$0xff]
      %v2223 = vld [vmem:[#allocation3 + $0xfa8] sm:$0xff]
      %v2224 = vld [vmem:[#allocation3 + $0xfb0] sm:$0xff]
      %v2225 = vld [vmem:[#allocation3 + $0xfb8] sm:$0xff]
      %v2226 = vld [vmem:[#allocation3 + $0xfc0] sm:$0xff]
      %v2227 = vld [vmem:[#allocation3 + $0xfc8] sm:$0xff]
      %v2228 = vld [vmem:[#allocation3 + $0xfd0] sm:$0xff]
      %v2229 = vld [vmem:[#allocation3 + $0xfd8] sm:$0xff]
      %v2230 = vld [vmem:[#allocation3 + $0xfe0] sm:$0xff]
      %v2231 = vld [vmem:[#allocation3 + $0xfe8] sm:$0xff]
      %v2232 = vld [vmem:[#allocation3 + $0xff0] sm:$0xff]
      %v2233 = vld [vmem:[#allocation3 + $0xff8] sm:$0xff]
      %2234 = vmatprep.subr.bf16.mxu0 %v1723
      %2235 = vmatpush1.bf16.msra.mxu0 %v1722
      %2236 = vmatprep.subr.bf16.mxu0 %v1731
      %2237 = vmatpush1.bf16.msra.mxu0 %v1730
      %2238 = vmatprep.subr.bf16.mxu0 %v1739
      %2239 = vmatpush1.bf16.msra.mxu0 %v1738
      %2240 = vmatprep.subr.bf16.mxu0 %v1747
      %2241 = vmatpush1.bf16.msra.mxu0 %v1746
      %2242 = vmatprep.subr.bf16.mxu0 %v1755
      %2243 = vmatpush1.bf16.msra.mxu0 %v1754
      %2244 = vmatprep.subr.bf16.mxu0 %v1763
      %2245 = vmatpush1.bf16.msra.mxu0 %v1762
      %2246 = vmatprep.subr.bf16.mxu0 %v1771
      %2247 = vmatpush1.bf16.msra.mxu0 %v1770
      %2248 = vmatprep.subr.bf16.mxu0 %v1779
      %2249 = vmatpush1.bf16.msra.mxu0 %v1778
      %2250 = vmatprep.subr.bf16.mxu0 %v1787
      %2251 = vmatpush1.bf16.msra.mxu0 %v1786
      %2252 = vmatprep.subr.bf16.mxu0 %v1795
      %2253 = vmatpush1.bf16.msra.mxu0 %v1794
      %2254 = vmatprep.subr.bf16.mxu0 %v1803
      %2255 = vmatpush1.bf16.msra.mxu0 %v1802
      %2256 = vmatprep.subr.bf16.mxu0 %v1811
      %2257 = vmatpush1.bf16.msra.mxu0 %v1810
      %2258 = vmatprep.subr.bf16.mxu0 %v1819
      %2259 = vmatpush1.bf16.msra.mxu0 %v1818
      %2260 = vmatprep.subr.bf16.mxu0 %v1827
      %2261 = vmatpush1.bf16.msra.mxu0 %v1826
      %2262 = vmatprep.subr.bf16.mxu0 %v1835
      %2263 = vmatpush1.bf16.msra.mxu0 %v1834
      %2264 = vmatprep.subr.bf16.mxu0 %v1843
      %2265 = vmatpush1.bf16.msra.mxu0 %v1842
      %2266 = vmatprep.mubr.bf16.mxu0 %v1715
      %2267 = vmatmul.mubr.bf16.gmra.mrb[0].mxu0 %v1714
      %v2268 = vpop.f32.mrb[0].mxu0
      %v2269 = vadd.f32 0.0, %v2268
      %v2270 = vpop.f32.mrb[0].mxu0
      %v2271 = vadd.f32 0.0, %v2270
      %v2272 = vpop.f32.mrb[0].mxu0
      %v2273 = vpop.f32.mrb[0].mxu0
      %2274 = vdwg.mxu0
      %2275 = vmatprep.subr.bf16.mxu0 %v1851
      %2276 = vmatpush1.bf16.msra.mxu0 %v1850
      %2277 = vmatprep.subr.bf16.mxu0 %v1859
      %2278 = vmatpush1.bf16.msra.mxu0 %v1858
      %2279 = vmatprep.subr.bf16.mxu0 %v1867
      %2280 = vmatpush1.bf16.msra.mxu0 %v1866
      %2281 = vmatprep.subr.bf16.mxu0 %v1875
      %2282 = vmatpush1.bf16.msra.mxu0 %v1874
      %2283 = vmatprep.subr.bf16.mxu0 %v1883
      %2284 = vmatpush1.bf16.msra.mxu0 %v1882
      %2285 = vmatprep.subr.bf16.mxu0 %v1891
      %2286 = vmatpush1.bf16.msra.mxu0 %v1890
      %2287 = vmatprep.subr.bf16.mxu0 %v1899
      %2288 = vmatpush1.bf16.msra.mxu0 %v1898
      %2289 = vmatprep.subr.bf16.mxu0 %v1907
      %2290 = vmatpush1.bf16.msra.mxu0 %v1906
      %2291 = vmatprep.subr.bf16.mxu0 %v1915
      %2292 = vmatpush1.bf16.msra.mxu0 %v1914
      %2293 = vmatprep.subr.bf16.mxu0 %v1923
      %2294 = vmatpush1.bf16.msra.mxu0 %v1922
      %2295 = vmatprep.subr.bf16.mxu0 %v1931
      %2296 = vmatpush1.bf16.msra.mxu0 %v1930
      %2297 = vmatprep.subr.bf16.mxu0 %v1939
      %2298 = vmatpush1.bf16.msra.mxu0 %v1938
      %2299 = vmatprep.subr.bf16.mxu0 %v1947
      %2300 = vmatpush1.bf16.msra.mxu0 %v1946
      %2301 = vmatprep.subr.bf16.mxu0 %v1955
      %2302 = vmatpush1.bf16.msra.mxu0 %v1954
      %2303 = vmatprep.subr.bf16.mxu0 %v1963
      %2304 = vmatpush1.bf16.msra.mxu0 %v1962
      %2305 = vmatprep.subr.bf16.mxu0 %v1971
      %2306 = vmatpush1.bf16.msra.mxu0 %v1970
      %2307 = vmatprep.mubr.bf16.mxu0 %v1717
      %2308 = vmatmul.mubr.bf16.gmra.mrb[0].mxu0 %v1716
      %v2309 = vpop.f32.mrb[0].mxu0
      %v2310 = vadd.f32 %v2269, %v2309
      %v2311 = vpop.f32.mrb[0].mxu0
      %v2312 = vadd.f32 %v2271, %v2311
      %v2313 = vpop.f32.mrb[0].mxu0
      %v2314 = vpop.f32.mrb[0].mxu0
      %2315 = vdwg.mxu0
      %2316 = vmatprep.subr.bf16.mxu0 %v1979
      %2317 = vmatpush1.bf16.msra.mxu0 %v1978
      %2318 = vmatprep.subr.bf16.mxu0 %v1987
      %2319 = vmatpush1.bf16.msra.mxu0 %v1986
      %2320 = vmatprep.subr.bf16.mxu0 %v1995
      %2321 = vmatpush1.bf16.msra.mxu0 %v1994
      %2322 = vmatprep.subr.bf16.mxu0 %v2003
      %2323 = vmatpush1.bf16.msra.mxu0 %v2002
      %2324 = vmatprep.subr.bf16.mxu0 %v2011
      %2325 = vmatpush1.bf16.msra.mxu0 %v2010
      %2326 = vmatprep.subr.bf16.mxu0 %v2019
      %2327 = vmatpush1.bf16.msra.mxu0 %v2018
      %2328 = vmatprep.subr.bf16.mxu0 %v2027
      %2329 = vmatpush1.bf16.msra.mxu0 %v2026
      %2330 = vmatprep.subr.bf16.mxu0 %v2035
      %2331 = vmatpush1.bf16.msra.mxu0 %v2034
      %2332 = vmatprep.subr.bf16.mxu0 %v2043
      %2333 = vmatpush1.bf16.msra.mxu0 %v2042
      %2334 = vmatprep.subr.bf16.mxu0 %v2051
      %2335 = vmatpush1.bf16.msra.mxu0 %v2050
      %2336 = vmatprep.subr.bf16.mxu0 %v2059
      %2337 = vmatpush1.bf16.msra.mxu0 %v2058
      %2338 = vmatprep.subr.bf16.mxu0 %v2067
      %2339 = vmatpush1.bf16.msra.mxu0 %v2066
      %2340 = vmatprep.subr.bf16.mxu0 %v2075
      %2341 = vmatpush1.bf16.msra.mxu0 %v2074
      %2342 = vmatprep.subr.bf16.mxu0 %v2083
      %2343 = vmatpush1.bf16.msra.mxu0 %v2082
      %2344 = vmatprep.subr.bf16.mxu0 %v2091
      %2345 = vmatpush1.bf16.msra.mxu0 %v2090
      %2346 = vmatprep.subr.bf16.mxu0 %v2099
      %2347 = vmatpush1.bf16.msra.mxu0 %v2098
      %2348 = vmatprep.mubr.bf16.mxu0 %v1719
      %2349 = vmatmul.mubr.bf16.gmra.mrb[0].mxu0 %v1718
      %v2350 = vpop.f32.mrb[0].mxu0
      %v2351 = vadd.f32 %v2310, %v2350
      %v2352 = vpop.f32.mrb[0].mxu0
      %v2353 = vadd.f32 %v2312, %v2352
      %v2354 = vpop.f32.mrb[0].mxu0
      %v2355 = vpop.f32.mrb[0].mxu0
      %2356 = vdwg.mxu0
      %2357 = vmatprep.subr.bf16.mxu0 %v2107
      %2358 = vmatpush1.bf16.msra.mxu0 %v2106
      %2359 = vmatprep.subr.bf16.mxu0 %v2115
      %2360 = vmatpush1.bf16.msra.mxu0 %v2114
      %2361 = vmatprep.subr.bf16.mxu0 %v2123
      %2362 = vmatpush1.bf16.msra.mxu0 %v2122
      %2363 = vmatprep.subr.bf16.mxu0 %v2131
      %2364 = vmatpush1.bf16.msra.mxu0 %v2130
      %2365 = vmatprep.subr.bf16.mxu0 %v2139
      %2366 = vmatpush1.bf16.msra.mxu0 %v2138
      %2367 = vmatprep.subr.bf16.mxu0 %v2147
      %2368 = vmatpush1.bf16.msra.mxu0 %v2146
      %2369 = vmatprep.subr.bf16.mxu0 %v2155
      %2370 = vmatpush1.bf16.msra.mxu0 %v2154
      %2371 = vmatprep.subr.bf16.mxu0 %v2163
      %2372 = vmatpush1.bf16.msra.mxu0 %v2162
      %2373 = vmatprep.subr.bf16.mxu0 %v2171
      %2374 = vmatpush1.bf16.msra.mxu0 %v2170
      %2375 = vmatprep.subr.bf16.mxu0 %v2179
      %2376 = vmatpush1.bf16.msra.mxu0 %v2178
      %2377 = vmatprep.subr.bf16.mxu0 %v2187
      %2378 = vmatpush1.bf16.msra.mxu0 %v2186
      %2379 = vmatprep.subr.bf16.mxu0 %v2195
      %2380 = vmatpush1.bf16.msra.mxu0 %v2194
      %2381 = vmatprep.subr.bf16.mxu0 %v2203
      %2382 = vmatpush1.bf16.msra.mxu0 %v2202
      %2383 = vmatprep.subr.bf16.mxu0 %v2211
      %2384 = vmatpush1.bf16.msra.mxu0 %v2210
      %2385 = vmatprep.subr.bf16.mxu0 %v2219
      %2386 = vmatpush1.bf16.msra.mxu0 %v2218
      %2387 = vmatprep.subr.bf16.mxu0 %v2227
      %2388 = vmatpush1.bf16.msra.mxu0 %v2226
      %2389 = vmatprep.mubr.bf16.mxu0 %v1721
      %2390 = vmatmul.mubr.bf16.gmra.mrb[0].mxu0 %v1720
      %v2391 = vpop.f32.mrb[0].mxu0
      %v2392 = vadd.f32 %v2351, %v2391
      %v2393 = vpop.f32.mrb[0].mxu0
      %v2394 = vadd.f32 %v2353, %v2393
      %v2395 = vpop.f32.mrb[0].mxu0
      %v2396 = vpop.f32.mrb[0].mxu0
      %2397 = vdwg.mxu0
      %2398 = vmatprep.subr.bf16.mxu0 %v1725
      %2399 = vmatpush1.bf16.msra.mxu0 %v1724
      %2400 = vmatprep.subr.bf16.mxu0 %v1733
      %2401 = vmatpush1.bf16.msra.mxu0 %v1732
      %2402 = vmatprep.subr.bf16.mxu0 %v1741
      %2403 = vmatpush1.bf16.msra.mxu0 %v1740
      %2404 = vmatprep.subr.bf16.mxu0 %v1749
      %2405 = vmatpush1.bf16.msra.mxu0 %v1748
      %2406 = vmatprep.subr.bf16.mxu0 %v1757
      %2407 = vmatpush1.bf16.msra.mxu0 %v1756
      %2408 = vmatprep.subr.bf16.mxu0 %v1765
      %2409 = vmatpush1.bf16.msra.mxu0 %v1764
      %2410 = vmatprep.subr.bf16.mxu0 %v1773
      %2411 = vmatpush1.bf16.msra.mxu0 %v1772
      %2412 = vmatprep.subr.bf16.mxu0 %v1781
      %2413 = vmatpush1.bf16.msra.mxu0 %v1780
      %2414 = vmatprep.subr.bf16.mxu0 %v1789
      %2415 = vmatpush1.bf16.msra.mxu0 %v1788
      %2416 = vmatprep.subr.bf16.mxu0 %v1797
      %2417 = vmatpush1.bf16.msra.mxu0 %v1796
      %2418 = vmatprep.subr.bf16.mxu0 %v1805
      %2419 = vmatpush1.bf16.msra.mxu0 %v1804
      %2420 = vmatprep.subr.bf16.mxu0 %v1813
      %2421 = vmatpush1.bf16.msra.mxu0 %v1812
      %2422 = vmatprep.subr.bf16.mxu0 %v1821
      %2423 = vmatpush1.bf16.msra.mxu0 %v1820
      %2424 = vmatprep.subr.bf16.mxu0 %v1829
      %2425 = vmatpush1.bf16.msra.mxu0 %v1828
      %2426 = vmatprep.subr.bf16.mxu0 %v1837
      %2427 = vmatpush1.bf16.msra.mxu0 %v1836
      %2428 = vmatprep.subr.bf16.mxu0 %v1845
      %2429 = vmatpush1.bf16.msra.mxu0 %v1844
      %2430 = vmatprep.mubr.bf16.mxu0 %v1715
      %2431 = vmatmul.mubr.bf16.gmra.mrb[0].mxu0 %v1714
      %v2432 = vpop.f32.mrb[0].mxu0
      %v2433 = vadd.f32 0.0, %v2432
      %v2434 = vpop.f32.mrb[0].mxu0
      %v2435 = vadd.f32 0.0, %v2434
      %v2436 = vpop.f32.mrb[0].mxu0
      %v2437 = vpop.f32.mrb[0].mxu0
      %2438 = vdwg.mxu0
      %2439 = vmatprep.subr.bf16.mxu0 %v1853
      %2440 = vmatpush1.bf16.msra.mxu0 %v1852
      %2441 = vmatprep.subr.bf16.mxu0 %v1861
      %2442 = vmatpush1.bf16.msra.mxu0 %v1860
      %2443 = vmatprep.subr.bf16.mxu0 %v1869
      %2444 = vmatpush1.bf16.msra.mxu0 %v1868
      %2445 = vmatprep.subr.bf16.mxu0 %v1877
      %2446 = vmatpush1.bf16.msra.mxu0 %v1876
      %2447 = vmatprep.subr.bf16.mxu0 %v1885
      %2448 = vmatpush1.bf16.msra.mxu0 %v1884
      %2449 = vmatprep.subr.bf16.mxu0 %v1893
      %2450 = vmatpush1.bf16.msra.mxu0 %v1892
      %2451 = vmatprep.subr.bf16.mxu0 %v1901
      %2452 = vmatpush1.bf16.msra.mxu0 %v1900
      %2453 = vmatprep.subr.bf16.mxu0 %v1909
      %2454 = vmatpush1.bf16.msra.mxu0 %v1908
      %2455 = vmatprep.subr.bf16.mxu0 %v1917
      %2456 = vmatpush1.bf16.msra.mxu0 %v1916
      %2457 = vmatprep.subr.bf16.mxu0 %v1925
      %2458 = vmatpush1.bf16.msra.mxu0 %v1924
      %2459 = vmatprep.subr.bf16.mxu0 %v1933
      %2460 = vmatpush1.bf16.msra.mxu0 %v1932
      %2461 = vmatprep.subr.bf16.mxu0 %v1941
      %2462 = vmatpush1.bf16.msra.mxu0 %v1940
      %2463 = vmatprep.subr.bf16.mxu0 %v1949
      %2464 = vmatpush1.bf16.msra.mxu0 %v1948
      %2465 = vmatprep.subr.bf16.mxu0 %v1957
      %2466 = vmatpush1.bf16.msra.mxu0 %v1956
      %2467 = vmatprep.subr.bf16.mxu0 %v1965
      %2468 = vmatpush1.bf16.msra.mxu0 %v1964
      %2469 = vmatprep.subr.bf16.mxu0 %v1973
      %2470 = vmatpush1.bf16.msra.mxu0 %v1972
      %2471 = vmatprep.mubr.bf16.mxu0 %v1717
      %2472 = vmatmul.mubr.bf16.gmra.mrb[0].mxu0 %v1716
      %v2473 = vpop.f32.mrb[0].mxu0
      %v2474 = vadd.f32 %v2433, %v2473
      %v2475 = vpop.f32.mrb[0].mxu0
      %v2476 = vadd.f32 %v2435, %v2475
      %v2477 = vpop.f32.mrb[0].mxu0
      %v2478 = vpop.f32.mrb[0].mxu0
      %2479 = vdwg.mxu0
      %2480 = vmatprep.subr.bf16.mxu0 %v1981
      %2481 = vmatpush1.bf16.msra.mxu0 %v1980
      %2482 = vmatprep.subr.bf16.mxu0 %v1989
      %2483 = vmatpush1.bf16.msra.mxu0 %v1988
      %2484 = vmatprep.subr.bf16.mxu0 %v1997
      %2485 = vmatpush1.bf16.msra.mxu0 %v1996
      %2486 = vmatprep.subr.bf16.mxu0 %v2005
      %2487 = vmatpush1.bf16.msra.mxu0 %v2004
      %2488 = vmatprep.subr.bf16.mxu0 %v2013
      %2489 = vmatpush1.bf16.msra.mxu0 %v2012
      %2490 = vmatprep.subr.bf16.mxu0 %v2021
      %2491 = vmatpush1.bf16.msra.mxu0 %v2020
      %2492 = vmatprep.subr.bf16.mxu0 %v2029
      %2493 = vmatpush1.bf16.msra.mxu0 %v2028
      %2494 = vmatprep.subr.bf16.mxu0 %v2037
      %2495 = vmatpush1.bf16.msra.mxu0 %v2036
      %2496 = vmatprep.subr.bf16.mxu0 %v2045
      %2497 = vmatpush1.bf16.msra.mxu0 %v2044
      %2498 = vmatprep.subr.bf16.mxu0 %v2053
      %2499 = vmatpush1.bf16.msra.mxu0 %v2052
      %2500 = vmatprep.subr.bf16.mxu0 %v2061
      %2501 = vmatpush1.bf16.msra.mxu0 %v2060
      %2502 = vmatprep.subr.bf16.mxu0 %v2069
      %2503 = vmatpush1.bf16.msra.mxu0 %v2068
      %2504 = vmatprep.subr.bf16.mxu0 %v2077
      %2505 = vmatpush1.bf16.msra.mxu0 %v2076
      %2506 = vmatprep.subr.bf16.mxu0 %v2085
      %2507 = vmatpush1.bf16.msra.mxu0 %v2084
      %2508 = vmatprep.subr.bf16.mxu0 %v2093
      %2509 = vmatpush1.bf16.msra.mxu0 %v2092
      %2510 = vmatprep.subr.bf16.mxu0 %v2101
      %2511 = vmatpush1.bf16.msra.mxu0 %v2100
      %2512 = vmatprep.mubr.bf16.mxu0 %v1719
      %2513 = vmatmul.mubr.bf16.gmra.mrb[0].mxu0 %v1718
      %v2514 = vpop.f32.mrb[0].mxu0
      %v2515 = vadd.f32 %v2474, %v2514
      %v2516 = vpop.f32.mrb[0].mxu0
      %v2517 = vadd.f32 %v2476, %v2516
      %v2518 = vpop.f32.mrb[0].mxu0
      %v2519 = vpop.f32.mrb[0].mxu0
      %2520 = vdwg.mxu0
      %2521 = vmatprep.subr.bf16.mxu0 %v2109
      %2522 = vmatpush1.bf16.msra.mxu0 %v2108
      %2523 = vmatprep.subr.bf16.mxu0 %v2117
      %2524 = vmatpush1.bf16.msra.mxu0 %v2116
      %2525 = vmatprep.subr.bf16.mxu0 %v2125
      %2526 = vmatpush1.bf16.msra.mxu0 %v2124
      %2527 = vmatprep.subr.bf16.mxu0 %v2133
      %2528 = vmatpush1.bf16.msra.mxu0 %v2132
      %2529 = vmatprep.subr.bf16.mxu0 %v2141
      %2530 = vmatpush1.bf16.msra.mxu0 %v2140
      %2531 = vmatprep.subr.bf16.mxu0 %v2149
      %2532 = vmatpush1.bf16.msra.mxu0 %v2148
      %2533 = vmatprep.subr.bf16.mxu0 %v2157
      %2534 = vmatpush1.bf16.msra.mxu0 %v2156
      %2535 = vmatprep.subr.bf16.mxu0 %v2165
      %2536 = vmatpush1.bf16.msra.mxu0 %v2164
      %2537 = vmatprep.subr.bf16.mxu0 %v2173
      %2538 = vmatpush1.bf16.msra.mxu0 %v2172
      %2539 = vmatprep.subr.bf16.mxu0 %v2181
      %2540 = vmatpush1.bf16.msra.mxu0 %v2180
      %2541 = vmatprep.subr.bf16.mxu0 %v2189
      %2542 = vmatpush1.bf16.msra.mxu0 %v2188
      %2543 = vmatprep.subr.bf16.mxu0 %v2197
      %2544 = vmatpush1.bf16.msra.mxu0 %v2196
      %2545 = vmatprep.subr.bf16.mxu0 %v2205
      %2546 = vmatpush1.bf16.msra.mxu0 %v2204
      %2547 = vmatprep.subr.bf16.mxu0 %v2213
      %2548 = vmatpush1.bf16.msra.mxu0 %v2212
      %2549 = vmatprep.subr.bf16.mxu0 %v2221
      %2550 = vmatpush1.bf16.msra.mxu0 %v2220
      %2551 = vmatprep.subr.bf16.mxu0 %v2229
      %2552 = vmatpush1.bf16.msra.mxu0 %v2228
      %2553 = vmatprep.mubr.bf16.mxu0 %v1721
      %2554 = vmatmul.mubr.bf16.gmra.mrb[0].mxu0 %v1720
      %v2555 = vpop.f32.mrb[0].mxu0
      %v2556 = vadd.f32 %v2515, %v2555
      %v2557 = vpop.f32.mrb[0].mxu0
      %v2558 = vadd.f32 %v2517, %v2557
      %v2559 = vpop.f32.mrb[0].mxu0
      %v2560 = vpop.f32.mrb[0].mxu0
      %2561 = vdwg.mxu0
      %2562 = vmatprep.subr.bf16.mxu0 %v1727
      %2563 = vmatpush1.bf16.msra.mxu0 %v1726
      %2564 = vmatprep.subr.bf16.mxu0 %v1735
      %2565 = vmatpush1.bf16.msra.mxu0 %v1734
      %2566 = vmatprep.subr.bf16.mxu0 %v1743
      %2567 = vmatpush1.bf16.msra.mxu0 %v1742
      %2568 = vmatprep.subr.bf16.mxu0 %v1751
      %2569 = vmatpush1.bf16.msra.mxu0 %v1750
      %2570 = vmatprep.subr.bf16.mxu0 %v1759
      %2571 = vmatpush1.bf16.msra.mxu0 %v1758
      %2572 = vmatprep.subr.bf16.mxu0 %v1767
      %2573 = vmatpush1.bf16.msra.mxu0 %v1766
      %2574 = vmatprep.subr.bf16.mxu0 %v1775
      %2575 = vmatpush1.bf16.msra.mxu0 %v1774
      %2576 = vmatprep.subr.bf16.mxu0 %v1783
      %2577 = vmatpush1.bf16.msra.mxu0 %v1782
      %2578 = vmatprep.subr.bf16.mxu0 %v1791
      %2579 = vmatpush1.bf16.msra.mxu0 %v1790
      %2580 = vmatprep.subr.bf16.mxu0 %v1799
      %2581 = vmatpush1.bf16.msra.mxu0 %v1798
      %2582 = vmatprep.subr.bf16.mxu0 %v1807
      %2583 = vmatpush1.bf16.msra.mxu0 %v1806
      %2584 = vmatprep.subr.bf16.mxu0 %v1815
      %2585 = vmatpush1.bf16.msra.mxu0 %v1814
      %2586 = vmatprep.subr.bf16.mxu0 %v1823
      %2587 = vmatpush1.bf16.msra.mxu0 %v1822
      %2588 = vmatprep.subr.bf16.mxu0 %v1831
      %2589 = vmatpush1.bf16.msra.mxu0 %v1830
      %2590 = vmatprep.subr.bf16.mxu0 %v1839
      %2591 = vmatpush1.bf16.msra.mxu0 %v1838
      %2592 = vmatprep.subr.bf16.mxu0 %v1847
      %2593 = vmatpush1.bf16.msra.mxu0 %v1846
      %2594 = vmatprep.mubr.bf16.mxu0 %v1715
      %2595 = vmatmul.mubr.bf16.gmra.mrb[0].mxu0 %v1714
      %v2596 = vpop.f32.mrb[0].mxu0
      %v2597 = vadd.f32 0.0, %v2596
      %v2598 = vpop.f32.mrb[0].mxu0
      %v2599 = vadd.f32 0.0, %v2598
      %v2600 = vpop.f32.mrb[0].mxu0
      %v2601 = vpop.f32.mrb[0].mxu0
      %2602 = vdwg.mxu0
      %2603 = vmatprep.subr.bf16.mxu0 %v1855
      %2604 = vmatpush1.bf16.msra.mxu0 %v1854
      %2605 = vmatprep.subr.bf16.mxu0 %v1863
      %2606 = vmatpush1.bf16.msra.mxu0 %v1862
      %2607 = vmatprep.subr.bf16.mxu0 %v1871
      %2608 = vmatpush1.bf16.msra.mxu0 %v1870
      %2609 = vmatprep.subr.bf16.mxu0 %v1879
      %2610 = vmatpush1.bf16.msra.mxu0 %v1878
      %2611 = vmatprep.subr.bf16.mxu0 %v1887
      %2612 = vmatpush1.bf16.msra.mxu0 %v1886
      %2613 = vmatprep.subr.bf16.mxu0 %v1895
      %2614 = vmatpush1.bf16.msra.mxu0 %v1894
      %2615 = vmatprep.subr.bf16.mxu0 %v1903
      %2616 = vmatpush1.bf16.msra.mxu0 %v1902
      %2617 = vmatprep.subr.bf16.mxu0 %v1911
      %2618 = vmatpush1.bf16.msra.mxu0 %v1910
      %2619 = vmatprep.subr.bf16.mxu0 %v1919
      %2620 = vmatpush1.bf16.msra.mxu0 %v1918
      %2621 = vmatprep.subr.bf16.mxu0 %v1927
      %2622 = vmatpush1.bf16.msra.mxu0 %v1926
      %2623 = vmatprep.subr.bf16.mxu0 %v1935
      %2624 = vmatpush1.bf16.msra.mxu0 %v1934
      %2625 = vmatprep.subr.bf16.mxu0 %v1943
      %2626 = vmatpush1.bf16.msra.mxu0 %v1942
      %2627 = vmatprep.subr.bf16.mxu0 %v1951
      %2628 = vmatpush1.bf16.msra.mxu0 %v1950
      %2629 = vmatprep.subr.bf16.mxu0 %v1959
      %2630 = vmatpush1.bf16.msra.mxu0 %v1958
      %2631 = vmatprep.subr.bf16.mxu0 %v1967
      %2632 = vmatpush1.bf16.msra.mxu0 %v1966
      %2633 = vmatprep.subr.bf16.mxu0 %v1975
      %2634 = vmatpush1.bf16.msra.mxu0 %v1974
      %2635 = vmatprep.mubr.bf16.mxu0 %v1717
      %2636 = vmatmul.mubr.bf16.gmra.mrb[0].mxu0 %v1716
      %v2637 = vpop.f32.mrb[0].mxu0
      %v2638 = vadd.f32 %v2597, %v2637
      %v2639 = vpop.f32.mrb[0].mxu0
      %v2640 = vadd.f32 %v2599, %v2639
      %v2641 = vpop.f32.mrb[0].mxu0
      %v2642 = vpop.f32.mrb[0].mxu0
      %2643 = vdwg.mxu0
      %2644 = vmatprep.subr.bf16.mxu0 %v1983
      %2645 = vmatpush1.bf16.msra.mxu0 %v1982
      %2646 = vmatprep.subr.bf16.mxu0 %v1991
      %2647 = vmatpush1.bf16.msra.mxu0 %v1990
      %2648 = vmatprep.subr.bf16.mxu0 %v1999
      %2649 = vmatpush1.bf16.msra.mxu0 %v1998
      %2650 = vmatprep.subr.bf16.mxu0 %v2007
      %2651 = vmatpush1.bf16.msra.mxu0 %v2006
      %2652 = vmatprep.subr.bf16.mxu0 %v2015
      %2653 = vmatpush1.bf16.msra.mxu0 %v2014
      %2654 = vmatprep.subr.bf16.mxu0 %v2023
      %2655 = vmatpush1.bf16.msra.mxu0 %v2022
      %2656 = vmatprep.subr.bf16.mxu0 %v2031
      %2657 = vmatpush1.bf16.msra.mxu0 %v2030
      %2658 = vmatprep.subr.bf16.mxu0 %v2039
      %2659 = vmatpush1.bf16.msra.mxu0 %v2038
      %2660 = vmatprep.subr.bf16.mxu0 %v2047
      %2661 = vmatpush1.bf16.msra.mxu0 %v2046
      %2662 = vmatprep.subr.bf16.mxu0 %v2055
      %2663 = vmatpush1.bf16.msra.mxu0 %v2054
      %2664 = vmatprep.subr.bf16.mxu0 %v2063
      %2665 = vmatpush1.bf16.msra.mxu0 %v2062
      %2666 = vmatprep.subr.bf16.mxu0 %v2071
      %2667 = vmatpush1.bf16.msra.mxu0 %v2070
      %2668 = vmatprep.subr.bf16.mxu0 %v2079
      %2669 = vmatpush1.bf16.msra.mxu0 %v2078
      %2670 = vmatprep.subr.bf16.mxu0 %v2087
      %2671 = vmatpush1.bf16.msra.mxu0 %v2086
      %2672 = vmatprep.subr.bf16.mxu0 %v2095
      %2673 = vmatpush1.bf16.msra.mxu0 %v2094
      %2674 = vmatprep.subr.bf16.mxu0 %v2103
      %2675 = vmatpush1.bf16.msra.mxu0 %v2102
      %2676 = vmatprep.mubr.bf16.mxu0 %v1719
      %2677 = vmatmul.mubr.bf16.gmra.mrb[0].mxu0 %v1718
      %v2678 = vpop.f32.mrb[0].mxu0
      %v2679 = vadd.f32 %v2638, %v2678
      %v2680 = vpop.f32.mrb[0].mxu0
      %v2681 = vadd.f32 %v2640, %v2680
      %v2682 = vpop.f32.mrb[0].mxu0
      %v2683 = vpop.f32.mrb[0].mxu0
      %2684 = vdwg.mxu0
      %2685 = vmatprep.subr.bf16.mxu0 %v2111
      %2686 = vmatpush1.bf16.msra.mxu0 %v2110
      %2687 = vmatprep.subr.bf16.mxu0 %v2119
      %2688 = vmatpush1.bf16.msra.mxu0 %v2118
      %2689 = vmatprep.subr.bf16.mxu0 %v2127
      %2690 = vmatpush1.bf16.msra.mxu0 %v2126
      %2691 = vmatprep.subr.bf16.mxu0 %v2135
      %2692 = vmatpush1.bf16.msra.mxu0 %v2134
      %2693 = vmatprep.subr.bf16.mxu0 %v2143
      %2694 = vmatpush1.bf16.msra.mxu0 %v2142
      %2695 = vmatprep.subr.bf16.mxu0 %v2151
      %2696 = vmatpush1.bf16.msra.mxu0 %v2150
      %2697 = vmatprep.subr.bf16.mxu0 %v2159
      %2698 = vmatpush1.bf16.msra.mxu0 %v2158
      %2699 = vmatprep.subr.bf16.mxu0 %v2167
      %2700 = vmatpush1.bf16.msra.mxu0 %v2166
      %2701 = vmatprep.subr.bf16.mxu0 %v2175
      %2702 = vmatpush1.bf16.msra.mxu0 %v2174
      %2703 = vmatprep.subr.bf16.mxu0 %v2183
      %2704 = vmatpush1.bf16.msra.mxu0 %v2182
      %2705 = vmatprep.subr.bf16.mxu0 %v2191
      %2706 = vmatpush1.bf16.msra.mxu0 %v2190
      %2707 = vmatprep.subr.bf16.mxu0 %v2199
      %2708 = vmatpush1.bf16.msra.mxu0 %v2198
      %2709 = vmatprep.subr.bf16.mxu0 %v2207
      %2710 = vmatpush1.bf16.msra.mxu0 %v2206
      %2711 = vmatprep.subr.bf16.mxu0 %v2215
      %2712 = vmatpush1.bf16.msra.mxu0 %v2214
      %2713 = vmatprep.subr.bf16.mxu0 %v2223
      %2714 = vmatpush1.bf16.msra.mxu0 %v2222
      %2715 = vmatprep.subr.bf16.mxu0 %v2231
      %2716 = vmatpush1.bf16.msra.mxu0 %v2230
      %2717 = vmatprep.mubr.bf16.mxu0 %v1721
      %2718 = vmatmul.mubr.bf16.gmra.mrb[0].mxu0 %v1720
      %v2719 = vpop.f32.mrb[0].mxu0
      %v2720 = vadd.f32 %v2679, %v2719
      %v2721 = vpop.f32.mrb[0].mxu0
      %v2722 = vadd.f32 %v2681, %v2721
      %v2723 = vpop.f32.mrb[0].mxu0
      %v2724 = vpop.f32.mrb[0].mxu0
      %2725 = vdwg.mxu0
      %2726 = vmatprep.subr.bf16.mxu0 %v1729
      %2727 = vmatpush1.bf16.msra.mxu0 %v1728
      %2728 = vmatprep.subr.bf16.mxu0 %v1737
      %2729 = vmatpush1.bf16.msra.mxu0 %v1736
      %2730 = vmatprep.subr.bf16.mxu0 %v1745
      %2731 = vmatpush1.bf16.msra.mxu0 %v1744
      %2732 = vmatprep.subr.bf16.mxu0 %v1753
      %2733 = vmatpush1.bf16.msra.mxu0 %v1752
      %2734 = vmatprep.subr.bf16.mxu0 %v1761
      %2735 = vmatpush1.bf16.msra.mxu0 %v1760
      %2736 = vmatprep.subr.bf16.mxu0 %v1769
      %2737 = vmatpush1.bf16.msra.mxu0 %v1768
      %2738 = vmatprep.subr.bf16.mxu0 %v1777
      %2739 = vmatpush1.bf16.msra.mxu0 %v1776
      %2740 = vmatprep.subr.bf16.mxu0 %v1785
      %2741 = vmatpush1.bf16.msra.mxu0 %v1784
      %2742 = vmatprep.subr.bf16.mxu0 %v1793
      %2743 = vmatpush1.bf16.msra.mxu0 %v1792
      %2744 = vmatprep.subr.bf16.mxu0 %v1801
      %2745 = vmatpush1.bf16.msra.mxu0 %v1800
      %2746 = vmatprep.subr.bf16.mxu0 %v1809
      %2747 = vmatpush1.bf16.msra.mxu0 %v1808
      %2748 = vmatprep.subr.bf16.mxu0 %v1817
      %2749 = vmatpush1.bf16.msra.mxu0 %v1816
      %2750 = vmatprep.subr.bf16.mxu0 %v1825
      %2751 = vmatpush1.bf16.msra.mxu0 %v1824
      %2752 = vmatprep.subr.bf16.mxu0 %v1833
      %2753 = vmatpush1.bf16.msra.mxu0 %v1832
      %2754 = vmatprep.subr.bf16.mxu0 %v1841
      %2755 = vmatpush1.bf16.msra.mxu0 %v1840
      %2756 = vmatprep.subr.bf16.mxu0 %v1849
      %2757 = vmatpush1.bf16.msra.mxu0 %v1848
      %2758 = vmatprep.mubr.bf16.mxu0 %v1715
      %2759 = vmatmul.mubr.bf16.gmra.mrb[0].mxu0 %v1714
      %v2760 = vpop.f32.mrb[0].mxu0
      %v2761 = vadd.f32 0.0, %v2760
      %v2762 = vpop.f32.mrb[0].mxu0
      %v2763 = vadd.f32 0.0, %v2762
      %v2764 = vpop.f32.mrb[0].mxu0
      %v2765 = vpop.f32.mrb[0].mxu0
      %2766 = vdwg.mxu0
      %2767 = vmatprep.subr.bf16.mxu0 %v1857
      %2768 = vmatpush1.bf16.msra.mxu0 %v1856
      %2769 = vmatprep.subr.bf16.mxu0 %v1865
      %2770 = vmatpush1.bf16.msra.mxu0 %v1864
      %2771 = vmatprep.subr.bf16.mxu0 %v1873
      %2772 = vmatpush1.bf16.msra.mxu0 %v1872
      %2773 = vmatprep.subr.bf16.mxu0 %v1881
      %2774 = vmatpush1.bf16.msra.mxu0 %v1880
      %2775 = vmatprep.subr.bf16.mxu0 %v1889
      %2776 = vmatpush1.bf16.msra.mxu0 %v1888
      %2777 = vmatprep.subr.bf16.mxu0 %v1897
      %2778 = vmatpush1.bf16.msra.mxu0 %v1896
      %2779 = vmatprep.subr.bf16.mxu0 %v1905
      %2780 = vmatpush1.bf16.msra.mxu0 %v1904
      %2781 = vmatprep.subr.bf16.mxu0 %v1913
      %2782 = vmatpush1.bf16.msra.mxu0 %v1912
      %2783 = vmatprep.subr.bf16.mxu0 %v1921
      %2784 = vmatpush1.bf16.msra.mxu0 %v1920
      %2785 = vmatprep.subr.bf16.mxu0 %v1929
      %2786 = vmatpush1.bf16.msra.mxu0 %v1928
      %2787 = vmatprep.subr.bf16.mxu0 %v1937
      %2788 = vmatpush1.bf16.msra.mxu0 %v1936
      %2789 = vmatprep.subr.bf16.mxu0 %v1945
      %2790 = vmatpush1.bf16.msra.mxu0 %v1944
      %2791 = vmatprep.subr.bf16.mxu0 %v1953
      %2792 = vmatpush1.bf16.msra.mxu0 %v1952
      %2793 = vmatprep.subr.bf16.mxu0 %v1961
      %2794 = vmatpush1.bf16.msra.mxu0 %v1960
      %2795 = vmatprep.subr.bf16.mxu0 %v1969
      %2796 = vmatpush1.bf16.msra.mxu0 %v1968
      %2797 = vmatprep.subr.bf16.mxu0 %v1977
      %2798 = vmatpush1.bf16.msra.mxu0 %v1976
      %2799 = vmatprep.mubr.bf16.mxu0 %v1717
      %2800 = vmatmul.mubr.bf16.gmra.mrb[0].mxu0 %v1716
      %v2801 = vpop.f32.mrb[0].mxu0
      %v2802 = vadd.f32 %v2761, %v2801
      %v2803 = vpop.f32.mrb[0].mxu0
      %v2804 = vadd.f32 %v2763, %v2803
      %v2805 = vpop.f32.mrb[0].mxu0
      %v2806 = vpop.f32.mrb[0].mxu0
      %2807 = vdwg.mxu0
      %2808 = vmatprep.subr.bf16.mxu0 %v1985
      %2809 = vmatpush1.bf16.msra.mxu0 %v1984
      %2810 = vmatprep.subr.bf16.mxu0 %v1993
      %2811 = vmatpush1.bf16.msra.mxu0 %v1992
      %2812 = vmatprep.subr.bf16.mxu0 %v2001
      %2813 = vmatpush1.bf16.msra.mxu0 %v2000
      %2814 = vmatprep.subr.bf16.mxu0 %v2009
      %2815 = vmatpush1.bf16.msra.mxu0 %v2008
      %2816 = vmatprep.subr.bf16.mxu0 %v2017
      %2817 = vmatpush1.bf16.msra.mxu0 %v2016
      %2818 = vmatprep.subr.bf16.mxu0 %v2025
      %2819 = vmatpush1.bf16.msra.mxu0 %v2024
      %2820 = vmatprep.subr.bf16.mxu0 %v2033
      %2821 = vmatpush1.bf16.msra.mxu0 %v2032
      %2822 = vmatprep.subr.bf16.mxu0 %v2041
      %2823 = vmatpush1.bf16.msra.mxu0 %v2040
      %2824 = vmatprep.subr.bf16.mxu0 %v2049
      %2825 = vmatpush1.bf16.msra.mxu0 %v2048
      %2826 = vmatprep.subr.bf16.mxu0 %v2057
      %2827 = vmatpush1.bf16.msra.mxu0 %v2056
      %2828 = vmatprep.subr.bf16.mxu0 %v2065
      %2829 = vmatpush1.bf16.msra.mxu0 %v2064
      %2830 = vmatprep.subr.bf16.mxu0 %v2073
      %2831 = vmatpush1.bf16.msra.mxu0 %v2072
      %2832 = vmatprep.subr.bf16.mxu0 %v2081
      %2833 = vmatpush1.bf16.msra.mxu0 %v2080
      %2834 = vmatprep.subr.bf16.mxu0 %v2089
      %2835 = vmatpush1.bf16.msra.mxu0 %v2088
      %2836 = vmatprep.subr.bf16.mxu0 %v2097
      %2837 = vmatpush1.bf16.msra.mxu0 %v2096
      %2838 = vmatprep.subr.bf16.mxu0 %v2105
      %2839 = vmatpush1.bf16.msra.mxu0 %v2104
      %2840 = vmatprep.mubr.bf16.mxu0 %v1719
      %2841 = vmatmul.mubr.bf16.gmra.mrb[0].mxu0 %v1718
      %v2842 = vpop.f32.mrb[0].mxu0
      %v2843 = vadd.f32 %v2802, %v2842
      %v2844 = vpop.f32.mrb[0].mxu0
      %v2845 = vadd.f32 %v2804, %v2844
      %v2846 = vpop.f32.mrb[0].mxu0
      %v2847 = vpop.f32.mrb[0].mxu0
      %2848 = vdwg.mxu0
      %2849 = vmatprep.subr.bf16.mxu0 %v2113
      %2850 = vmatpush1.bf16.msra.mxu0 %v2112
      %2851 = vmatprep.subr.bf16.mxu0 %v2121
      %2852 = vmatpush1.bf16.msra.mxu0 %v2120
      %2853 = vmatprep.subr.bf16.mxu0 %v2129
      %2854 = vmatpush1.bf16.msra.mxu0 %v2128
      %2855 = vmatprep.subr.bf16.mxu0 %v2137
      %2856 = vmatpush1.bf16.msra.mxu0 %v2136
      %2857 = vmatprep.subr.bf16.mxu0 %v2145
      %2858 = vmatpush1.bf16.msra.mxu0 %v2144
      %2859 = vmatprep.subr.bf16.mxu0 %v2153
      %2860 = vmatpush1.bf16.msra.mxu0 %v2152
      %2861 = vmatprep.subr.bf16.mxu0 %v2161
      %2862 = vmatpush1.bf16.msra.mxu0 %v2160
      %2863 = vmatprep.subr.bf16.mxu0 %v2169
      %2864 = vmatpush1.bf16.msra.mxu0 %v2168
      %2865 = vmatprep.subr.bf16.mxu0 %v2177
      %2866 = vmatpush1.bf16.msra.mxu0 %v2176
      %2867 = vmatprep.subr.bf16.mxu0 %v2185
      %2868 = vmatpush1.bf16.msra.mxu0 %v2184
      %2869 = vmatprep.subr.bf16.mxu0 %v2193
      %2870 = vmatpush1.bf16.msra.mxu0 %v2192
      %2871 = vmatprep.subr.bf16.mxu0 %v2201
      %2872 = vmatpush1.bf16.msra.mxu0 %v2200
      %2873 = vmatprep.subr.bf16.mxu0 %v2209
      %2874 = vmatpush1.bf16.msra.mxu0 %v2208
      %2875 = vmatprep.subr.bf16.mxu0 %v2217
      %2876 = vmatpush1.bf16.msra.mxu0 %v2216
      %2877 = vmatprep.subr.bf16.mxu0 %v2225
      %2878 = vmatpush1.bf16.msra.mxu0 %v2224
      %2879 = vmatprep.subr.bf16.mxu0 %v2233
      %2880 = vmatpush1.bf16.msra.mxu0 %v2232
      %2881 = vmatprep.mubr.bf16.mxu0 %v1721
      %2882 = vmatmul.mubr.bf16.gmra.mrb[0].mxu0 %v1720
      %v2883 = vpop.f32.mrb[0].mxu0
      %v2884 = vadd.f32 %v2843, %v2883
      %v2885 = vpop.f32.mrb[0].mxu0
      %v2886 = vadd.f32 %v2845, %v2885
      %v2887 = vpop.f32.mrb[0].mxu0
      %v2888 = vpop.f32.mrb[0].mxu0
      %2889 = vdwg.mxu0
      %v2890 = vld [vmem:[#allocation11] ss:$4 sm:$0xff]
      %v2892 = vlaneseq
      %v2893 = vshrl.u32 %v2892, 7
      %v2894 = vsub.s32 0, %v2893
      %v2895 = vrot.slane %v2890, %v2894
      %v2896 = vlaneseq
      %v2897 = vshrl.u32 %v2896, 7
      %v2898 = vsub.s32 1, %v2897
      %v2899 = vrot.slane %v2890, %v2898
      %v2900 = vlaneseq
      %v2901 = vshrl.u32 %v2900, 7
      %v2902 = vsub.s32 2, %v2901
      %v2903 = vrot.slane %v2890, %v2902
      %v2904 = vlaneseq
      %v2905 = vshrl.u32 %v2904, 7
      %v2906 = vsub.s32 3, %v2905
      %v2907 = vrot.slane %v2890, %v2906
      %v2908 = vlaneseq
      %v2909 = vshrl.u32 %v2908, 7
      %v2910 = vsub.s32 4, %v2909
      %v2911 = vrot.slane %v2890, %v2910
      %v2912 = vlaneseq
      %v2913 = vshrl.u32 %v2912, 7
      %v2914 = vsub.s32 5, %v2913
      %v2915 = vrot.slane %v2890, %v2914
      %v2916 = vlaneseq
      %v2917 = vshrl.u32 %v2916, 7
      %v2918 = vsub.s32 6, %v2917
      %v2919 = vrot.slane %v2890, %v2918
      %v2920 = vlaneseq
      %v2921 = vshrl.u32 %v2920, 7
      %v2922 = vsub.s32 7, %v2921
      %v2923 = vrot.slane %v2890, %v2922
      %v2932 = vmul.f32 %v2392, %v2895
      %v2933 = vmul.f32 %v2394, %v2899
      %v2934 = vmul.f32 %v2556, %v2903
      %v2935 = vmul.f32 %v2558, %v2907
      %v2936 = vmul.f32 %v2720, %v2911
      %v2937 = vmul.f32 %v2722, %v2915
      %v2938 = vmul.f32 %v2884, %v2919
      %v2939 = vmul.f32 %v2886, %v2923
      %v2940 = vld [vmem:[#allocation12] ss:$4 sm:$0xff]
      %v2942 = vlaneseq
      %v2943 = vshrl.u32 %v2942, 7
      %v2944 = vsub.s32 0, %v2943
      %v2945 = vrot.slane %v2940, %v2944
      %v2946 = vlaneseq
      %v2947 = vshrl.u32 %v2946, 7
      %v2948 = vsub.s32 1, %v2947
      %v2949 = vrot.slane %v2940, %v2948
      %v2950 = vlaneseq
      %v2951 = vshrl.u32 %v2950, 7
      %v2952 = vsub.s32 2, %v2951
      %v2953 = vrot.slane %v2940, %v2952
      %v2954 = vlaneseq
      %v2955 = vshrl.u32 %v2954, 7
      %v2956 = vsub.s32 3, %v2955
      %v2957 = vrot.slane %v2940, %v2956
      %v2958 = vlaneseq
      %v2959 = vshrl.u32 %v2958, 7
      %v2960 = vsub.s32 4, %v2959
      %v2961 = vrot.slane %v2940, %v2960
      %v2962 = vlaneseq
      %v2963 = vshrl.u32 %v2962, 7
      %v2964 = vsub.s32 5, %v2963
      %v2965 = vrot.slane %v2940, %v2964
      %v2966 = vlaneseq
      %v2967 = vshrl.u32 %v2966, 7
      %v2968 = vsub.s32 6, %v2967
      %v2969 = vrot.slane %v2940, %v2968
      %v2970 = vlaneseq
      %v2971 = vshrl.u32 %v2970, 7
      %v2972 = vsub.s32 7, %v2971
      %v2973 = vrot.slane %v2940, %v2972
      %v2982 = vadd.f32 %v2932, %v2945
      %v2983 = vadd.f32 %v2933, %v2949
      %v2984 = vadd.f32 %v2934, %v2953
      %v2985 = vadd.f32 %v2935, %v2957
      %v2986 = vadd.f32 %v2936, %v2961
      %v2987 = vadd.f32 %v2937, %v2965
      %v2988 = vadd.f32 %v2938, %v2969
      %v2989 = vadd.f32 %v2939, %v2973
      %v2990 = vmax.f32 %v2982, 0.0
      %v2991 = vmax.f32 %v2983, 0.0
      %v2992 = vmax.f32 %v2984, 0.0
      %v2993 = vmax.f32 %v2985, 0.0
      %v2994 = vmax.f32 %v2986, 0.0
      %v2995 = vmax.f32 %v2987, 0.0
      %v2996 = vmax.f32 %v2988, 0.0
      %v2997 = vmax.f32 %v2989, 0.0
      %v2998 = vpack.c.bf16 %v2990, %v2990
      %v2999 = vpack.c.bf16 %v2991, %v2991
      %v3000 = vpack.c.bf16 %v2992, %v2992
      %v3001 = vpack.c.bf16 %v2993, %v2993
      %v3002 = vpack.c.bf16 %v2994, %v2994
      %v3003 = vpack.c.bf16 %v2995, %v2995
      %v3004 = vpack.c.bf16 %v2996, %v2996
      %v3005 = vpack.c.bf16 %v2997, %v2997
      %s3006 = scalar_lea.vmem [#allocation3], 4096
      %v3007 = vld [vmem:[%s3006] sm:$0xff]
      %v3008 = vld [vmem:[%s3006 + $0x8] sm:$0xff]
      %v3009 = vld [vmem:[%s3006 + $0x10] sm:$0xff]
      %v3010 = vld [vmem:[%s3006 + $0x18] sm:$0xff]
      %v3011 = vld [vmem:[%s3006 + $0x20] sm:$0xff]
      %v3012 = vld [vmem:[%s3006 + $0x28] sm:$0xff]
      %v3013 = vld [vmem:[%s3006 + $0x30] sm:$0xff]
      %v3014 = vld [vmem:[%s3006 + $0x38] sm:$0xff]
      %v3015 = vld [vmem:[%s3006 + $0x40] sm:$0xff]
      %v3016 = vld [vmem:[%s3006 + $0x48] sm:$0xff]
      %v3017 = vld [vmem:[%s3006 + $0x50] sm:$0xff]
      %v3018 = vld [vmem:[%s3006 + $0x58] sm:$0xff]
      %v3019 = vld [vmem:[%s3006 + $0x60] sm:$0xff]
      %v3020 = vld [vmem:[%s3006 + $0x68] sm:$0xff]
      %v3021 = vld [vmem:[%s3006 + $0x70] sm:$0xff]
      %v3022 = vld [vmem:[%s3006 + $0x78] sm:$0xff]
      %v3023 = vld [vmem:[%s3006 + $0x80] sm:$0xff]
      %v3024 = vld [vmem:[%s3006 + $0x88] sm:$0xff]
      %v3025 = vld [vmem:[%s3006 + $0x90] sm:$0xff]
      %v3026 = vld [vmem:[%s3006 + $0x98] sm:$0xff]
      %v3027 = vld [vmem:[%s3006 + $0xa0] sm:$0xff]
      %v3028 = vld [vmem:[%s3006 + $0xa8] sm:$0xff]
      %v3029 = vld [vmem:[%s3006 + $0xb0] sm:$0xff]
      %v3030 = vld [vmem:[%s3006 + $0xb8] sm:$0xff]
      %v3031 = vld [vmem:[%s3006 + $0xc0] sm:$0xff]
      %v3032 = vld [vmem:[%s3006 + $0xc8] sm:$0xff]
      %v3033 = vld [vmem:[%s3006 + $0xd0] sm:$0xff]
      %v3034 = vld [vmem:[%s3006 + $0xd8] sm:$0xff]
      %v3035 = vld [vmem:[%s3006 + $0xe0] sm:$0xff]
      %v3036 = vld [vmem:[%s3006 + $0xe8] sm:$0xff]
      %v3037 = vld [vmem:[%s3006 + $0xf0] sm:$0xff]
      %v3038 = vld [vmem:[%s3006 + $0xf8] sm:$0xff]
      %v3039 = vld [vmem:[%s3006 + $0x100] sm:$0xff]
      %v3040 = vld [vmem:[%s3006 + $0x108] sm:$0xff]
      %v3041 = vld [vmem:[%s3006 + $0x110] sm:$0xff]
      %v3042 = vld [vmem:[%s3006 + $0x118] sm:$0xff]
      %v3043 = vld [vmem:[%s3006 + $0x120] sm:$0xff]
      %v3044 = vld [vmem:[%s3006 + $0x128] sm:$0xff]
      %v3045 = vld [vmem:[%s3006 + $0x130] sm:$0xff]
      %v3046 = vld [vmem:[%s3006 + $0x138] sm:$0xff]
      %v3047 = vld [vmem:[%s3006 + $0x140] sm:$0xff]
      %v3048 = vld [vmem:[%s3006 + $0x148] sm:$0xff]
      %v3049 = vld [vmem:[%s3006 + $0x150] sm:$0xff]
      %v3050 = vld [vmem:[%s3006 + $0x158] sm:$0xff]
      %v3051 = vld [vmem:[%s3006 + $0x160] sm:$0xff]
      %v3052 = vld [vmem:[%s3006 + $0x168] sm:$0xff]
      %v3053 = vld [vmem:[%s3006 + $0x170] sm:$0xff]
      %v3054 = vld [vmem:[%s3006 + $0x178] sm:$0xff]
      %v3055 = vld [vmem:[%s3006 + $0x180] sm:$0xff]
      %v3056 = vld [vmem:[%s3006 + $0x188] sm:$0xff]
      %v3057 = vld [vmem:[%s3006 + $0x190] sm:$0xff]
      %v3058 = vld [vmem:[%s3006 + $0x198] sm:$0xff]
      %v3059 = vld [vmem:[%s3006 + $0x1a0] sm:$0xff]
      %v3060 = vld [vmem:[%s3006 + $0x1a8] sm:$0xff]
      %v3061 = vld [vmem:[%s3006 + $0x1b0] sm:$0xff]
      %v3062 = vld [vmem:[%s3006 + $0x1b8] sm:$0xff]
      %v3063 = vld [vmem:[%s3006 + $0x1c0] sm:$0xff]
      %v3064 = vld [vmem:[%s3006 + $0x1c8] sm:$0xff]
      %v3065 = vld [vmem:[%s3006 + $0x1d0] sm:$0xff]
      %v3066 = vld [vmem:[%s3006 + $0x1d8] sm:$0xff]
      %v3067 = vld [vmem:[%s3006 + $0x1e0] sm:$0xff]
      %v3068 = vld [vmem:[%s3006 + $0x1e8] sm:$0xff]
      %v3069 = vld [vmem:[%s3006 + $0x1f0] sm:$0xff]
      %v3070 = vld [vmem:[%s3006 + $0x1f8] sm:$0xff]
      %v3071 = vld [vmem:[%s3006 + $0x200] sm:$0xff]
      %v3072 = vld [vmem:[%s3006 + $0x208] sm:$0xff]
      %v3073 = vld [vmem:[%s3006 + $0x210] sm:$0xff]
      %v3074 = vld [vmem:[%s3006 + $0x218] sm:$0xff]
      %v3075 = vld [vmem:[%s3006 + $0x220] sm:$0xff]
      %v3076 = vld [vmem:[%s3006 + $0x228] sm:$0xff]
      %v3077 = vld [vmem:[%s3006 + $0x230] sm:$0xff]
      %v3078 = vld [vmem:[%s3006 + $0x238] sm:$0xff]
      %v3079 = vld [vmem:[%s3006 + $0x240] sm:$0xff]
      %v3080 = vld [vmem:[%s3006 + $0x248] sm:$0xff]
      %v3081 = vld [vmem:[%s3006 + $0x250] sm:$0xff]
      %v3082 = vld [vmem:[%s3006 + $0x258] sm:$0xff]
      %v3083 = vld [vmem:[%s3006 + $0x260] sm:$0xff]
      %v3084 = vld [vmem:[%s3006 + $0x268] sm:$0xff]
      %v3085 = vld [vmem:[%s3006 + $0x270] sm:$0xff]
      %v3086 = vld [vmem:[%s3006 + $0x278] sm:$0xff]
      %v3087 = vld [vmem:[%s3006 + $0x280] sm:$0xff]
      %v3088 = vld [vmem:[%s3006 + $0x288] sm:$0xff]
      %v3089 = vld [vmem:[%s3006 + $0x290] sm:$0xff]
      %v3090 = vld [vmem:[%s3006 + $0x298] sm:$0xff]
      %v3091 = vld [vmem:[%s3006 + $0x2a0] sm:$0xff]
      %v3092 = vld [vmem:[%s3006 + $0x2a8] sm:$0xff]
      %v3093 = vld [vmem:[%s3006 + $0x2b0] sm:$0xff]
      %v3094 = vld [vmem:[%s3006 + $0x2b8] sm:$0xff]
      %v3095 = vld [vmem:[%s3006 + $0x2c0] sm:$0xff]
      %v3096 = vld [vmem:[%s3006 + $0x2c8] sm:$0xff]
      %v3097 = vld [vmem:[%s3006 + $0x2d0] sm:$0xff]
      %v3098 = vld [vmem:[%s3006 + $0x2d8] sm:$0xff]
      %v3099 = vld [vmem:[%s3006 + $0x2e0] sm:$0xff]
      %v3100 = vld [vmem:[%s3006 + $0x2e8] sm:$0xff]
      %v3101 = vld [vmem:[%s3006 + $0x2f0] sm:$0xff]
      %v3102 = vld [vmem:[%s3006 + $0x2f8] sm:$0xff]
      %v3103 = vld [vmem:[%s3006 + $0x300] sm:$0xff]
      %v3104 = vld [vmem:[%s3006 + $0x308] sm:$0xff]
      %v3105 = vld [vmem:[%s3006 + $0x310] sm:$0xff]
      %v3106 = vld [vmem:[%s3006 + $0x318] sm:$0xff]
      %v3107 = vld [vmem:[%s3006 + $0x320] sm:$0xff]
      %v3108 = vld [vmem:[%s3006 + $0x328] sm:$0xff]
      %v3109 = vld [vmem:[%s3006 + $0x330] sm:$0xff]
      %v3110 = vld [vmem:[%s3006 + $0x338] sm:$0xff]
      %v3111 = vld [vmem:[%s3006 + $0x340] sm:$0xff]
      %v3112 = vld [vmem:[%s3006 + $0x348] sm:$0xff]
      %v3113 = vld [vmem:[%s3006 + $0x350] sm:$0xff]
      %v3114 = vld [vmem:[%s3006 + $0x358] sm:$0xff]
      %v3115 = vld [vmem:[%s3006 + $0x360] sm:$0xff]
      %v3116 = vld [vmem:[%s3006 + $0x368] sm:$0xff]
      %v3117 = vld [vmem:[%s3006 + $0x370] sm:$0xff]
      %v3118 = vld [vmem:[%s3006 + $0x378] sm:$0xff]
      %v3119 = vld [vmem:[%s3006 + $0x380] sm:$0xff]
      %v3120 = vld [vmem:[%s3006 + $0x388] sm:$0xff]
      %v3121 = vld [vmem:[%s3006 + $0x390] sm:$0xff]
      %v3122 = vld [vmem:[%s3006 + $0x398] sm:$0xff]
      %v3123 = vld [vmem:[%s3006 + $0x3a0] sm:$0xff]
      %v3124 = vld [vmem:[%s3006 + $0x3a8] sm:$0xff]
      %v3125 = vld [vmem:[%s3006 + $0x3b0] sm:$0xff]
      %v3126 = vld [vmem:[%s3006 + $0x3b8] sm:$0xff]
      %v3127 = vld [vmem:[%s3006 + $0x3c0] sm:$0xff]
      %v3128 = vld [vmem:[%s3006 + $0x3c8] sm:$0xff]
      %v3129 = vld [vmem:[%s3006 + $0x3d0] sm:$0xff]
      %v3130 = vld [vmem:[%s3006 + $0x3d8] sm:$0xff]
      %v3131 = vld [vmem:[%s3006 + $0x3e0] sm:$0xff]
      %v3132 = vld [vmem:[%s3006 + $0x3e8] sm:$0xff]
      %v3133 = vld [vmem:[%s3006 + $0x3f0] sm:$0xff]
      %v3134 = vld [vmem:[%s3006 + $0x3f8] sm:$0xff]
      %v3135 = vld [vmem:[%s3006 + $0x400] sm:$0xff]
      %v3136 = vld [vmem:[%s3006 + $0x408] sm:$0xff]
      %v3137 = vld [vmem:[%s3006 + $0x410] sm:$0xff]
      %v3138 = vld [vmem:[%s3006 + $0x418] sm:$0xff]
      %v3139 = vld [vmem:[%s3006 + $0x420] sm:$0xff]
      %v3140 = vld [vmem:[%s3006 + $0x428] sm:$0xff]
      %v3141 = vld [vmem:[%s3006 + $0x430] sm:$0xff]
      %v3142 = vld [vmem:[%s3006 + $0x438] sm:$0xff]
      %v3143 = vld [vmem:[%s3006 + $0x440] sm:$0xff]
      %v3144 = vld [vmem:[%s3006 + $0x448] sm:$0xff]
      %v3145 = vld [vmem:[%s3006 + $0x450] sm:$0xff]
      %v3146 = vld [vmem:[%s3006 + $0x458] sm:$0xff]
      %v3147 = vld [vmem:[%s3006 + $0x460] sm:$0xff]
      %v3148 = vld [vmem:[%s3006 + $0x468] sm:$0xff]
      %v3149 = vld [vmem:[%s3006 + $0x470] sm:$0xff]
      %v3150 = vld [vmem:[%s3006 + $0x478] sm:$0xff]
      %v3151 = vld [vmem:[%s3006 + $0x480] sm:$0xff]
      %v3152 = vld [vmem:[%s3006 + $0x488] sm:$0xff]
      %v3153 = vld [vmem:[%s3006 + $0x490] sm:$0xff]
      %v3154 = vld [vmem:[%s3006 + $0x498] sm:$0xff]
      %v3155 = vld [vmem:[%s3006 + $0x4a0] sm:$0xff]
      %v3156 = vld [vmem:[%s3006 + $0x4a8] sm:$0xff]
      %v3157 = vld [vmem:[%s3006 + $0x4b0] sm:$0xff]
      %v3158 = vld [vmem:[%s3006 + $0x4b8] sm:$0xff]
      %v3159 = vld [vmem:[%s3006 + $0x4c0] sm:$0xff]
      %v3160 = vld [vmem:[%s3006 + $0x4c8] sm:$0xff]
      %v3161 = vld [vmem:[%s3006 + $0x4d0] sm:$0xff]
      %v3162 = vld [vmem:[%s3006 + $0x4d8] sm:$0xff]
      %v3163 = vld [vmem:[%s3006 + $0x4e0] sm:$0xff]
      %v3164 = vld [vmem:[%s3006 + $0x4e8] sm:$0xff]
      %v3165 = vld [vmem:[%s3006 + $0x4f0] sm:$0xff]
      %v3166 = vld [vmem:[%s3006 + $0x4f8] sm:$0xff]
      %v3167 = vld [vmem:[%s3006 + $0x500] sm:$0xff]
      %v3168 = vld [vmem:[%s3006 + $0x508] sm:$0xff]
      %v3169 = vld [vmem:[%s3006 + $0x510] sm:$0xff]
      %v3170 = vld [vmem:[%s3006 + $0x518] sm:$0xff]
      %v3171 = vld [vmem:[%s3006 + $0x520] sm:$0xff]
      %v3172 = vld [vmem:[%s3006 + $0x528] sm:$0xff]
      %v3173 = vld [vmem:[%s3006 + $0x530] sm:$0xff]
      %v3174 = vld [vmem:[%s3006 + $0x538] sm:$0xff]
      %v3175 = vld [vmem:[%s3006 + $0x540] sm:$0xff]
      %v3176 = vld [vmem:[%s3006 + $0x548] sm:$0xff]
      %v3177 = vld [vmem:[%s3006 + $0x550] sm:$0xff]
      %v3178 = vld [vmem:[%s3006 + $0x558] sm:$0xff]
      %v3179 = vld [vmem:[%s3006 + $0x560] sm:$0xff]
      %v3180 = vld [vmem:[%s3006 + $0x568] sm:$0xff]
      %v3181 = vld [vmem:[%s3006 + $0x570] sm:$0xff]
      %v3182 = vld [vmem:[%s3006 + $0x578] sm:$0xff]
      %v3183 = vld [vmem:[%s3006 + $0x580] sm:$0xff]
      %v3184 = vld [vmem:[%s3006 + $0x588] sm:$0xff]
      %v3185 = vld [vmem:[%s3006 + $0x590] sm:$0xff]
      %v3186 = vld [vmem:[%s3006 + $0x598] sm:$0xff]
      %v3187 = vld [vmem:[%s3006 + $0x5a0] sm:$0xff]
      %v3188 = vld [vmem:[%s3006 + $0x5a8] sm:$0xff]
      %v3189 = vld [vmem:[%s3006 + $0x5b0] sm:$0xff]
      %v3190 = vld [vmem:[%s3006 + $0x5b8] sm:$0xff]
      %v3191 = vld [vmem:[%s3006 + $0x5c0] sm:$0xff]
      %v3192 = vld [vmem:[%s3006 + $0x5c8] sm:$0xff]
      %v3193 = vld [vmem:[%s3006 + $0x5d0] sm:$0xff]
      %v3194 = vld [vmem:[%s3006 + $0x5d8] sm:$0xff]
      %v3195 = vld [vmem:[%s3006 + $0x5e0] sm:$0xff]
      %v3196 = vld [vmem:[%s3006 + $0x5e8] sm:$0xff]
      %v3197 = vld [vmem:[%s3006 + $0x5f0] sm:$0xff]
      %v3198 = vld [vmem:[%s3006 + $0x5f8] sm:$0xff]
      %v3199 = vld [vmem:[%s3006 + $0x600] sm:$0xff]
      %v3200 = vld [vmem:[%s3006 + $0x608] sm:$0xff]
      %v3201 = vld [vmem:[%s3006 + $0x610] sm:$0xff]
      %v3202 = vld [vmem:[%s3006 + $0x618] sm:$0xff]
      %v3203 = vld [vmem:[%s3006 + $0x620] sm:$0xff]
      %v3204 = vld [vmem:[%s3006 + $0x628] sm:$0xff]
      %v3205 = vld [vmem:[%s3006 + $0x630] sm:$0xff]
      %v3206 = vld [vmem:[%s3006 + $0x638] sm:$0xff]
      %v3207 = vld [vmem:[%s3006 + $0x640] sm:$0xff]
      %v3208 = vld [vmem:[%s3006 + $0x648] sm:$0xff]
      %v3209 = vld [vmem:[%s3006 + $0x650] sm:$0xff]
      %v3210 = vld [vmem:[%s3006 + $0x658] sm:$0xff]
      %v3211 = vld [vmem:[%s3006 + $0x660] sm:$0xff]
      %v3212 = vld [vmem:[%s3006 + $0x668] sm:$0xff]
      %v3213 = vld [vmem:[%s3006 + $0x670] sm:$0xff]
      %v3214 = vld [vmem:[%s3006 + $0x678] sm:$0xff]
      %v3215 = vld [vmem:[%s3006 + $0x680] sm:$0xff]
      %v3216 = vld [vmem:[%s3006 + $0x688] sm:$0xff]
      %v3217 = vld [vmem:[%s3006 + $0x690] sm:$0xff]
      %v3218 = vld [vmem:[%s3006 + $0x698] sm:$0xff]
      %v3219 = vld [vmem:[%s3006 + $0x6a0] sm:$0xff]
      %v3220 = vld [vmem:[%s3006 + $0x6a8] sm:$0xff]
      %v3221 = vld [vmem:[%s3006 + $0x6b0] sm:$0xff]
      %v3222 = vld [vmem:[%s3006 + $0x6b8] sm:$0xff]
      %v3223 = vld [vmem:[%s3006 + $0x6c0] sm:$0xff]
      %v3224 = vld [vmem:[%s3006 + $0x6c8] sm:$0xff]
      %v3225 = vld [vmem:[%s3006 + $0x6d0] sm:$0xff]
      %v3226 = vld [vmem:[%s3006 + $0x6d8] sm:$0xff]
      %v3227 = vld [vmem:[%s3006 + $0x6e0] sm:$0xff]
      %v3228 = vld [vmem:[%s3006 + $0x6e8] sm:$0xff]
      %v3229 = vld [vmem:[%s3006 + $0x6f0] sm:$0xff]
      %v3230 = vld [vmem:[%s3006 + $0x6f8] sm:$0xff]
      %v3231 = vld [vmem:[%s3006 + $0x700] sm:$0xff]
      %v3232 = vld [vmem:[%s3006 + $0x708] sm:$0xff]
      %v3233 = vld [vmem:[%s3006 + $0x710] sm:$0xff]
      %v3234 = vld [vmem:[%s3006 + $0x718] sm:$0xff]
      %v3235 = vld [vmem:[%s3006 + $0x720] sm:$0xff]
      %v3236 = vld [vmem:[%s3006 + $0x728] sm:$0xff]
      %v3237 = vld [vmem:[%s3006 + $0x730] sm:$0xff]
      %v3238 = vld [vmem:[%s3006 + $0x738] sm:$0xff]
      %v3239 = vld [vmem:[%s3006 + $0x740] sm:$0xff]
      %v3240 = vld [vmem:[%s3006 + $0x748] sm:$0xff]
      %v3241 = vld [vmem:[%s3006 + $0x750] sm:$0xff]
      %v3242 = vld [vmem:[%s3006 + $0x758] sm:$0xff]
      %v3243 = vld [vmem:[%s3006 + $0x760] sm:$0xff]
      %v3244 = vld [vmem:[%s3006 + $0x768] sm:$0xff]
      %v3245 = vld [vmem:[%s3006 + $0x770] sm:$0xff]
      %v3246 = vld [vmem:[%s3006 + $0x778] sm:$0xff]
      %v3247 = vld [vmem:[%s3006 + $0x780] sm:$0xff]
      %v3248 = vld [vmem:[%s3006 + $0x788] sm:$0xff]
      %v3249 = vld [vmem:[%s3006 + $0x790] sm:$0xff]
      %v3250 = vld [vmem:[%s3006 + $0x798] sm:$0xff]
      %v3251 = vld [vmem:[%s3006 + $0x7a0] sm:$0xff]
      %v3252 = vld [vmem:[%s3006 + $0x7a8] sm:$0xff]
      %v3253 = vld [vmem:[%s3006 + $0x7b0] sm:$0xff]
      %v3254 = vld [vmem:[%s3006 + $0x7b8] sm:$0xff]
      %v3255 = vld [vmem:[%s3006 + $0x7c0] sm:$0xff]
      %v3256 = vld [vmem:[%s3006 + $0x7c8] sm:$0xff]
      %v3257 = vld [vmem:[%s3006 + $0x7d0] sm:$0xff]
      %v3258 = vld [vmem:[%s3006 + $0x7d8] sm:$0xff]
      %v3259 = vld [vmem:[%s3006 + $0x7e0] sm:$0xff]
      %v3260 = vld [vmem:[%s3006 + $0x7e8] sm:$0xff]
      %v3261 = vld [vmem:[%s3006 + $0x7f0] sm:$0xff]
      %v3262 = vld [vmem:[%s3006 + $0x7f8] sm:$0xff]
      %v3263 = vld [vmem:[%s3006 + $0x800] sm:$0xff]
      %v3264 = vld [vmem:[%s3006 + $0x808] sm:$0xff]
      %v3265 = vld [vmem:[%s3006 + $0x810] sm:$0xff]
      %v3266 = vld [vmem:[%s3006 + $0x818] sm:$0xff]
      %v3267 = vld [vmem:[%s3006 + $0x820] sm:$0xff]
      %v3268 = vld [vmem:[%s3006 + $0x828] sm:$0xff]
      %v3269 = vld [vmem:[%s3006 + $0x830] sm:$0xff]
      %v3270 = vld [vmem:[%s3006 + $0x838] sm:$0xff]
      %v3271 = vld [vmem:[%s3006 + $0x840] sm:$0xff]
      %v3272 = vld [vmem:[%s3006 + $0x848] sm:$0xff]
      %v3273 = vld [vmem:[%s3006 + $0x850] sm:$0xff]
      %v3274 = vld [vmem:[%s3006 + $0x858] sm:$0xff]
      %v3275 = vld [vmem:[%s3006 + $0x860] sm:$0xff]
      %v3276 = vld [vmem:[%s3006 + $0x868] sm:$0xff]
      %v3277 = vld [vmem:[%s3006 + $0x870] sm:$0xff]
      %v3278 = vld [vmem:[%s3006 + $0x878] sm:$0xff]
      %v3279 = vld [vmem:[%s3006 + $0x880] sm:$0xff]
      %v3280 = vld [vmem:[%s3006 + $0x888] sm:$0xff]
      %v3281 = vld [vmem:[%s3006 + $0x890] sm:$0xff]
      %v3282 = vld [vmem:[%s3006 + $0x898] sm:$0xff]
      %v3283 = vld [vmem:[%s3006 + $0x8a0] sm:$0xff]
      %v3284 = vld [vmem:[%s3006 + $0x8a8] sm:$0xff]
      %v3285 = vld [vmem:[%s3006 + $0x8b0] sm:$0xff]
      %v3286 = vld [vmem:[%s3006 + $0x8b8] sm:$0xff]
      %v3287 = vld [vmem:[%s3006 + $0x8c0] sm:$0xff]
      %v3288 = vld [vmem:[%s3006 + $0x8c8] sm:$0xff]
      %v3289 = vld [vmem:[%s3006 + $0x8d0] sm:$0xff]
      %v3290 = vld [vmem:[%s3006 + $0x8d8] sm:$0xff]
      %v3291 = vld [vmem:[%s3006 + $0x8e0] sm:$0xff]
      %v3292 = vld [vmem:[%s3006 + $0x8e8] sm:$0xff]
      %v3293 = vld [vmem:[%s3006 + $0x8f0] sm:$0xff]
      %v3294 = vld [vmem:[%s3006 + $0x8f8] sm:$0xff]
      %v3295 = vld [vmem:[%s3006 + $0x900] sm:$0xff]
      %v3296 = vld [vmem:[%s3006 + $0x908] sm:$0xff]
      %v3297 = vld [vmem:[%s3006 + $0x910] sm:$0xff]
      %v3298 = vld [vmem:[%s3006 + $0x918] sm:$0xff]
      %v3299 = vld [vmem:[%s3006 + $0x920] sm:$0xff]
      %v3300 = vld [vmem:[%s3006 + $0x928] sm:$0xff]
      %v3301 = vld [vmem:[%s3006 + $0x930] sm:$0xff]
      %v3302 = vld [vmem:[%s3006 + $0x938] sm:$0xff]
      %v3303 = vld [vmem:[%s3006 + $0x940] sm:$0xff]
      %v3304 = vld [vmem:[%s3006 + $0x948] sm:$0xff]
      %v3305 = vld [vmem:[%s3006 + $0x950] sm:$0xff]
      %v3306 = vld [vmem:[%s3006 + $0x958] sm:$0xff]
      %v3307 = vld [vmem:[%s3006 + $0x960] sm:$0xff]
      %v3308 = vld [vmem:[%s3006 + $0x968] sm:$0xff]
      %v3309 = vld [vmem:[%s3006 + $0x970] sm:$0xff]
      %v3310 = vld [vmem:[%s3006 + $0x978] sm:$0xff]
      %v3311 = vld [vmem:[%s3006 + $0x980] sm:$0xff]
      %v3312 = vld [vmem:[%s3006 + $0x988] sm:$0xff]
      %v3313 = vld [vmem:[%s3006 + $0x990] sm:$0xff]
      %v3314 = vld [vmem:[%s3006 + $0x998] sm:$0xff]
      %v3315 = vld [vmem:[%s3006 + $0x9a0] sm:$0xff]
      %v3316 = vld [vmem:[%s3006 + $0x9a8] sm:$0xff]
      %v3317 = vld [vmem:[%s3006 + $0x9b0] sm:$0xff]
      %v3318 = vld [vmem:[%s3006 + $0x9b8] sm:$0xff]
      %v3319 = vld [vmem:[%s3006 + $0x9c0] sm:$0xff]
      %v3320 = vld [vmem:[%s3006 + $0x9c8] sm:$0xff]
      %v3321 = vld [vmem:[%s3006 + $0x9d0] sm:$0xff]
      %v3322 = vld [vmem:[%s3006 + $0x9d8] sm:$0xff]
      %v3323 = vld [vmem:[%s3006 + $0x9e0] sm:$0xff]
      %v3324 = vld [vmem:[%s3006 + $0x9e8] sm:$0xff]
      %v3325 = vld [vmem:[%s3006 + $0x9f0] sm:$0xff]
      %v3326 = vld [vmem:[%s3006 + $0x9f8] sm:$0xff]
      %v3327 = vld [vmem:[%s3006 + $0xa00] sm:$0xff]
      %v3328 = vld [vmem:[%s3006 + $0xa08] sm:$0xff]
      %v3329 = vld [vmem:[%s3006 + $0xa10] sm:$0xff]
      %v3330 = vld [vmem:[%s3006 + $0xa18] sm:$0xff]
      %v3331 = vld [vmem:[%s3006 + $0xa20] sm:$0xff]
      %v3332 = vld [vmem:[%s3006 + $0xa28] sm:$0xff]
      %v3333 = vld [vmem:[%s3006 + $0xa30] sm:$0xff]
      %v3334 = vld [vmem:[%s3006 + $0xa38] sm:$0xff]
      %v3335 = vld [vmem:[%s3006 + $0xa40] sm:$0xff]
      %v3336 = vld [vmem:[%s3006 + $0xa48] sm:$0xff]
      %v3337 = vld [vmem:[%s3006 + $0xa50] sm:$0xff]
      %v3338 = vld [vmem:[%s3006 + $0xa58] sm:$0xff]
      %v3339 = vld [vmem:[%s3006 + $0xa60] sm:$0xff]
      %v3340 = vld [vmem:[%s3006 + $0xa68] sm:$0xff]
      %v3341 = vld [vmem:[%s3006 + $0xa70] sm:$0xff]
      %v3342 = vld [vmem:[%s3006 + $0xa78] sm:$0xff]
      %v3343 = vld [vmem:[%s3006 + $0xa80] sm:$0xff]
      %v3344 = vld [vmem:[%s3006 + $0xa88] sm:$0xff]
      %v3345 = vld [vmem:[%s3006 + $0xa90] sm:$0xff]
      %v3346 = vld [vmem:[%s3006 + $0xa98] sm:$0xff]
      %v3347 = vld [vmem:[%s3006 + $0xaa0] sm:$0xff]
      %v3348 = vld [vmem:[%s3006 + $0xaa8] sm:$0xff]
      %v3349 = vld [vmem:[%s3006 + $0xab0] sm:$0xff]
      %v3350 = vld [vmem:[%s3006 + $0xab8] sm:$0xff]
      %v3351 = vld [vmem:[%s3006 + $0xac0] sm:$0xff]
      %v3352 = vld [vmem:[%s3006 + $0xac8] sm:$0xff]
      %v3353 = vld [vmem:[%s3006 + $0xad0] sm:$0xff]
      %v3354 = vld [vmem:[%s3006 + $0xad8] sm:$0xff]
      %v3355 = vld [vmem:[%s3006 + $0xae0] sm:$0xff]
      %v3356 = vld [vmem:[%s3006 + $0xae8] sm:$0xff]
      %v3357 = vld [vmem:[%s3006 + $0xaf0] sm:$0xff]
      %v3358 = vld [vmem:[%s3006 + $0xaf8] sm:$0xff]
      %v3359 = vld [vmem:[%s3006 + $0xb00] sm:$0xff]
      %v3360 = vld [vmem:[%s3006 + $0xb08] sm:$0xff]
      %v3361 = vld [vmem:[%s3006 + $0xb10] sm:$0xff]
      %v3362 = vld [vmem:[%s3006 + $0xb18] sm:$0xff]
      %v3363 = vld [vmem:[%s3006 + $0xb20] sm:$0xff]
      %v3364 = vld [vmem:[%s3006 + $0xb28] sm:$0xff]
      %v3365 = vld [vmem:[%s3006 + $0xb30] sm:$0xff]
      %v3366 = vld [vmem:[%s3006 + $0xb38] sm:$0xff]
      %v3367 = vld [vmem:[%s3006 + $0xb40] sm:$0xff]
      %v3368 = vld [vmem:[%s3006 + $0xb48] sm:$0xff]
      %v3369 = vld [vmem:[%s3006 + $0xb50] sm:$0xff]
      %v3370 = vld [vmem:[%s3006 + $0xb58] sm:$0xff]
      %v3371 = vld [vmem:[%s3006 + $0xb60] sm:$0xff]
      %v3372 = vld [vmem:[%s3006 + $0xb68] sm:$0xff]
      %v3373 = vld [vmem:[%s3006 + $0xb70] sm:$0xff]
      %v3374 = vld [vmem:[%s3006 + $0xb78] sm:$0xff]
      %v3375 = vld [vmem:[%s3006 + $0xb80] sm:$0xff]
      %v3376 = vld [vmem:[%s3006 + $0xb88] sm:$0xff]
      %v3377 = vld [vmem:[%s3006 + $0xb90] sm:$0xff]
      %v3378 = vld [vmem:[%s3006 + $0xb98] sm:$0xff]
      %v3379 = vld [vmem:[%s3006 + $0xba0] sm:$0xff]
      %v3380 = vld [vmem:[%s3006 + $0xba8] sm:$0xff]
      %v3381 = vld [vmem:[%s3006 + $0xbb0] sm:$0xff]
      %v3382 = vld [vmem:[%s3006 + $0xbb8] sm:$0xff]
      %v3383 = vld [vmem:[%s3006 + $0xbc0] sm:$0xff]
      %v3384 = vld [vmem:[%s3006 + $0xbc8] sm:$0xff]
      %v3385 = vld [vmem:[%s3006 + $0xbd0] sm:$0xff]
      %v3386 = vld [vmem:[%s3006 + $0xbd8] sm:$0xff]
      %v3387 = vld [vmem:[%s3006 + $0xbe0] sm:$0xff]
      %v3388 = vld [vmem:[%s3006 + $0xbe8] sm:$0xff]
      %v3389 = vld [vmem:[%s3006 + $0xbf0] sm:$0xff]
      %v3390 = vld [vmem:[%s3006 + $0xbf8] sm:$0xff]
      %v3391 = vld [vmem:[%s3006 + $0xc00] sm:$0xff]
      %v3392 = vld [vmem:[%s3006 + $0xc08] sm:$0xff]
      %v3393 = vld [vmem:[%s3006 + $0xc10] sm:$0xff]
      %v3394 = vld [vmem:[%s3006 + $0xc18] sm:$0xff]
      %v3395 = vld [vmem:[%s3006 + $0xc20] sm:$0xff]
      %v3396 = vld [vmem:[%s3006 + $0xc28] sm:$0xff]
      %v3397 = vld [vmem:[%s3006 + $0xc30] sm:$0xff]
      %v3398 = vld [vmem:[%s3006 + $0xc38] sm:$0xff]
      %v3399 = vld [vmem:[%s3006 + $0xc40] sm:$0xff]
      %v3400 = vld [vmem:[%s3006 + $0xc48] sm:$0xff]
      %v3401 = vld [vmem:[%s3006 + $0xc50] sm:$0xff]
      %v3402 = vld [vmem:[%s3006 + $0xc58] sm:$0xff]
      %v3403 = vld [vmem:[%s3006 + $0xc60] sm:$0xff]
      %v3404 = vld [vmem:[%s3006 + $0xc68] sm:$0xff]
      %v3405 = vld [vmem:[%s3006 + $0xc70] sm:$0xff]
      %v3406 = vld [vmem:[%s3006 + $0xc78] sm:$0xff]
      %v3407 = vld [vmem:[%s3006 + $0xc80] sm:$0xff]
      %v3408 = vld [vmem:[%s3006 + $0xc88] sm:$0xff]
      %v3409 = vld [vmem:[%s3006 + $0xc90] sm:$0xff]
      %v3410 = vld [vmem:[%s3006 + $0xc98] sm:$0xff]
      %v3411 = vld [vmem:[%s3006 + $0xca0] sm:$0xff]
      %v3412 = vld [vmem:[%s3006 + $0xca8] sm:$0xff]
      %v3413 = vld [vmem:[%s3006 + $0xcb0] sm:$0xff]
      %v3414 = vld [vmem:[%s3006 + $0xcb8] sm:$0xff]
      %v3415 = vld [vmem:[%s3006 + $0xcc0] sm:$0xff]
      %v3416 = vld [vmem:[%s3006 + $0xcc8] sm:$0xff]
      %v3417 = vld [vmem:[%s3006 + $0xcd0] sm:$0xff]
      %v3418 = vld [vmem:[%s3006 + $0xcd8] sm:$0xff]
      %v3419 = vld [vmem:[%s3006 + $0xce0] sm:$0xff]
      %v3420 = vld [vmem:[%s3006 + $0xce8] sm:$0xff]
      %v3421 = vld [vmem:[%s3006 + $0xcf0] sm:$0xff]
      %v3422 = vld [vmem:[%s3006 + $0xcf8] sm:$0xff]
      %v3423 = vld [vmem:[%s3006 + $0xd00] sm:$0xff]
      %v3424 = vld [vmem:[%s3006 + $0xd08] sm:$0xff]
      %v3425 = vld [vmem:[%s3006 + $0xd10] sm:$0xff]
      %v3426 = vld [vmem:[%s3006 + $0xd18] sm:$0xff]
      %v3427 = vld [vmem:[%s3006 + $0xd20] sm:$0xff]
      %v3428 = vld [vmem:[%s3006 + $0xd28] sm:$0xff]
      %v3429 = vld [vmem:[%s3006 + $0xd30] sm:$0xff]
      %v3430 = vld [vmem:[%s3006 + $0xd38] sm:$0xff]
      %v3431 = vld [vmem:[%s3006 + $0xd40] sm:$0xff]
      %v3432 = vld [vmem:[%s3006 + $0xd48] sm:$0xff]
      %v3433 = vld [vmem:[%s3006 + $0xd50] sm:$0xff]
      %v3434 = vld [vmem:[%s3006 + $0xd58] sm:$0xff]
      %v3435 = vld [vmem:[%s3006 + $0xd60] sm:$0xff]
      %v3436 = vld [vmem:[%s3006 + $0xd68] sm:$0xff]
      %v3437 = vld [vmem:[%s3006 + $0xd70] sm:$0xff]
      %v3438 = vld [vmem:[%s3006 + $0xd78] sm:$0xff]
      %v3439 = vld [vmem:[%s3006 + $0xd80] sm:$0xff]
      %v3440 = vld [vmem:[%s3006 + $0xd88] sm:$0xff]
      %v3441 = vld [vmem:[%s3006 + $0xd90] sm:$0xff]
      %v3442 = vld [vmem:[%s3006 + $0xd98] sm:$0xff]
      %v3443 = vld [vmem:[%s3006 + $0xda0] sm:$0xff]
      %v3444 = vld [vmem:[%s3006 + $0xda8] sm:$0xff]
      %v3445 = vld [vmem:[%s3006 + $0xdb0] sm:$0xff]
      %v3446 = vld [vmem:[%s3006 + $0xdb8] sm:$0xff]
      %v3447 = vld [vmem:[%s3006 + $0xdc0] sm:$0xff]
      %v3448 = vld [vmem:[%s3006 + $0xdc8] sm:$0xff]
      %v3449 = vld [vmem:[%s3006 + $0xdd0] sm:$0xff]
      %v3450 = vld [vmem:[%s3006 + $0xdd8] sm:$0xff]
      %v3451 = vld [vmem:[%s3006 + $0xde0] sm:$0xff]
      %v3452 = vld [vmem:[%s3006 + $0xde8] sm:$0xff]
      %v3453 = vld [vmem:[%s3006 + $0xdf0] sm:$0xff]
      %v3454 = vld [vmem:[%s3006 + $0xdf8] sm:$0xff]
      %v3455 = vld [vmem:[%s3006 + $0xe00] sm:$0xff]
      %v3456 = vld [vmem:[%s3006 + $0xe08] sm:$0xff]
      %v3457 = vld [vmem:[%s3006 + $0xe10] sm:$0xff]
      %v3458 = vld [vmem:[%s3006 + $0xe18] sm:$0xff]
      %v3459 = vld [vmem:[%s3006 + $0xe20] sm:$0xff]
      %v3460 = vld [vmem:[%s3006 + $0xe28] sm:$0xff]
      %v3461 = vld [vmem:[%s3006 + $0xe30] sm:$0xff]
      %v3462 = vld [vmem:[%s3006 + $0xe38] sm:$0xff]
      %v3463 = vld [vmem:[%s3006 + $0xe40] sm:$0xff]
      %v3464 = vld [vmem:[%s3006 + $0xe48] sm:$0xff]
      %v3465 = vld [vmem:[%s3006 + $0xe50] sm:$0xff]
      %v3466 = vld [vmem:[%s3006 + $0xe58] sm:$0xff]
      %v3467 = vld [vmem:[%s3006 + $0xe60] sm:$0xff]
      %v3468 = vld [vmem:[%s3006 + $0xe68] sm:$0xff]
      %v3469 = vld [vmem:[%s3006 + $0xe70] sm:$0xff]
      %v3470 = vld [vmem:[%s3006 + $0xe78] sm:$0xff]
      %v3471 = vld [vmem:[%s3006 + $0xe80] sm:$0xff]
      %v3472 = vld [vmem:[%s3006 + $0xe88] sm:$0xff]
      %v3473 = vld [vmem:[%s3006 + $0xe90] sm:$0xff]
      %v3474 = vld [vmem:[%s3006 + $0xe98] sm:$0xff]
      %v3475 = vld [vmem:[%s3006 + $0xea0] sm:$0xff]
      %v3476 = vld [vmem:[%s3006 + $0xea8] sm:$0xff]
      %v3477 = vld [vmem:[%s3006 + $0xeb0] sm:$0xff]
      %v3478 = vld [vmem:[%s3006 + $0xeb8] sm:$0xff]
      %v3479 = vld [vmem:[%s3006 + $0xec0] sm:$0xff]
      %v3480 = vld [vmem:[%s3006 + $0xec8] sm:$0xff]
      %v3481 = vld [vmem:[%s3006 + $0xed0] sm:$0xff]
      %v3482 = vld [vmem:[%s3006 + $0xed8] sm:$0xff]
      %v3483 = vld [vmem:[%s3006 + $0xee0] sm:$0xff]
      %v3484 = vld [vmem:[%s3006 + $0xee8] sm:$0xff]
      %v3485 = vld [vmem:[%s3006 + $0xef0] sm:$0xff]
      %v3486 = vld [vmem:[%s3006 + $0xef8] sm:$0xff]
      %v3487 = vld [vmem:[%s3006 + $0xf00] sm:$0xff]
      %v3488 = vld [vmem:[%s3006 + $0xf08] sm:$0xff]
      %v3489 = vld [vmem:[%s3006 + $0xf10] sm:$0xff]
      %v3490 = vld [vmem:[%s3006 + $0xf18] sm:$0xff]
      %v3491 = vld [vmem:[%s3006 + $0xf20] sm:$0xff]
      %v3492 = vld [vmem:[%s3006 + $0xf28] sm:$0xff]
      %v3493 = vld [vmem:[%s3006 + $0xf30] sm:$0xff]
      %v3494 = vld [vmem:[%s3006 + $0xf38] sm:$0xff]
      %v3495 = vld [vmem:[%s3006 + $0xf40] sm:$0xff]
      %v3496 = vld [vmem:[%s3006 + $0xf48] sm:$0xff]
      %v3497 = vld [vmem:[%s3006 + $0xf50] sm:$0xff]
      %v3498 = vld [vmem:[%s3006 + $0xf58] sm:$0xff]
      %v3499 = vld [vmem:[%s3006 + $0xf60] sm:$0xff]
      %v3500 = vld [vmem:[%s3006 + $0xf68] sm:$0xff]
      %v3501 = vld [vmem:[%s3006 + $0xf70] sm:$0xff]
      %v3502 = vld [vmem:[%s3006 + $0xf78] sm:$0xff]
      %v3503 = vld [vmem:[%s3006 + $0xf80] sm:$0xff]
      %v3504 = vld [vmem:[%s3006 + $0xf88] sm:$0xff]
      %v3505 = vld [vmem:[%s3006 + $0xf90] sm:$0xff]
      %v3506 = vld [vmem:[%s3006 + $0xf98] sm:$0xff]
      %v3507 = vld [vmem:[%s3006 + $0xfa0] sm:$0xff]
      %v3508 = vld [vmem:[%s3006 + $0xfa8] sm:$0xff]
      %v3509 = vld [vmem:[%s3006 + $0xfb0] sm:$0xff]
      %v3510 = vld [vmem:[%s3006 + $0xfb8] sm:$0xff]
      %v3511 = vld [vmem:[%s3006 + $0xfc0] sm:$0xff]
      %v3512 = vld [vmem:[%s3006 + $0xfc8] sm:$0xff]
      %v3513 = vld [vmem:[%s3006 + $0xfd0] sm:$0xff]
      %v3514 = vld [vmem:[%s3006 + $0xfd8] sm:$0xff]
      %v3515 = vld [vmem:[%s3006 + $0xfe0] sm:$0xff]
      %v3516 = vld [vmem:[%s3006 + $0xfe8] sm:$0xff]
      %v3517 = vld [vmem:[%s3006 + $0xff0] sm:$0xff]
      %v3518 = vld [vmem:[%s3006 + $0xff8] sm:$0xff]
      %3519 = vmatprep.subr.bf16.mxu0 %v3008
      %3520 = vmatpush1.bf16.msra.mxu0 %v3007
      %3521 = vmatprep.subr.bf16.mxu0 %v3016
      %3522 = vmatpush1.bf16.msra.mxu0 %v3015
      %3523 = vmatprep.subr.bf16.mxu0 %v3024
      %3524 = vmatpush1.bf16.msra.mxu0 %v3023
      %3525 = vmatprep.subr.bf16.mxu0 %v3032
      %3526 = vmatpush1.bf16.msra.mxu0 %v3031
      %3527 = vmatprep.subr.bf16.mxu0 %v3040
      %3528 = vmatpush1.bf16.msra.mxu0 %v3039
      %3529 = vmatprep.subr.bf16.mxu0 %v3048
      %3530 = vmatpush1.bf16.msra.mxu0 %v3047
      %3531 = vmatprep.subr.bf16.mxu0 %v3056
      %3532 = vmatpush1.bf16.msra.mxu0 %v3055
      %3533 = vmatprep.subr.bf16.mxu0 %v3064
      %3534 = vmatpush1.bf16.msra.mxu0 %v3063
      %3535 = vmatprep.subr.bf16.mxu0 %v3072
      %3536 = vmatpush1.bf16.msra.mxu0 %v3071
      %3537 = vmatprep.subr.bf16.mxu0 %v3080
      %3538 = vmatpush1.bf16.msra.mxu0 %v3079
      %3539 = vmatprep.subr.bf16.mxu0 %v3088
      %3540 = vmatpush1.bf16.msra.mxu0 %v3087
      %3541 = vmatprep.subr.bf16.mxu0 %v3096
      %3542 = vmatpush1.bf16.msra.mxu0 %v3095
      %3543 = vmatprep.subr.bf16.mxu0 %v3104
      %3544 = vmatpush1.bf16.msra.mxu0 %v3103
      %3545 = vmatprep.subr.bf16.mxu0 %v3112
      %3546 = vmatpush1.bf16.msra.mxu0 %v3111
      %3547 = vmatprep.subr.bf16.mxu0 %v3120
      %3548 = vmatpush1.bf16.msra.mxu0 %v3119
      %3549 = vmatprep.subr.bf16.mxu0 %v3128
      %3550 = vmatpush1.bf16.msra.mxu0 %v3127
      %3551 = vmatprep.mubr.bf16.mxu0 %v2999
      %3552 = vmatmul.mubr.bf16.gmra.mrb[0].mxu0 %v2998
      %v3553 = vpop.f32.mrb[0].mxu0
      %v3554 = vadd.f32 0.0, %v3553
      %v3555 = vpop.f32.mrb[0].mxu0
      %v3556 = vadd.f32 0.0, %v3555
      %v3557 = vpop.f32.mrb[0].mxu0
      %v3558 = vpop.f32.mrb[0].mxu0
      %3559 = vdwg.mxu0
      %3560 = vmatprep.subr.bf16.mxu0 %v3136
      %3561 = vmatpush1.bf16.msra.mxu0 %v3135
      %3562 = vmatprep.subr.bf16.mxu0 %v3144
      %3563 = vmatpush1.bf16.msra.mxu0 %v3143
      %3564 = vmatprep.subr.bf16.mxu0 %v3152
      %3565 = vmatpush1.bf16.msra.mxu0 %v3151
      %3566 = vmatprep.subr.bf16.mxu0 %v3160
      %3567 = vmatpush1.bf16.msra.mxu0 %v3159
      %3568 = vmatprep.subr.bf16.mxu0 %v3168
      %3569 = vmatpush1.bf16.msra.mxu0 %v3167
      %3570 = vmatprep.subr.bf16.mxu0 %v3176
      %3571 = vmatpush1.bf16.msra.mxu0 %v3175
      %3572 = vmatprep.subr.bf16.mxu0 %v3184
      %3573 = vmatpush1.bf16.msra.mxu0 %v3183
      %3574 = vmatprep.subr.bf16.mxu0 %v3192
      %3575 = vmatpush1.bf16.msra.mxu0 %v3191
      %3576 = vmatprep.subr.bf16.mxu0 %v3200
      %3577 = vmatpush1.bf16.msra.mxu0 %v3199
      %3578 = vmatprep.subr.bf16.mxu0 %v3208
      %3579 = vmatpush1.bf16.msra.mxu0 %v3207
      %3580 = vmatprep.subr.bf16.mxu0 %v3216
      %3581 = vmatpush1.bf16.msra.mxu0 %v3215
      %3582 = vmatprep.subr.bf16.mxu0 %v3224
      %3583 = vmatpush1.bf16.msra.mxu0 %v3223
      %3584 = vmatprep.subr.bf16.mxu0 %v3232
      %3585 = vmatpush1.bf16.msra.mxu0 %v3231
      %3586 = vmatprep.subr.bf16.mxu0 %v3240
      %3587 = vmatpush1.bf16.msra.mxu0 %v3239
      %3588 = vmatprep.subr.bf16.mxu0 %v3248
      %3589 = vmatpush1.bf16.msra.mxu0 %v3247
      %3590 = vmatprep.subr.bf16.mxu0 %v3256
      %3591 = vmatpush1.bf16.msra.mxu0 %v3255
      %3592 = vmatprep.mubr.bf16.mxu0 %v3001
      %3593 = vmatmul.mubr.bf16.gmra.mrb[0].mxu0 %v3000
      %v3594 = vpop.f32.mrb[0].mxu0
      %v3595 = vadd.f32 %v3554, %v3594
      %v3596 = vpop.f32.mrb[0].mxu0
      %v3597 = vadd.f32 %v3556, %v3596
      %v3598 = vpop.f32.mrb[0].mxu0
      %v3599 = vpop.f32.mrb[0].mxu0
      %3600 = vdwg.mxu0
      %3601 = vmatprep.subr.bf16.mxu0 %v3264
      %3602 = vmatpush1.bf16.msra.mxu0 %v3263
      %3603 = vmatprep.subr.bf16.mxu0 %v3272
      %3604 = vmatpush1.bf16.msra.mxu0 %v3271
      %3605 = vmatprep.subr.bf16.mxu0 %v3280
      %3606 = vmatpush1.bf16.msra.mxu0 %v3279
      %3607 = vmatprep.subr.bf16.mxu0 %v3288
      %3608 = vmatpush1.bf16.msra.mxu0 %v3287
      %3609 = vmatprep.subr.bf16.mxu0 %v3296
      %3610 = vmatpush1.bf16.msra.mxu0 %v3295
      %3611 = vmatprep.subr.bf16.mxu0 %v3304
      %3612 = vmatpush1.bf16.msra.mxu0 %v3303
      %3613 = vmatprep.subr.bf16.mxu0 %v3312
      %3614 = vmatpush1.bf16.msra.mxu0 %v3311
      %3615 = vmatprep.subr.bf16.mxu0 %v3320
      %3616 = vmatpush1.bf16.msra.mxu0 %v3319
      %3617 = vmatprep.subr.bf16.mxu0 %v3328
      %3618 = vmatpush1.bf16.msra.mxu0 %v3327
      %3619 = vmatprep.subr.bf16.mxu0 %v3336
      %3620 = vmatpush1.bf16.msra.mxu0 %v3335
      %3621 = vmatprep.subr.bf16.mxu0 %v3344
      %3622 = vmatpush1.bf16.msra.mxu0 %v3343
      %3623 = vmatprep.subr.bf16.mxu0 %v3352
      %3624 = vmatpush1.bf16.msra.mxu0 %v3351
      %3625 = vmatprep.subr.bf16.mxu0 %v3360
      %3626 = vmatpush1.bf16.msra.mxu0 %v3359
      %3627 = vmatprep.subr.bf16.mxu0 %v3368
      %3628 = vmatpush1.bf16.msra.mxu0 %v3367
      %3629 = vmatprep.subr.bf16.mxu0 %v3376
      %3630 = vmatpush1.bf16.msra.mxu0 %v3375
      %3631 = vmatprep.subr.bf16.mxu0 %v3384
      %3632 = vmatpush1.bf16.msra.mxu0 %v3383
      %3633 = vmatprep.mubr.bf16.mxu0 %v3003
      %3634 = vmatmul.mubr.bf16.gmra.mrb[0].mxu0 %v3002
      %v3635 = vpop.f32.mrb[0].mxu0
      %v3636 = vadd.f32 %v3595, %v3635
      %v3637 = vpop.f32.mrb[0].mxu0
      %v3638 = vadd.f32 %v3597, %v3637
      %v3639 = vpop.f32.mrb[0].mxu0
      %v3640 = vpop.f32.mrb[0].mxu0
      %3641 = vdwg.mxu0
      %3642 = vmatprep.subr.bf16.mxu0 %v3392
      %3643 = vmatpush1.bf16.msra.mxu0 %v3391
      %3644 = vmatprep.subr.bf16.mxu0 %v3400
      %3645 = vmatpush1.bf16.msra.mxu0 %v3399
      %3646 = vmatprep.subr.bf16.mxu0 %v3408
      %3647 = vmatpush1.bf16.msra.mxu0 %v3407
      %3648 = vmatprep.subr.bf16.mxu0 %v3416
      %3649 = vmatpush1.bf16.msra.mxu0 %v3415
      %3650 = vmatprep.subr.bf16.mxu0 %v3424
      %3651 = vmatpush1.bf16.msra.mxu0 %v3423
      %3652 = vmatprep.subr.bf16.mxu0 %v3432
      %3653 = vmatpush1.bf16.msra.mxu0 %v3431
      %3654 = vmatprep.subr.bf16.mxu0 %v3440
      %3655 = vmatpush1.bf16.msra.mxu0 %v3439
      %3656 = vmatprep.subr.bf16.mxu0 %v3448
      %3657 = vmatpush1.bf16.msra.mxu0 %v3447
      %3658 = vmatprep.subr.bf16.mxu0 %v3456
      %3659 = vmatpush1.bf16.msra.mxu0 %v3455
      %3660 = vmatprep.subr.bf16.mxu0 %v3464
      %3661 = vmatpush1.bf16.msra.mxu0 %v3463
      %3662 = vmatprep.subr.bf16.mxu0 %v3472
      %3663 = vmatpush1.bf16.msra.mxu0 %v3471
      %3664 = vmatprep.subr.bf16.mxu0 %v3480
      %3665 = vmatpush1.bf16.msra.mxu0 %v3479
      %3666 = vmatprep.subr.bf16.mxu0 %v3488
      %3667 = vmatpush1.bf16.msra.mxu0 %v3487
      %3668 = vmatprep.subr.bf16.mxu0 %v3496
      %3669 = vmatpush1.bf16.msra.mxu0 %v3495
      %3670 = vmatprep.subr.bf16.mxu0 %v3504
      %3671 = vmatpush1.bf16.msra.mxu0 %v3503
      %3672 = vmatprep.subr.bf16.mxu0 %v3512
      %3673 = vmatpush1.bf16.msra.mxu0 %v3511
      %3674 = vmatprep.mubr.bf16.mxu0 %v3005
      %3675 = vmatmul.mubr.bf16.gmra.mrb[0].mxu0 %v3004
      %v3676 = vpop.f32.mrb[0].mxu0
      %v3677 = vadd.f32 %v3636, %v3676
      %v3678 = vpop.f32.mrb[0].mxu0
      %v3679 = vadd.f32 %v3638, %v3678
      %v3680 = vpop.f32.mrb[0].mxu0
      %v3681 = vpop.f32.mrb[0].mxu0
      %3682 = vdwg.mxu0
      %3683 = vmatprep.subr.bf16.mxu0 %v3010
      %3684 = vmatpush1.bf16.msra.mxu0 %v3009
      %3685 = vmatprep.subr.bf16.mxu0 %v3018
      %3686 = vmatpush1.bf16.msra.mxu0 %v3017
      %3687 = vmatprep.subr.bf16.mxu0 %v3026
      %3688 = vmatpush1.bf16.msra.mxu0 %v3025
      %3689 = vmatprep.subr.bf16.mxu0 %v3034
      %3690 = vmatpush1.bf16.msra.mxu0 %v3033
      %3691 = vmatprep.subr.bf16.mxu0 %v3042
      %3692 = vmatpush1.bf16.msra.mxu0 %v3041
      %3693 = vmatprep.subr.bf16.mxu0 %v3050
      %3694 = vmatpush1.bf16.msra.mxu0 %v3049
      %3695 = vmatprep.subr.bf16.mxu0 %v3058
      %3696 = vmatpush1.bf16.msra.mxu0 %v3057
      %3697 = vmatprep.subr.bf16.mxu0 %v3066
      %3698 = vmatpush1.bf16.msra.mxu0 %v3065
      %3699 = vmatprep.subr.bf16.mxu0 %v3074
      %3700 = vmatpush1.bf16.msra.mxu0 %v3073
      %3701 = vmatprep.subr.bf16.mxu0 %v3082
      %3702 = vmatpush1.bf16.msra.mxu0 %v3081
      %3703 = vmatprep.subr.bf16.mxu0 %v3090
      %3704 = vmatpush1.bf16.msra.mxu0 %v3089
      %3705 = vmatprep.subr.bf16.mxu0 %v3098
      %3706 = vmatpush1.bf16.msra.mxu0 %v3097
      %3707 = vmatprep.subr.bf16.mxu0 %v3106
      %3708 = vmatpush1.bf16.msra.mxu0 %v3105
      %3709 = vmatprep.subr.bf16.mxu0 %v3114
      %3710 = vmatpush1.bf16.msra.mxu0 %v3113
      %3711 = vmatprep.subr.bf16.mxu0 %v3122
      %3712 = vmatpush1.bf16.msra.mxu0 %v3121
      %3713 = vmatprep.subr.bf16.mxu0 %v3130
      %3714 = vmatpush1.bf16.msra.mxu0 %v3129
      %3715 = vmatprep.mubr.bf16.mxu0 %v2999
      %3716 = vmatmul.mubr.bf16.gmra.mrb[0].mxu0 %v2998
      %v3717 = vpop.f32.mrb[0].mxu0
      %v3718 = vadd.f32 0.0, %v3717
      %v3719 = vpop.f32.mrb[0].mxu0
      %v3720 = vadd.f32 0.0, %v3719
      %v3721 = vpop.f32.mrb[0].mxu0
      %v3722 = vpop.f32.mrb[0].mxu0
      %3723 = vdwg.mxu0
      %3724 = vmatprep.subr.bf16.mxu0 %v3138
      %3725 = vmatpush1.bf16.msra.mxu0 %v3137
      %3726 = vmatprep.subr.bf16.mxu0 %v3146
      %3727 = vmatpush1.bf16.msra.mxu0 %v3145
      %3728 = vmatprep.subr.bf16.mxu0 %v3154
      %3729 = vmatpush1.bf16.msra.mxu0 %v3153
      %3730 = vmatprep.subr.bf16.mxu0 %v3162
      %3731 = vmatpush1.bf16.msra.mxu0 %v3161
      %3732 = vmatprep.subr.bf16.mxu0 %v3170
      %3733 = vmatpush1.bf16.msra.mxu0 %v3169
      %3734 = vmatprep.subr.bf16.mxu0 %v3178
      %3735 = vmatpush1.bf16.msra.mxu0 %v3177
      %3736 = vmatprep.subr.bf16.mxu0 %v3186
      %3737 = vmatpush1.bf16.msra.mxu0 %v3185
      %3738 = vmatprep.subr.bf16.mxu0 %v3194
      %3739 = vmatpush1.bf16.msra.mxu0 %v3193
      %3740 = vmatprep.subr.bf16.mxu0 %v3202
      %3741 = vmatpush1.bf16.msra.mxu0 %v3201
      %3742 = vmatprep.subr.bf16.mxu0 %v3210
      %3743 = vmatpush1.bf16.msra.mxu0 %v3209
      %3744 = vmatprep.subr.bf16.mxu0 %v3218
      %3745 = vmatpush1.bf16.msra.mxu0 %v3217
      %3746 = vmatprep.subr.bf16.mxu0 %v3226
      %3747 = vmatpush1.bf16.msra.mxu0 %v3225
      %3748 = vmatprep.subr.bf16.mxu0 %v3234
      %3749 = vmatpush1.bf16.msra.mxu0 %v3233
      %3750 = vmatprep.subr.bf16.mxu0 %v3242
      %3751 = vmatpush1.bf16.msra.mxu0 %v3241
      %3752 = vmatprep.subr.bf16.mxu0 %v3250
      %3753 = vmatpush1.bf16.msra.mxu0 %v3249
      %3754 = vmatprep.subr.bf16.mxu0 %v3258
      %3755 = vmatpush1.bf16.msra.mxu0 %v3257
      %3756 = vmatprep.mubr.bf16.mxu0 %v3001
      %3757 = vmatmul.mubr.bf16.gmra.mrb[0].mxu0 %v3000
      %v3758 = vpop.f32.mrb[0].mxu0
      %v3759 = vadd.f32 %v3718, %v3758
      %v3760 = vpop.f32.mrb[0].mxu0
      %v3761 = vadd.f32 %v3720, %v3760
      %v3762 = vpop.f32.mrb[0].mxu0
      %v3763 = vpop.f32.mrb[0].mxu0
      %3764 = vdwg.mxu0
      %3765 = vmatprep.subr.bf16.mxu0 %v3266
      %3766 = vmatpush1.bf16.msra.mxu0 %v3265
      %3767 = vmatprep.subr.bf16.mxu0 %v3274
      %3768 = vmatpush1.bf16.msra.mxu0 %v3273
      %3769 = vmatprep.subr.bf16.mxu0 %v3282
      %3770 = vmatpush1.bf16.msra.mxu0 %v3281
      %3771 = vmatprep.subr.bf16.mxu0 %v3290
      %3772 = vmatpush1.bf16.msra.mxu0 %v3289
      %3773 = vmatprep.subr.bf16.mxu0 %v3298
      %3774 = vmatpush1.bf16.msra.mxu0 %v3297
      %3775 = vmatprep.subr.bf16.mxu0 %v3306
      %3776 = vmatpush1.bf16.msra.mxu0 %v3305
      %3777 = vmatprep.subr.bf16.mxu0 %v3314
      %3778 = vmatpush1.bf16.msra.mxu0 %v3313
      %3779 = vmatprep.subr.bf16.mxu0 %v3322
      %3780 = vmatpush1.bf16.msra.mxu0 %v3321
      %3781 = vmatprep.subr.bf16.mxu0 %v3330
      %3782 = vmatpush1.bf16.msra.mxu0 %v3329
      %3783 = vmatprep.subr.bf16.mxu0 %v3338
      %3784 = vmatpush1.bf16.msra.mxu0 %v3337
      %3785 = vmatprep.subr.bf16.mxu0 %v3346
      %3786 = vmatpush1.bf16.msra.mxu0 %v3345
      %3787 = vmatprep.subr.bf16.mxu0 %v3354
      %3788 = vmatpush1.bf16.msra.mxu0 %v3353
      %3789 = vmatprep.subr.bf16.mxu0 %v3362
      %3790 = vmatpush1.bf16.msra.mxu0 %v3361
      %3791 = vmatprep.subr.bf16.mxu0 %v3370
      %3792 = vmatpush1.bf16.msra.mxu0 %v3369
      %3793 = vmatprep.subr.bf16.mxu0 %v3378
      %3794 = vmatpush1.bf16.msra.mxu0 %v3377
      %3795 = vmatprep.subr.bf16.mxu0 %v3386
      %3796 = vmatpush1.bf16.msra.mxu0 %v3385
      %3797 = vmatprep.mubr.bf16.mxu0 %v3003
      %3798 = vmatmul.mubr.bf16.gmra.mrb[0].mxu0 %v3002
      %v3799 = vpop.f32.mrb[0].mxu0
      %v3800 = vadd.f32 %v3759, %v3799
      %v3801 = vpop.f32.mrb[0].mxu0
      %v3802 = vadd.f32 %v3761, %v3801
      %v3803 = vpop.f32.mrb[0].mxu0
      %v3804 = vpop.f32.mrb[0].mxu0
      %3805 = vdwg.mxu0
      %3806 = vmatprep.subr.bf16.mxu0 %v3394
      %3807 = vmatpush1.bf16.msra.mxu0 %v3393
      %3808 = vmatprep.subr.bf16.mxu0 %v3402
      %3809 = vmatpush1.bf16.msra.mxu0 %v3401
      %3810 = vmatprep.subr.bf16.mxu0 %v3410
      %3811 = vmatpush1.bf16.msra.mxu0 %v3409
      %3812 = vmatprep.subr.bf16.mxu0 %v3418
      %3813 = vmatpush1.bf16.msra.mxu0 %v3417
      %3814 = vmatprep.subr.bf16.mxu0 %v3426
      %3815 = vmatpush1.bf16.msra.mxu0 %v3425
      %3816 = vmatprep.subr.bf16.mxu0 %v3434
      %3817 = vmatpush1.bf16.msra.mxu0 %v3433
      %3818 = vmatprep.subr.bf16.mxu0 %v3442
      %3819 = vmatpush1.bf16.msra.mxu0 %v3441
      %3820 = vmatprep.subr.bf16.mxu0 %v3450
      %3821 = vmatpush1.bf16.msra.mxu0 %v3449
      %3822 = vmatprep.subr.bf16.mxu0 %v3458
      %3823 = vmatpush1.bf16.msra.mxu0 %v3457
      %3824 = vmatprep.subr.bf16.mxu0 %v3466
      %3825 = vmatpush1.bf16.msra.mxu0 %v3465
      %3826 = vmatprep.subr.bf16.mxu0 %v3474
      %3827 = vmatpush1.bf16.msra.mxu0 %v3473
      %3828 = vmatprep.subr.bf16.mxu0 %v3482
      %3829 = vmatpush1.bf16.msra.mxu0 %v3481
      %3830 = vmatprep.subr.bf16.mxu0 %v3490
      %3831 = vmatpush1.bf16.msra.mxu0 %v3489
      %3832 = vmatprep.subr.bf16.mxu0 %v3498
      %3833 = vmatpush1.bf16.msra.mxu0 %v3497
      %3834 = vmatprep.subr.bf16.mxu0 %v3506
      %3835 = vmatpush1.bf16.msra.mxu0 %v3505
      %3836 = vmatprep.subr.bf16.mxu0 %v3514
      %3837 = vmatpush1.bf16.msra.mxu0 %v3513
      %3838 = vmatprep.mubr.bf16.mxu0 %v3005
      %3839 = vmatmul.mubr.bf16.gmra.mrb[0].mxu0 %v3004
      %v3840 = vpop.f32.mrb[0].mxu0
      %v3841 = vadd.f32 %v3800, %v3840
      %v3842 = vpop.f32.mrb[0].mxu0
      %v3843 = vadd.f32 %v3802, %v3842
      %v3844 = vpop.f32.mrb[0].mxu0
      %v3845 = vpop.f32.mrb[0].mxu0
      %3846 = vdwg.mxu0
      %3847 = vmatprep.subr.bf16.mxu0 %v3012
      %3848 = vmatpush1.bf16.msra.mxu0 %v3011
      %3849 = vmatprep.subr.bf16.mxu0 %v3020
      %3850 = vmatpush1.bf16.msra.mxu0 %v3019
      %3851 = vmatprep.subr.bf16.mxu0 %v3028
      %3852 = vmatpush1.bf16.msra.mxu0 %v3027
      %3853 = vmatprep.subr.bf16.mxu0 %v3036
      %3854 = vmatpush1.bf16.msra.mxu0 %v3035
      %3855 = vmatprep.subr.bf16.mxu0 %v3044
      %3856 = vmatpush1.bf16.msra.mxu0 %v3043
      %3857 = vmatprep.subr.bf16.mxu0 %v3052
      %3858 = vmatpush1.bf16.msra.mxu0 %v3051
      %3859 = vmatprep.subr.bf16.mxu0 %v3060
      %3860 = vmatpush1.bf16.msra.mxu0 %v3059
      %3861 = vmatprep.subr.bf16.mxu0 %v3068
      %3862 = vmatpush1.bf16.msra.mxu0 %v3067
      %3863 = vmatprep.subr.bf16.mxu0 %v3076
      %3864 = vmatpush1.bf16.msra.mxu0 %v3075
      %3865 = vmatprep.subr.bf16.mxu0 %v3084
      %3866 = vmatpush1.bf16.msra.mxu0 %v3083
      %3867 = vmatprep.subr.bf16.mxu0 %v3092
      %3868 = vmatpush1.bf16.msra.mxu0 %v3091
      %3869 = vmatprep.subr.bf16.mxu0 %v3100
      %3870 = vmatpush1.bf16.msra.mxu0 %v3099
      %3871 = vmatprep.subr.bf16.mxu0 %v3108
      %3872 = vmatpush1.bf16.msra.mxu0 %v3107
      %3873 = vmatprep.subr.bf16.mxu0 %v3116
      %3874 = vmatpush1.bf16.msra.mxu0 %v3115
      %3875 = vmatprep.subr.bf16.mxu0 %v3124
      %3876 = vmatpush1.bf16.msra.mxu0 %v3123
      %3877 = vmatprep.subr.bf16.mxu0 %v3132
      %3878 = vmatpush1.bf16.msra.mxu0 %v3131
      %3879 = vmatprep.mubr.bf16.mxu0 %v2999
      %3880 = vmatmul.mubr.bf16.gmra.mrb[0].mxu0 %v2998
      %v3881 = vpop.f32.mrb[0].mxu0
      %v3882 = vadd.f32 0.0, %v3881
      %v3883 = vpop.f32.mrb[0].mxu0
      %v3884 = vadd.f32 0.0, %v3883
      %v3885 = vpop.f32.mrb[0].mxu0
      %v3886 = vpop.f32.mrb[0].mxu0
      %3887 = vdwg.mxu0
      %3888 = vmatprep.subr.bf16.mxu0 %v3140
      %3889 = vmatpush1.bf16.msra.mxu0 %v3139
      %3890 = vmatprep.subr.bf16.mxu0 %v3148
      %3891 = vmatpush1.bf16.msra.mxu0 %v3147
      %3892 = vmatprep.subr.bf16.mxu0 %v3156
      %3893 = vmatpush1.bf16.msra.mxu0 %v3155
      %3894 = vmatprep.subr.bf16.mxu0 %v3164
      %3895 = vmatpush1.bf16.msra.mxu0 %v3163
      %3896 = vmatprep.subr.bf16.mxu0 %v3172
      %3897 = vmatpush1.bf16.msra.mxu0 %v3171
      %3898 = vmatprep.subr.bf16.mxu0 %v3180
      %3899 = vmatpush1.bf16.msra.mxu0 %v3179
      %3900 = vmatprep.subr.bf16.mxu0 %v3188
      %3901 = vmatpush1.bf16.msra.mxu0 %v3187
      %3902 = vmatprep.subr.bf16.mxu0 %v3196
      %3903 = vmatpush1.bf16.msra.mxu0 %v3195
      %3904 = vmatprep.subr.bf16.mxu0 %v3204
      %3905 = vmatpush1.bf16.msra.mxu0 %v3203
      %3906 = vmatprep.subr.bf16.mxu0 %v3212
      %3907 = vmatpush1.bf16.msra.mxu0 %v3211
      %3908 = vmatprep.subr.bf16.mxu0 %v3220
      %3909 = vmatpush1.bf16.msra.mxu0 %v3219
      %3910 = vmatprep.subr.bf16.mxu0 %v3228
      %3911 = vmatpush1.bf16.msra.mxu0 %v3227
      %3912 = vmatprep.subr.bf16.mxu0 %v3236
      %3913 = vmatpush1.bf16.msra.mxu0 %v3235
      %3914 = vmatprep.subr.bf16.mxu0 %v3244
      %3915 = vmatpush1.bf16.msra.mxu0 %v3243
      %3916 = vmatprep.subr.bf16.mxu0 %v3252
      %3917 = vmatpush1.bf16.msra.mxu0 %v3251
      %3918 = vmatprep.subr.bf16.mxu0 %v3260
      %3919 = vmatpush1.bf16.msra.mxu0 %v3259
      %3920 = vmatprep.mubr.bf16.mxu0 %v3001
      %3921 = vmatmul.mubr.bf16.gmra.mrb[0].mxu0 %v3000
      %v3922 = vpop.f32.mrb[0].mxu0
      %v3923 = vadd.f32 %v3882, %v3922
      %v3924 = vpop.f32.mrb[0].mxu0
      %v3925 = vadd.f32 %v3884, %v3924
      %v3926 = vpop.f32.mrb[0].mxu0
      %v3927 = vpop.f32.mrb[0].mxu0
      %3928 = vdwg.mxu0
      %3929 = vmatprep.subr.bf16.mxu0 %v3268
      %3930 = vmatpush1.bf16.msra.mxu0 %v3267
      %3931 = vmatprep.subr.bf16.mxu0 %v3276
      %3932 = vmatpush1.bf16.msra.mxu0 %v3275
      %3933 = vmatprep.subr.bf16.mxu0 %v3284
      %3934 = vmatpush1.bf16.msra.mxu0 %v3283
      %3935 = vmatprep.subr.bf16.mxu0 %v3292
      %3936 = vmatpush1.bf16.msra.mxu0 %v3291
      %3937 = vmatprep.subr.bf16.mxu0 %v3300
      %3938 = vmatpush1.bf16.msra.mxu0 %v3299
      %3939 = vmatprep.subr.bf16.mxu0 %v3308
      %3940 = vmatpush1.bf16.msra.mxu0 %v3307
      %3941 = vmatprep.subr.bf16.mxu0 %v3316
      %3942 = vmatpush1.bf16.msra.mxu0 %v3315
      %3943 = vmatprep.subr.bf16.mxu0 %v3324
      %3944 = vmatpush1.bf16.msra.mxu0 %v3323
      %3945 = vmatprep.subr.bf16.mxu0 %v3332
      %3946 = vmatpush1.bf16.msra.mxu0 %v3331
      %3947 = vmatprep.subr.bf16.mxu0 %v3340
      %3948 = vmatpush1.bf16.msra.mxu0 %v3339
      %3949 = vmatprep.subr.bf16.mxu0 %v3348
      %3950 = vmatpush1.bf16.msra.mxu0 %v3347
      %3951 = vmatprep.subr.bf16.mxu0 %v3356
      %3952 = vmatpush1.bf16.msra.mxu0 %v3355
      %3953 = vmatprep.subr.bf16.mxu0 %v3364
      %3954 = vmatpush1.bf16.msra.mxu0 %v3363
      %3955 = vmatprep.subr.bf16.mxu0 %v3372
      %3956 = vmatpush1.bf16.msra.mxu0 %v3371
      %3957 = vmatprep.subr.bf16.mxu0 %v3380
      %3958 = vmatpush1.bf16.msra.mxu0 %v3379
      %3959 = vmatprep.subr.bf16.mxu0 %v3388
      %3960 = vmatpush1.bf16.msra.mxu0 %v3387
      %3961 = vmatprep.mubr.bf16.mxu0 %v3003
      %3962 = vmatmul.mubr.bf16.gmra.mrb[0].mxu0 %v3002
      %v3963 = vpop.f32.mrb[0].mxu0
      %v3964 = vadd.f32 %v3923, %v3963
      %v3965 = vpop.f32.mrb[0].mxu0
      %v3966 = vadd.f32 %v3925, %v3965
      %v3967 = vpop.f32.mrb[0].mxu0
      %v3968 = vpop.f32.mrb[0].mxu0
      %3969 = vdwg.mxu0
      %3970 = vmatprep.subr.bf16.mxu0 %v3396
      %3971 = vmatpush1.bf16.msra.mxu0 %v3395
      %3972 = vmatprep.subr.bf16.mxu0 %v3404
      %3973 = vmatpush1.bf16.msra.mxu0 %v3403
      %3974 = vmatprep.subr.bf16.mxu0 %v3412
      %3975 = vmatpush1.bf16.msra.mxu0 %v3411
      %3976 = vmatprep.subr.bf16.mxu0 %v3420
      %3977 = vmatpush1.bf16.msra.mxu0 %v3419
      %3978 = vmatprep.subr.bf16.mxu0 %v3428
      %3979 = vmatpush1.bf16.msra.mxu0 %v3427
      %3980 = vmatprep.subr.bf16.mxu0 %v3436
      %3981 = vmatpush1.bf16.msra.mxu0 %v3435
      %3982 = vmatprep.subr.bf16.mxu0 %v3444
      %3983 = vmatpush1.bf16.msra.mxu0 %v3443
      %3984 = vmatprep.subr.bf16.mxu0 %v3452
      %3985 = vmatpush1.bf16.msra.mxu0 %v3451
      %3986 = vmatprep.subr.bf16.mxu0 %v3460
      %3987 = vmatpush1.bf16.msra.mxu0 %v3459
      %3988 = vmatprep.subr.bf16.mxu0 %v3468
      %3989 = vmatpush1.bf16.msra.mxu0 %v3467
      %3990 = vmatprep.subr.bf16.mxu0 %v3476
      %3991 = vmatpush1.bf16.msra.mxu0 %v3475
      %3992 = vmatprep.subr.bf16.mxu0 %v3484
      %3993 = vmatpush1.bf16.msra.mxu0 %v3483
      %3994 = vmatprep.subr.bf16.mxu0 %v3492
      %3995 = vmatpush1.bf16.msra.mxu0 %v3491
      %3996 = vmatprep.subr.bf16.mxu0 %v3500
      %3997 = vmatpush1.bf16.msra.mxu0 %v3499
      %3998 = vmatprep.subr.bf16.mxu0 %v3508
      %3999 = vmatpush1.bf16.msra.mxu0 %v3507
      %4000 = vmatprep.subr.bf16.mxu0 %v3516
      %4001 = vmatpush1.bf16.msra.mxu0 %v3515
      %4002 = vmatprep.mubr.bf16.mxu0 %v3005
      %4003 = vmatmul.mubr.bf16.gmra.mrb[0].mxu0 %v3004
      %v4004 = vpop.f32.mrb[0].mxu0
      %v4005 = vadd.f32 %v3964, %v4004
      %v4006 = vpop.f32.mrb[0].mxu0
      %v4007 = vadd.f32 %v3966, %v4006
      %v4008 = vpop.f32.mrb[0].mxu0
      %v4009 = vpop.f32.mrb[0].mxu0
      %4010 = vdwg.mxu0
      %4011 = vmatprep.subr.bf16.mxu0 %v3014
      %4012 = vmatpush1.bf16.msra.mxu0 %v3013
      %4013 = vmatprep.subr.bf16.mxu0 %v3022
      %4014 = vmatpush1.bf16.msra.mxu0 %v3021
      %4015 = vmatprep.subr.bf16.mxu0 %v3030
      %4016 = vmatpush1.bf16.msra.mxu0 %v3029
      %4017 = vmatprep.subr.bf16.mxu0 %v3038
      %4018 = vmatpush1.bf16.msra.mxu0 %v3037
      %4019 = vmatprep.subr.bf16.mxu0 %v3046
      %4020 = vmatpush1.bf16.msra.mxu0 %v3045
      %4021 = vmatprep.subr.bf16.mxu0 %v3054
      %4022 = vmatpush1.bf16.msra.mxu0 %v3053
      %4023 = vmatprep.subr.bf16.mxu0 %v3062
      %4024 = vmatpush1.bf16.msra.mxu0 %v3061
      %4025 = vmatprep.subr.bf16.mxu0 %v3070
      %4026 = vmatpush1.bf16.msra.mxu0 %v3069
      %4027 = vmatprep.subr.bf16.mxu0 %v3078
      %4028 = vmatpush1.bf16.msra.mxu0 %v3077
      %4029 = vmatprep.subr.bf16.mxu0 %v3086
      %4030 = vmatpush1.bf16.msra.mxu0 %v3085
      %4031 = vmatprep.subr.bf16.mxu0 %v3094
      %4032 = vmatpush1.bf16.msra.mxu0 %v3093
      %4033 = vmatprep.subr.bf16.mxu0 %v3102
      %4034 = vmatpush1.bf16.msra.mxu0 %v3101
      %4035 = vmatprep.subr.bf16.mxu0 %v3110
      %4036 = vmatpush1.bf16.msra.mxu0 %v3109
      %4037 = vmatprep.subr.bf16.mxu0 %v3118
      %4038 = vmatpush1.bf16.msra.mxu0 %v3117
      %4039 = vmatprep.subr.bf16.mxu0 %v3126
      %4040 = vmatpush1.bf16.msra.mxu0 %v3125
      %4041 = vmatprep.subr.bf16.mxu0 %v3134
      %4042 = vmatpush1.bf16.msra.mxu0 %v3133
      %4043 = vmatprep.mubr.bf16.mxu0 %v2999
      %4044 = vmatmul.mubr.bf16.gmra.mrb[0].mxu0 %v2998
      %v4045 = vpop.f32.mrb[0].mxu0
      %v4046 = vadd.f32 0.0, %v4045
      %v4047 = vpop.f32.mrb[0].mxu0
      %v4048 = vadd.f32 0.0, %v4047
      %v4049 = vpop.f32.mrb[0].mxu0
      %v4050 = vpop.f32.mrb[0].mxu0
      %4051 = vdwg.mxu0
      %4052 = vmatprep.subr.bf16.mxu0 %v3142
      %4053 = vmatpush1.bf16.msra.mxu0 %v3141
      %4054 = vmatprep.subr.bf16.mxu0 %v3150
      %4055 = vmatpush1.bf16.msra.mxu0 %v3149
      %4056 = vmatprep.subr.bf16.mxu0 %v3158
      %4057 = vmatpush1.bf16.msra.mxu0 %v3157
      %4058 = vmatprep.subr.bf16.mxu0 %v3166
      %4059 = vmatpush1.bf16.msra.mxu0 %v3165
      %4060 = vmatprep.subr.bf16.mxu0 %v3174
      %4061 = vmatpush1.bf16.msra.mxu0 %v3173
      %4062 = vmatprep.subr.bf16.mxu0 %v3182
      %4063 = vmatpush1.bf16.msra.mxu0 %v3181
      %4064 = vmatprep.subr.bf16.mxu0 %v3190
      %4065 = vmatpush1.bf16.msra.mxu0 %v3189
      %4066 = vmatprep.subr.bf16.mxu0 %v3198
      %4067 = vmatpush1.bf16.msra.mxu0 %v3197
      %4068 = vmatprep.subr.bf16.mxu0 %v3206
      %4069 = vmatpush1.bf16.msra.mxu0 %v3205
      %4070 = vmatprep.subr.bf16.mxu0 %v3214
      %4071 = vmatpush1.bf16.msra.mxu0 %v3213
      %4072 = vmatprep.subr.bf16.mxu0 %v3222
      %4073 = vmatpush1.bf16.msra.mxu0 %v3221
      %4074 = vmatprep.subr.bf16.mxu0 %v3230
      %4075 = vmatpush1.bf16.msra.mxu0 %v3229
      %4076 = vmatprep.subr.bf16.mxu0 %v3238
      %4077 = vmatpush1.bf16.msra.mxu0 %v3237
      %4078 = vmatprep.subr.bf16.mxu0 %v3246
      %4079 = vmatpush1.bf16.msra.mxu0 %v3245
      %4080 = vmatprep.subr.bf16.mxu0 %v3254
      %4081 = vmatpush1.bf16.msra.mxu0 %v3253
      %4082 = vmatprep.subr.bf16.mxu0 %v3262
      %4083 = vmatpush1.bf16.msra.mxu0 %v3261
      %4084 = vmatprep.mubr.bf16.mxu0 %v3001
      %4085 = vmatmul.mubr.bf16.gmra.mrb[0].mxu0 %v3000
      %v4086 = vpop.f32.mrb[0].mxu0
      %v4087 = vadd.f32 %v4046, %v4086
      %v4088 = vpop.f32.mrb[0].mxu0
      %v4089 = vadd.f32 %v4048, %v4088
      %v4090 = vpop.f32.mrb[0].mxu0
      %v4091 = vpop.f32.mrb[0].mxu0
      %4092 = vdwg.mxu0
      %4093 = vmatprep.subr.bf16.mxu0 %v3270
      %4094 = vmatpush1.bf16.msra.mxu0 %v3269
      %4095 = vmatprep.subr.bf16.mxu0 %v3278
      %4096 = vmatpush1.bf16.msra.mxu0 %v3277
      %4097 = vmatprep.subr.bf16.mxu0 %v3286
      %4098 = vmatpush1.bf16.msra.mxu0 %v3285
      %4099 = vmatprep.subr.bf16.mxu0 %v3294
      %4100 = vmatpush1.bf16.msra.mxu0 %v3293
      %4101 = vmatprep.subr.bf16.mxu0 %v3302
      %4102 = vmatpush1.bf16.msra.mxu0 %v3301
      %4103 = vmatprep.subr.bf16.mxu0 %v3310
      %4104 = vmatpush1.bf16.msra.mxu0 %v3309
      %4105 = vmatprep.subr.bf16.mxu0 %v3318
      %4106 = vmatpush1.bf16.msra.mxu0 %v3317
      %4107 = vmatprep.subr.bf16.mxu0 %v3326
      %4108 = vmatpush1.bf16.msra.mxu0 %v3325
      %4109 = vmatprep.subr.bf16.mxu0 %v3334
      %4110 = vmatpush1.bf16.msra.mxu0 %v3333
      %4111 = vmatprep.subr.bf16.mxu0 %v3342
      %4112 = vmatpush1.bf16.msra.mxu0 %v3341
      %4113 = vmatprep.subr.bf16.mxu0 %v3350
      %4114 = vmatpush1.bf16.msra.mxu0 %v3349
      %4115 = vmatprep.subr.bf16.mxu0 %v3358
      %4116 = vmatpush1.bf16.msra.mxu0 %v3357
      %4117 = vmatprep.subr.bf16.mxu0 %v3366
      %4118 = vmatpush1.bf16.msra.mxu0 %v3365
      %4119 = vmatprep.subr.bf16.mxu0 %v3374
      %4120 = vmatpush1.bf16.msra.mxu0 %v3373
      %4121 = vmatprep.subr.bf16.mxu0 %v3382
      %4122 = vmatpush1.bf16.msra.mxu0 %v3381
      %4123 = vmatprep.subr.bf16.mxu0 %v3390
      %4124 = vmatpush1.bf16.msra.mxu0 %v3389
      %4125 = vmatprep.mubr.bf16.mxu0 %v3003
      %4126 = vmatmul.mubr.bf16.gmra.mrb[0].mxu0 %v3002
      %v4127 = vpop.f32.mrb[0].mxu0
      %v4128 = vadd.f32 %v4087, %v4127
      %v4129 = vpop.f32.mrb[0].mxu0
      %v4130 = vadd.f32 %v4089, %v4129
      %v4131 = vpop.f32.mrb[0].mxu0
      %v4132 = vpop.f32.mrb[0].mxu0
      %4133 = vdwg.mxu0
      %4134 = vmatprep.subr.bf16.mxu0 %v3398
      %4135 = vmatpush1.bf16.msra.mxu0 %v3397
      %4136 = vmatprep.subr.bf16.mxu0 %v3406
      %4137 = vmatpush1.bf16.msra.mxu0 %v3405
      %4138 = vmatprep.subr.bf16.mxu0 %v3414
      %4139 = vmatpush1.bf16.msra.mxu0 %v3413
      %4140 = vmatprep.subr.bf16.mxu0 %v3422
      %4141 = vmatpush1.bf16.msra.mxu0 %v3421
      %4142 = vmatprep.subr.bf16.mxu0 %v3430
      %4143 = vmatpush1.bf16.msra.mxu0 %v3429
      %4144 = vmatprep.subr.bf16.mxu0 %v3438
      %4145 = vmatpush1.bf16.msra.mxu0 %v3437
      %4146 = vmatprep.subr.bf16.mxu0 %v3446
      %4147 = vmatpush1.bf16.msra.mxu0 %v3445
      %4148 = vmatprep.subr.bf16.mxu0 %v3454
      %4149 = vmatpush1.bf16.msra.mxu0 %v3453
      %4150 = vmatprep.subr.bf16.mxu0 %v3462
      %4151 = vmatpush1.bf16.msra.mxu0 %v3461
      %4152 = vmatprep.subr.bf16.mxu0 %v3470
      %4153 = vmatpush1.bf16.msra.mxu0 %v3469
      %4154 = vmatprep.subr.bf16.mxu0 %v3478
      %4155 = vmatpush1.bf16.msra.mxu0 %v3477
      %4156 = vmatprep.subr.bf16.mxu0 %v3486
      %4157 = vmatpush1.bf16.msra.mxu0 %v3485
      %4158 = vmatprep.subr.bf16.mxu0 %v3494
      %4159 = vmatpush1.bf16.msra.mxu0 %v3493
      %4160 = vmatprep.subr.bf16.mxu0 %v3502
      %4161 = vmatpush1.bf16.msra.mxu0 %v3501
      %4162 = vmatprep.subr.bf16.mxu0 %v3510
      %4163 = vmatpush1.bf16.msra.mxu0 %v3509
      %4164 = vmatprep.subr.bf16.mxu0 %v3518
      %4165 = vmatpush1.bf16.msra.mxu0 %v3517
      %4166 = vmatprep.mubr.bf16.mxu0 %v3005
      %4167 = vmatmul.mubr.bf16.gmra.mrb[0].mxu0 %v3004
      %v4168 = vpop.f32.mrb[0].mxu0
      %v4169 = vadd.f32 %v4128, %v4168
      %v4170 = vpop.f32.mrb[0].mxu0
      %v4171 = vadd.f32 %v4130, %v4170
      %v4172 = vpop.f32.mrb[0].mxu0
      %v4173 = vpop.f32.mrb[0].mxu0
      %4174 = vdwg.mxu0
      %s4175 = scalar_lea.vmem [#allocation11], 1
      %v4176 = vld [vmem:[%s4175] ss:$4 sm:$0xff]
      %v4178 = vlaneseq
      %v4179 = vshrl.u32 %v4178, 7
      %v4180 = vsub.s32 0, %v4179
      %v4181 = vrot.slane %v4176, %v4180
      %v4182 = vlaneseq
      %v4183 = vshrl.u32 %v4182, 7
      %v4184 = vsub.s32 1, %v4183
      %v4185 = vrot.slane %v4176, %v4184
      %v4186 = vlaneseq
      %v4187 = vshrl.u32 %v4186, 7
      %v4188 = vsub.s32 2, %v4187
      %v4189 = vrot.slane %v4176, %v4188
      %v4190 = vlaneseq
      %v4191 = vshrl.u32 %v4190, 7
      %v4192 = vsub.s32 3, %v4191
      %v4193 = vrot.slane %v4176, %v4192
      %v4194 = vlaneseq
      %v4195 = vshrl.u32 %v4194, 7
      %v4196 = vsub.s32 4, %v4195
      %v4197 = vrot.slane %v4176, %v4196
      %v4198 = vlaneseq
      %v4199 = vshrl.u32 %v4198, 7
      %v4200 = vsub.s32 5, %v4199
      %v4201 = vrot.slane %v4176, %v4200
      %v4202 = vlaneseq
      %v4203 = vshrl.u32 %v4202, 7
      %v4204 = vsub.s32 6, %v4203
      %v4205 = vrot.slane %v4176, %v4204
      %v4206 = vlaneseq
      %v4207 = vshrl.u32 %v4206, 7
      %v4208 = vsub.s32 7, %v4207
      %v4209 = vrot.slane %v4176, %v4208
      %v4218 = vmul.f32 %v3677, %v4181
      %v4219 = vmul.f32 %v3679, %v4185
      %v4220 = vmul.f32 %v3841, %v4189
      %v4221 = vmul.f32 %v3843, %v4193
      %v4222 = vmul.f32 %v4005, %v4197
      %v4223 = vmul.f32 %v4007, %v4201
      %v4224 = vmul.f32 %v4169, %v4205
      %v4225 = vmul.f32 %v4171, %v4209
      %s4226 = scalar_lea.vmem [#allocation12], 1
      %v4227 = vld [vmem:[%s4226] ss:$4 sm:$0xff]
      %v4229 = vlaneseq
      %v4230 = vshrl.u32 %v4229, 7
      %v4231 = vsub.s32 0, %v4230
      %v4232 = vrot.slane %v4227, %v4231
      %v4233 = vlaneseq
      %v4234 = vshrl.u32 %v4233, 7
      %v4235 = vsub.s32 1, %v4234
      %v4236 = vrot.slane %v4227, %v4235
      %v4237 = vlaneseq
      %v4238 = vshrl.u32 %v4237, 7
      %v4239 = vsub.s32 2, %v4238
      %v4240 = vrot.slane %v4227, %v4239
      %v4241 = vlaneseq
      %v4242 = vshrl.u32 %v4241, 7
      %v4243 = vsub.s32 3, %v4242
      %v4244 = vrot.slane %v4227, %v4243
      %v4245 = vlaneseq
      %v4246 = vshrl.u32 %v4245, 7
      %v4247 = vsub.s32 4, %v4246
      %v4248 = vrot.slane %v4227, %v4247
      %v4249 = vlaneseq
      %v4250 = vshrl.u32 %v4249, 7
      %v4251 = vsub.s32 5, %v4250
      %v4252 = vrot.slane %v4227, %v4251
      %v4253 = vlaneseq
      %v4254 = vshrl.u32 %v4253, 7
      %v4255 = vsub.s32 6, %v4254
      %v4256 = vrot.slane %v4227, %v4255
      %v4257 = vlaneseq
      %v4258 = vshrl.u32 %v4257, 7
      %v4259 = vsub.s32 7, %v4258
      %v4260 = vrot.slane %v4227, %v4259
      %v4269 = vadd.f32 %v4218, %v4232
      %v4270 = vadd.f32 %v4219, %v4236
      %v4271 = vadd.f32 %v4220, %v4240
      %v4272 = vadd.f32 %v4221, %v4244
      %v4273 = vadd.f32 %v4222, %v4248
      %v4274 = vadd.f32 %v4223, %v4252
      %v4275 = vadd.f32 %v4224, %v4256
      %v4276 = vadd.f32 %v4225, %v4260
      %v4277 = vmax.f32 %v4269, 0.0
      %v4278 = vmax.f32 %v4270, 0.0
      %v4279 = vmax.f32 %v4271, 0.0
      %v4280 = vmax.f32 %v4272, 0.0
      %v4281 = vmax.f32 %v4273, 0.0
      %v4282 = vmax.f32 %v4274, 0.0
      %v4283 = vmax.f32 %v4275, 0.0
      %v4284 = vmax.f32 %v4276, 0.0
      %v4285 = vpack.c.bf16 %v4277, %v4277
      %v4286 = vpack.c.bf16 %v4278, %v4278
      %v4287 = vpack.c.bf16 %v4279, %v4279
      %v4288 = vpack.c.bf16 %v4280, %v4280
      %v4289 = vpack.c.bf16 %v4281, %v4281
      %v4290 = vpack.c.bf16 %v4282, %v4282
      %v4291 = vpack.c.bf16 %v4283, %v4283
      %v4292 = vpack.c.bf16 %v4284, %v4284
      %s4293 = scalar_lea.vmem [#allocation3], 8192
      %v4294 = vld [vmem:[%s4293] sm:$0xff]
      %v4295 = vld [vmem:[%s4293 + $0x8] sm:$0xff]
      %v4296 = vld [vmem:[%s4293 + $0x10] sm:$0xff]
      %v4297 = vld [vmem:[%s4293 + $0x18] sm:$0xff]
      %v4298 = vld [vmem:[%s4293 + $0x20] sm:$0xff]
      %v4299 = vld [vmem:[%s4293 + $0x28] sm:$0xff]
      %v4300 = vld [vmem:[%s4293 + $0x30] sm:$0xff]
      %v4301 = vld [vmem:[%s4293 + $0x38] sm:$0xff]
      %v4302 = vld [vmem:[%s4293 + $0x40] sm:$0xff]
      %v4303 = vld [vmem:[%s4293 + $0x48] sm:$0xff]
      %v4304 = vld [vmem:[%s4293 + $0x50] sm:$0xff]
      %v4305 = vld [vmem:[%s4293 + $0x58] sm:$0xff]
      %v4306 = vld [vmem:[%s4293 + $0x60] sm:$0xff]
      %v4307 = vld [vmem:[%s4293 + $0x68] sm:$0xff]
      %v4308 = vld [vmem:[%s4293 + $0x70] sm:$0xff]
      %v4309 = vld [vmem:[%s4293 + $0x78] sm:$0xff]
      %v4310 = vld [vmem:[%s4293 + $0x80] sm:$0xff]
      %v4311 = vld [vmem:[%s4293 + $0x88] sm:$0xff]
      %v4312 = vld [vmem:[%s4293 + $0x90] sm:$0xff]
      %v4313 = vld [vmem:[%s4293 + $0x98] sm:$0xff]
      %v4314 = vld [vmem:[%s4293 + $0xa0] sm:$0xff]
      %v4315 = vld [vmem:[%s4293 + $0xa8] sm:$0xff]
      %v4316 = vld [vmem:[%s4293 + $0xb0] sm:$0xff]
      %v4317 = vld [vmem:[%s4293 + $0xb8] sm:$0xff]
      %v4318 = vld [vmem:[%s4293 + $0xc0] sm:$0xff]
      %v4319 = vld [vmem:[%s4293 + $0xc8] sm:$0xff]
      %v4320 = vld [vmem:[%s4293 + $0xd0] sm:$0xff]
      %v4321 = vld [vmem:[%s4293 + $0xd8] sm:$0xff]
      %v4322 = vld [vmem:[%s4293 + $0xe0] sm:$0xff]
      %v4323 = vld [vmem:[%s4293 + $0xe8] sm:$0xff]
      %v4324 = vld [vmem:[%s4293 + $0xf0] sm:$0xff]
      %v4325 = vld [vmem:[%s4293 + $0xf8] sm:$0xff]
      %v4326 = vld [vmem:[%s4293 + $0x100] sm:$0xff]
      %v4327 = vld [vmem:[%s4293 + $0x108] sm:$0xff]
      %v4328 = vld [vmem:[%s4293 + $0x110] sm:$0xff]
      %v4329 = vld [vmem:[%s4293 + $0x118] sm:$0xff]
      %v4330 = vld [vmem:[%s4293 + $0x120] sm:$0xff]
      %v4331 = vld [vmem:[%s4293 + $0x128] sm:$0xff]
      %v4332 = vld [vmem:[%s4293 + $0x130] sm:$0xff]
      %v4333 = vld [vmem:[%s4293 + $0x138] sm:$0xff]
      %v4334 = vld [vmem:[%s4293 + $0x140] sm:$0xff]
      %v4335 = vld [vmem:[%s4293 + $0x148] sm:$0xff]
      %v4336 = vld [vmem:[%s4293 + $0x150] sm:$0xff]
      %v4337 = vld [vmem:[%s4293 + $0x158] sm:$0xff]
      %v4338 = vld [vmem:[%s4293 + $0x160] sm:$0xff]
      %v4339 = vld [vmem:[%s4293 + $0x168] sm:$0xff]
      %v4340 = vld [vmem:[%s4293 + $0x170] sm:$0xff]
      %v4341 = vld [vmem:[%s4293 + $0x178] sm:$0xff]
      %v4342 = vld [vmem:[%s4293 + $0x180] sm:$0xff]
      %v4343 = vld [vmem:[%s4293 + $0x188] sm:$0xff]
      %v4344 = vld [vmem:[%s4293 + $0x190] sm:$0xff]
      %v4345 = vld [vmem:[%s4293 + $0x198] sm:$0xff]
      %v4346 = vld [vmem:[%s4293 + $0x1a0] sm:$0xff]
      %v4347 = vld [vmem:[%s4293 + $0x1a8] sm:$0xff]
      %v4348 = vld [vmem:[%s4293 + $0x1b0] sm:$0xff]
      %v4349 = vld [vmem:[%s4293 + $0x1b8] sm:$0xff]
      %v4350 = vld [vmem:[%s4293 + $0x1c0] sm:$0xff]
      %v4351 = vld [vmem:[%s4293 + $0x1c8] sm:$0xff]
      %v4352 = vld [vmem:[%s4293 + $0x1d0] sm:$0xff]
      %v4353 = vld [vmem:[%s4293 + $0x1d8] sm:$0xff]
      %v4354 = vld [vmem:[%s4293 + $0x1e0] sm:$0xff]
      %v4355 = vld [vmem:[%s4293 + $0x1e8] sm:$0xff]
      %v4356 = vld [vmem:[%s4293 + $0x1f0] sm:$0xff]
      %v4357 = vld [vmem:[%s4293 + $0x1f8] sm:$0xff]
      %v4358 = vld [vmem:[%s4293 + $0x200] sm:$0xff]
      %v4359 = vld [vmem:[%s4293 + $0x208] sm:$0xff]
      %v4360 = vld [vmem:[%s4293 + $0x210] sm:$0xff]
      %v4361 = vld [vmem:[%s4293 + $0x218] sm:$0xff]
      %v4362 = vld [vmem:[%s4293 + $0x220] sm:$0xff]
      %v4363 = vld [vmem:[%s4293 + $0x228] sm:$0xff]
      %v4364 = vld [vmem:[%s4293 + $0x230] sm:$0xff]
      %v4365 = vld [vmem:[%s4293 + $0x238] sm:$0xff]
      %v4366 = vld [vmem:[%s4293 + $0x240] sm:$0xff]
      %v4367 = vld [vmem:[%s4293 + $0x248] sm:$0xff]
      %v4368 = vld [vmem:[%s4293 + $0x250] sm:$0xff]
      %v4369 = vld [vmem:[%s4293 + $0x258] sm:$0xff]
      %v4370 = vld [vmem:[%s4293 + $0x260] sm:$0xff]
      %v4371 = vld [vmem:[%s4293 + $0x268] sm:$0xff]
      %v4372 = vld [vmem:[%s4293 + $0x270] sm:$0xff]
      %v4373 = vld [vmem:[%s4293 + $0x278] sm:$0xff]
      %v4374 = vld [vmem:[%s4293 + $0x280] sm:$0xff]
      %v4375 = vld [vmem:[%s4293 + $0x288] sm:$0xff]
      %v4376 = vld [vmem:[%s4293 + $0x290] sm:$0xff]
      %v4377 = vld [vmem:[%s4293 + $0x298] sm:$0xff]
      %v4378 = vld [vmem:[%s4293 + $0x2a0] sm:$0xff]
      %v4379 = vld [vmem:[%s4293 + $0x2a8] sm:$0xff]
      %v4380 = vld [vmem:[%s4293 + $0x2b0] sm:$0xff]
      %v4381 = vld [vmem:[%s4293 + $0x2b8] sm:$0xff]
      %v4382 = vld [vmem:[%s4293 + $0x2c0] sm:$0xff]
      %v4383 = vld [vmem:[%s4293 + $0x2c8] sm:$0xff]
      %v4384 = vld [vmem:[%s4293 + $0x2d0] sm:$0xff]
      %v4385 = vld [vmem:[%s4293 + $0x2d8] sm:$0xff]
      %v4386 = vld [vmem:[%s4293 + $0x2e0] sm:$0xff]
      %v4387 = vld [vmem:[%s4293 + $0x2e8] sm:$0xff]
      %v4388 = vld [vmem:[%s4293 + $0x2f0] sm:$0xff]
      %v4389 = vld [vmem:[%s4293 + $0x2f8] sm:$0xff]
      %v4390 = vld [vmem:[%s4293 + $0x300] sm:$0xff]
      %v4391 = vld [vmem:[%s4293 + $0x308] sm:$0xff]
      %v4392 = vld [vmem:[%s4293 + $0x310] sm:$0xff]
      %v4393 = vld [vmem:[%s4293 + $0x318] sm:$0xff]
      %v4394 = vld [vmem:[%s4293 + $0x320] sm:$0xff]
      %v4395 = vld [vmem:[%s4293 + $0x328] sm:$0xff]
      %v4396 = vld [vmem:[%s4293 + $0x330] sm:$0xff]
      %v4397 = vld [vmem:[%s4293 + $0x338] sm:$0xff]
      %v4398 = vld [vmem:[%s4293 + $0x340] sm:$0xff]
      %v4399 = vld [vmem:[%s4293 + $0x348] sm:$0xff]
      %v4400 = vld [vmem:[%s4293 + $0x350] sm:$0xff]
      %v4401 = vld [vmem:[%s4293 + $0x358] sm:$0xff]
      %v4402 = vld [vmem:[%s4293 + $0x360] sm:$0xff]
      %v4403 = vld [vmem:[%s4293 + $0x368] sm:$0xff]
      %v4404 = vld [vmem:[%s4293 + $0x370] sm:$0xff]
      %v4405 = vld [vmem:[%s4293 + $0x378] sm:$0xff]
      %v4406 = vld [vmem:[%s4293 + $0x380] sm:$0xff]
      %v4407 = vld [vmem:[%s4293 + $0x388] sm:$0xff]
      %v4408 = vld [vmem:[%s4293 + $0x390] sm:$0xff]
      %v4409 = vld [vmem:[%s4293 + $0x398] sm:$0xff]
      %v4410 = vld [vmem:[%s4293 + $0x3a0] sm:$0xff]
      %v4411 = vld [vmem:[%s4293 + $0x3a8] sm:$0xff]
      %v4412 = vld [vmem:[%s4293 + $0x3b0] sm:$0xff]
      %v4413 = vld [vmem:[%s4293 + $0x3b8] sm:$0xff]
      %v4414 = vld [vmem:[%s4293 + $0x3c0] sm:$0xff]
      %v4415 = vld [vmem:[%s4293 + $0x3c8] sm:$0xff]
      %v4416 = vld [vmem:[%s4293 + $0x3d0] sm:$0xff]
      %v4417 = vld [vmem:[%s4293 + $0x3d8] sm:$0xff]
      %v4418 = vld [vmem:[%s4293 + $0x3e0] sm:$0xff]
      %v4419 = vld [vmem:[%s4293 + $0x3e8] sm:$0xff]
      %v4420 = vld [vmem:[%s4293 + $0x3f0] sm:$0xff]
      %v4421 = vld [vmem:[%s4293 + $0x3f8] sm:$0xff]
      %v4422 = vld [vmem:[%s4293 + $0x400] sm:$0xff]
      %v4423 = vld [vmem:[%s4293 + $0x408] sm:$0xff]
      %v4424 = vld [vmem:[%s4293 + $0x410] sm:$0xff]
      %v4425 = vld [vmem:[%s4293 + $0x418] sm:$0xff]
      %v4426 = vld [vmem:[%s4293 + $0x420] sm:$0xff]
      %v4427 = vld [vmem:[%s4293 + $0x428] sm:$0xff]
      %v4428 = vld [vmem:[%s4293 + $0x430] sm:$0xff]
      %v4429 = vld [vmem:[%s4293 + $0x438] sm:$0xff]
      %v4430 = vld [vmem:[%s4293 + $0x440] sm:$0xff]
      %v4431 = vld [vmem:[%s4293 + $0x448] sm:$0xff]
      %v4432 = vld [vmem:[%s4293 + $0x450] sm:$0xff]
      %v4433 = vld [vmem:[%s4293 + $0x458] sm:$0xff]
      %v4434 = vld [vmem:[%s4293 + $0x460] sm:$0xff]
      %v4435 = vld [vmem:[%s4293 + $0x468] sm:$0xff]
      %v4436 = vld [vmem:[%s4293 + $0x470] sm:$0xff]
      %v4437 = vld [vmem:[%s4293 + $0x478] sm:$0xff]
      %v4438 = vld [vmem:[%s4293 + $0x480] sm:$0xff]
      %v4439 = vld [vmem:[%s4293 + $0x488] sm:$0xff]
      %v4440 = vld [vmem:[%s4293 + $0x490] sm:$0xff]
      %v4441 = vld [vmem:[%s4293 + $0x498] sm:$0xff]
      %v4442 = vld [vmem:[%s4293 + $0x4a0] sm:$0xff]
      %v4443 = vld [vmem:[%s4293 + $0x4a8] sm:$0xff]
      %v4444 = vld [vmem:[%s4293 + $0x4b0] sm:$0xff]
      %v4445 = vld [vmem:[%s4293 + $0x4b8] sm:$0xff]
      %v4446 = vld [vmem:[%s4293 + $0x4c0] sm:$0xff]
      %v4447 = vld [vmem:[%s4293 + $0x4c8] sm:$0xff]
      %v4448 = vld [vmem:[%s4293 + $0x4d0] sm:$0xff]
      %v4449 = vld [vmem:[%s4293 + $0x4d8] sm:$0xff]
      %v4450 = vld [vmem:[%s4293 + $0x4e0] sm:$0xff]
      %v4451 = vld [vmem:[%s4293 + $0x4e8] sm:$0xff]
      %v4452 = vld [vmem:[%s4293 + $0x4f0] sm:$0xff]
      %v4453 = vld [vmem:[%s4293 + $0x4f8] sm:$0xff]
      %v4454 = vld [vmem:[%s4293 + $0x500] sm:$0xff]
      %v4455 = vld [vmem:[%s4293 + $0x508] sm:$0xff]
      %v4456 = vld [vmem:[%s4293 + $0x510] sm:$0xff]
      %v4457 = vld [vmem:[%s4293 + $0x518] sm:$0xff]
      %v4458 = vld [vmem:[%s4293 + $0x520] sm:$0xff]
      %v4459 = vld [vmem:[%s4293 + $0x528] sm:$0xff]
      %v4460 = vld [vmem:[%s4293 + $0x530] sm:$0xff]
      %v4461 = vld [vmem:[%s4293 + $0x538] sm:$0xff]
      %v4462 = vld [vmem:[%s4293 + $0x540] sm:$0xff]
      %v4463 = vld [vmem:[%s4293 + $0x548] sm:$0xff]
      %v4464 = vld [vmem:[%s4293 + $0x550] sm:$0xff]
      %v4465 = vld [vmem:[%s4293 + $0x558] sm:$0xff]
      %v4466 = vld [vmem:[%s4293 + $0x560] sm:$0xff]
      %v4467 = vld [vmem:[%s4293 + $0x568] sm:$0xff]
      %v4468 = vld [vmem:[%s4293 + $0x570] sm:$0xff]
      %v4469 = vld [vmem:[%s4293 + $0x578] sm:$0xff]
      %v4470 = vld [vmem:[%s4293 + $0x580] sm:$0xff]
      %v4471 = vld [vmem:[%s4293 + $0x588] sm:$0xff]
      %v4472 = vld [vmem:[%s4293 + $0x590] sm:$0xff]
      %v4473 = vld [vmem:[%s4293 + $0x598] sm:$0xff]
      %v4474 = vld [vmem:[%s4293 + $0x5a0] sm:$0xff]
      %v4475 = vld [vmem:[%s4293 + $0x5a8] sm:$0xff]
      %v4476 = vld [vmem:[%s4293 + $0x5b0] sm:$0xff]
      %v4477 = vld [vmem:[%s4293 + $0x5b8] sm:$0xff]
      %v4478 = vld [vmem:[%s4293 + $0x5c0] sm:$0xff]
      %v4479 = vld [vmem:[%s4293 + $0x5c8] sm:$0xff]
      %v4480 = vld [vmem:[%s4293 + $0x5d0] sm:$0xff]
      %v4481 = vld [vmem:[%s4293 + $0x5d8] sm:$0xff]
      %v4482 = vld [vmem:[%s4293 + $0x5e0] sm:$0xff]
      %v4483 = vld [vmem:[%s4293 + $0x5e8] sm:$0xff]
      %v4484 = vld [vmem:[%s4293 + $0x5f0] sm:$0xff]
      %v4485 = vld [vmem:[%s4293 + $0x5f8] sm:$0xff]
      %v4486 = vld [vmem:[%s4293 + $0x600] sm:$0xff]
      %v4487 = vld [vmem:[%s4293 + $0x608] sm:$0xff]
      %v4488 = vld [vmem:[%s4293 + $0x610] sm:$0xff]
      %v4489 = vld [vmem:[%s4293 + $0x618] sm:$0xff]
      %v4490 = vld [vmem:[%s4293 + $0x620] sm:$0xff]
      %v4491 = vld [vmem:[%s4293 + $0x628] sm:$0xff]
      %v4492 = vld [vmem:[%s4293 + $0x630] sm:$0xff]
      %v4493 = vld [vmem:[%s4293 + $0x638] sm:$0xff]
      %v4494 = vld [vmem:[%s4293 + $0x640] sm:$0xff]
      %v4495 = vld [vmem:[%s4293 + $0x648] sm:$0xff]
      %v4496 = vld [vmem:[%s4293 + $0x650] sm:$0xff]
      %v4497 = vld [vmem:[%s4293 + $0x658] sm:$0xff]
      %v4498 = vld [vmem:[%s4293 + $0x660] sm:$0xff]
      %v4499 = vld [vmem:[%s4293 + $0x668] sm:$0xff]
      %v4500 = vld [vmem:[%s4293 + $0x670] sm:$0xff]
      %v4501 = vld [vmem:[%s4293 + $0x678] sm:$0xff]
      %v4502 = vld [vmem:[%s4293 + $0x680] sm:$0xff]
      %v4503 = vld [vmem:[%s4293 + $0x688] sm:$0xff]
      %v4504 = vld [vmem:[%s4293 + $0x690] sm:$0xff]
      %v4505 = vld [vmem:[%s4293 + $0x698] sm:$0xff]
      %v4506 = vld [vmem:[%s4293 + $0x6a0] sm:$0xff]
      %v4507 = vld [vmem:[%s4293 + $0x6a8] sm:$0xff]
      %v4508 = vld [vmem:[%s4293 + $0x6b0] sm:$0xff]
      %v4509 = vld [vmem:[%s4293 + $0x6b8] sm:$0xff]
      %v4510 = vld [vmem:[%s4293 + $0x6c0] sm:$0xff]
      %v4511 = vld [vmem:[%s4293 + $0x6c8] sm:$0xff]
      %v4512 = vld [vmem:[%s4293 + $0x6d0] sm:$0xff]
      %v4513 = vld [vmem:[%s4293 + $0x6d8] sm:$0xff]
      %v4514 = vld [vmem:[%s4293 + $0x6e0] sm:$0xff]
      %v4515 = vld [vmem:[%s4293 + $0x6e8] sm:$0xff]
      %v4516 = vld [vmem:[%s4293 + $0x6f0] sm:$0xff]
      %v4517 = vld [vmem:[%s4293 + $0x6f8] sm:$0xff]
      %v4518 = vld [vmem:[%s4293 + $0x700] sm:$0xff]
      %v4519 = vld [vmem:[%s4293 + $0x708] sm:$0xff]
      %v4520 = vld [vmem:[%s4293 + $0x710] sm:$0xff]
      %v4521 = vld [vmem:[%s4293 + $0x718] sm:$0xff]
      %v4522 = vld [vmem:[%s4293 + $0x720] sm:$0xff]
      %v4523 = vld [vmem:[%s4293 + $0x728] sm:$0xff]
      %v4524 = vld [vmem:[%s4293 + $0x730] sm:$0xff]
      %v4525 = vld [vmem:[%s4293 + $0x738] sm:$0xff]
      %v4526 = vld [vmem:[%s4293 + $0x740] sm:$0xff]
      %v4527 = vld [vmem:[%s4293 + $0x748] sm:$0xff]
      %v4528 = vld [vmem:[%s4293 + $0x750] sm:$0xff]
      %v4529 = vld [vmem:[%s4293 + $0x758] sm:$0xff]
      %v4530 = vld [vmem:[%s4293 + $0x760] sm:$0xff]
      %v4531 = vld [vmem:[%s4293 + $0x768] sm:$0xff]
      %v4532 = vld [vmem:[%s4293 + $0x770] sm:$0xff]
      %v4533 = vld [vmem:[%s4293 + $0x778] sm:$0xff]
      %v4534 = vld [vmem:[%s4293 + $0x780] sm:$0xff]
      %v4535 = vld [vmem:[%s4293 + $0x788] sm:$0xff]
      %v4536 = vld [vmem:[%s4293 + $0x790] sm:$0xff]
      %v4537 = vld [vmem:[%s4293 + $0x798] sm:$0xff]
      %v4538 = vld [vmem:[%s4293 + $0x7a0] sm:$0xff]
      %v4539 = vld [vmem:[%s4293 + $0x7a8] sm:$0xff]
      %v4540 = vld [vmem:[%s4293 + $0x7b0] sm:$0xff]
      %v4541 = vld [vmem:[%s4293 + $0x7b8] sm:$0xff]
      %v4542 = vld [vmem:[%s4293 + $0x7c0] sm:$0xff]
      %v4543 = vld [vmem:[%s4293 + $0x7c8] sm:$0xff]
      %v4544 = vld [vmem:[%s4293 + $0x7d0] sm:$0xff]
      %v4545 = vld [vmem:[%s4293 + $0x7d8] sm:$0xff]
      %v4546 = vld [vmem:[%s4293 + $0x7e0] sm:$0xff]
      %v4547 = vld [vmem:[%s4293 + $0x7e8] sm:$0xff]
      %v4548 = vld [vmem:[%s4293 + $0x7f0] sm:$0xff]
      %v4549 = vld [vmem:[%s4293 + $0x7f8] sm:$0xff]
      %v4550 = vld [vmem:[%s4293 + $0x800] sm:$0xff]
      %v4551 = vld [vmem:[%s4293 + $0x808] sm:$0xff]
      %v4552 = vld [vmem:[%s4293 + $0x810] sm:$0xff]
      %v4553 = vld [vmem:[%s4293 + $0x818] sm:$0xff]
      %v4554 = vld [vmem:[%s4293 + $0x820] sm:$0xff]
      %v4555 = vld [vmem:[%s4293 + $0x828] sm:$0xff]
      %v4556 = vld [vmem:[%s4293 + $0x830] sm:$0xff]
      %v4557 = vld [vmem:[%s4293 + $0x838] sm:$0xff]
      %v4558 = vld [vmem:[%s4293 + $0x840] sm:$0xff]
      %v4559 = vld [vmem:[%s4293 + $0x848] sm:$0xff]
      %v4560 = vld [vmem:[%s4293 + $0x850] sm:$0xff]
      %v4561 = vld [vmem:[%s4293 + $0x858] sm:$0xff]
      %v4562 = vld [vmem:[%s4293 + $0x860] sm:$0xff]
      %v4563 = vld [vmem:[%s4293 + $0x868] sm:$0xff]
      %v4564 = vld [vmem:[%s4293 + $0x870] sm:$0xff]
      %v4565 = vld [vmem:[%s4293 + $0x878] sm:$0xff]
      %v4566 = vld [vmem:[%s4293 + $0x880] sm:$0xff]
      %v4567 = vld [vmem:[%s4293 + $0x888] sm:$0xff]
      %v4568 = vld [vmem:[%s4293 + $0x890] sm:$0xff]
      %v4569 = vld [vmem:[%s4293 + $0x898] sm:$0xff]
      %v4570 = vld [vmem:[%s4293 + $0x8a0] sm:$0xff]
      %v4571 = vld [vmem:[%s4293 + $0x8a8] sm:$0xff]
      %v4572 = vld [vmem:[%s4293 + $0x8b0] sm:$0xff]
      %v4573 = vld [vmem:[%s4293 + $0x8b8] sm:$0xff]
      %v4574 = vld [vmem:[%s4293 + $0x8c0] sm:$0xff]
      %v4575 = vld [vmem:[%s4293 + $0x8c8] sm:$0xff]
      %v4576 = vld [vmem:[%s4293 + $0x8d0] sm:$0xff]
      %v4577 = vld [vmem:[%s4293 + $0x8d8] sm:$0xff]
      %v4578 = vld [vmem:[%s4293 + $0x8e0] sm:$0xff]
      %v4579 = vld [vmem:[%s4293 + $0x8e8] sm:$0xff]
      %v4580 = vld [vmem:[%s4293 + $0x8f0] sm:$0xff]
      %v4581 = vld [vmem:[%s4293 + $0x8f8] sm:$0xff]
      %v4582 = vld [vmem:[%s4293 + $0x900] sm:$0xff]
      %v4583 = vld [vmem:[%s4293 + $0x908] sm:$0xff]
      %v4584 = vld [vmem:[%s4293 + $0x910] sm:$0xff]
      %v4585 = vld [vmem:[%s4293 + $0x918] sm:$0xff]
      %v4586 = vld [vmem:[%s4293 + $0x920] sm:$0xff]
      %v4587 = vld [vmem:[%s4293 + $0x928] sm:$0xff]
      %v4588 = vld [vmem:[%s4293 + $0x930] sm:$0xff]
      %v4589 = vld [vmem:[%s4293 + $0x938] sm:$0xff]
      %v4590 = vld [vmem:[%s4293 + $0x940] sm:$0xff]
      %v4591 = vld [vmem:[%s4293 + $0x948] sm:$0xff]
      %v4592 = vld [vmem:[%s4293 + $0x950] sm:$0xff]
      %v4593 = vld [vmem:[%s4293 + $0x958] sm:$0xff]
      %v4594 = vld [vmem:[%s4293 + $0x960] sm:$0xff]
      %v4595 = vld [vmem:[%s4293 + $0x968] sm:$0xff]
      %v4596 = vld [vmem:[%s4293 + $0x970] sm:$0xff]
      %v4597 = vld [vmem:[%s4293 + $0x978] sm:$0xff]
      %v4598 = vld [vmem:[%s4293 + $0x980] sm:$0xff]
      %v4599 = vld [vmem:[%s4293 + $0x988] sm:$0xff]
      %v4600 = vld [vmem:[%s4293 + $0x990] sm:$0xff]
      %v4601 = vld [vmem:[%s4293 + $0x998] sm:$0xff]
      %v4602 = vld [vmem:[%s4293 + $0x9a0] sm:$0xff]
      %v4603 = vld [vmem:[%s4293 + $0x9a8] sm:$0xff]
      %v4604 = vld [vmem:[%s4293 + $0x9b0] sm:$0xff]
      %v4605 = vld [vmem:[%s4293 + $0x9b8] sm:$0xff]
      %v4606 = vld [vmem:[%s4293 + $0x9c0] sm:$0xff]
      %v4607 = vld [vmem:[%s4293 + $0x9c8] sm:$0xff]
      %v4608 = vld [vmem:[%s4293 + $0x9d0] sm:$0xff]
      %v4609 = vld [vmem:[%s4293 + $0x9d8] sm:$0xff]
      %v4610 = vld [vmem:[%s4293 + $0x9e0] sm:$0xff]
      %v4611 = vld [vmem:[%s4293 + $0x9e8] sm:$0xff]
      %v4612 = vld [vmem:[%s4293 + $0x9f0] sm:$0xff]
      %v4613 = vld [vmem:[%s4293 + $0x9f8] sm:$0xff]
      %v4614 = vld [vmem:[%s4293 + $0xa00] sm:$0xff]
      %v4615 = vld [vmem:[%s4293 + $0xa08] sm:$0xff]
      %v4616 = vld [vmem:[%s4293 + $0xa10] sm:$0xff]
      %v4617 = vld [vmem:[%s4293 + $0xa18] sm:$0xff]
      %v4618 = vld [vmem:[%s4293 + $0xa20] sm:$0xff]
      %v4619 = vld [vmem:[%s4293 + $0xa28] sm:$0xff]
      %v4620 = vld [vmem:[%s4293 + $0xa30] sm:$0xff]
      %v4621 = vld [vmem:[%s4293 + $0xa38] sm:$0xff]
      %v4622 = vld [vmem:[%s4293 + $0xa40] sm:$0xff]
      %v4623 = vld [vmem:[%s4293 + $0xa48] sm:$0xff]
      %v4624 = vld [vmem:[%s4293 + $0xa50] sm:$0xff]
      %v4625 = vld [vmem:[%s4293 + $0xa58] sm:$0xff]
      %v4626 = vld [vmem:[%s4293 + $0xa60] sm:$0xff]
      %v4627 = vld [vmem:[%s4293 + $0xa68] sm:$0xff]
      %v4628 = vld [vmem:[%s4293 + $0xa70] sm:$0xff]
      %v4629 = vld [vmem:[%s4293 + $0xa78] sm:$0xff]
      %v4630 = vld [vmem:[%s4293 + $0xa80] sm:$0xff]
      %v4631 = vld [vmem:[%s4293 + $0xa88] sm:$0xff]
      %v4632 = vld [vmem:[%s4293 + $0xa90] sm:$0xff]
      %v4633 = vld [vmem:[%s4293 + $0xa98] sm:$0xff]
      %v4634 = vld [vmem:[%s4293 + $0xaa0] sm:$0xff]
      %v4635 = vld [vmem:[%s4293 + $0xaa8] sm:$0xff]
      %v4636 = vld [vmem:[%s4293 + $0xab0] sm:$0xff]
      %v4637 = vld [vmem:[%s4293 + $0xab8] sm:$0xff]
      %v4638 = vld [vmem:[%s4293 + $0xac0] sm:$0xff]
      %v4639 = vld [vmem:[%s4293 + $0xac8] sm:$0xff]
      %v4640 = vld [vmem:[%s4293 + $0xad0] sm:$0xff]
      %v4641 = vld [vmem:[%s4293 + $0xad8] sm:$0xff]
      %v4642 = vld [vmem:[%s4293 + $0xae0] sm:$0xff]
      %v4643 = vld [vmem:[%s4293 + $0xae8] sm:$0xff]
      %v4644 = vld [vmem:[%s4293 + $0xaf0] sm:$0xff]
      %v4645 = vld [vmem:[%s4293 + $0xaf8] sm:$0xff]
      %v4646 = vld [vmem:[%s4293 + $0xb00] sm:$0xff]
      %v4647 = vld [vmem:[%s4293 + $0xb08] sm:$0xff]
      %v4648 = vld [vmem:[%s4293 + $0xb10] sm:$0xff]
      %v4649 = vld [vmem:[%s4293 + $0xb18] sm:$0xff]
      %v4650 = vld [vmem:[%s4293 + $0xb20] sm:$0xff]
      %v4651 = vld [vmem:[%s4293 + $0xb28] sm:$0xff]
      %v4652 = vld [vmem:[%s4293 + $0xb30] sm:$0xff]
      %v4653 = vld [vmem:[%s4293 + $0xb38] sm:$0xff]
      %v4654 = vld [vmem:[%s4293 + $0xb40] sm:$0xff]
      %v4655 = vld [vmem:[%s4293 + $0xb48] sm:$0xff]
      %v4656 = vld [vmem:[%s4293 + $0xb50] sm:$0xff]
      %v4657 = vld [vmem:[%s4293 + $0xb58] sm:$0xff]
      %v4658 = vld [vmem:[%s4293 + $0xb60] sm:$0xff]
      %v4659 = vld [vmem:[%s4293 + $0xb68] sm:$0xff]
      %v4660 = vld [vmem:[%s4293 + $0xb70] sm:$0xff]
      %v4661 = vld [vmem:[%s4293 + $0xb78] sm:$0xff]
      %v4662 = vld [vmem:[%s4293 + $0xb80] sm:$0xff]
      %v4663 = vld [vmem:[%s4293 + $0xb88] sm:$0xff]
      %v4664 = vld [vmem:[%s4293 + $0xb90] sm:$0xff]
      %v4665 = vld [vmem:[%s4293 + $0xb98] sm:$0xff]
      %v4666 = vld [vmem:[%s4293 + $0xba0] sm:$0xff]
      %v4667 = vld [vmem:[%s4293 + $0xba8] sm:$0xff]
      %v4668 = vld [vmem:[%s4293 + $0xbb0] sm:$0xff]
      %v4669 = vld [vmem:[%s4293 + $0xbb8] sm:$0xff]
      %v4670 = vld [vmem:[%s4293 + $0xbc0] sm:$0xff]
      %v4671 = vld [vmem:[%s4293 + $0xbc8] sm:$0xff]
      %v4672 = vld [vmem:[%s4293 + $0xbd0] sm:$0xff]
      %v4673 = vld [vmem:[%s4293 + $0xbd8] sm:$0xff]
      %v4674 = vld [vmem:[%s4293 + $0xbe0] sm:$0xff]
      %v4675 = vld [vmem:[%s4293 + $0xbe8] sm:$0xff]
      %v4676 = vld [vmem:[%s4293 + $0xbf0] sm:$0xff]
      %v4677 = vld [vmem:[%s4293 + $0xbf8] sm:$0xff]
      %v4678 = vld [vmem:[%s4293 + $0xc00] sm:$0xff]
      %v4679 = vld [vmem:[%s4293 + $0xc08] sm:$0xff]
      %v4680 = vld [vmem:[%s4293 + $0xc10] sm:$0xff]
      %v4681 = vld [vmem:[%s4293 + $0xc18] sm:$0xff]
      %v4682 = vld [vmem:[%s4293 + $0xc20] sm:$0xff]
      %v4683 = vld [vmem:[%s4293 + $0xc28] sm:$0xff]
      %v4684 = vld [vmem:[%s4293 + $0xc30] sm:$0xff]
      %v4685 = vld [vmem:[%s4293 + $0xc38] sm:$0xff]
      %v4686 = vld [vmem:[%s4293 + $0xc40] sm:$0xff]
      %v4687 = vld [vmem:[%s4293 + $0xc48] sm:$0xff]
      %v4688 = vld [vmem:[%s4293 + $0xc50] sm:$0xff]
      %v4689 = vld [vmem:[%s4293 + $0xc58] sm:$0xff]
      %v4690 = vld [vmem:[%s4293 + $0xc60] sm:$0xff]
      %v4691 = vld [vmem:[%s4293 + $0xc68] sm:$0xff]
      %v4692 = vld [vmem:[%s4293 + $0xc70] sm:$0xff]
      %v4693 = vld [vmem:[%s4293 + $0xc78] sm:$0xff]
      %v4694 = vld [vmem:[%s4293 + $0xc80] sm:$0xff]
      %v4695 = vld [vmem:[%s4293 + $0xc88] sm:$0xff]
      %v4696 = vld [vmem:[%s4293 + $0xc90] sm:$0xff]
      %v4697 = vld [vmem:[%s4293 + $0xc98] sm:$0xff]
      %v4698 = vld [vmem:[%s4293 + $0xca0] sm:$0xff]
      %v4699 = vld [vmem:[%s4293 + $0xca8] sm:$0xff]
      %v4700 = vld [vmem:[%s4293 + $0xcb0] sm:$0xff]
      %v4701 = vld [vmem:[%s4293 + $0xcb8] sm:$0xff]
      %v4702 = vld [vmem:[%s4293 + $0xcc0] sm:$0xff]
      %v4703 = vld [vmem:[%s4293 + $0xcc8] sm:$0xff]
      %v4704 = vld [vmem:[%s4293 + $0xcd0] sm:$0xff]
      %v4705 = vld [vmem:[%s4293 + $0xcd8] sm:$0xff]
      %v4706 = vld [vmem:[%s4293 + $0xce0] sm:$0xff]
      %v4707 = vld [vmem:[%s4293 + $0xce8] sm:$0xff]
      %v4708 = vld [vmem:[%s4293 + $0xcf0] sm:$0xff]
      %v4709 = vld [vmem:[%s4293 + $0xcf8] sm:$0xff]
      %v4710 = vld [vmem:[%s4293 + $0xd00] sm:$0xff]
      %v4711 = vld [vmem:[%s4293 + $0xd08] sm:$0xff]
      %v4712 = vld [vmem:[%s4293 + $0xd10] sm:$0xff]
      %v4713 = vld [vmem:[%s4293 + $0xd18] sm:$0xff]
      %v4714 = vld [vmem:[%s4293 + $0xd20] sm:$0xff]
      %v4715 = vld [vmem:[%s4293 + $0xd28] sm:$0xff]
      %v4716 = vld [vmem:[%s4293 + $0xd30] sm:$0xff]
      %v4717 = vld [vmem:[%s4293 + $0xd38] sm:$0xff]
      %v4718 = vld [vmem:[%s4293 + $0xd40] sm:$0xff]
      %v4719 = vld [vmem:[%s4293 + $0xd48] sm:$0xff]
      %v4720 = vld [vmem:[%s4293 + $0xd50] sm:$0xff]
      %v4721 = vld [vmem:[%s4293 + $0xd58] sm:$0xff]
      %v4722 = vld [vmem:[%s4293 + $0xd60] sm:$0xff]
      %v4723 = vld [vmem:[%s4293 + $0xd68] sm:$0xff]
      %v4724 = vld [vmem:[%s4293 + $0xd70] sm:$0xff]
      %v4725 = vld [vmem:[%s4293 + $0xd78] sm:$0xff]
      %v4726 = vld [vmem:[%s4293 + $0xd80] sm:$0xff]
      %v4727 = vld [vmem:[%s4293 + $0xd88] sm:$0xff]
      %v4728 = vld [vmem:[%s4293 + $0xd90] sm:$0xff]
      %v4729 = vld [vmem:[%s4293 + $0xd98] sm:$0xff]
      %v4730 = vld [vmem:[%s4293 + $0xda0] sm:$0xff]
      %v4731 = vld [vmem:[%s4293 + $0xda8] sm:$0xff]
      %v4732 = vld [vmem:[%s4293 + $0xdb0] sm:$0xff]
      %v4733 = vld [vmem:[%s4293 + $0xdb8] sm:$0xff]
      %v4734 = vld [vmem:[%s4293 + $0xdc0] sm:$0xff]
      %v4735 = vld [vmem:[%s4293 + $0xdc8] sm:$0xff]
      %v4736 = vld [vmem:[%s4293 + $0xdd0] sm:$0xff]
      %v4737 = vld [vmem:[%s4293 + $0xdd8] sm:$0xff]
      %v4738 = vld [vmem:[%s4293 + $0xde0] sm:$0xff]
      %v4739 = vld [vmem:[%s4293 + $0xde8] sm:$0xff]
      %v4740 = vld [vmem:[%s4293 + $0xdf0] sm:$0xff]
      %v4741 = vld [vmem:[%s4293 + $0xdf8] sm:$0xff]
      %v4742 = vld [vmem:[%s4293 + $0xe00] sm:$0xff]
      %v4743 = vld [vmem:[%s4293 + $0xe08] sm:$0xff]
      %v4744 = vld [vmem:[%s4293 + $0xe10] sm:$0xff]
      %v4745 = vld [vmem:[%s4293 + $0xe18] sm:$0xff]
      %v4746 = vld [vmem:[%s4293 + $0xe20] sm:$0xff]
      %v4747 = vld [vmem:[%s4293 + $0xe28] sm:$0xff]
      %v4748 = vld [vmem:[%s4293 + $0xe30] sm:$0xff]
      %v4749 = vld [vmem:[%s4293 + $0xe38] sm:$0xff]
      %v4750 = vld [vmem:[%s4293 + $0xe40] sm:$0xff]
      %v4751 = vld [vmem:[%s4293 + $0xe48] sm:$0xff]
      %v4752 = vld [vmem:[%s4293 + $0xe50] sm:$0xff]
      %v4753 = vld [vmem:[%s4293 + $0xe58] sm:$0xff]
      %v4754 = vld [vmem:[%s4293 + $0xe60] sm:$0xff]
      %v4755 = vld [vmem:[%s4293 + $0xe68] sm:$0xff]
      %v4756 = vld [vmem:[%s4293 + $0xe70] sm:$0xff]
      %v4757 = vld [vmem:[%s4293 + $0xe78] sm:$0xff]
      %v4758 = vld [vmem:[%s4293 + $0xe80] sm:$0xff]
      %v4759 = vld [vmem:[%s4293 + $0xe88] sm:$0xff]
      %v4760 = vld [vmem:[%s4293 + $0xe90] sm:$0xff]
      %v4761 = vld [vmem:[%s4293 + $0xe98] sm:$0xff]
      %v4762 = vld [vmem:[%s4293 + $0xea0] sm:$0xff]
      %v4763 = vld [vmem:[%s4293 + $0xea8] sm:$0xff]
      %v4764 = vld [vmem:[%s4293 + $0xeb0] sm:$0xff]
      %v4765 = vld [vmem:[%s4293 + $0xeb8] sm:$0xff]
      %v4766 = vld [vmem:[%s4293 + $0xec0] sm:$0xff]
      %v4767 = vld [vmem:[%s4293 + $0xec8] sm:$0xff]
      %v4768 = vld [vmem:[%s4293 + $0xed0] sm:$0xff]
      %v4769 = vld [vmem:[%s4293 + $0xed8] sm:$0xff]
      %v4770 = vld [vmem:[%s4293 + $0xee0] sm:$0xff]
      %v4771 = vld [vmem:[%s4293 + $0xee8] sm:$0xff]
      %v4772 = vld [vmem:[%s4293 + $0xef0] sm:$0xff]
      %v4773 = vld [vmem:[%s4293 + $0xef8] sm:$0xff]
      %v4774 = vld [vmem:[%s4293 + $0xf00] sm:$0xff]
      %v4775 = vld [vmem:[%s4293 + $0xf08] sm:$0xff]
      %v4776 = vld [vmem:[%s4293 + $0xf10] sm:$0xff]
      %v4777 = vld [vmem:[%s4293 + $0xf18] sm:$0xff]
      %v4778 = vld [vmem:[%s4293 + $0xf20] sm:$0xff]
      %v4779 = vld [vmem:[%s4293 + $0xf28] sm:$0xff]
      %v4780 = vld [vmem:[%s4293 + $0xf30] sm:$0xff]
      %v4781 = vld [vmem:[%s4293 + $0xf38] sm:$0xff]
      %v4782 = vld [vmem:[%s4293 + $0xf40] sm:$0xff]
      %v4783 = vld [vmem:[%s4293 + $0xf48] sm:$0xff]
      %v4784 = vld [vmem:[%s4293 + $0xf50] sm:$0xff]
      %v4785 = vld [vmem:[%s4293 + $0xf58] sm:$0xff]
      %v4786 = vld [vmem:[%s4293 + $0xf60] sm:$0xff]
      %v4787 = vld [vmem:[%s4293 + $0xf68] sm:$0xff]
      %v4788 = vld [vmem:[%s4293 + $0xf70] sm:$0xff]
      %v4789 = vld [vmem:[%s4293 + $0xf78] sm:$0xff]
      %v4790 = vld [vmem:[%s4293 + $0xf80] sm:$0xff]
      %v4791 = vld [vmem:[%s4293 + $0xf88] sm:$0xff]
      %v4792 = vld [vmem:[%s4293 + $0xf90] sm:$0xff]
      %v4793 = vld [vmem:[%s4293 + $0xf98] sm:$0xff]
      %v4794 = vld [vmem:[%s4293 + $0xfa0] sm:$0xff]
      %v4795 = vld [vmem:[%s4293 + $0xfa8] sm:$0xff]
      %v4796 = vld [vmem:[%s4293 + $0xfb0] sm:$0xff]
      %v4797 = vld [vmem:[%s4293 + $0xfb8] sm:$0xff]
      %v4798 = vld [vmem:[%s4293 + $0xfc0] sm:$0xff]
      %v4799 = vld [vmem:[%s4293 + $0xfc8] sm:$0xff]
      %v4800 = vld [vmem:[%s4293 + $0xfd0] sm:$0xff]
      %v4801 = vld [vmem:[%s4293 + $0xfd8] sm:$0xff]
      %v4802 = vld [vmem:[%s4293 + $0xfe0] sm:$0xff]
      %v4803 = vld [vmem:[%s4293 + $0xfe8] sm:$0xff]
      %v4804 = vld [vmem:[%s4293 + $0xff0] sm:$0xff]
      %v4805 = vld [vmem:[%s4293 + $0xff8] sm:$0xff]
      %4806 = vmatprep.subr.bf16.mxu0 %v4295
      %4807 = vmatpush1.bf16.msra.mxu0 %v4294
      %4808 = vmatprep.subr.bf16.mxu0 %v4303
      %4809 = vmatpush1.bf16.msra.mxu0 %v4302
      %4810 = vmatprep.subr.bf16.mxu0 %v4311
      %4811 = vmatpush1.bf16.msra.mxu0 %v4310
      %4812 = vmatprep.subr.bf16.mxu0 %v4319
      %4813 = vmatpush1.bf16.msra.mxu0 %v4318
      %4814 = vmatprep.subr.bf16.mxu0 %v4327
      %4815 = vmatpush1.bf16.msra.mxu0 %v4326
      %4816 = vmatprep.subr.bf16.mxu0 %v4335
      %4817 = vmatpush1.bf16.msra.mxu0 %v4334
      %4818 = vmatprep.subr.bf16.mxu0 %v4343
      %4819 = vmatpush1.bf16.msra.mxu0 %v4342
      %4820 = vmatprep.subr.bf16.mxu0 %v4351
      %4821 = vmatpush1.bf16.msra.mxu0 %v4350
      %4822 = vmatprep.subr.bf16.mxu0 %v4359
      %4823 = vmatpush1.bf16.msra.mxu0 %v4358
      %4824 = vmatprep.subr.bf16.mxu0 %v4367
      %4825 = vmatpush1.bf16.msra.mxu0 %v4366
      %4826 = vmatprep.subr.bf16.mxu0 %v4375
      %4827 = vmatpush1.bf16.msra.mxu0 %v4374
      %4828 = vmatprep.subr.bf16.mxu0 %v4383
      %4829 = vmatpush1.bf16.msra.mxu0 %v4382
      %4830 = vmatprep.subr.bf16.mxu0 %v4391
      %4831 = vmatpush1.bf16.msra.mxu0 %v4390
      %4832 = vmatprep.subr.bf16.mxu0 %v4399
      %4833 = vmatpush1.bf16.msra.mxu0 %v4398
      %4834 = vmatprep.subr.bf16.mxu0 %v4407
      %4835 = vmatpush1.bf16.msra.mxu0 %v4406
      %4836 = vmatprep.subr.bf16.mxu0 %v4415
      %4837 = vmatpush1.bf16.msra.mxu0 %v4414
      %4838 = vmatprep.mubr.bf16.mxu0 %v4286
      %4839 = vmatmul.mubr.bf16.gmra.mrb[0].mxu0 %v4285
      %v4840 = vpop.f32.mrb[0].mxu0
      %v4841 = vadd.f32 0.0, %v4840
      %v4842 = vpop.f32.mrb[0].mxu0
      %v4843 = vadd.f32 0.0, %v4842
      %v4844 = vpop.f32.mrb[0].mxu0
      %v4845 = vpop.f32.mrb[0].mxu0
      %4846 = vdwg.mxu0
      %4847 = vmatprep.subr.bf16.mxu0 %v4423
      %4848 = vmatpush1.bf16.msra.mxu0 %v4422
      %4849 = vmatprep.subr.bf16.mxu0 %v4431
      %4850 = vmatpush1.bf16.msra.mxu0 %v4430
      %4851 = vmatprep.subr.bf16.mxu0 %v4439
      %4852 = vmatpush1.bf16.msra.mxu0 %v4438
      %4853 = vmatprep.subr.bf16.mxu0 %v4447
      %4854 = vmatpush1.bf16.msra.mxu0 %v4446
      %4855 = vmatprep.subr.bf16.mxu0 %v4455
      %4856 = vmatpush1.bf16.msra.mxu0 %v4454
      %4857 = vmatprep.subr.bf16.mxu0 %v4463
      %4858 = vmatpush1.bf16.msra.mxu0 %v4462
      %4859 = vmatprep.subr.bf16.mxu0 %v4471
      %4860 = vmatpush1.bf16.msra.mxu0 %v4470
      %4861 = vmatprep.subr.bf16.mxu0 %v4479
      %4862 = vmatpush1.bf16.msra.mxu0 %v4478
      %4863 = vmatprep.subr.bf16.mxu0 %v4487
      %4864 = vmatpush1.bf16.msra.mxu0 %v4486
      %4865 = vmatprep.subr.bf16.mxu0 %v4495
      %4866 = vmatpush1.bf16.msra.mxu0 %v4494
      %4867 = vmatprep.subr.bf16.mxu0 %v4503
      %4868 = vmatpush1.bf16.msra.mxu0 %v4502
      %4869 = vmatprep.subr.bf16.mxu0 %v4511
      %4870 = vmatpush1.bf16.msra.mxu0 %v4510
      %4871 = vmatprep.subr.bf16.mxu0 %v4519
      %4872 = vmatpush1.bf16.msra.mxu0 %v4518
      %4873 = vmatprep.subr.bf16.mxu0 %v4527
      %4874 = vmatpush1.bf16.msra.mxu0 %v4526
      %4875 = vmatprep.subr.bf16.mxu0 %v4535
      %4876 = vmatpush1.bf16.msra.mxu0 %v4534
      %4877 = vmatprep.subr.bf16.mxu0 %v4543
      %4878 = vmatpush1.bf16.msra.mxu0 %v4542
      %4879 = vmatprep.mubr.bf16.mxu0 %v4288
      %4880 = vmatmul.mubr.bf16.gmra.mrb[0].mxu0 %v4287
      %v4881 = vpop.f32.mrb[0].mxu0
      %v4882 = vadd.f32 %v4841, %v4881
      %v4883 = vpop.f32.mrb[0].mxu0
      %v4884 = vadd.f32 %v4843, %v4883
      %v4885 = vpop.f32.mrb[0].mxu0
      %v4886 = vpop.f32.mrb[0].mxu0
      %4887 = vdwg.mxu0
      %4888 = vmatprep.subr.bf16.mxu0 %v4551
      %4889 = vmatpush1.bf16.msra.mxu0 %v4550
      %4890 = vmatprep.subr.bf16.mxu0 %v4559
      %4891 = vmatpush1.bf16.msra.mxu0 %v4558
      %4892 = vmatprep.subr.bf16.mxu0 %v4567
      %4893 = vmatpush1.bf16.msra.mxu0 %v4566
      %4894 = vmatprep.subr.bf16.mxu0 %v4575
      %4895 = vmatpush1.bf16.msra.mxu0 %v4574
      %4896 = vmatprep.subr.bf16.mxu0 %v4583
      %4897 = vmatpush1.bf16.msra.mxu0 %v4582
      %4898 = vmatprep.subr.bf16.mxu0 %v4591
      %4899 = vmatpush1.bf16.msra.mxu0 %v4590
      %4900 = vmatprep.subr.bf16.mxu0 %v4599
      %4901 = vmatpush1.bf16.msra.mxu0 %v4598
      %4902 = vmatprep.subr.bf16.mxu0 %v4607
      %4903 = vmatpush1.bf16.msra.mxu0 %v4606
      %4904 = vmatprep.subr.bf16.mxu0 %v4615
      %4905 = vmatpush1.bf16.msra.mxu0 %v4614
      %4906 = vmatprep.subr.bf16.mxu0 %v4623
      %4907 = vmatpush1.bf16.msra.mxu0 %v4622
      %4908 = vmatprep.subr.bf16.mxu0 %v4631
      %4909 = vmatpush1.bf16.msra.mxu0 %v4630
      %4910 = vmatprep.subr.bf16.mxu0 %v4639
      %4911 = vmatpush1.bf16.msra.mxu0 %v4638
      %4912 = vmatprep.subr.bf16.mxu0 %v4647
      %4913 = vmatpush1.bf16.msra.mxu0 %v4646
      %4914 = vmatprep.subr.bf16.mxu0 %v4655
      %4915 = vmatpush1.bf16.msra.mxu0 %v4654
      %4916 = vmatprep.subr.bf16.mxu0 %v4663
      %4917 = vmatpush1.bf16.msra.mxu0 %v4662
      %4918 = vmatprep.subr.bf16.mxu0 %v4671
      %4919 = vmatpush1.bf16.msra.mxu0 %v4670
      %4920 = vmatprep.mubr.bf16.mxu0 %v4290
      %4921 = vmatmul.mubr.bf16.gmra.mrb[0].mxu0 %v4289
      %v4922 = vpop.f32.mrb[0].mxu0
      %v4923 = vadd.f32 %v4882, %v4922
      %v4924 = vpop.f32.mrb[0].mxu0
      %v4925 = vadd.f32 %v4884, %v4924
      %v4926 = vpop.f32.mrb[0].mxu0
      %v4927 = vpop.f32.mrb[0].mxu0
      %4928 = vdwg.mxu0
      %4929 = vmatprep.subr.bf16.mxu0 %v4679
      %4930 = vmatpush1.bf16.msra.mxu0 %v4678
      %4931 = vmatprep.subr.bf16.mxu0 %v4687
      %4932 = vmatpush1.bf16.msra.mxu0 %v4686
      %4933 = vmatprep.subr.bf16.mxu0 %v4695
      %4934 = vmatpush1.bf16.msra.mxu0 %v4694
      %4935 = vmatprep.subr.bf16.mxu0 %v4703
      %4936 = vmatpush1.bf16.msra.mxu0 %v4702
      %4937 = vmatprep.subr.bf16.mxu0 %v4711
      %4938 = vmatpush1.bf16.msra.mxu0 %v4710
      %4939 = vmatprep.subr.bf16.mxu0 %v4719
      %4940 = vmatpush1.bf16.msra.mxu0 %v4718
      %4941 = vmatprep.subr.bf16.mxu0 %v4727
      %4942 = vmatpush1.bf16.msra.mxu0 %v4726
      %4943 = vmatprep.subr.bf16.mxu0 %v4735
      %4944 = vmatpush1.bf16.msra.mxu0 %v4734
      %4945 = vmatprep.subr.bf16.mxu0 %v4743
      %4946 = vmatpush1.bf16.msra.mxu0 %v4742
      %4947 = vmatprep.subr.bf16.mxu0 %v4751
      %4948 = vmatpush1.bf16.msra.mxu0 %v4750
      %4949 = vmatprep.subr.bf16.mxu0 %v4759
      %4950 = vmatpush1.bf16.msra.mxu0 %v4758
      %4951 = vmatprep.subr.bf16.mxu0 %v4767
      %4952 = vmatpush1.bf16.msra.mxu0 %v4766
      %4953 = vmatprep.subr.bf16.mxu0 %v4775
      %4954 = vmatpush1.bf16.msra.mxu0 %v4774
      %4955 = vmatprep.subr.bf16.mxu0 %v4783
      %4956 = vmatpush1.bf16.msra.mxu0 %v4782
      %4957 = vmatprep.subr.bf16.mxu0 %v4791
      %4958 = vmatpush1.bf16.msra.mxu0 %v4790
      %4959 = vmatprep.subr.bf16.mxu0 %v4799
      %4960 = vmatpush1.bf16.msra.mxu0 %v4798
      %4961 = vmatprep.mubr.bf16.mxu0 %v4292
      %4962 = vmatmul.mubr.bf16.gmra.mrb[0].mxu0 %v4291
      %v4963 = vpop.f32.mrb[0].mxu0
      %v4964 = vadd.f32 %v4923, %v4963
      %v4965 = vpop.f32.mrb[0].mxu0
      %v4966 = vadd.f32 %v4925, %v4965
      %v4967 = vpop.f32.mrb[0].mxu0
      %v4968 = vpop.f32.mrb[0].mxu0
      %4969 = vdwg.mxu0
      %4970 = vmatprep.subr.bf16.mxu0 %v4297
      %4971 = vmatpush1.bf16.msra.mxu0 %v4296
      %4972 = vmatprep.subr.bf16.mxu0 %v4305
      %4973 = vmatpush1.bf16.msra.mxu0 %v4304
      %4974 = vmatprep.subr.bf16.mxu0 %v4313
      %4975 = vmatpush1.bf16.msra.mxu0 %v4312
      %4976 = vmatprep.subr.bf16.mxu0 %v4321
      %4977 = vmatpush1.bf16.msra.mxu0 %v4320
      %4978 = vmatprep.subr.bf16.mxu0 %v4329
      %4979 = vmatpush1.bf16.msra.mxu0 %v4328
      %4980 = vmatprep.subr.bf16.mxu0 %v4337
      %4981 = vmatpush1.bf16.msra.mxu0 %v4336
      %4982 = vmatprep.subr.bf16.mxu0 %v4345
      %4983 = vmatpush1.bf16.msra.mxu0 %v4344
      %4984 = vmatprep.subr.bf16.mxu0 %v4353
      %4985 = vmatpush1.bf16.msra.mxu0 %v4352
      %4986 = vmatprep.subr.bf16.mxu0 %v4361
      %4987 = vmatpush1.bf16.msra.mxu0 %v4360
      %4988 = vmatprep.subr.bf16.mxu0 %v4369
      %4989 = vmatpush1.bf16.msra.mxu0 %v4368
      %4990 = vmatprep.subr.bf16.mxu0 %v4377
      %4991 = vmatpush1.bf16.msra.mxu0 %v4376
      %4992 = vmatprep.subr.bf16.mxu0 %v4385
      %4993 = vmatpush1.bf16.msra.mxu0 %v4384
      %4994 = vmatprep.subr.bf16.mxu0 %v4393
      %4995 = vmatpush1.bf16.msra.mxu0 %v4392
      %4996 = vmatprep.subr.bf16.mxu0 %v4401
      %4997 = vmatpush1.bf16.msra.mxu0 %v4400
      %4998 = vmatprep.subr.bf16.mxu0 %v4409
      %4999 = vmatpush1.bf16.msra.mxu0 %v4408
      %5000 = vmatprep.subr.bf16.mxu0 %v4417
      %5001 = vmatpush1.bf16.msra.mxu0 %v4416
      %5002 = vmatprep.mubr.bf16.mxu0 %v4286
      %5003 = vmatmul.mubr.bf16.gmra.mrb[0].mxu0 %v4285
      %v5004 = vpop.f32.mrb[0].mxu0
      %v5005 = vadd.f32 0.0, %v5004
      %v5006 = vpop.f32.mrb[0].mxu0
      %v5007 = vadd.f32 0.0, %v5006
      %v5008 = vpop.f32.mrb[0].mxu0
      %v5009 = vpop.f32.mrb[0].mxu0
      %5010 = vdwg.mxu0
      %5011 = vmatprep.subr.bf16.mxu0 %v4425
      %5012 = vmatpush1.bf16.msra.mxu0 %v4424
      %5013 = vmatprep.subr.bf16.mxu0 %v4433
      %5014 = vmatpush1.bf16.msra.mxu0 %v4432
      %5015 = vmatprep.subr.bf16.mxu0 %v4441
      %5016 = vmatpush1.bf16.msra.mxu0 %v4440
      %5017 = vmatprep.subr.bf16.mxu0 %v4449
      %5018 = vmatpush1.bf16.msra.mxu0 %v4448
      %5019 = vmatprep.subr.bf16.mxu0 %v4457
      %5020 = vmatpush1.bf16.msra.mxu0 %v4456
      %5021 = vmatprep.subr.bf16.mxu0 %v4465
      %5022 = vmatpush1.bf16.msra.mxu0 %v4464
      %5023 = vmatprep.subr.bf16.mxu0 %v4473
      %5024 = vmatpush1.bf16.msra.mxu0 %v4472
      %5025 = vmatprep.subr.bf16.mxu0 %v4481
      %5026 = vmatpush1.bf16.msra.mxu0 %v4480
      %5027 = vmatprep.subr.bf16.mxu0 %v4489
      %5028 = vmatpush1.bf16.msra.mxu0 %v4488
      %5029 = vmatprep.subr.bf16.mxu0 %v4497
      %5030 = vmatpush1.bf16.msra.mxu0 %v4496
      %5031 = vmatprep.subr.bf16.mxu0 %v4505
      %5032 = vmatpush1.bf16.msra.mxu0 %v4504
      %5033 = vmatprep.subr.bf16.mxu0 %v4513
      %5034 = vmatpush1.bf16.msra.mxu0 %v4512
      %5035 = vmatprep.subr.bf16.mxu0 %v4521
      %5036 = vmatpush1.bf16.msra.mxu0 %v4520
      %5037 = vmatprep.subr.bf16.mxu0 %v4529
      %5038 = vmatpush1.bf16.msra.mxu0 %v4528
      %5039 = vmatprep.subr.bf16.mxu0 %v4537
      %5040 = vmatpush1.bf16.msra.mxu0 %v4536
      %5041 = vmatprep.subr.bf16.mxu0 %v4545
      %5042 = vmatpush1.bf16.msra.mxu0 %v4544
      %5043 = vmatprep.mubr.bf16.mxu0 %v4288
      %5044 = vmatmul.mubr.bf16.gmra.mrb[0].mxu0 %v4287
      %v5045 = vpop.f32.mrb[0].mxu0
      %v5046 = vadd.f32 %v5005, %v5045
      %v5047 = vpop.f32.mrb[0].mxu0
      %v5048 = vadd.f32 %v5007, %v5047
      %v5049 = vpop.f32.mrb[0].mxu0
      %v5050 = vpop.f32.mrb[0].mxu0
      %5051 = vdwg.mxu0
      %5052 = vmatprep.subr.bf16.mxu0 %v4553
      %5053 = vmatpush1.bf16.msra.mxu0 %v4552
      %5054 = vmatprep.subr.bf16.mxu0 %v4561
      %5055 = vmatpush1.bf16.msra.mxu0 %v4560
      %5056 = vmatprep.subr.bf16.mxu0 %v4569
      %5057 = vmatpush1.bf16.msra.mxu0 %v4568
      %5058 = vmatprep.subr.bf16.mxu0 %v4577
      %5059 = vmatpush1.bf16.msra.mxu0 %v4576
      %5060 = vmatprep.subr.bf16.mxu0 %v4585
      %5061 = vmatpush1.bf16.msra.mxu0 %v4584
      %5062 = vmatprep.subr.bf16.mxu0 %v4593
      %5063 = vmatpush1.bf16.msra.mxu0 %v4592
      %5064 = vmatprep.subr.bf16.mxu0 %v4601
      %5065 = vmatpush1.bf16.msra.mxu0 %v4600
      %5066 = vmatprep.subr.bf16.mxu0 %v4609
      %5067 = vmatpush1.bf16.msra.mxu0 %v4608
      %5068 = vmatprep.subr.bf16.mxu0 %v4617
      %5069 = vmatpush1.bf16.msra.mxu0 %v4616
      %5070 = vmatprep.subr.bf16.mxu0 %v4625
      %5071 = vmatpush1.bf16.msra.mxu0 %v4624
      %5072 = vmatprep.subr.bf16.mxu0 %v4633
      %5073 = vmatpush1.bf16.msra.mxu0 %v4632
      %5074 = vmatprep.subr.bf16.mxu0 %v4641
      %5075 = vmatpush1.bf16.msra.mxu0 %v4640
      %5076 = vmatprep.subr.bf16.mxu0 %v4649
      %5077 = vmatpush1.bf16.msra.mxu0 %v4648
      %5078 = vmatprep.subr.bf16.mxu0 %v4657
      %5079 = vmatpush1.bf16.msra.mxu0 %v4656
      %5080 = vmatprep.subr.bf16.mxu0 %v4665
      %5081 = vmatpush1.bf16.msra.mxu0 %v4664
      %5082 = vmatprep.subr.bf16.mxu0 %v4673
      %5083 = vmatpush1.bf16.msra.mxu0 %v4672
      %5084 = vmatprep.mubr.bf16.mxu0 %v4290
      %5085 = vmatmul.mubr.bf16.gmra.mrb[0].mxu0 %v4289
      %v5086 = vpop.f32.mrb[0].mxu0
      %v5087 = vadd.f32 %v5046, %v5086
      %v5088 = vpop.f32.mrb[0].mxu0
      %v5089 = vadd.f32 %v5048, %v5088
      %v5090 = vpop.f32.mrb[0].mxu0
      %v5091 = vpop.f32.mrb[0].mxu0
      %5092 = vdwg.mxu0
      %5093 = vmatprep.subr.bf16.mxu0 %v4681
      %5094 = vmatpush1.bf16.msra.mxu0 %v4680
      %5095 = vmatprep.subr.bf16.mxu0 %v4689
      %5096 = vmatpush1.bf16.msra.mxu0 %v4688
      %5097 = vmatprep.subr.bf16.mxu0 %v4697
      %5098 = vmatpush1.bf16.msra.mxu0 %v4696
      %5099 = vmatprep.subr.bf16.mxu0 %v4705
      %5100 = vmatpush1.bf16.msra.mxu0 %v4704
      %5101 = vmatprep.subr.bf16.mxu0 %v4713
      %5102 = vmatpush1.bf16.msra.mxu0 %v4712
      %5103 = vmatprep.subr.bf16.mxu0 %v4721
      %5104 = vmatpush1.bf16.msra.mxu0 %v4720
      %5105 = vmatprep.subr.bf16.mxu0 %v4729
      %5106 = vmatpush1.bf16.msra.mxu0 %v4728
      %5107 = vmatprep.subr.bf16.mxu0 %v4737
      %5108 = vmatpush1.bf16.msra.mxu0 %v4736
      %5109 = vmatprep.subr.bf16.mxu0 %v4745
      %5110 = vmatpush1.bf16.msra.mxu0 %v4744
      %5111 = vmatprep.subr.bf16.mxu0 %v4753
      %5112 = vmatpush1.bf16.msra.mxu0 %v4752
      %5113 = vmatprep.subr.bf16.mxu0 %v4761
      %5114 = vmatpush1.bf16.msra.mxu0 %v4760
      %5115 = vmatprep.subr.bf16.mxu0 %v4769
      %5116 = vmatpush1.bf16.msra.mxu0 %v4768
      %5117 = vmatprep.subr.bf16.mxu0 %v4777
      %5118 = vmatpush1.bf16.msra.mxu0 %v4776
      %5119 = vmatprep.subr.bf16.mxu0 %v4785
      %5120 = vmatpush1.bf16.msra.mxu0 %v4784
      %5121 = vmatprep.subr.bf16.mxu0 %v4793
      %5122 = vmatpush1.bf16.msra.mxu0 %v4792
      %5123 = vmatprep.subr.bf16.mxu0 %v4801
      %5124 = vmatpush1.bf16.msra.mxu0 %v4800
      %5125 = vmatprep.mubr.bf16.mxu0 %v4292
      %5126 = vmatmul.mubr.bf16.gmra.mrb[0].mxu0 %v4291
      %v5127 = vpop.f32.mrb[0].mxu0
      %v5128 = vadd.f32 %v5087, %v5127
      %v5129 = vpop.f32.mrb[0].mxu0
      %v5130 = vadd.f32 %v5089, %v5129
      %v5131 = vpop.f32.mrb[0].mxu0
      %v5132 = vpop.f32.mrb[0].mxu0
      %5133 = vdwg.mxu0
      %5134 = vmatprep.subr.bf16.mxu0 %v4299
      %5135 = vmatpush1.bf16.msra.mxu0 %v4298
      %5136 = vmatprep.subr.bf16.mxu0 %v4307
      %5137 = vmatpush1.bf16.msra.mxu0 %v4306
      %5138 = vmatprep.subr.bf16.mxu0 %v4315
      %5139 = vmatpush1.bf16.msra.mxu0 %v4314
      %5140 = vmatprep.subr.bf16.mxu0 %v4323
      %5141 = vmatpush1.bf16.msra.mxu0 %v4322
      %5142 = vmatprep.subr.bf16.mxu0 %v4331
      %5143 = vmatpush1.bf16.msra.mxu0 %v4330
      %5144 = vmatprep.subr.bf16.mxu0 %v4339
      %5145 = vmatpush1.bf16.msra.mxu0 %v4338
      %5146 = vmatprep.subr.bf16.mxu0 %v4347
      %5147 = vmatpush1.bf16.msra.mxu0 %v4346
      %5148 = vmatprep.subr.bf16.mxu0 %v4355
      %5149 = vmatpush1.bf16.msra.mxu0 %v4354
      %5150 = vmatprep.subr.bf16.mxu0 %v4363
      %5151 = vmatpush1.bf16.msra.mxu0 %v4362
      %5152 = vmatprep.subr.bf16.mxu0 %v4371
      %5153 = vmatpush1.bf16.msra.mxu0 %v4370
      %5154 = vmatprep.subr.bf16.mxu0 %v4379
      %5155 = vmatpush1.bf16.msra.mxu0 %v4378
      %5156 = vmatprep.subr.bf16.mxu0 %v4387
      %5157 = vmatpush1.bf16.msra.mxu0 %v4386
      %5158 = vmatprep.subr.bf16.mxu0 %v4395
      %5159 = vmatpush1.bf16.msra.mxu0 %v4394
      %5160 = vmatprep.subr.bf16.mxu0 %v4403
      %5161 = vmatpush1.bf16.msra.mxu0 %v4402
      %5162 = vmatprep.subr.bf16.mxu0 %v4411
      %5163 = vmatpush1.bf16.msra.mxu0 %v4410
      %5164 = vmatprep.subr.bf16.mxu0 %v4419
      %5165 = vmatpush1.bf16.msra.mxu0 %v4418
      %5166 = vmatprep.mubr.bf16.mxu0 %v4286
      %5167 = vmatmul.mubr.bf16.gmra.mrb[0].mxu0 %v4285
      %v5168 = vpop.f32.mrb[0].mxu0
      %v5169 = vadd.f32 0.0, %v5168
      %v5170 = vpop.f32.mrb[0].mxu0
      %v5171 = vadd.f32 0.0, %v5170
      %v5172 = vpop.f32.mrb[0].mxu0
      %v5173 = vpop.f32.mrb[0].mxu0
      %5174 = vdwg.mxu0
      %5175 = vmatprep.subr.bf16.mxu0 %v4427
      %5176 = vmatpush1.bf16.msra.mxu0 %v4426
      %5177 = vmatprep.subr.bf16.mxu0 %v4435
      %5178 = vmatpush1.bf16.msra.mxu0 %v4434
      %5179 = vmatprep.subr.bf16.mxu0 %v4443
      %5180 = vmatpush1.bf16.msra.mxu0 %v4442
      %5181 = vmatprep.subr.bf16.mxu0 %v4451
      %5182 = vmatpush1.bf16.msra.mxu0 %v4450
      %5183 = vmatprep.subr.bf16.mxu0 %v4459
      %5184 = vmatpush1.bf16.msra.mxu0 %v4458
      %5185 = vmatprep.subr.bf16.mxu0 %v4467
      %5186 = vmatpush1.bf16.msra.mxu0 %v4466
      %5187 = vmatprep.subr.bf16.mxu0 %v4475
      %5188 = vmatpush1.bf16.msra.mxu0 %v4474
      %5189 = vmatprep.subr.bf16.mxu0 %v4483
      %5190 = vmatpush1.bf16.msra.mxu0 %v4482
      %5191 = vmatprep.subr.bf16.mxu0 %v4491
      %5192 = vmatpush1.bf16.msra.mxu0 %v4490
      %5193 = vmatprep.subr.bf16.mxu0 %v4499
      %5194 = vmatpush1.bf16.msra.mxu0 %v4498
      %5195 = vmatprep.subr.bf16.mxu0 %v4507
      %5196 = vmatpush1.bf16.msra.mxu0 %v4506
      %5197 = vmatprep.subr.bf16.mxu0 %v4515
      %5198 = vmatpush1.bf16.msra.mxu0 %v4514
      %5199 = vmatprep.subr.bf16.mxu0 %v4523
      %5200 = vmatpush1.bf16.msra.mxu0 %v4522
      %5201 = vmatprep.subr.bf16.mxu0 %v4531
      %5202 = vmatpush1.bf16.msra.mxu0 %v4530
      %5203 = vmatprep.subr.bf16.mxu0 %v4539
      %5204 = vmatpush1.bf16.msra.mxu0 %v4538
      %5205 = vmatprep.subr.bf16.mxu0 %v4547
      %5206 = vmatpush1.bf16.msra.mxu0 %v4546
      %5207 = vmatprep.mubr.bf16.mxu0 %v4288
      %5208 = vmatmul.mubr.bf16.gmra.mrb[0].mxu0 %v4287
      %v5209 = vpop.f32.mrb[0].mxu0
      %v5210 = vadd.f32 %v5169, %v5209
      %v5211 = vpop.f32.mrb[0].mxu0
      %v5212 = vadd.f32 %v5171, %v5211
      %v5213 = vpop.f32.mrb[0].mxu0
      %v5214 = vpop.f32.mrb[0].mxu0
      %5215 = vdwg.mxu0
      %5216 = vmatprep.subr.bf16.mxu0 %v4555
      %5217 = vmatpush1.bf16.msra.mxu0 %v4554
      %5218 = vmatprep.subr.bf16.mxu0 %v4563
      %5219 = vmatpush1.bf16.msra.mxu0 %v4562
      %5220 = vmatprep.subr.bf16.mxu0 %v4571
      %5221 = vmatpush1.bf16.msra.mxu0 %v4570
      %5222 = vmatprep.subr.bf16.mxu0 %v4579
      %5223 = vmatpush1.bf16.msra.mxu0 %v4578
      %5224 = vmatprep.subr.bf16.mxu0 %v4587
      %5225 = vmatpush1.bf16.msra.mxu0 %v4586
      %5226 = vmatprep.subr.bf16.mxu0 %v4595
      %5227 = vmatpush1.bf16.msra.mxu0 %v4594
      %5228 = vmatprep.subr.bf16.mxu0 %v4603
      %5229 = vmatpush1.bf16.msra.mxu0 %v4602
      %5230 = vmatprep.subr.bf16.mxu0 %v4611
      %5231 = vmatpush1.bf16.msra.mxu0 %v4610
      %5232 = vmatprep.subr.bf16.mxu0 %v4619
      %5233 = vmatpush1.bf16.msra.mxu0 %v4618
      %5234 = vmatprep.subr.bf16.mxu0 %v4627
      %5235 = vmatpush1.bf16.msra.mxu0 %v4626
      %5236 = vmatprep.subr.bf16.mxu0 %v4635
      %5237 = vmatpush1.bf16.msra.mxu0 %v4634
      %5238 = vmatprep.subr.bf16.mxu0 %v4643
      %5239 = vmatpush1.bf16.msra.mxu0 %v4642
      %5240 = vmatprep.subr.bf16.mxu0 %v4651
      %5241 = vmatpush1.bf16.msra.mxu0 %v4650
      %5242 = vmatprep.subr.bf16.mxu0 %v4659
      %5243 = vmatpush1.bf16.msra.mxu0 %v4658
      %5244 = vmatprep.subr.bf16.mxu0 %v4667
      %5245 = vmatpush1.bf16.msra.mxu0 %v4666
      %5246 = vmatprep.subr.bf16.mxu0 %v4675
      %5247 = vmatpush1.bf16.msra.mxu0 %v4674
      %5248 = vmatprep.mubr.bf16.mxu0 %v4290
      %5249 = vmatmul.mubr.bf16.gmra.mrb[0].mxu0 %v4289
      %v5250 = vpop.f32.mrb[0].mxu0
      %v5251 = vadd.f32 %v5210, %v5250
      %v5252 = vpop.f32.mrb[0].mxu0
      %v5253 = vadd.f32 %v5212, %v5252
      %v5254 = vpop.f32.mrb[0].mxu0
      %v5255 = vpop.f32.mrb[0].mxu0
      %5256 = vdwg.mxu0
      %5257 = vmatprep.subr.bf16.mxu0 %v4683
      %5258 = vmatpush1.bf16.msra.mxu0 %v4682
      %5259 = vmatprep.subr.bf16.mxu0 %v4691
      %5260 = vmatpush1.bf16.msra.mxu0 %v4690
      %5261 = vmatprep.subr.bf16.mxu0 %v4699
      %5262 = vmatpush1.bf16.msra.mxu0 %v4698
      %5263 = vmatprep.subr.bf16.mxu0 %v4707
      %5264 = vmatpush1.bf16.msra.mxu0 %v4706
      %5265 = vmatprep.subr.bf16.mxu0 %v4715
      %5266 = vmatpush1.bf16.msra.mxu0 %v4714
      %5267 = vmatprep.subr.bf16.mxu0 %v4723
      %5268 = vmatpush1.bf16.msra.mxu0 %v4722
      %5269 = vmatprep.subr.bf16.mxu0 %v4731
      %5270 = vmatpush1.bf16.msra.mxu0 %v4730
      %5271 = vmatprep.subr.bf16.mxu0 %v4739
      %5272 = vmatpush1.bf16.msra.mxu0 %v4738
      %5273 = vmatprep.subr.bf16.mxu0 %v4747
      %5274 = vmatpush1.bf16.msra.mxu0 %v4746
      %5275 = vmatprep.subr.bf16.mxu0 %v4755
      %5276 = vmatpush1.bf16.msra.mxu0 %v4754
      %5277 = vmatprep.subr.bf16.mxu0 %v4763
      %5278 = vmatpush1.bf16.msra.mxu0 %v4762
      %5279 = vmatprep.subr.bf16.mxu0 %v4771
      %5280 = vmatpush1.bf16.msra.mxu0 %v4770
      %5281 = vmatprep.subr.bf16.mxu0 %v4779
      %5282 = vmatpush1.bf16.msra.mxu0 %v4778
      %5283 = vmatprep.subr.bf16.mxu0 %v4787
      %5284 = vmatpush1.bf16.msra.mxu0 %v4786
      %5285 = vmatprep.subr.bf16.mxu0 %v4795
      %5286 = vmatpush1.bf16.msra.mxu0 %v4794
      %5287 = vmatprep.subr.bf16.mxu0 %v4803
      %5288 = vmatpush1.bf16.msra.mxu0 %v4802
      %5289 = vmatprep.mubr.bf16.mxu0 %v4292
      %5290 = vmatmul.mubr.bf16.gmra.mrb[0].mxu0 %v4291
      %v5291 = vpop.f32.mrb[0].mxu0
      %v5292 = vadd.f32 %v5251, %v5291
      %v5293 = vpop.f32.mrb[0].mxu0
      %v5294 = vadd.f32 %v5253, %v5293
      %v5295 = vpop.f32.mrb[0].mxu0
      %v5296 = vpop.f32.mrb[0].mxu0
      %5297 = vdwg.mxu0
      %5298 = vmatprep.subr.bf16.mxu0 %v4301
      %5299 = vmatpush1.bf16.msra.mxu0 %v4300
      %5300 = vmatprep.subr.bf16.mxu0 %v4309
      %5301 = vmatpush1.bf16.msra.mxu0 %v4308
      %5302 = vmatprep.subr.bf16.mxu0 %v4317
      %5303 = vmatpush1.bf16.msra.mxu0 %v4316
      %5304 = vmatprep.subr.bf16.mxu0 %v4325
      %5305 = vmatpush1.bf16.msra.mxu0 %v4324
      %5306 = vmatprep.subr.bf16.mxu0 %v4333
      %5307 = vmatpush1.bf16.msra.mxu0 %v4332
      %5308 = vmatprep.subr.bf16.mxu0 %v4341
      %5309 = vmatpush1.bf16.msra.mxu0 %v4340
      %5310 = vmatprep.subr.bf16.mxu0 %v4349
      %5311 = vmatpush1.bf16.msra.mxu0 %v4348
      %5312 = vmatprep.subr.bf16.mxu0 %v4357
      %5313 = vmatpush1.bf16.msra.mxu0 %v4356
      %5314 = vmatprep.subr.bf16.mxu0 %v4365
      %5315 = vmatpush1.bf16.msra.mxu0 %v4364
      %5316 = vmatprep.subr.bf16.mxu0 %v4373
      %5317 = vmatpush1.bf16.msra.mxu0 %v4372
      %5318 = vmatprep.subr.bf16.mxu0 %v4381
      %5319 = vmatpush1.bf16.msra.mxu0 %v4380
      %5320 = vmatprep.subr.bf16.mxu0 %v4389
      %5321 = vmatpush1.bf16.msra.mxu0 %v4388
      %5322 = vmatprep.subr.bf16.mxu0 %v4397
      %5323 = vmatpush1.bf16.msra.mxu0 %v4396
      %5324 = vmatprep.subr.bf16.mxu0 %v4405
      %5325 = vmatpush1.bf16.msra.mxu0 %v4404
      %5326 = vmatprep.subr.bf16.mxu0 %v4413
      %5327 = vmatpush1.bf16.msra.mxu0 %v4412
      %5328 = vmatprep.subr.bf16.mxu0 %v4421
      %5329 = vmatpush1.bf16.msra.mxu0 %v4420
      %5330 = vmatprep.mubr.bf16.mxu0 %v4286
      %5331 = vmatmul.mubr.bf16.gmra.mrb[0].mxu0 %v4285
      %v5332 = vpop.f32.mrb[0].mxu0
      %v5333 = vadd.f32 0.0, %v5332
      %v5334 = vpop.f32.mrb[0].mxu0
      %v5335 = vadd.f32 0.0, %v5334
      %v5336 = vpop.f32.mrb[0].mxu0
      %v5337 = vpop.f32.mrb[0].mxu0
      %5338 = vdwg.mxu0
      %5339 = vmatprep.subr.bf16.mxu0 %v4429
      %5340 = vmatpush1.bf16.msra.mxu0 %v4428
      %5341 = vmatprep.subr.bf16.mxu0 %v4437
      %5342 = vmatpush1.bf16.msra.mxu0 %v4436
      %5343 = vmatprep.subr.bf16.mxu0 %v4445
      %5344 = vmatpush1.bf16.msra.mxu0 %v4444
      %5345 = vmatprep.subr.bf16.mxu0 %v4453
      %5346 = vmatpush1.bf16.msra.mxu0 %v4452
      %5347 = vmatprep.subr.bf16.mxu0 %v4461
      %5348 = vmatpush1.bf16.msra.mxu0 %v4460
      %5349 = vmatprep.subr.bf16.mxu0 %v4469
      %5350 = vmatpush1.bf16.msra.mxu0 %v4468
      %5351 = vmatprep.subr.bf16.mxu0 %v4477
      %5352 = vmatpush1.bf16.msra.mxu0 %v4476
      %5353 = vmatprep.subr.bf16.mxu0 %v4485
      %5354 = vmatpush1.bf16.msra.mxu0 %v4484
      %5355 = vmatprep.subr.bf16.mxu0 %v4493
      %5356 = vmatpush1.bf16.msra.mxu0 %v4492
      %5357 = vmatprep.subr.bf16.mxu0 %v4501
      %5358 = vmatpush1.bf16.msra.mxu0 %v4500
      %5359 = vmatprep.subr.bf16.mxu0 %v4509
      %5360 = vmatpush1.bf16.msra.mxu0 %v4508
      %5361 = vmatprep.subr.bf16.mxu0 %v4517
      %5362 = vmatpush1.bf16.msra.mxu0 %v4516
      %5363 = vmatprep.subr.bf16.mxu0 %v4525
      %5364 = vmatpush1.bf16.msra.mxu0 %v4524
      %5365 = vmatprep.subr.bf16.mxu0 %v4533
      %5366 = vmatpush1.bf16.msra.mxu0 %v4532
      %5367 = vmatprep.subr.bf16.mxu0 %v4541
      %5368 = vmatpush1.bf16.msra.mxu0 %v4540
      %5369 = vmatprep.subr.bf16.mxu0 %v4549
      %5370 = vmatpush1.bf16.msra.mxu0 %v4548
      %5371 = vmatprep.mubr.bf16.mxu0 %v4288
      %5372 = vmatmul.mubr.bf16.gmra.mrb[0].mxu0 %v4287
      %v5373 = vpop.f32.mrb[0].mxu0
      %v5374 = vadd.f32 %v5333, %v5373
      %v5375 = vpop.f32.mrb[0].mxu0
      %v5376 = vadd.f32 %v5335, %v5375
      %v5377 = vpop.f32.mrb[0].mxu0
      %v5378 = vpop.f32.mrb[0].mxu0
      %5379 = vdwg.mxu0
      %5380 = vmatprep.subr.bf16.mxu0 %v4557
      %5381 = vmatpush1.bf16.msra.mxu0 %v4556
      %5382 = vmatprep.subr.bf16.mxu0 %v4565
      %5383 = vmatpush1.bf16.msra.mxu0 %v4564
      %5384 = vmatprep.subr.bf16.mxu0 %v4573
      %5385 = vmatpush1.bf16.msra.mxu0 %v4572
      %5386 = vmatprep.subr.bf16.mxu0 %v4581
      %5387 = vmatpush1.bf16.msra.mxu0 %v4580
      %5388 = vmatprep.subr.bf16.mxu0 %v4589
      %5389 = vmatpush1.bf16.msra.mxu0 %v4588
      %5390 = vmatprep.subr.bf16.mxu0 %v4597
      %5391 = vmatpush1.bf16.msra.mxu0 %v4596
      %5392 = vmatprep.subr.bf16.mxu0 %v4605
      %5393 = vmatpush1.bf16.msra.mxu0 %v4604
      %5394 = vmatprep.subr.bf16.mxu0 %v4613
      %5395 = vmatpush1.bf16.msra.mxu0 %v4612
      %5396 = vmatprep.subr.bf16.mxu0 %v4621
      %5397 = vmatpush1.bf16.msra.mxu0 %v4620
      %5398 = vmatprep.subr.bf16.mxu0 %v4629
      %5399 = vmatpush1.bf16.msra.mxu0 %v4628
      %5400 = vmatprep.subr.bf16.mxu0 %v4637
      %5401 = vmatpush1.bf16.msra.mxu0 %v4636
      %5402 = vmatprep.subr.bf16.mxu0 %v4645
      %5403 = vmatpush1.bf16.msra.mxu0 %v4644
      %5404 = vmatprep.subr.bf16.mxu0 %v4653
      %5405 = vmatpush1.bf16.msra.mxu0 %v4652
      %5406 = vmatprep.subr.bf16.mxu0 %v4661
      %5407 = vmatpush1.bf16.msra.mxu0 %v4660
      %5408 = vmatprep.subr.bf16.mxu0 %v4669
      %5409 = vmatpush1.bf16.msra.mxu0 %v4668
      %5410 = vmatprep.subr.bf16.mxu0 %v4677
      %5411 = vmatpush1.bf16.msra.mxu0 %v4676
      %5412 = vmatprep.mubr.bf16.mxu0 %v4290
      %5413 = vmatmul.mubr.bf16.gmra.mrb[0].mxu0 %v4289
      %v5414 = vpop.f32.mrb[0].mxu0
      %v5415 = vadd.f32 %v5374, %v5414
      %v5416 = vpop.f32.mrb[0].mxu0
      %v5417 = vadd.f32 %v5376, %v5416
      %v5418 = vpop.f32.mrb[0].mxu0
      %v5419 = vpop.f32.mrb[0].mxu0
      %5420 = vdwg.mxu0
      %5421 = vmatprep.subr.bf16.mxu0 %v4685
      %5422 = vmatpush1.bf16.msra.mxu0 %v4684
      %5423 = vmatprep.subr.bf16.mxu0 %v4693
      %5424 = vmatpush1.bf16.msra.mxu0 %v4692
      %5425 = vmatprep.subr.bf16.mxu0 %v4701
      %5426 = vmatpush1.bf16.msra.mxu0 %v4700
      %5427 = vmatprep.subr.bf16.mxu0 %v4709
      %5428 = vmatpush1.bf16.msra.mxu0 %v4708
      %5429 = vmatprep.subr.bf16.mxu0 %v4717
      %5430 = vmatpush1.bf16.msra.mxu0 %v4716
      %5431 = vmatprep.subr.bf16.mxu0 %v4725
      %5432 = vmatpush1.bf16.msra.mxu0 %v4724
      %5433 = vmatprep.subr.bf16.mxu0 %v4733
      %5434 = vmatpush1.bf16.msra.mxu0 %v4732
      %5435 = vmatprep.subr.bf16.mxu0 %v4741
      %5436 = vmatpush1.bf16.msra.mxu0 %v4740
      %5437 = vmatprep.subr.bf16.mxu0 %v4749
      %5438 = vmatpush1.bf16.msra.mxu0 %v4748
      %5439 = vmatprep.subr.bf16.mxu0 %v4757
      %5440 = vmatpush1.bf16.msra.mxu0 %v4756
      %5441 = vmatprep.subr.bf16.mxu0 %v4765
      %5442 = vmatpush1.bf16.msra.mxu0 %v4764
      %5443 = vmatprep.subr.bf16.mxu0 %v4773
      %5444 = vmatpush1.bf16.msra.mxu0 %v4772
      %5445 = vmatprep.subr.bf16.mxu0 %v4781
      %5446 = vmatpush1.bf16.msra.mxu0 %v4780
      %5447 = vmatprep.subr.bf16.mxu0 %v4789
      %5448 = vmatpush1.bf16.msra.mxu0 %v4788
      %5449 = vmatprep.subr.bf16.mxu0 %v4797
      %5450 = vmatpush1.bf16.msra.mxu0 %v4796
      %5451 = vmatprep.subr.bf16.mxu0 %v4805
      %5452 = vmatpush1.bf16.msra.mxu0 %v4804
      %5453 = vmatprep.mubr.bf16.mxu0 %v4292
      %5454 = vmatmul.mubr.bf16.gmra.mrb[0].mxu0 %v4291
      %v5455 = vpop.f32.mrb[0].mxu0
      %v5456 = vadd.f32 %v5415, %v5455
      %v5457 = vpop.f32.mrb[0].mxu0
      %v5458 = vadd.f32 %v5417, %v5457
      %v5459 = vpop.f32.mrb[0].mxu0
      %v5460 = vpop.f32.mrb[0].mxu0
      %5461 = vdwg.mxu0
      %s5462 = scalar_lea.vmem [#allocation11], 2
      %v5463 = vld [vmem:[%s5462] ss:$4 sm:$0xff]
      %v5465 = vlaneseq
      %v5466 = vshrl.u32 %v5465, 7
      %v5467 = vsub.s32 0, %v5466
      %v5468 = vrot.slane %v5463, %v5467
      %v5469 = vlaneseq
      %v5470 = vshrl.u32 %v5469, 7
      %v5471 = vsub.s32 1, %v5470
      %v5472 = vrot.slane %v5463, %v5471
      %v5473 = vlaneseq
      %v5474 = vshrl.u32 %v5473, 7
      %v5475 = vsub.s32 2, %v5474
      %v5476 = vrot.slane %v5463, %v5475
      %v5477 = vlaneseq
      %v5478 = vshrl.u32 %v5477, 7
      %v5479 = vsub.s32 3, %v5478
      %v5480 = vrot.slane %v5463, %v5479
      %v5481 = vlaneseq
      %v5482 = vshrl.u32 %v5481, 7
      %v5483 = vsub.s32 4, %v5482
      %v5484 = vrot.slane %v5463, %v5483
      %v5485 = vlaneseq
      %v5486 = vshrl.u32 %v5485, 7
      %v5487 = vsub.s32 5, %v5486
      %v5488 = vrot.slane %v5463, %v5487
      %v5489 = vlaneseq
      %v5490 = vshrl.u32 %v5489, 7
      %v5491 = vsub.s32 6, %v5490
      %v5492 = vrot.slane %v5463, %v5491
      %v5493 = vlaneseq
      %v5494 = vshrl.u32 %v5493, 7
      %v5495 = vsub.s32 7, %v5494
      %v5496 = vrot.slane %v5463, %v5495
      %v5505 = vmul.f32 %v4964, %v5468
      %v5506 = vmul.f32 %v4966, %v5472
      %v5507 = vmul.f32 %v5128, %v5476
      %v5508 = vmul.f32 %v5130, %v5480
      %v5509 = vmul.f32 %v5292, %v5484
      %v5510 = vmul.f32 %v5294, %v5488
      %v5511 = vmul.f32 %v5456, %v5492
      %v5512 = vmul.f32 %v5458, %v5496
      %s5513 = scalar_lea.vmem [#allocation12], 2
      %v5514 = vld [vmem:[%s5513] ss:$4 sm:$0xff]
      %v5516 = vlaneseq
      %v5517 = vshrl.u32 %v5516, 7
      %v5518 = vsub.s32 0, %v5517
      %v5519 = vrot.slane %v5514, %v5518
      %v5520 = vlaneseq
      %v5521 = vshrl.u32 %v5520, 7
      %v5522 = vsub.s32 1, %v5521
      %v5523 = vrot.slane %v5514, %v5522
      %v5524 = vlaneseq
      %v5525 = vshrl.u32 %v5524, 7
      %v5526 = vsub.s32 2, %v5525
      %v5527 = vrot.slane %v5514, %v5526
      %v5528 = vlaneseq
      %v5529 = vshrl.u32 %v5528, 7
      %v5530 = vsub.s32 3, %v5529
      %v5531 = vrot.slane %v5514, %v5530
      %v5532 = vlaneseq
      %v5533 = vshrl.u32 %v5532, 7
      %v5534 = vsub.s32 4, %v5533
      %v5535 = vrot.slane %v5514, %v5534
      %v5536 = vlaneseq
      %v5537 = vshrl.u32 %v5536, 7
      %v5538 = vsub.s32 5, %v5537
      %v5539 = vrot.slane %v5514, %v5538
      %v5540 = vlaneseq
      %v5541 = vshrl.u32 %v5540, 7
      %v5542 = vsub.s32 6, %v5541
      %v5543 = vrot.slane %v5514, %v5542
      %v5544 = vlaneseq
      %v5545 = vshrl.u32 %v5544, 7
      %v5546 = vsub.s32 7, %v5545
      %v5547 = vrot.slane %v5514, %v5546
      %v5556 = vadd.f32 %v5505, %v5519
      %v5557 = vadd.f32 %v5506, %v5523
      %v5558 = vadd.f32 %v5507, %v5527
      %v5559 = vadd.f32 %v5508, %v5531
      %v5560 = vadd.f32 %v5509, %v5535
      %v5561 = vadd.f32 %v5510, %v5539
      %v5562 = vadd.f32 %v5511, %v5543
      %v5563 = vadd.f32 %v5512, %v5547
      %v5564 = vmax.f32 %v5556, 0.0
      %v5565 = vmax.f32 %v5557, 0.0
      %v5566 = vmax.f32 %v5558, 0.0
      %v5567 = vmax.f32 %v5559, 0.0
      %v5568 = vmax.f32 %v5560, 0.0
      %v5569 = vmax.f32 %v5561, 0.0
      %v5570 = vmax.f32 %v5562, 0.0
      %v5571 = vmax.f32 %v5563, 0.0
      %v5572 = vpack.c.bf16 %v5564, %v5564
      %v5573 = vpack.c.bf16 %v5565, %v5565
      %v5574 = vpack.c.bf16 %v5566, %v5566
      %v5575 = vpack.c.bf16 %v5567, %v5567
      %v5576 = vpack.c.bf16 %v5568, %v5568
      %v5577 = vpack.c.bf16 %v5569, %v5569
      %v5578 = vpack.c.bf16 %v5570, %v5570
      %v5579 = vpack.c.bf16 %v5571, %v5571
      %s5580 = scalar_lea.vmem [#allocation3], 12288
      %v5581 = vld [vmem:[%s5580] sm:$0xff]
      %v5582 = vld [vmem:[%s5580 + $0x8] sm:$0xff]
      %v5583 = vld [vmem:[%s5580 + $0x10] sm:$0xff]
      %v5584 = vld [vmem:[%s5580 + $0x18] sm:$0xff]
      %v5585 = vld [vmem:[%s5580 + $0x20] sm:$0xff]
      %v5586 = vld [vmem:[%s5580 + $0x28] sm:$0xff]
      %v5587 = vld [vmem:[%s5580 + $0x30] sm:$0xff]
      %v5588 = vld [vmem:[%s5580 + $0x38] sm:$0xff]
      %v5589 = vld [vmem:[%s5580 + $0x40] sm:$0xff]
      %v5590 = vld [vmem:[%s5580 + $0x48] sm:$0xff]
      %v5591 = vld [vmem:[%s5580 + $0x50] sm:$0xff]
      %v5592 = vld [vmem:[%s5580 + $0x58] sm:$0xff]
      %v5593 = vld [vmem:[%s5580 + $0x60] sm:$0xff]
      %v5594 = vld [vmem:[%s5580 + $0x68] sm:$0xff]
      %v5595 = vld [vmem:[%s5580 + $0x70] sm:$0xff]
      %v5596 = vld [vmem:[%s5580 + $0x78] sm:$0xff]
      %v5597 = vld [vmem:[%s5580 + $0x80] sm:$0xff]
      %v5598 = vld [vmem:[%s5580 + $0x88] sm:$0xff]
      %v5599 = vld [vmem:[%s5580 + $0x90] sm:$0xff]
      %v5600 = vld [vmem:[%s5580 + $0x98] sm:$0xff]
      %v5601 = vld [vmem:[%s5580 + $0xa0] sm:$0xff]
      %v5602 = vld [vmem:[%s5580 + $0xa8] sm:$0xff]
      %v5603 = vld [vmem:[%s5580 + $0xb0] sm:$0xff]
      %v5604 = vld [vmem:[%s5580 + $0xb8] sm:$0xff]
      %v5605 = vld [vmem:[%s5580 + $0xc0] sm:$0xff]
      %v5606 = vld [vmem:[%s5580 + $0xc8] sm:$0xff]
      %v5607 = vld [vmem:[%s5580 + $0xd0] sm:$0xff]
      %v5608 = vld [vmem:[%s5580 + $0xd8] sm:$0xff]
      %v5609 = vld [vmem:[%s5580 + $0xe0] sm:$0xff]
      %v5610 = vld [vmem:[%s5580 + $0xe8] sm:$0xff]
      %v5611 = vld [vmem:[%s5580 + $0xf0] sm:$0xff]
      %v5612 = vld [vmem:[%s5580 + $0xf8] sm:$0xff]
      %v5613 = vld [vmem:[%s5580 + $0x100] sm:$0xff]
      %v5614 = vld [vmem:[%s5580 + $0x108] sm:$0xff]
      %v5615 = vld [vmem:[%s5580 + $0x110] sm:$0xff]
      %v5616 = vld [vmem:[%s5580 + $0x118] sm:$0xff]
      %v5617 = vld [vmem:[%s5580 + $0x120] sm:$0xff]
      %v5618 = vld [vmem:[%s5580 + $0x128] sm:$0xff]
      %v5619 = vld [vmem:[%s5580 + $0x130] sm:$0xff]
      %v5620 = vld [vmem:[%s5580 + $0x138] sm:$0xff]
      %v5621 = vld [vmem:[%s5580 + $0x140] sm:$0xff]
      %v5622 = vld [vmem:[%s5580 + $0x148] sm:$0xff]
      %v5623 = vld [vmem:[%s5580 + $0x150] sm:$0xff]
      %v5624 = vld [vmem:[%s5580 + $0x158] sm:$0xff]
      %v5625 = vld [vmem:[%s5580 + $0x160] sm:$0xff]
      %v5626 = vld [vmem:[%s5580 + $0x168] sm:$0xff]
      %v5627 = vld [vmem:[%s5580 + $0x170] sm:$0xff]
      %v5628 = vld [vmem:[%s5580 + $0x178] sm:$0xff]
      %v5629 = vld [vmem:[%s5580 + $0x180] sm:$0xff]
      %v5630 = vld [vmem:[%s5580 + $0x188] sm:$0xff]
      %v5631 = vld [vmem:[%s5580 + $0x190] sm:$0xff]
      %v5632 = vld [vmem:[%s5580 + $0x198] sm:$0xff]
      %v5633 = vld [vmem:[%s5580 + $0x1a0] sm:$0xff]
      %v5634 = vld [vmem:[%s5580 + $0x1a8] sm:$0xff]
      %v5635 = vld [vmem:[%s5580 + $0x1b0] sm:$0xff]
      %v5636 = vld [vmem:[%s5580 + $0x1b8] sm:$0xff]
      %v5637 = vld [vmem:[%s5580 + $0x1c0] sm:$0xff]
      %v5638 = vld [vmem:[%s5580 + $0x1c8] sm:$0xff]
      %v5639 = vld [vmem:[%s5580 + $0x1d0] sm:$0xff]
      %v5640 = vld [vmem:[%s5580 + $0x1d8] sm:$0xff]
      %v5641 = vld [vmem:[%s5580 + $0x1e0] sm:$0xff]
      %v5642 = vld [vmem:[%s5580 + $0x1e8] sm:$0xff]
      %v5643 = vld [vmem:[%s5580 + $0x1f0] sm:$0xff]
      %v5644 = vld [vmem:[%s5580 + $0x1f8] sm:$0xff]
      %v5645 = vld [vmem:[%s5580 + $0x200] sm:$0xff]
      %v5646 = vld [vmem:[%s5580 + $0x208] sm:$0xff]
      %v5647 = vld [vmem:[%s5580 + $0x210] sm:$0xff]
      %v5648 = vld [vmem:[%s5580 + $0x218] sm:$0xff]
      %v5649 = vld [vmem:[%s5580 + $0x220] sm:$0xff]
      %v5650 = vld [vmem:[%s5580 + $0x228] sm:$0xff]
      %v5651 = vld [vmem:[%s5580 + $0x230] sm:$0xff]
      %v5652 = vld [vmem:[%s5580 + $0x238] sm:$0xff]
      %v5653 = vld [vmem:[%s5580 + $0x240] sm:$0xff]
      %v5654 = vld [vmem:[%s5580 + $0x248] sm:$0xff]
      %v5655 = vld [vmem:[%s5580 + $0x250] sm:$0xff]
      %v5656 = vld [vmem:[%s5580 + $0x258] sm:$0xff]
      %v5657 = vld [vmem:[%s5580 + $0x260] sm:$0xff]
      %v5658 = vld [vmem:[%s5580 + $0x268] sm:$0xff]
      %v5659 = vld [vmem:[%s5580 + $0x270] sm:$0xff]
      %v5660 = vld [vmem:[%s5580 + $0x278] sm:$0xff]
      %v5661 = vld [vmem:[%s5580 + $0x280] sm:$0xff]
      %v5662 = vld [vmem:[%s5580 + $0x288] sm:$0xff]
      %v5663 = vld [vmem:[%s5580 + $0x290] sm:$0xff]
      %v5664 = vld [vmem:[%s5580 + $0x298] sm:$0xff]
      %v5665 = vld [vmem:[%s5580 + $0x2a0] sm:$0xff]
      %v5666 = vld [vmem:[%s5580 + $0x2a8] sm:$0xff]
      %v5667 = vld [vmem:[%s5580 + $0x2b0] sm:$0xff]
      %v5668 = vld [vmem:[%s5580 + $0x2b8] sm:$0xff]
      %v5669 = vld [vmem:[%s5580 + $0x2c0] sm:$0xff]
      %v5670 = vld [vmem:[%s5580 + $0x2c8] sm:$0xff]
      %v5671 = vld [vmem:[%s5580 + $0x2d0] sm:$0xff]
      %v5672 = vld [vmem:[%s5580 + $0x2d8] sm:$0xff]
      %v5673 = vld [vmem:[%s5580 + $0x2e0] sm:$0xff]
      %v5674 = vld [vmem:[%s5580 + $0x2e8] sm:$0xff]
      %v5675 = vld [vmem:[%s5580 + $0x2f0] sm:$0xff]
      %v5676 = vld [vmem:[%s5580 + $0x2f8] sm:$0xff]
      %v5677 = vld [vmem:[%s5580 + $0x300] sm:$0xff]
      %v5678 = vld [vmem:[%s5580 + $0x308] sm:$0xff]
      %v5679 = vld [vmem:[%s5580 + $0x310] sm:$0xff]
      %v5680 = vld [vmem:[%s5580 + $0x318] sm:$0xff]
      %v5681 = vld [vmem:[%s5580 + $0x320] sm:$0xff]
      %v5682 = vld [vmem:[%s5580 + $0x328] sm:$0xff]
      %v5683 = vld [vmem:[%s5580 + $0x330] sm:$0xff]
      %v5684 = vld [vmem:[%s5580 + $0x338] sm:$0xff]
      %v5685 = vld [vmem:[%s5580 + $0x340] sm:$0xff]
      %v5686 = vld [vmem:[%s5580 + $0x348] sm:$0xff]
      %v5687 = vld [vmem:[%s5580 + $0x350] sm:$0xff]
      %v5688 = vld [vmem:[%s5580 + $0x358] sm:$0xff]
      %v5689 = vld [vmem:[%s5580 + $0x360] sm:$0xff]
      %v5690 = vld [vmem:[%s5580 + $0x368] sm:$0xff]
      %v5691 = vld [vmem:[%s5580 + $0x370] sm:$0xff]
      %v5692 = vld [vmem:[%s5580 + $0x378] sm:$0xff]
      %v5693 = vld [vmem:[%s5580 + $0x380] sm:$0xff]
      %v5694 = vld [vmem:[%s5580 + $0x388] sm:$0xff]
      %v5695 = vld [vmem:[%s5580 + $0x390] sm:$0xff]
      %v5696 = vld [vmem:[%s5580 + $0x398] sm:$0xff]
      %v5697 = vld [vmem:[%s5580 + $0x3a0] sm:$0xff]
      %v5698 = vld [vmem:[%s5580 + $0x3a8] sm:$0xff]
      %v5699 = vld [vmem:[%s5580 + $0x3b0] sm:$0xff]
      %v5700 = vld [vmem:[%s5580 + $0x3b8] sm:$0xff]
      %v5701 = vld [vmem:[%s5580 + $0x3c0] sm:$0xff]
      %v5702 = vld [vmem:[%s5580 + $0x3c8] sm:$0xff]
      %v5703 = vld [vmem:[%s5580 + $0x3d0] sm:$0xff]
      %v5704 = vld [vmem:[%s5580 + $0x3d8] sm:$0xff]
      %v5705 = vld [vmem:[%s5580 + $0x3e0] sm:$0xff]
      %v5706 = vld [vmem:[%s5580 + $0x3e8] sm:$0xff]
      %v5707 = vld [vmem:[%s5580 + $0x3f0] sm:$0xff]
      %v5708 = vld [vmem:[%s5580 + $0x3f8] sm:$0xff]
      %v5709 = vld [vmem:[%s5580 + $0x400] sm:$0xff]
      %v5710 = vld [vmem:[%s5580 + $0x408] sm:$0xff]
      %v5711 = vld [vmem:[%s5580 + $0x410] sm:$0xff]
      %v5712 = vld [vmem:[%s5580 + $0x418] sm:$0xff]
      %v5713 = vld [vmem:[%s5580 + $0x420] sm:$0xff]
      %v5714 = vld [vmem:[%s5580 + $0x428] sm:$0xff]
      %v5715 = vld [vmem:[%s5580 + $0x430] sm:$0xff]
      %v5716 = vld [vmem:[%s5580 + $0x438] sm:$0xff]
      %v5717 = vld [vmem:[%s5580 + $0x440] sm:$0xff]
      %v5718 = vld [vmem:[%s5580 + $0x448] sm:$0xff]
      %v5719 = vld [vmem:[%s5580 + $0x450] sm:$0xff]
      %v5720 = vld [vmem:[%s5580 + $0x458] sm:$0xff]
      %v5721 = vld [vmem:[%s5580 + $0x460] sm:$0xff]
      %v5722 = vld [vmem:[%s5580 + $0x468] sm:$0xff]
      %v5723 = vld [vmem:[%s5580 + $0x470] sm:$0xff]
      %v5724 = vld [vmem:[%s5580 + $0x478] sm:$0xff]
      %v5725 = vld [vmem:[%s5580 + $0x480] sm:$0xff]
      %v5726 = vld [vmem:[%s5580 + $0x488] sm:$0xff]
      %v5727 = vld [vmem:[%s5580 + $0x490] sm:$0xff]
      %v5728 = vld [vmem:[%s5580 + $0x498] sm:$0xff]
      %v5729 = vld [vmem:[%s5580 + $0x4a0] sm:$0xff]
      %v5730 = vld [vmem:[%s5580 + $0x4a8] sm:$0xff]
      %v5731 = vld [vmem:[%s5580 + $0x4b0] sm:$0xff]
      %v5732 = vld [vmem:[%s5580 + $0x4b8] sm:$0xff]
      %v5733 = vld [vmem:[%s5580 + $0x4c0] sm:$0xff]
      %v5734 = vld [vmem:[%s5580 + $0x4c8] sm:$0xff]
      %v5735 = vld [vmem:[%s5580 + $0x4d0] sm:$0xff]
      %v5736 = vld [vmem:[%s5580 + $0x4d8] sm:$0xff]
      %v5737 = vld [vmem:[%s5580 + $0x4e0] sm:$0xff]
      %v5738 = vld [vmem:[%s5580 + $0x4e8] sm:$0xff]
      %v5739 = vld [vmem:[%s5580 + $0x4f0] sm:$0xff]
      %v5740 = vld [vmem:[%s5580 + $0x4f8] sm:$0xff]
      %v5741 = vld [vmem:[%s5580 + $0x500] sm:$0xff]
      %v5742 = vld [vmem:[%s5580 + $0x508] sm:$0xff]
      %v5743 = vld [vmem:[%s5580 + $0x510] sm:$0xff]
      %v5744 = vld [vmem:[%s5580 + $0x518] sm:$0xff]
      %v5745 = vld [vmem:[%s5580 + $0x520] sm:$0xff]
      %v5746 = vld [vmem:[%s5580 + $0x528] sm:$0xff]
      %v5747 = vld [vmem:[%s5580 + $0x530] sm:$0xff]
      %v5748 = vld [vmem:[%s5580 + $0x538] sm:$0xff]
      %v5749 = vld [vmem:[%s5580 + $0x540] sm:$0xff]
      %v5750 = vld [vmem:[%s5580 + $0x548] sm:$0xff]
      %v5751 = vld [vmem:[%s5580 + $0x550] sm:$0xff]
      %v5752 = vld [vmem:[%s5580 + $0x558] sm:$0xff]
      %v5753 = vld [vmem:[%s5580 + $0x560] sm:$0xff]
      %v5754 = vld [vmem:[%s5580 + $0x568] sm:$0xff]
      %v5755 = vld [vmem:[%s5580 + $0x570] sm:$0xff]
      %v5756 = vld [vmem:[%s5580 + $0x578] sm:$0xff]
      %v5757 = vld [vmem:[%s5580 + $0x580] sm:$0xff]
      %v5758 = vld [vmem:[%s5580 + $0x588] sm:$0xff]
      %v5759 = vld [vmem:[%s5580 + $0x590] sm:$0xff]
      %v5760 = vld [vmem:[%s5580 + $0x598] sm:$0xff]
      %v5761 = vld [vmem:[%s5580 + $0x5a0] sm:$0xff]
      %v5762 = vld [vmem:[%s5580 + $0x5a8] sm:$0xff]
      %v5763 = vld [vmem:[%s5580 + $0x5b0] sm:$0xff]
      %v5764 = vld [vmem:[%s5580 + $0x5b8] sm:$0xff]
      %v5765 = vld [vmem:[%s5580 + $0x5c0] sm:$0xff]
      %v5766 = vld [vmem:[%s5580 + $0x5c8] sm:$0xff]
      %v5767 = vld [vmem:[%s5580 + $0x5d0] sm:$0xff]
      %v5768 = vld [vmem:[%s5580 + $0x5d8] sm:$0xff]
      %v5769 = vld [vmem:[%s5580 + $0x5e0] sm:$0xff]
      %v5770 = vld [vmem:[%s5580 + $0x5e8] sm:$0xff]
      %v5771 = vld [vmem:[%s5580 + $0x5f0] sm:$0xff]
      %v5772 = vld [vmem:[%s5580 + $0x5f8] sm:$0xff]
      %v5773 = vld [vmem:[%s5580 + $0x600] sm:$0xff]
      %v5774 = vld [vmem:[%s5580 + $0x608] sm:$0xff]
      %v5775 = vld [vmem:[%s5580 + $0x610] sm:$0xff]
      %v5776 = vld [vmem:[%s5580 + $0x618] sm:$0xff]
      %v5777 = vld [vmem:[%s5580 + $0x620] sm:$0xff]
      %v5778 = vld [vmem:[%s5580 + $0x628] sm:$0xff]
      %v5779 = vld [vmem:[%s5580 + $0x630] sm:$0xff]
      %v5780 = vld [vmem:[%s5580 + $0x638] sm:$0xff]
      %v5781 = vld [vmem:[%s5580 + $0x640] sm:$0xff]
      %v5782 = vld [vmem:[%s5580 + $0x648] sm:$0xff]
      %v5783 = vld [vmem:[%s5580 + $0x650] sm:$0xff]
      %v5784 = vld [vmem:[%s5580 + $0x658] sm:$0xff]
      %v5785 = vld [vmem:[%s5580 + $0x660] sm:$0xff]
      %v5786 = vld [vmem:[%s5580 + $0x668] sm:$0xff]
      %v5787 = vld [vmem:[%s5580 + $0x670] sm:$0xff]
      %v5788 = vld [vmem:[%s5580 + $0x678] sm:$0xff]
      %v5789 = vld [vmem:[%s5580 + $0x680] sm:$0xff]
      %v5790 = vld [vmem:[%s5580 + $0x688] sm:$0xff]
      %v5791 = vld [vmem:[%s5580 + $0x690] sm:$0xff]
      %v5792 = vld [vmem:[%s5580 + $0x698] sm:$0xff]
      %v5793 = vld [vmem:[%s5580 + $0x6a0] sm:$0xff]
      %v5794 = vld [vmem:[%s5580 + $0x6a8] sm:$0xff]
      %v5795 = vld [vmem:[%s5580 + $0x6b0] sm:$0xff]
      %v5796 = vld [vmem:[%s5580 + $0x6b8] sm:$0xff]
      %v5797 = vld [vmem:[%s5580 + $0x6c0] sm:$0xff]
      %v5798 = vld [vmem:[%s5580 + $0x6c8] sm:$0xff]
      %v5799 = vld [vmem:[%s5580 + $0x6d0] sm:$0xff]
      %v5800 = vld [vmem:[%s5580 + $0x6d8] sm:$0xff]
      %v5801 = vld [vmem:[%s5580 + $0x6e0] sm:$0xff]
      %v5802 = vld [vmem:[%s5580 + $0x6e8] sm:$0xff]
      %v5803 = vld [vmem:[%s5580 + $0x6f0] sm:$0xff]
      %v5804 = vld [vmem:[%s5580 + $0x6f8] sm:$0xff]
      %v5805 = vld [vmem:[%s5580 + $0x700] sm:$0xff]
      %v5806 = vld [vmem:[%s5580 + $0x708] sm:$0xff]
      %v5807 = vld [vmem:[%s5580 + $0x710] sm:$0xff]
      %v5808 = vld [vmem:[%s5580 + $0x718] sm:$0xff]
      %v5809 = vld [vmem:[%s5580 + $0x720] sm:$0xff]
      %v5810 = vld [vmem:[%s5580 + $0x728] sm:$0xff]
      %v5811 = vld [vmem:[%s5580 + $0x730] sm:$0xff]
      %v5812 = vld [vmem:[%s5580 + $0x738] sm:$0xff]
      %v5813 = vld [vmem:[%s5580 + $0x740] sm:$0xff]
      %v5814 = vld [vmem:[%s5580 + $0x748] sm:$0xff]
      %v5815 = vld [vmem:[%s5580 + $0x750] sm:$0xff]
      %v5816 = vld [vmem:[%s5580 + $0x758] sm:$0xff]
      %v5817 = vld [vmem:[%s5580 + $0x760] sm:$0xff]
      %v5818 = vld [vmem:[%s5580 + $0x768] sm:$0xff]
      %v5819 = vld [vmem:[%s5580 + $0x770] sm:$0xff]
      %v5820 = vld [vmem:[%s5580 + $0x778] sm:$0xff]
      %v5821 = vld [vmem:[%s5580 + $0x780] sm:$0xff]
      %v5822 = vld [vmem:[%s5580 + $0x788] sm:$0xff]
      %v5823 = vld [vmem:[%s5580 + $0x790] sm:$0xff]
      %v5824 = vld [vmem:[%s5580 + $0x798] sm:$0xff]
      %v5825 = vld [vmem:[%s5580 + $0x7a0] sm:$0xff]
      %v5826 = vld [vmem:[%s5580 + $0x7a8] sm:$0xff]
      %v5827 = vld [vmem:[%s5580 + $0x7b0] sm:$0xff]
      %v5828 = vld [vmem:[%s5580 + $0x7b8] sm:$0xff]
      %v5829 = vld [vmem:[%s5580 + $0x7c0] sm:$0xff]
      %v5830 = vld [vmem:[%s5580 + $0x7c8] sm:$0xff]
      %v5831 = vld [vmem:[%s5580 + $0x7d0] sm:$0xff]
      %v5832 = vld [vmem:[%s5580 + $0x7d8] sm:$0xff]
      %v5833 = vld [vmem:[%s5580 + $0x7e0] sm:$0xff]
      %v5834 = vld [vmem:[%s5580 + $0x7e8] sm:$0xff]
      %v5835 = vld [vmem:[%s5580 + $0x7f0] sm:$0xff]
      %v5836 = vld [vmem:[%s5580 + $0x7f8] sm:$0xff]
      %v5837 = vld [vmem:[%s5580 + $0x800] sm:$0xff]
      %v5838 = vld [vmem:[%s5580 + $0x808] sm:$0xff]
      %v5839 = vld [vmem:[%s5580 + $0x810] sm:$0xff]
      %v5840 = vld [vmem:[%s5580 + $0x818] sm:$0xff]
      %v5841 = vld [vmem:[%s5580 + $0x820] sm:$0xff]
      %v5842 = vld [vmem:[%s5580 + $0x828] sm:$0xff]
      %v5843 = vld [vmem:[%s5580 + $0x830] sm:$0xff]
      %v5844 = vld [vmem:[%s5580 + $0x838] sm:$0xff]
      %v5845 = vld [vmem:[%s5580 + $0x840] sm:$0xff]
      %v5846 = vld [vmem:[%s5580 + $0x848] sm:$0xff]
      %v5847 = vld [vmem:[%s5580 + $0x850] sm:$0xff]
      %v5848 = vld [vmem:[%s5580 + $0x858] sm:$0xff]
      %v5849 = vld [vmem:[%s5580 + $0x860] sm:$0xff]
      %v5850 = vld [vmem:[%s5580 + $0x868] sm:$0xff]
      %v5851 = vld [vmem:[%s5580 + $0x870] sm:$0xff]
      %v5852 = vld [vmem:[%s5580 + $0x878] sm:$0xff]
      %v5853 = vld [vmem:[%s5580 + $0x880] sm:$0xff]
      %v5854 = vld [vmem:[%s5580 + $0x888] sm:$0xff]
      %v5855 = vld [vmem:[%s5580 + $0x890] sm:$0xff]
      %v5856 = vld [vmem:[%s5580 + $0x898] sm:$0xff]
      %v5857 = vld [vmem:[%s5580 + $0x8a0] sm:$0xff]
      %v5858 = vld [vmem:[%s5580 + $0x8a8] sm:$0xff]
      %v5859 = vld [vmem:[%s5580 + $0x8b0] sm:$0xff]
      %v5860 = vld [vmem:[%s5580 + $0x8b8] sm:$0xff]
      %v5861 = vld [vmem:[%s5580 + $0x8c0] sm:$0xff]
      %v5862 = vld [vmem:[%s5580 + $0x8c8] sm:$0xff]
      %v5863 = vld [vmem:[%s5580 + $0x8d0] sm:$0xff]
      %v5864 = vld [vmem:[%s5580 + $0x8d8] sm:$0xff]
      %v5865 = vld [vmem:[%s5580 + $0x8e0] sm:$0xff]
      %v5866 = vld [vmem:[%s5580 + $0x8e8] sm:$0xff]
      %v5867 = vld [vmem:[%s5580 + $0x8f0] sm:$0xff]
      %v5868 = vld [vmem:[%s5580 + $0x8f8] sm:$0xff]
      %v5869 = vld [vmem:[%s5580 + $0x900] sm:$0xff]
      %v5870 = vld [vmem:[%s5580 + $0x908] sm:$0xff]
      %v5871 = vld [vmem:[%s5580 + $0x910] sm:$0xff]
      %v5872 = vld [vmem:[%s5580 + $0x918] sm:$0xff]
      %v5873 = vld [vmem:[%s5580 + $0x920] sm:$0xff]
      %v5874 = vld [vmem:[%s5580 + $0x928] sm:$0xff]
      %v5875 = vld [vmem:[%s5580 + $0x930] sm:$0xff]
      %v5876 = vld [vmem:[%s5580 + $0x938] sm:$0xff]
      %v5877 = vld [vmem:[%s5580 + $0x940] sm:$0xff]
      %v5878 = vld [vmem:[%s5580 + $0x948] sm:$0xff]
      %v5879 = vld [vmem:[%s5580 + $0x950] sm:$0xff]
      %v5880 = vld [vmem:[%s5580 + $0x958] sm:$0xff]
      %v5881 = vld [vmem:[%s5580 + $0x960] sm:$0xff]
      %v5882 = vld [vmem:[%s5580 + $0x968] sm:$0xff]
      %v5883 = vld [vmem:[%s5580 + $0x970] sm:$0xff]
      %v5884 = vld [vmem:[%s5580 + $0x978] sm:$0xff]
      %v5885 = vld [vmem:[%s5580 + $0x980] sm:$0xff]
      %v5886 = vld [vmem:[%s5580 + $0x988] sm:$0xff]
      %v5887 = vld [vmem:[%s5580 + $0x990] sm:$0xff]
      %v5888 = vld [vmem:[%s5580 + $0x998] sm:$0xff]
      %v5889 = vld [vmem:[%s5580 + $0x9a0] sm:$0xff]
      %v5890 = vld [vmem:[%s5580 + $0x9a8] sm:$0xff]
      %v5891 = vld [vmem:[%s5580 + $0x9b0] sm:$0xff]
      %v5892 = vld [vmem:[%s5580 + $0x9b8] sm:$0xff]
      %v5893 = vld [vmem:[%s5580 + $0x9c0] sm:$0xff]
      %v5894 = vld [vmem:[%s5580 + $0x9c8] sm:$0xff]
      %v5895 = vld [vmem:[%s5580 + $0x9d0] sm:$0xff]
      %v5896 = vld [vmem:[%s5580 + $0x9d8] sm:$0xff]
      %v5897 = vld [vmem:[%s5580 + $0x9e0] sm:$0xff]
      %v5898 = vld [vmem:[%s5580 + $0x9e8] sm:$0xff]
      %v5899 = vld [vmem:[%s5580 + $0x9f0] sm:$0xff]
      %v5900 = vld [vmem:[%s5580 + $0x9f8] sm:$0xff]
      %v5901 = vld [vmem:[%s5580 + $0xa00] sm:$0xff]
      %v5902 = vld [vmem:[%s5580 + $0xa08] sm:$0xff]
      %v5903 = vld [vmem:[%s5580 + $0xa10] sm:$0xff]
      %v5904 = vld [vmem:[%s5580 + $0xa18] sm:$0xff]
      %v5905 = vld [vmem:[%s5580 + $0xa20] sm:$0xff]
      %v5906 = vld [vmem:[%s5580 + $0xa28] sm:$0xff]
      %v5907 = vld [vmem:[%s5580 + $0xa30] sm:$0xff]
      %v5908 = vld [vmem:[%s5580 + $0xa38] sm:$0xff]
      %v5909 = vld [vmem:[%s5580 + $0xa40] sm:$0xff]
      %v5910 = vld [vmem:[%s5580 + $0xa48] sm:$0xff]
      %v5911 = vld [vmem:[%s5580 + $0xa50] sm:$0xff]
      %v5912 = vld [vmem:[%s5580 + $0xa58] sm:$0xff]
      %v5913 = vld [vmem:[%s5580 + $0xa60] sm:$0xff]
      %v5914 = vld [vmem:[%s5580 + $0xa68] sm:$0xff]
      %v5915 = vld [vmem:[%s5580 + $0xa70] sm:$0xff]
      %v5916 = vld [vmem:[%s5580 + $0xa78] sm:$0xff]
      %v5917 = vld [vmem:[%s5580 + $0xa80] sm:$0xff]
      %v5918 = vld [vmem:[%s5580 + $0xa88] sm:$0xff]
      %v5919 = vld [vmem:[%s5580 + $0xa90] sm:$0xff]
      %v5920 = vld [vmem:[%s5580 + $0xa98] sm:$0xff]
      %v5921 = vld [vmem:[%s5580 + $0xaa0] sm:$0xff]
      %v5922 = vld [vmem:[%s5580 + $0xaa8] sm:$0xff]
      %v5923 = vld [vmem:[%s5580 + $0xab0] sm:$0xff]
      %v5924 = vld [vmem:[%s5580 + $0xab8] sm:$0xff]
      %v5925 = vld [vmem:[%s5580 + $0xac0] sm:$0xff]
      %v5926 = vld [vmem:[%s5580 + $0xac8] sm:$0xff]
      %v5927 = vld [vmem:[%s5580 + $0xad0] sm:$0xff]
      %v5928 = vld [vmem:[%s5580 + $0xad8] sm:$0xff]
      %v5929 = vld [vmem:[%s5580 + $0xae0] sm:$0xff]
      %v5930 = vld [vmem:[%s5580 + $0xae8] sm:$0xff]
      %v5931 = vld [vmem:[%s5580 + $0xaf0] sm:$0xff]
      %v5932 = vld [vmem:[%s5580 + $0xaf8] sm:$0xff]
      %v5933 = vld [vmem:[%s5580 + $0xb00] sm:$0xff]
      %v5934 = vld [vmem:[%s5580 + $0xb08] sm:$0xff]
      %v5935 = vld [vmem:[%s5580 + $0xb10] sm:$0xff]
      %v5936 = vld [vmem:[%s5580 + $0xb18] sm:$0xff]
      %v5937 = vld [vmem:[%s5580 + $0xb20] sm:$0xff]
      %v5938 = vld [vmem:[%s5580 + $0xb28] sm:$0xff]
      %v5939 = vld [vmem:[%s5580 + $0xb30] sm:$0xff]
      %v5940 = vld [vmem:[%s5580 + $0xb38] sm:$0xff]
      %v5941 = vld [vmem:[%s5580 + $0xb40] sm:$0xff]
      %v5942 = vld [vmem:[%s5580 + $0xb48] sm:$0xff]
      %v5943 = vld [vmem:[%s5580 + $0xb50] sm:$0xff]
      %v5944 = vld [vmem:[%s5580 + $0xb58] sm:$0xff]
      %v5945 = vld [vmem:[%s5580 + $0xb60] sm:$0xff]
      %v5946 = vld [vmem:[%s5580 + $0xb68] sm:$0xff]
      %v5947 = vld [vmem:[%s5580 + $0xb70] sm:$0xff]
      %v5948 = vld [vmem:[%s5580 + $0xb78] sm:$0xff]
      %v5949 = vld [vmem:[%s5580 + $0xb80] sm:$0xff]
      %v5950 = vld [vmem:[%s5580 + $0xb88] sm:$0xff]
      %v5951 = vld [vmem:[%s5580 + $0xb90] sm:$0xff]
      %v5952 = vld [vmem:[%s5580 + $0xb98] sm:$0xff]
      %v5953 = vld [vmem:[%s5580 + $0xba0] sm:$0xff]
      %v5954 = vld [vmem:[%s5580 + $0xba8] sm:$0xff]
      %v5955 = vld [vmem:[%s5580 + $0xbb0] sm:$0xff]
      %v5956 = vld [vmem:[%s5580 + $0xbb8] sm:$0xff]
      %v5957 = vld [vmem:[%s5580 + $0xbc0] sm:$0xff]
      %v5958 = vld [vmem:[%s5580 + $0xbc8] sm:$0xff]
      %v5959 = vld [vmem:[%s5580 + $0xbd0] sm:$0xff]
      %v5960 = vld [vmem:[%s5580 + $0xbd8] sm:$0xff]
      %v5961 = vld [vmem:[%s5580 + $0xbe0] sm:$0xff]
      %v5962 = vld [vmem:[%s5580 + $0xbe8] sm:$0xff]
      %v5963 = vld [vmem:[%s5580 + $0xbf0] sm:$0xff]
      %v5964 = vld [vmem:[%s5580 + $0xbf8] sm:$0xff]
      %v5965 = vld [vmem:[%s5580 + $0xc00] sm:$0xff]
      %v5966 = vld [vmem:[%s5580 + $0xc08] sm:$0xff]
      %v5967 = vld [vmem:[%s5580 + $0xc10] sm:$0xff]
      %v5968 = vld [vmem:[%s5580 + $0xc18] sm:$0xff]
      %v5969 = vld [vmem:[%s5580 + $0xc20] sm:$0xff]
      %v5970 = vld [vmem:[%s5580 + $0xc28] sm:$0xff]
      %v5971 = vld [vmem:[%s5580 + $0xc30] sm:$0xff]
      %v5972 = vld [vmem:[%s5580 + $0xc38] sm:$0xff]
      %v5973 = vld [vmem:[%s5580 + $0xc40] sm:$0xff]
      %v5974 = vld [vmem:[%s5580 + $0xc48] sm:$0xff]
      %v5975 = vld [vmem:[%s5580 + $0xc50] sm:$0xff]
      %v5976 = vld [vmem:[%s5580 + $0xc58] sm:$0xff]
      %v5977 = vld [vmem:[%s5580 + $0xc60] sm:$0xff]
      %v5978 = vld [vmem:[%s5580 + $0xc68] sm:$0xff]
      %v5979 = vld [vmem:[%s5580 + $0xc70] sm:$0xff]
      %v5980 = vld [vmem:[%s5580 + $0xc78] sm:$0xff]
      %v5981 = vld [vmem:[%s5580 + $0xc80] sm:$0xff]
      %v5982 = vld [vmem:[%s5580 + $0xc88] sm:$0xff]
      %v5983 = vld [vmem:[%s5580 + $0xc90] sm:$0xff]
      %v5984 = vld [vmem:[%s5580 + $0xc98] sm:$0xff]
      %v5985 = vld [vmem:[%s5580 + $0xca0] sm:$0xff]
      %v5986 = vld [vmem:[%s5580 + $0xca8] sm:$0xff]
      %v5987 = vld [vmem:[%s5580 + $0xcb0] sm:$0xff]
      %v5988 = vld [vmem:[%s5580 + $0xcb8] sm:$0xff]
      %v5989 = vld [vmem:[%s5580 + $0xcc0] sm:$0xff]
      %v5990 = vld [vmem:[%s5580 + $0xcc8] sm:$0xff]
      %v5991 = vld [vmem:[%s5580 + $0xcd0] sm:$0xff]
      %v5992 = vld [vmem:[%s5580 + $0xcd8] sm:$0xff]
      %v5993 = vld [vmem:[%s5580 + $0xce0] sm:$0xff]
      %v5994 = vld [vmem:[%s5580 + $0xce8] sm:$0xff]
      %v5995 = vld [vmem:[%s5580 + $0xcf0] sm:$0xff]
      %v5996 = vld [vmem:[%s5580 + $0xcf8] sm:$0xff]
      %v5997 = vld [vmem:[%s5580 + $0xd00] sm:$0xff]
      %v5998 = vld [vmem:[%s5580 + $0xd08] sm:$0xff]
      %v5999 = vld [vmem:[%s5580 + $0xd10] sm:$0xff]
      %v6000 = vld [vmem:[%s5580 + $0xd18] sm:$0xff]
      %v6001 = vld [vmem:[%s5580 + $0xd20] sm:$0xff]
      %v6002 = vld [vmem:[%s5580 + $0xd28] sm:$0xff]
      %v6003 = vld [vmem:[%s5580 + $0xd30] sm:$0xff]
      %v6004 = vld [vmem:[%s5580 + $0xd38] sm:$0xff]
      %v6005 = vld [vmem:[%s5580 + $0xd40] sm:$0xff]
      %v6006 = vld [vmem:[%s5580 + $0xd48] sm:$0xff]
      %v6007 = vld [vmem:[%s5580 + $0xd50] sm:$0xff]
      %v6008 = vld [vmem:[%s5580 + $0xd58] sm:$0xff]
      %v6009 = vld [vmem:[%s5580 + $0xd60] sm:$0xff]
      %v6010 = vld [vmem:[%s5580 + $0xd68] sm:$0xff]
      %v6011 = vld [vmem:[%s5580 + $0xd70] sm:$0xff]
      %v6012 = vld [vmem:[%s5580 + $0xd78] sm:$0xff]
      %v6013 = vld [vmem:[%s5580 + $0xd80] sm:$0xff]
      %v6014 = vld [vmem:[%s5580 + $0xd88] sm:$0xff]
      %v6015 = vld [vmem:[%s5580 + $0xd90] sm:$0xff]
      %v6016 = vld [vmem:[%s5580 + $0xd98] sm:$0xff]
      %v6017 = vld [vmem:[%s5580 + $0xda0] sm:$0xff]
      %v6018 = vld [vmem:[%s5580 + $0xda8] sm:$0xff]
      %v6019 = vld [vmem:[%s5580 + $0xdb0] sm:$0xff]
      %v6020 = vld [vmem:[%s5580 + $0xdb8] sm:$0xff]
      %v6021 = vld [vmem:[%s5580 + $0xdc0] sm:$0xff]
      %v6022 = vld [vmem:[%s5580 + $0xdc8] sm:$0xff]
      %v6023 = vld [vmem:[%s5580 + $0xdd0] sm:$0xff]
      %v6024 = vld [vmem:[%s5580 + $0xdd8] sm:$0xff]
      %v6025 = vld [vmem:[%s5580 + $0xde0] sm:$0xff]
      %v6026 = vld [vmem:[%s5580 + $0xde8] sm:$0xff]
      %v6027 = vld [vmem:[%s5580 + $0xdf0] sm:$0xff]
      %v6028 = vld [vmem:[%s5580 + $0xdf8] sm:$0xff]
      %v6029 = vld [vmem:[%s5580 + $0xe00] sm:$0xff]
      %v6030 = vld [vmem:[%s5580 + $0xe08] sm:$0xff]
      %v6031 = vld [vmem:[%s5580 + $0xe10] sm:$0xff]
      %v6032 = vld [vmem:[%s5580 + $0xe18] sm:$0xff]
      %v6033 = vld [vmem:[%s5580 + $0xe20] sm:$0xff]
      %v6034 = vld [vmem:[%s5580 + $0xe28] sm:$0xff]
      %v6035 = vld [vmem:[%s5580 + $0xe30] sm:$0xff]
      %v6036 = vld [vmem:[%s5580 + $0xe38] sm:$0xff]
      %v6037 = vld [vmem:[%s5580 + $0xe40] sm:$0xff]
      %v6038 = vld [vmem:[%s5580 + $0xe48] sm:$0xff]
      %v6039 = vld [vmem:[%s5580 + $0xe50] sm:$0xff]
      %v6040 = vld [vmem:[%s5580 + $0xe58] sm:$0xff]
      %v6041 = vld [vmem:[%s5580 + $0xe60] sm:$0xff]
      %v6042 = vld [vmem:[%s5580 + $0xe68] sm:$0xff]
      %v6043 = vld [vmem:[%s5580 + $0xe70] sm:$0xff]
      %v6044 = vld [vmem:[%s5580 + $0xe78] sm:$0xff]
      %v6045 = vld [vmem:[%s5580 + $0xe80] sm:$0xff]
      %v6046 = vld [vmem:[%s5580 + $0xe88] sm:$0xff]
      %v6047 = vld [vmem:[%s5580 + $0xe90] sm:$0xff]
      %v6048 = vld [vmem:[%s5580 + $0xe98] sm:$0xff]
      %v6049 = vld [vmem:[%s5580 + $0xea0] sm:$0xff]
      %v6050 = vld [vmem:[%s5580 + $0xea8] sm:$0xff]
      %v6051 = vld [vmem:[%s5580 + $0xeb0] sm:$0xff]
      %v6052 = vld [vmem:[%s5580 + $0xeb8] sm:$0xff]
      %v6053 = vld [vmem:[%s5580 + $0xec0] sm:$0xff]
      %v6054 = vld [vmem:[%s5580 + $0xec8] sm:$0xff]
      %v6055 = vld [vmem:[%s5580 + $0xed0] sm:$0xff]
      %v6056 = vld [vmem:[%s5580 + $0xed8] sm:$0xff]
      %v6057 = vld [vmem:[%s5580 + $0xee0] sm:$0xff]
      %v6058 = vld [vmem:[%s5580 + $0xee8] sm:$0xff]
      %v6059 = vld [vmem:[%s5580 + $0xef0] sm:$0xff]
      %v6060 = vld [vmem:[%s5580 + $0xef8] sm:$0xff]
      %v6061 = vld [vmem:[%s5580 + $0xf00] sm:$0xff]
      %v6062 = vld [vmem:[%s5580 + $0xf08] sm:$0xff]
      %v6063 = vld [vmem:[%s5580 + $0xf10] sm:$0xff]
      %v6064 = vld [vmem:[%s5580 + $0xf18] sm:$0xff]
      %v6065 = vld [vmem:[%s5580 + $0xf20] sm:$0xff]
      %v6066 = vld [vmem:[%s5580 + $0xf28] sm:$0xff]
      %v6067 = vld [vmem:[%s5580 + $0xf30] sm:$0xff]
      %v6068 = vld [vmem:[%s5580 + $0xf38] sm:$0xff]
      %v6069 = vld [vmem:[%s5580 + $0xf40] sm:$0xff]
      %v6070 = vld [vmem:[%s5580 + $0xf48] sm:$0xff]
      %v6071 = vld [vmem:[%s5580 + $0xf50] sm:$0xff]
      %v6072 = vld [vmem:[%s5580 + $0xf58] sm:$0xff]
      %v6073 = vld [vmem:[%s5580 + $0xf60] sm:$0xff]
      %v6074 = vld [vmem:[%s5580 + $0xf68] sm:$0xff]
      %v6075 = vld [vmem:[%s5580 + $0xf70] sm:$0xff]
      %v6076 = vld [vmem:[%s5580 + $0xf78] sm:$0xff]
      %v6077 = vld [vmem:[%s5580 + $0xf80] sm:$0xff]
      %v6078 = vld [vmem:[%s5580 + $0xf88] sm:$0xff]
      %v6079 = vld [vmem:[%s5580 + $0xf90] sm:$0xff]
      %v6080 = vld [vmem:[%s5580 + $0xf98] sm:$0xff]
      %v6081 = vld [vmem:[%s5580 + $0xfa0] sm:$0xff]
      %v6082 = vld [vmem:[%s5580 + $0xfa8] sm:$0xff]
      %v6083 = vld [vmem:[%s5580 + $0xfb0] sm:$0xff]
      %v6084 = vld [vmem:[%s5580 + $0xfb8] sm:$0xff]
      %v6085 = vld [vmem:[%s5580 + $0xfc0] sm:$0xff]
      %v6086 = vld [vmem:[%s5580 + $0xfc8] sm:$0xff]
      %v6087 = vld [vmem:[%s5580 + $0xfd0] sm:$0xff]
      %v6088 = vld [vmem:[%s5580 + $0xfd8] sm:$0xff]
      %v6089 = vld [vmem:[%s5580 + $0xfe0] sm:$0xff]
      %v6090 = vld [vmem:[%s5580 + $0xfe8] sm:$0xff]
      %v6091 = vld [vmem:[%s5580 + $0xff0] sm:$0xff]
      %v6092 = vld [vmem:[%s5580 + $0xff8] sm:$0xff]
      %6093 = vmatprep.subr.bf16.mxu0 %v5582
      %6094 = vmatpush1.bf16.msra.mxu0 %v5581
      %6095 = vmatprep.subr.bf16.mxu0 %v5590
      %6096 = vmatpush1.bf16.msra.mxu0 %v5589
      %6097 = vmatprep.subr.bf16.mxu0 %v5598
      %6098 = vmatpush1.bf16.msra.mxu0 %v5597
      %6099 = vmatprep.subr.bf16.mxu0 %v5606
      %6100 = vmatpush1.bf16.msra.mxu0 %v5605
      %6101 = vmatprep.subr.bf16.mxu0 %v5614
      %6102 = vmatpush1.bf16.msra.mxu0 %v5613
      %6103 = vmatprep.subr.bf16.mxu0 %v5622
      %6104 = vmatpush1.bf16.msra.mxu0 %v5621
      %6105 = vmatprep.subr.bf16.mxu0 %v5630
      %6106 = vmatpush1.bf16.msra.mxu0 %v5629
      %6107 = vmatprep.subr.bf16.mxu0 %v5638
      %6108 = vmatpush1.bf16.msra.mxu0 %v5637
      %6109 = vmatprep.subr.bf16.mxu0 %v5646
      %6110 = vmatpush1.bf16.msra.mxu0 %v5645
      %6111 = vmatprep.subr.bf16.mxu0 %v5654
      %6112 = vmatpush1.bf16.msra.mxu0 %v5653
      %6113 = vmatprep.subr.bf16.mxu0 %v5662
      %6114 = vmatpush1.bf16.msra.mxu0 %v5661
      %6115 = vmatprep.subr.bf16.mxu0 %v5670
      %6116 = vmatpush1.bf16.msra.mxu0 %v5669
      %6117 = vmatprep.subr.bf16.mxu0 %v5678
      %6118 = vmatpush1.bf16.msra.mxu0 %v5677
      %6119 = vmatprep.subr.bf16.mxu0 %v5686
      %6120 = vmatpush1.bf16.msra.mxu0 %v5685
      %6121 = vmatprep.subr.bf16.mxu0 %v5694
      %6122 = vmatpush1.bf16.msra.mxu0 %v5693
      %6123 = vmatprep.subr.bf16.mxu0 %v5702
      %6124 = vmatpush1.bf16.msra.mxu0 %v5701
      %6125 = vmatprep.mubr.bf16.mxu0 %v5573
      %6126 = vmatmul.mubr.bf16.gmra.mrb[0].mxu0 %v5572
      %v6127 = vpop.f32.mrb[0].mxu0
      %v6128 = vadd.f32 0.0, %v6127
      %v6129 = vpop.f32.mrb[0].mxu0
      %v6130 = vadd.f32 0.0, %v6129
      %v6131 = vpop.f32.mrb[0].mxu0
      %v6132 = vpop.f32.mrb[0].mxu0
      %6133 = vdwg.mxu0
      %6134 = vmatprep.subr.bf16.mxu0 %v5710
      %6135 = vmatpush1.bf16.msra.mxu0 %v5709
      %6136 = vmatprep.subr.bf16.mxu0 %v5718
      %6137 = vmatpush1.bf16.msra.mxu0 %v5717
      %6138 = vmatprep.subr.bf16.mxu0 %v5726
      %6139 = vmatpush1.bf16.msra.mxu0 %v5725
      %6140 = vmatprep.subr.bf16.mxu0 %v5734
      %6141 = vmatpush1.bf16.msra.mxu0 %v5733
      %6142 = vmatprep.subr.bf16.mxu0 %v5742
      %6143 = vmatpush1.bf16.msra.mxu0 %v5741
      %6144 = vmatprep.subr.bf16.mxu0 %v5750
      %6145 = vmatpush1.bf16.msra.mxu0 %v5749
      %6146 = vmatprep.subr.bf16.mxu0 %v5758
      %6147 = vmatpush1.bf16.msra.mxu0 %v5757
      %6148 = vmatprep.subr.bf16.mxu0 %v5766
      %6149 = vmatpush1.bf16.msra.mxu0 %v5765
      %6150 = vmatprep.subr.bf16.mxu0 %v5774
      %6151 = vmatpush1.bf16.msra.mxu0 %v5773
      %6152 = vmatprep.subr.bf16.mxu0 %v5782
      %6153 = vmatpush1.bf16.msra.mxu0 %v5781
      %6154 = vmatprep.subr.bf16.mxu0 %v5790
      %6155 = vmatpush1.bf16.msra.mxu0 %v5789
      %6156 = vmatprep.subr.bf16.mxu0 %v5798
      %6157 = vmatpush1.bf16.msra.mxu0 %v5797
      %6158 = vmatprep.subr.bf16.mxu0 %v5806
      %6159 = vmatpush1.bf16.msra.mxu0 %v5805
      %6160 = vmatprep.subr.bf16.mxu0 %v5814
      %6161 = vmatpush1.bf16.msra.mxu0 %v5813
      %6162 = vmatprep.subr.bf16.mxu0 %v5822
      %6163 = vmatpush1.bf16.msra.mxu0 %v5821
      %6164 = vmatprep.subr.bf16.mxu0 %v5830
      %6165 = vmatpush1.bf16.msra.mxu0 %v5829
      %6166 = vmatprep.mubr.bf16.mxu0 %v5575
      %6167 = vmatmul.mubr.bf16.gmra.mrb[0].mxu0 %v5574
      %v6168 = vpop.f32.mrb[0].mxu0
      %v6169 = vadd.f32 %v6128, %v6168
      %v6170 = vpop.f32.mrb[0].mxu0
      %v6171 = vadd.f32 %v6130, %v6170
      %v6172 = vpop.f32.mrb[0].mxu0
      %v6173 = vpop.f32.mrb[0].mxu0
      %6174 = vdwg.mxu0
      %6175 = vmatprep.subr.bf16.mxu0 %v5838
      %6176 = vmatpush1.bf16.msra.mxu0 %v5837
      %6177 = vmatprep.subr.bf16.mxu0 %v5846
      %6178 = vmatpush1.bf16.msra.mxu0 %v5845
      %6179 = vmatprep.subr.bf16.mxu0 %v5854
      %6180 = vmatpush1.bf16.msra.mxu0 %v5853
      %6181 = vmatprep.subr.bf16.mxu0 %v5862
      %6182 = vmatpush1.bf16.msra.mxu0 %v5861
      %6183 = vmatprep.subr.bf16.mxu0 %v5870
      %6184 = vmatpush1.bf16.msra.mxu0 %v5869
      %6185 = vmatprep.subr.bf16.mxu0 %v5878
      %6186 = vmatpush1.bf16.msra.mxu0 %v5877
      %6187 = vmatprep.subr.bf16.mxu0 %v5886
      %6188 = vmatpush1.bf16.msra.mxu0 %v5885
      %6189 = vmatprep.subr.bf16.mxu0 %v5894
      %6190 = vmatpush1.bf16.msra.mxu0 %v5893
      %6191 = vmatprep.subr.bf16.mxu0 %v5902
      %6192 = vmatpush1.bf16.msra.mxu0 %v5901
      %6193 = vmatprep.subr.bf16.mxu0 %v5910
      %6194 = vmatpush1.bf16.msra.mxu0 %v5909
      %6195 = vmatprep.subr.bf16.mxu0 %v5918
      %6196 = vmatpush1.bf16.msra.mxu0 %v5917
      %6197 = vmatprep.subr.bf16.mxu0 %v5926
      %6198 = vmatpush1.bf16.msra.mxu0 %v5925
      %6199 = vmatprep.subr.bf16.mxu0 %v5934
      %6200 = vmatpush1.bf16.msra.mxu0 %v5933
      %6201 = vmatprep.subr.bf16.mxu0 %v5942
      %6202 = vmatpush1.bf16.msra.mxu0 %v5941
      %6203 = vmatprep.subr.bf16.mxu0 %v5950
      %6204 = vmatpush1.bf16.msra.mxu0 %v5949
      %6205 = vmatprep.subr.bf16.mxu0 %v5958
      %6206 = vmatpush1.bf16.msra.mxu0 %v5957
      %6207 = vmatprep.mubr.bf16.mxu0 %v5577
      %6208 = vmatmul.mubr.bf16.gmra.mrb[0].mxu0 %v5576
      %v6209 = vpop.f32.mrb[0].mxu0
      %v6210 = vadd.f32 %v6169, %v6209
      %v6211 = vpop.f32.mrb[0].mxu0
      %v6212 = vadd.f32 %v6171, %v6211
      %v6213 = vpop.f32.mrb[0].mxu0
      %v6214 = vpop.f32.mrb[0].mxu0
      %6215 = vdwg.mxu0
      %6216 = vmatprep.subr.bf16.mxu0 %v5966
      %6217 = vmatpush1.bf16.msra.mxu0 %v5965
      %6218 = vmatprep.subr.bf16.mxu0 %v5974
      %6219 = vmatpush1.bf16.msra.mxu0 %v5973
      %6220 = vmatprep.subr.bf16.mxu0 %v5982
      %6221 = vmatpush1.bf16.msra.mxu0 %v5981
      %6222 = vmatprep.subr.bf16.mxu0 %v5990
      %6223 = vmatpush1.bf16.msra.mxu0 %v5989
      %6224 = vmatprep.subr.bf16.mxu0 %v5998
      %6225 = vmatpush1.bf16.msra.mxu0 %v5997
      %6226 = vmatprep.subr.bf16.mxu0 %v6006
      %6227 = vmatpush1.bf16.msra.mxu0 %v6005
      %6228 = vmatprep.subr.bf16.mxu0 %v6014
      %6229 = vmatpush1.bf16.msra.mxu0 %v6013
      %6230 = vmatprep.subr.bf16.mxu0 %v6022
      %6231 = vmatpush1.bf16.msra.mxu0 %v6021
      %6232 = vmatprep.subr.bf16.mxu0 %v6030
      %6233 = vmatpush1.bf16.msra.mxu0 %v6029
      %6234 = vmatprep.subr.bf16.mxu0 %v6038
      %6235 = vmatpush1.bf16.msra.mxu0 %v6037
      %6236 = vmatprep.subr.bf16.mxu0 %v6046
      %6237 = vmatpush1.bf16.msra.mxu0 %v6045
      %6238 = vmatprep.subr.bf16.mxu0 %v6054
      %6239 = vmatpush1.bf16.msra.mxu0 %v6053
      %6240 = vmatprep.subr.bf16.mxu0 %v6062
      %6241 = vmatpush1.bf16.msra.mxu0 %v6061
      %6242 = vmatprep.subr.bf16.mxu0 %v6070
      %6243 = vmatpush1.bf16.msra.mxu0 %v6069
      %6244 = vmatprep.subr.bf16.mxu0 %v6078
      %6245 = vmatpush1.bf16.msra.mxu0 %v6077
      %6246 = vmatprep.subr.bf16.mxu0 %v6086
      %6247 = vmatpush1.bf16.msra.mxu0 %v6085
      %6248 = vmatprep.mubr.bf16.mxu0 %v5579
      %6249 = vmatmul.mubr.bf16.gmra.mrb[0].mxu0 %v5578
      %v6250 = vpop.f32.mrb[0].mxu0
      %v6251 = vadd.f32 %v6210, %v6250
      %v6252 = vpop.f32.mrb[0].mxu0
      %v6253 = vadd.f32 %v6212, %v6252
      %v6254 = vpop.f32.mrb[0].mxu0
      %v6255 = vpop.f32.mrb[0].mxu0
      %6256 = vdwg.mxu0
      %6257 = vmatprep.subr.bf16.mxu0 %v5584
      %6258 = vmatpush1.bf16.msra.mxu0 %v5583
      %6259 = vmatprep.subr.bf16.mxu0 %v5592
      %6260 = vmatpush1.bf16.msra.mxu0 %v5591
      %6261 = vmatprep.subr.bf16.mxu0 %v5600
      %6262 = vmatpush1.bf16.msra.mxu0 %v5599
      %6263 = vmatprep.subr.bf16.mxu0 %v5608
      %6264 = vmatpush1.bf16.msra.mxu0 %v5607
      %6265 = vmatprep.subr.bf16.mxu0 %v5616
      %6266 = vmatpush1.bf16.msra.mxu0 %v5615
      %6267 = vmatprep.subr.bf16.mxu0 %v5624
      %6268 = vmatpush1.bf16.msra.mxu0 %v5623
      %6269 = vmatprep.subr.bf16.mxu0 %v5632
      %6270 = vmatpush1.bf16.msra.mxu0 %v5631
      %6271 = vmatprep.subr.bf16.mxu0 %v5640
      %6272 = vmatpush1.bf16.msra.mxu0 %v5639
      %6273 = vmatprep.subr.bf16.mxu0 %v5648
      %6274 = vmatpush1.bf16.msra.mxu0 %v5647
      %6275 = vmatprep.subr.bf16.mxu0 %v5656
      %6276 = vmatpush1.bf16.msra.mxu0 %v5655
      %6277 = vmatprep.subr.bf16.mxu0 %v5664
      %6278 = vmatpush1.bf16.msra.mxu0 %v5663
      %6279 = vmatprep.subr.bf16.mxu0 %v5672
      %6280 = vmatpush1.bf16.msra.mxu0 %v5671
      %6281 = vmatprep.subr.bf16.mxu0 %v5680
      %6282 = vmatpush1.bf16.msra.mxu0 %v5679
      %6283 = vmatprep.subr.bf16.mxu0 %v5688
      %6284 = vmatpush1.bf16.msra.mxu0 %v5687
      %6285 = vmatprep.subr.bf16.mxu0 %v5696
      %6286 = vmatpush1.bf16.msra.mxu0 %v5695
      %6287 = vmatprep.subr.bf16.mxu0 %v5704
      %6288 = vmatpush1.bf16.msra.mxu0 %v5703
      %6289 = vmatprep.mubr.bf16.mxu0 %v5573
      %6290 = vmatmul.mubr.bf16.gmra.mrb[0].mxu0 %v5572
      %v6291 = vpop.f32.mrb[0].mxu0
      %v6292 = vadd.f32 0.0, %v6291
      %v6293 = vpop.f32.mrb[0].mxu0
      %v6294 = vadd.f32 0.0, %v6293
      %v6295 = vpop.f32.mrb[0].mxu0
      %v6296 = vpop.f32.mrb[0].mxu0
      %6297 = vdwg.mxu0
      %6298 = vmatprep.subr.bf16.mxu0 %v5712
      %6299 = vmatpush1.bf16.msra.mxu0 %v5711
      %6300 = vmatprep.subr.bf16.mxu0 %v5720
      %6301 = vmatpush1.bf16.msra.mxu0 %v5719
      %6302 = vmatprep.subr.bf16.mxu0 %v5728
      %6303 = vmatpush1.bf16.msra.mxu0 %v5727
      %6304 = vmatprep.subr.bf16.mxu0 %v5736
      %6305 = vmatpush1.bf16.msra.mxu0 %v5735
      %6306 = vmatprep.subr.bf16.mxu0 %v5744
      %6307 = vmatpush1.bf16.msra.mxu0 %v5743
      %6308 = vmatprep.subr.bf16.mxu0 %v5752
      %6309 = vmatpush1.bf16.msra.mxu0 %v5751
      %6310 = vmatprep.subr.bf16.mxu0 %v5760
      %6311 = vmatpush1.bf16.msra.mxu0 %v5759
      %6312 = vmatprep.subr.bf16.mxu0 %v5768
      %6313 = vmatpush1.bf16.msra.mxu0 %v5767
      %6314 = vmatprep.subr.bf16.mxu0 %v5776
      %6315 = vmatpush1.bf16.msra.mxu0 %v5775
      %6316 = vmatprep.subr.bf16.mxu0 %v5784
      %6317 = vmatpush1.bf16.msra.mxu0 %v5783
      %6318 = vmatprep.subr.bf16.mxu0 %v5792
      %6319 = vmatpush1.bf16.msra.mxu0 %v5791
      %6320 = vmatprep.subr.bf16.mxu0 %v5800
      %6321 = vmatpush1.bf16.msra.mxu0 %v5799
      %6322 = vmatprep.subr.bf16.mxu0 %v5808
      %6323 = vmatpush1.bf16.msra.mxu0 %v5807
      %6324 = vmatprep.subr.bf16.mxu0 %v5816
      %6325 = vmatpush1.bf16.msra.mxu0 %v5815
      %6326 = vmatprep.subr.bf16.mxu0 %v5824
      %6327 = vmatpush1.bf16.msra.mxu0 %v5823
      %6328 = vmatprep.subr.bf16.mxu0 %v5832
      %6329 = vmatpush1.bf16.msra.mxu0 %v5831
      %6330 = vmatprep.mubr.bf16.mxu0 %v5575
      %6331 = vmatmul.mubr.bf16.gmra.mrb[0].mxu0 %v5574
      %v6332 = vpop.f32.mrb[0].mxu0
      %v6333 = vadd.f32 %v6292, %v6332
      %v6334 = vpop.f32.mrb[0].mxu0
      %v6335 = vadd.f32 %v6294, %v6334
      %v6336 = vpop.f32.mrb[0].mxu0
      %v6337 = vpop.f32.mrb[0].mxu0
      %6338 = vdwg.mxu0
      %6339 = vmatprep.subr.bf16.mxu0 %v5840
      %6340 = vmatpush1.bf16.msra.mxu0 %v5839
      %6341 = vmatprep.subr.bf16.mxu0 %v5848
      %6342 = vmatpush1.bf16.msra.mxu0 %v5847
      %6343 = vmatprep.subr.bf16.mxu0 %v5856
      %6344 = vmatpush1.bf16.msra.mxu0 %v5855
      %6345 = vmatprep.subr.bf16.mxu0 %v5864
      %6346 = vmatpush1.bf16.msra.mxu0 %v5863
      %6347 = vmatprep.subr.bf16.mxu0 %v5872
      %6348 = vmatpush1.bf16.msra.mxu0 %v5871
      %6349 = vmatprep.subr.bf16.mxu0 %v5880
      %6350 = vmatpush1.bf16.msra.mxu0 %v5879
      %6351 = vmatprep.subr.bf16.mxu0 %v5888
      %6352 = vmatpush1.bf16.msra.mxu0 %v5887
      %6353 = vmatprep.subr.bf16.mxu0 %v5896
      %6354 = vmatpush1.bf16.msra.mxu0 %v5895
      %6355 = vmatprep.subr.bf16.mxu0 %v5904
      %6356 = vmatpush1.bf16.msra.mxu0 %v5903
      %6357 = vmatprep.subr.bf16.mxu0 %v5912
      %6358 = vmatpush1.bf16.msra.mxu0 %v5911
      %6359 = vmatprep.subr.bf16.mxu0 %v5920
      %6360 = vmatpush1.bf16.msra.mxu0 %v5919
      %6361 = vmatprep.subr.bf16.mxu0 %v5928
      %6362 = vmatpush1.bf16.msra.mxu0 %v5927
      %6363 = vmatprep.subr.bf16.mxu0 %v5936
      %6364 = vmatpush1.bf16.msra.mxu0 %v5935
      %6365 = vmatprep.subr.bf16.mxu0 %v5944
      %6366 = vmatpush1.bf16.msra.mxu0 %v5943
      %6367 = vmatprep.subr.bf16.mxu0 %v5952
      %6368 = vmatpush1.bf16.msra.mxu0 %v5951
      %6369 = vmatprep.subr.bf16.mxu0 %v5960
      %6370 = vmatpush1.bf16.msra.mxu0 %v5959
      %6371 = vmatprep.mubr.bf16.mxu0 %v5577
      %6372 = vmatmul.mubr.bf16.gmra.mrb[0].mxu0 %v5576
      %v6373 = vpop.f32.mrb[0].mxu0
      %v6374 = vadd.f32 %v6333, %v6373
      %v6375 = vpop.f32.mrb[0].mxu0
      %v6376 = vadd.f32 %v6335, %v6375
      %v6377 = vpop.f32.mrb[0].mxu0
      %v6378 = vpop.f32.mrb[0].mxu0
      %6379 = vdwg.mxu0
      %6380 = vmatprep.subr.bf16.mxu0 %v5968
      %6381 = vmatpush1.bf16.msra.mxu0 %v5967
      %6382 = vmatprep.subr.bf16.mxu0 %v5976
      %6383 = vmatpush1.bf16.msra.mxu0 %v5975
      %6384 = vmatprep.subr.bf16.mxu0 %v5984
      %6385 = vmatpush1.bf16.msra.mxu0 %v5983
      %6386 = vmatprep.subr.bf16.mxu0 %v5992
      %6387 = vmatpush1.bf16.msra.mxu0 %v5991
      %6388 = vmatprep.subr.bf16.mxu0 %v6000
      %6389 = vmatpush1.bf16.msra.mxu0 %v5999
      %6390 = vmatprep.subr.bf16.mxu0 %v6008
      %6391 = vmatpush1.bf16.msra.mxu0 %v6007
      %6392 = vmatprep.subr.bf16.mxu0 %v6016
      %6393 = vmatpush1.bf16.msra.mxu0 %v6015
      %6394 = vmatprep.subr.bf16.mxu0 %v6024
      %6395 = vmatpush1.bf16.msra.mxu0 %v6023
      %6396 = vmatprep.subr.bf16.mxu0 %v6032
      %6397 = vmatpush1.bf16.msra.mxu0 %v6031
      %6398 = vmatprep.subr.bf16.mxu0 %v6040
      %6399 = vmatpush1.bf16.msra.mxu0 %v6039
      %6400 = vmatprep.subr.bf16.mxu0 %v6048
      %6401 = vmatpush1.bf16.msra.mxu0 %v6047
      %6402 = vmatprep.subr.bf16.mxu0 %v6056
      %6403 = vmatpush1.bf16.msra.mxu0 %v6055
      %6404 = vmatprep.subr.bf16.mxu0 %v6064
      %6405 = vmatpush1.bf16.msra.mxu0 %v6063
      %6406 = vmatprep.subr.bf16.mxu0 %v6072
      %6407 = vmatpush1.bf16.msra.mxu0 %v6071
      %6408 = vmatprep.subr.bf16.mxu0 %v6080
      %6409 = vmatpush1.bf16.msra.mxu0 %v6079
      %6410 = vmatprep.subr.bf16.mxu0 %v6088
      %6411 = vmatpush1.bf16.msra.mxu0 %v6087
      %6412 = vmatprep.mubr.bf16.mxu0 %v5579
      %6413 = vmatmul.mubr.bf16.gmra.mrb[0].mxu0 %v5578
      %v6414 = vpop.f32.mrb[0].mxu0
      %v6415 = vadd.f32 %v6374, %v6414
      %v6416 = vpop.f32.mrb[0].mxu0
      %v6417 = vadd.f32 %v6376, %v6416
      %v6418 = vpop.f32.mrb[0].mxu0
      %v6419 = vpop.f32.mrb[0].mxu0
      %6420 = vdwg.mxu0
      %6421 = vmatprep.subr.bf16.mxu0 %v5586
      %6422 = vmatpush1.bf16.msra.mxu0 %v5585
      %6423 = vmatprep.subr.bf16.mxu0 %v5594
      %6424 = vmatpush1.bf16.msra.mxu0 %v5593
      %6425 = vmatprep.subr.bf16.mxu0 %v5602
      %6426 = vmatpush1.bf16.msra.mxu0 %v5601
      %6427 = vmatprep.subr.bf16.mxu0 %v5610
      %6428 = vmatpush1.bf16.msra.mxu0 %v5609
      %6429 = vmatprep.subr.bf16.mxu0 %v5618
      %6430 = vmatpush1.bf16.msra.mxu0 %v5617
      %6431 = vmatprep.subr.bf16.mxu0 %v5626
      %6432 = vmatpush1.bf16.msra.mxu0 %v5625
      %6433 = vmatprep.subr.bf16.mxu0 %v5634
      %6434 = vmatpush1.bf16.msra.mxu0 %v5633
      %6435 = vmatprep.subr.bf16.mxu0 %v5642
      %6436 = vmatpush1.bf16.msra.mxu0 %v5641
      %6437 = vmatprep.subr.bf16.mxu0 %v5650
      %6438 = vmatpush1.bf16.msra.mxu0 %v5649
      %6439 = vmatprep.subr.bf16.mxu0 %v5658
      %6440 = vmatpush1.bf16.msra.mxu0 %v5657
      %6441 = vmatprep.subr.bf16.mxu0 %v5666
      %6442 = vmatpush1.bf16.msra.mxu0 %v5665
      %6443 = vmatprep.subr.bf16.mxu0 %v5674
      %6444 = vmatpush1.bf16.msra.mxu0 %v5673
      %6445 = vmatprep.subr.bf16.mxu0 %v5682
      %6446 = vmatpush1.bf16.msra.mxu0 %v5681
      %6447 = vmatprep.subr.bf16.mxu0 %v5690
      %6448 = vmatpush1.bf16.msra.mxu0 %v5689
      %6449 = vmatprep.subr.bf16.mxu0 %v5698
      %6450 = vmatpush1.bf16.msra.mxu0 %v5697
      %6451 = vmatprep.subr.bf16.mxu0 %v5706
      %6452 = vmatpush1.bf16.msra.mxu0 %v5705
      %6453 = vmatprep.mubr.bf16.mxu0 %v5573
      %6454 = vmatmul.mubr.bf16.gmra.mrb[0].mxu0 %v5572
      %v6455 = vpop.f32.mrb[0].mxu0
      %v6456 = vadd.f32 0.0, %v6455
      %v6457 = vpop.f32.mrb[0].mxu0
      %v6458 = vadd.f32 0.0, %v6457
      %v6459 = vpop.f32.mrb[0].mxu0
      %v6460 = vpop.f32.mrb[0].mxu0
      %6461 = vdwg.mxu0
      %6462 = vmatprep.subr.bf16.mxu0 %v5714
      %6463 = vmatpush1.bf16.msra.mxu0 %v5713
      %6464 = vmatprep.subr.bf16.mxu0 %v5722
      %6465 = vmatpush1.bf16.msra.mxu0 %v5721
      %6466 = vmatprep.subr.bf16.mxu0 %v5730
      %6467 = vmatpush1.bf16.msra.mxu0 %v5729
      %6468 = vmatprep.subr.bf16.mxu0 %v5738
      %6469 = vmatpush1.bf16.msra.mxu0 %v5737
      %6470 = vmatprep.subr.bf16.mxu0 %v5746
      %6471 = vmatpush1.bf16.msra.mxu0 %v5745
      %6472 = vmatprep.subr.bf16.mxu0 %v5754
      %6473 = vmatpush1.bf16.msra.mxu0 %v5753
      %6474 = vmatprep.subr.bf16.mxu0 %v5762
      %6475 = vmatpush1.bf16.msra.mxu0 %v5761
      %6476 = vmatprep.subr.bf16.mxu0 %v5770
      %6477 = vmatpush1.bf16.msra.mxu0 %v5769
      %6478 = vmatprep.subr.bf16.mxu0 %v5778
      %6479 = vmatpush1.bf16.msra.mxu0 %v5777
      %6480 = vmatprep.subr.bf16.mxu0 %v5786
      %6481 = vmatpush1.bf16.msra.mxu0 %v5785
      %6482 = vmatprep.subr.bf16.mxu0 %v5794
      %6483 = vmatpush1.bf16.msra.mxu0 %v5793
      %6484 = vmatprep.subr.bf16.mxu0 %v5802
      %6485 = vmatpush1.bf16.msra.mxu0 %v5801
      %6486 = vmatprep.subr.bf16.mxu0 %v5810
      %6487 = vmatpush1.bf16.msra.mxu0 %v5809
      %6488 = vmatprep.subr.bf16.mxu0 %v5818
      %6489 = vmatpush1.bf16.msra.mxu0 %v5817
      %6490 = vmatprep.subr.bf16.mxu0 %v5826
      %6491 = vmatpush1.bf16.msra.mxu0 %v5825
      %6492 = vmatprep.subr.bf16.mxu0 %v5834
      %6493 = vmatpush1.bf16.msra.mxu0 %v5833
      %6494 = vmatprep.mubr.bf16.mxu0 %v5575
      %6495 = vmatmul.mubr.bf16.gmra.mrb[0].mxu0 %v5574
      %v6496 = vpop.f32.mrb[0].mxu0
      %v6497 = vadd.f32 %v6456, %v6496
      %v6498 = vpop.f32.mrb[0].mxu0
      %v6499 = vadd.f32 %v6458, %v6498
      %v6500 = vpop.f32.mrb[0].mxu0
      %v6501 = vpop.f32.mrb[0].mxu0
      %6502 = vdwg.mxu0
      %6503 = vmatprep.subr.bf16.mxu0 %v5842
      %6504 = vmatpush1.bf16.msra.mxu0 %v5841
      %6505 = vmatprep.subr.bf16.mxu0 %v5850
      %6506 = vmatpush1.bf16.msra.mxu0 %v5849
      %6507 = vmatprep.subr.bf16.mxu0 %v5858
      %6508 = vmatpush1.bf16.msra.mxu0 %v5857
      %6509 = vmatprep.subr.bf16.mxu0 %v5866
      %6510 = vmatpush1.bf16.msra.mxu0 %v5865
      %6511 = vmatprep.subr.bf16.mxu0 %v5874
      %6512 = vmatpush1.bf16.msra.mxu0 %v5873
      %6513 = vmatprep.subr.bf16.mxu0 %v5882
      %6514 = vmatpush1.bf16.msra.mxu0 %v5881
      %6515 = vmatprep.subr.bf16.mxu0 %v5890
      %6516 = vmatpush1.bf16.msra.mxu0 %v5889
      %6517 = vmatprep.subr.bf16.mxu0 %v5898
      %6518 = vmatpush1.bf16.msra.mxu0 %v5897
      %6519 = vmatprep.subr.bf16.mxu0 %v5906
      %6520 = vmatpush1.bf16.msra.mxu0 %v5905
      %6521 = vmatprep.subr.bf16.mxu0 %v5914
      %6522 = vmatpush1.bf16.msra.mxu0 %v5913
      %6523 = vmatprep.subr.bf16.mxu0 %v5922
      %6524 = vmatpush1.bf16.msra.mxu0 %v5921
      %6525 = vmatprep.subr.bf16.mxu0 %v5930
      %6526 = vmatpush1.bf16.msra.mxu0 %v5929
      %6527 = vmatprep.subr.bf16.mxu0 %v5938
      %6528 = vmatpush1.bf16.msra.mxu0 %v5937
      %6529 = vmatprep.subr.bf16.mxu0 %v5946
      %6530 = vmatpush1.bf16.msra.mxu0 %v5945
      %6531 = vmatprep.subr.bf16.mxu0 %v5954
      %6532 = vmatpush1.bf16.msra.mxu0 %v5953
      %6533 = vmatprep.subr.bf16.mxu0 %v5962
      %6534 = vmatpush1.bf16.msra.mxu0 %v5961
      %6535 = vmatprep.mubr.bf16.mxu0 %v5577
      %6536 = vmatmul.mubr.bf16.gmra.mrb[0].mxu0 %v5576
      %v6537 = vpop.f32.mrb[0].mxu0
      %v6538 = vadd.f32 %v6497, %v6537
      %v6539 = vpop.f32.mrb[0].mxu0
      %v6540 = vadd.f32 %v6499, %v6539
      %v6541 = vpop.f32.mrb[0].mxu0
      %v6542 = vpop.f32.mrb[0].mxu0
      %6543 = vdwg.mxu0
      %6544 = vmatprep.subr.bf16.mxu0 %v5970
      %6545 = vmatpush1.bf16.msra.mxu0 %v5969
      %6546 = vmatprep.subr.bf16.mxu0 %v5978
      %6547 = vmatpush1.bf16.msra.mxu0 %v5977
      %6548 = vmatprep.subr.bf16.mxu0 %v5986
      %6549 = vmatpush1.bf16.msra.mxu0 %v5985
      %6550 = vmatprep.subr.bf16.mxu0 %v5994
      %6551 = vmatpush1.bf16.msra.mxu0 %v5993
      %6552 = vmatprep.subr.bf16.mxu0 %v6002
      %6553 = vmatpush1.bf16.msra.mxu0 %v6001
      %6554 = vmatprep.subr.bf16.mxu0 %v6010
      %6555 = vmatpush1.bf16.msra.mxu0 %v6009
      %6556 = vmatprep.subr.bf16.mxu0 %v6018
      %6557 = vmatpush1.bf16.msra.mxu0 %v6017
      %6558 = vmatprep.subr.bf16.mxu0 %v6026
      %6559 = vmatpush1.bf16.msra.mxu0 %v6025
      %6560 = vmatprep.subr.bf16.mxu0 %v6034
      %6561 = vmatpush1.bf16.msra.mxu0 %v6033
      %6562 = vmatprep.subr.bf16.mxu0 %v6042
      %6563 = vmatpush1.bf16.msra.mxu0 %v6041
      %6564 = vmatprep.subr.bf16.mxu0 %v6050
      %6565 = vmatpush1.bf16.msra.mxu0 %v6049
      %6566 = vmatprep.subr.bf16.mxu0 %v6058
      %6567 = vmatpush1.bf16.msra.mxu0 %v6057
      %6568 = vmatprep.subr.bf16.mxu0 %v6066
      %6569 = vmatpush1.bf16.msra.mxu0 %v6065
      %6570 = vmatprep.subr.bf16.mxu0 %v6074
      %6571 = vmatpush1.bf16.msra.mxu0 %v6073
      %6572 = vmatprep.subr.bf16.mxu0 %v6082
      %6573 = vmatpush1.bf16.msra.mxu0 %v6081
      %6574 = vmatprep.subr.bf16.mxu0 %v6090
      %6575 = vmatpush1.bf16.msra.mxu0 %v6089
      %6576 = vmatprep.mubr.bf16.mxu0 %v5579
      %6577 = vmatmul.mubr.bf16.gmra.mrb[0].mxu0 %v5578
      %v6578 = vpop.f32.mrb[0].mxu0
      %v6579 = vadd.f32 %v6538, %v6578
      %v6580 = vpop.f32.mrb[0].mxu0
      %v6581 = vadd.f32 %v6540, %v6580
      %v6582 = vpop.f32.mrb[0].mxu0
      %v6583 = vpop.f32.mrb[0].mxu0
      %6584 = vdwg.mxu0
      %6585 = vmatprep.subr.bf16.mxu0 %v5588
      %6586 = vmatpush1.bf16.msra.mxu0 %v5587
      %6587 = vmatprep.subr.bf16.mxu0 %v5596
      %6588 = vmatpush1.bf16.msra.mxu0 %v5595
      %6589 = vmatprep.subr.bf16.mxu0 %v5604
      %6590 = vmatpush1.bf16.msra.mxu0 %v5603
      %6591 = vmatprep.subr.bf16.mxu0 %v5612
      %6592 = vmatpush1.bf16.msra.mxu0 %v5611
      %6593 = vmatprep.subr.bf16.mxu0 %v5620
      %6594 = vmatpush1.bf16.msra.mxu0 %v5619
      %6595 = vmatprep.subr.bf16.mxu0 %v5628
      %6596 = vmatpush1.bf16.msra.mxu0 %v5627
      %6597 = vmatprep.subr.bf16.mxu0 %v5636
      %6598 = vmatpush1.bf16.msra.mxu0 %v5635
      %6599 = vmatprep.subr.bf16.mxu0 %v5644
      %6600 = vmatpush1.bf16.msra.mxu0 %v5643
      %6601 = vmatprep.subr.bf16.mxu0 %v5652
      %6602 = vmatpush1.bf16.msra.mxu0 %v5651
      %6603 = vmatprep.subr.bf16.mxu0 %v5660
      %6604 = vmatpush1.bf16.msra.mxu0 %v5659
      %6605 = vmatprep.subr.bf16.mxu0 %v5668
      %6606 = vmatpush1.bf16.msra.mxu0 %v5667
      %6607 = vmatprep.subr.bf16.mxu0 %v5676
      %6608 = vmatpush1.bf16.msra.mxu0 %v5675
      %6609 = vmatprep.subr.bf16.mxu0 %v5684
      %6610 = vmatpush1.bf16.msra.mxu0 %v5683
      %6611 = vmatprep.subr.bf16.mxu0 %v5692
      %6612 = vmatpush1.bf16.msra.mxu0 %v5691
      %6613 = vmatprep.subr.bf16.mxu0 %v5700
      %6614 = vmatpush1.bf16.msra.mxu0 %v5699
      %6615 = vmatprep.subr.bf16.mxu0 %v5708
      %6616 = vmatpush1.bf16.msra.mxu0 %v5707
      %6617 = vmatprep.mubr.bf16.mxu0 %v5573
      %6618 = vmatmul.mubr.bf16.gmra.mrb[0].mxu0 %v5572
      %v6619 = vpop.f32.mrb[0].mxu0
      %v6620 = vadd.f32 0.0, %v6619
      %v6621 = vpop.f32.mrb[0].mxu0
      %v6622 = vadd.f32 0.0, %v6621
      %v6623 = vpop.f32.mrb[0].mxu0
      %v6624 = vpop.f32.mrb[0].mxu0
      %6625 = vdwg.mxu0
      %6626 = vmatprep.subr.bf16.mxu0 %v5716
      %6627 = vmatpush1.bf16.msra.mxu0 %v5715
      %6628 = vmatprep.subr.bf16.mxu0 %v5724
      %6629 = vmatpush1.bf16.msra.mxu0 %v5723
      %6630 = vmatprep.subr.bf16.mxu0 %v5732
      %6631 = vmatpush1.bf16.msra.mxu0 %v5731
      %6632 = vmatprep.subr.bf16.mxu0 %v5740
      %6633 = vmatpush1.bf16.msra.mxu0 %v5739
      %6634 = vmatprep.subr.bf16.mxu0 %v5748
      %6635 = vmatpush1.bf16.msra.mxu0 %v5747
      %6636 = vmatprep.subr.bf16.mxu0 %v5756
      %6637 = vmatpush1.bf16.msra.mxu0 %v5755
      %6638 = vmatprep.subr.bf16.mxu0 %v5764
      %6639 = vmatpush1.bf16.msra.mxu0 %v5763
      %6640 = vmatprep.subr.bf16.mxu0 %v5772
      %6641 = vmatpush1.bf16.msra.mxu0 %v5771
      %6642 = vmatprep.subr.bf16.mxu0 %v5780
      %6643 = vmatpush1.bf16.msra.mxu0 %v5779
      %6644 = vmatprep.subr.bf16.mxu0 %v5788
      %6645 = vmatpush1.bf16.msra.mxu0 %v5787
      %6646 = vmatprep.subr.bf16.mxu0 %v5796
      %6647 = vmatpush1.bf16.msra.mxu0 %v5795
      %6648 = vmatprep.subr.bf16.mxu0 %v5804
      %6649 = vmatpush1.bf16.msra.mxu0 %v5803
      %6650 = vmatprep.subr.bf16.mxu0 %v5812
      %6651 = vmatpush1.bf16.msra.mxu0 %v5811
      %6652 = vmatprep.subr.bf16.mxu0 %v5820
      %6653 = vmatpush1.bf16.msra.mxu0 %v5819
      %6654 = vmatprep.subr.bf16.mxu0 %v5828
      %6655 = vmatpush1.bf16.msra.mxu0 %v5827
      %6656 = vmatprep.subr.bf16.mxu0 %v5836
      %6657 = vmatpush1.bf16.msra.mxu0 %v5835
      %6658 = vmatprep.mubr.bf16.mxu0 %v5575
      %6659 = vmatmul.mubr.bf16.gmra.mrb[0].mxu0 %v5574
      %v6660 = vpop.f32.mrb[0].mxu0
      %v6661 = vadd.f32 %v6620, %v6660
      %v6662 = vpop.f32.mrb[0].mxu0
      %v6663 = vadd.f32 %v6622, %v6662
      %v6664 = vpop.f32.mrb[0].mxu0
      %v6665 = vpop.f32.mrb[0].mxu0
      %6666 = vdwg.mxu0
      %6667 = vmatprep.subr.bf16.mxu0 %v5844
      %6668 = vmatpush1.bf16.msra.mxu0 %v5843
      %6669 = vmatprep.subr.bf16.mxu0 %v5852
      %6670 = vmatpush1.bf16.msra.mxu0 %v5851
      %6671 = vmatprep.subr.bf16.mxu0 %v5860
      %6672 = vmatpush1.bf16.msra.mxu0 %v5859
      %6673 = vmatprep.subr.bf16.mxu0 %v5868
      %6674 = vmatpush1.bf16.msra.mxu0 %v5867
      %6675 = vmatprep.subr.bf16.mxu0 %v5876
      %6676 = vmatpush1.bf16.msra.mxu0 %v5875
      %6677 = vmatprep.subr.bf16.mxu0 %v5884
      %6678 = vmatpush1.bf16.msra.mxu0 %v5883
      %6679 = vmatprep.subr.bf16.mxu0 %v5892
      %6680 = vmatpush1.bf16.msra.mxu0 %v5891
      %6681 = vmatprep.subr.bf16.mxu0 %v5900
      %6682 = vmatpush1.bf16.msra.mxu0 %v5899
      %6683 = vmatprep.subr.bf16.mxu0 %v5908
      %6684 = vmatpush1.bf16.msra.mxu0 %v5907
      %6685 = vmatprep.subr.bf16.mxu0 %v5916
      %6686 = vmatpush1.bf16.msra.mxu0 %v5915
      %6687 = vmatprep.subr.bf16.mxu0 %v5924
      %6688 = vmatpush1.bf16.msra.mxu0 %v5923
      %6689 = vmatprep.subr.bf16.mxu0 %v5932
      %6690 = vmatpush1.bf16.msra.mxu0 %v5931
      %6691 = vmatprep.subr.bf16.mxu0 %v5940
      %6692 = vmatpush1.bf16.msra.mxu0 %v5939
      %6693 = vmatprep.subr.bf16.mxu0 %v5948
      %6694 = vmatpush1.bf16.msra.mxu0 %v5947
      %6695 = vmatprep.subr.bf16.mxu0 %v5956
      %6696 = vmatpush1.bf16.msra.mxu0 %v5955
      %6697 = vmatprep.subr.bf16.mxu0 %v5964
      %6698 = vmatpush1.bf16.msra.mxu0 %v5963
      %6699 = vmatprep.mubr.bf16.mxu0 %v5577
      %6700 = vmatmul.mubr.bf16.gmra.mrb[0].mxu0 %v5576
      %v6701 = vpop.f32.mrb[0].mxu0
      %v6702 = vadd.f32 %v6661, %v6701
      %v6703 = vpop.f32.mrb[0].mxu0
      %v6704 = vadd.f32 %v6663, %v6703
      %v6705 = vpop.f32.mrb[0].mxu0
      %v6706 = vpop.f32.mrb[0].mxu0
      %6707 = vdwg.mxu0
      %6708 = vmatprep.subr.bf16.mxu0 %v5972
      %6709 = vmatpush1.bf16.msra.mxu0 %v5971
      %6710 = vmatprep.subr.bf16.mxu0 %v5980
      %6711 = vmatpush1.bf16.msra.mxu0 %v5979
      %6712 = vmatprep.subr.bf16.mxu0 %v5988
      %6713 = vmatpush1.bf16.msra.mxu0 %v5987
      %6714 = vmatprep.subr.bf16.mxu0 %v5996
      %6715 = vmatpush1.bf16.msra.mxu0 %v5995
      %6716 = vmatprep.subr.bf16.mxu0 %v6004
      %6717 = vmatpush1.bf16.msra.mxu0 %v6003
      %6718 = vmatprep.subr.bf16.mxu0 %v6012
      %6719 = vmatpush1.bf16.msra.mxu0 %v6011
      %6720 = vmatprep.subr.bf16.mxu0 %v6020
      %6721 = vmatpush1.bf16.msra.mxu0 %v6019
      %6722 = vmatprep.subr.bf16.mxu0 %v6028
      %6723 = vmatpush1.bf16.msra.mxu0 %v6027
      %6724 = vmatprep.subr.bf16.mxu0 %v6036
      %6725 = vmatpush1.bf16.msra.mxu0 %v6035
      %6726 = vmatprep.subr.bf16.mxu0 %v6044
      %6727 = vmatpush1.bf16.msra.mxu0 %v6043
      %6728 = vmatprep.subr.bf16.mxu0 %v6052
      %6729 = vmatpush1.bf16.msra.mxu0 %v6051
      %6730 = vmatprep.subr.bf16.mxu0 %v6060
      %6731 = vmatpush1.bf16.msra.mxu0 %v6059
      %6732 = vmatprep.subr.bf16.mxu0 %v6068
      %6733 = vmatpush1.bf16.msra.mxu0 %v6067
      %6734 = vmatprep.subr.bf16.mxu0 %v6076
      %6735 = vmatpush1.bf16.msra.mxu0 %v6075
      %6736 = vmatprep.subr.bf16.mxu0 %v6084
      %6737 = vmatpush1.bf16.msra.mxu0 %v6083
      %6738 = vmatprep.subr.bf16.mxu0 %v6092
      %6739 = vmatpush1.bf16.msra.mxu0 %v6091
      %6740 = vmatprep.mubr.bf16.mxu0 %v5579
      %6741 = vmatmul.mubr.bf16.gmra.mrb[0].mxu0 %v5578
      %v6742 = vpop.f32.mrb[0].mxu0
      %v6743 = vadd.f32 %v6702, %v6742
      %v6744 = vpop.f32.mrb[0].mxu0
      %v6745 = vadd.f32 %v6704, %v6744
      %v6746 = vpop.f32.mrb[0].mxu0
      %v6747 = vpop.f32.mrb[0].mxu0
      %6748 = vdwg.mxu0
      %s6749 = scalar_lea.vmem [#allocation11], 3
      %v6750 = vld [vmem:[%s6749] ss:$4 sm:$0xff]
      %v6752 = vlaneseq
      %v6753 = vshrl.u32 %v6752, 7
      %v6754 = vsub.s32 0, %v6753
      %v6755 = vrot.slane %v6750, %v6754
      %v6756 = vlaneseq
      %v6757 = vshrl.u32 %v6756, 7
      %v6758 = vsub.s32 1, %v6757
      %v6759 = vrot.slane %v6750, %v6758
      %v6760 = vlaneseq
      %v6761 = vshrl.u32 %v6760, 7
      %v6762 = vsub.s32 2, %v6761
      %v6763 = vrot.slane %v6750, %v6762
      %v6764 = vlaneseq
      %v6765 = vshrl.u32 %v6764, 7
      %v6766 = vsub.s32 3, %v6765
      %v6767 = vrot.slane %v6750, %v6766
      %v6768 = vlaneseq
      %v6769 = vshrl.u32 %v6768, 7
      %v6770 = vsub.s32 4, %v6769
      %v6771 = vrot.slane %v6750, %v6770
      %v6772 = vlaneseq
      %v6773 = vshrl.u32 %v6772, 7
      %v6774 = vsub.s32 5, %v6773
      %v6775 = vrot.slane %v6750, %v6774
      %v6776 = vlaneseq
      %v6777 = vshrl.u32 %v6776, 7
      %v6778 = vsub.s32 6, %v6777
      %v6779 = vrot.slane %v6750, %v6778
      %v6780 = vlaneseq
      %v6781 = vshrl.u32 %v6780, 7
      %v6782 = vsub.s32 7, %v6781
      %v6783 = vrot.slane %v6750, %v6782
      %v6792 = vmul.f32 %v6251, %v6755
      %v6793 = vmul.f32 %v6253, %v6759
      %v6794 = vmul.f32 %v6415, %v6763
      %v6795 = vmul.f32 %v6417, %v6767
      %v6796 = vmul.f32 %v6579, %v6771
      %v6797 = vmul.f32 %v6581, %v6775
      %v6798 = vmul.f32 %v6743, %v6779
      %v6799 = vmul.f32 %v6745, %v6783
      %s6800 = scalar_lea.vmem [#allocation12], 3
      %v6801 = vld [vmem:[%s6800] ss:$4 sm:$0xff]
      %v6803 = vlaneseq
      %v6804 = vshrl.u32 %v6803, 7
      %v6805 = vsub.s32 0, %v6804
      %v6806 = vrot.slane %v6801, %v6805
      %v6807 = vlaneseq
      %v6808 = vshrl.u32 %v6807, 7
      %v6809 = vsub.s32 1, %v6808
      %v6810 = vrot.slane %v6801, %v6809
      %v6811 = vlaneseq
      %v6812 = vshrl.u32 %v6811, 7
      %v6813 = vsub.s32 2, %v6812
      %v6814 = vrot.slane %v6801, %v6813
      %v6815 = vlaneseq
      %v6816 = vshrl.u32 %v6815, 7
      %v6817 = vsub.s32 3, %v6816
      %v6818 = vrot.slane %v6801, %v6817
      %v6819 = vlaneseq
      %v6820 = vshrl.u32 %v6819, 7
      %v6821 = vsub.s32 4, %v6820
      %v6822 = vrot.slane %v6801, %v6821
      %v6823 = vlaneseq
      %v6824 = vshrl.u32 %v6823, 7
      %v6825 = vsub.s32 5, %v6824
      %v6826 = vrot.slane %v6801, %v6825
      %v6827 = vlaneseq
      %v6828 = vshrl.u32 %v6827, 7
      %v6829 = vsub.s32 6, %v6828
      %v6830 = vrot.slane %v6801, %v6829
      %v6831 = vlaneseq
      %v6832 = vshrl.u32 %v6831, 7
      %v6833 = vsub.s32 7, %v6832
      %v6834 = vrot.slane %v6801, %v6833
      %v6843 = vadd.f32 %v6792, %v6806
      %v6844 = vadd.f32 %v6793, %v6810
      %v6845 = vadd.f32 %v6794, %v6814
      %v6846 = vadd.f32 %v6795, %v6818
      %v6847 = vadd.f32 %v6796, %v6822
      %v6848 = vadd.f32 %v6797, %v6826
      %v6849 = vadd.f32 %v6798, %v6830
      %v6850 = vadd.f32 %v6799, %v6834
      %v6851 = vmax.f32 %v6843, 0.0
      %v6852 = vmax.f32 %v6844, 0.0
      %v6853 = vmax.f32 %v6845, 0.0
      %v6854 = vmax.f32 %v6846, 0.0
      %v6855 = vmax.f32 %v6847, 0.0
      %v6856 = vmax.f32 %v6848, 0.0
      %v6857 = vmax.f32 %v6849, 0.0
      %v6858 = vmax.f32 %v6850, 0.0
      %v6859 = vpack.c.bf16 %v6851, %v6851
      %v6860 = vpack.c.bf16 %v6852, %v6852
      %v6861 = vpack.c.bf16 %v6853, %v6853
      %v6862 = vpack.c.bf16 %v6854, %v6854
      %v6863 = vpack.c.bf16 %v6855, %v6855
      %v6864 = vpack.c.bf16 %v6856, %v6856
      %v6865 = vpack.c.bf16 %v6857, %v6857
      %v6866 = vpack.c.bf16 %v6858, %v6858
      %v6867 = vld [vmem:[#allocation4] sm:$0xff]
      %v6868 = vld [vmem:[#allocation4 + $0x8] sm:$0xff]
      %v6869 = vld [vmem:[#allocation4 + $0x10] sm:$0xff]
      %v6870 = vld [vmem:[#allocation4 + $0x18] sm:$0xff]
      %v6871 = vld [vmem:[#allocation4 + $0x20] sm:$0xff]
      %v6872 = vld [vmem:[#allocation4 + $0x28] sm:$0xff]
      %v6873 = vld [vmem:[#allocation4 + $0x30] sm:$0xff]
      %v6874 = vld [vmem:[#allocation4 + $0x38] sm:$0xff]
      %v6875 = vld [vmem:[#allocation4 + $0x40] sm:$0xff]
      %v6876 = vld [vmem:[#allocation4 + $0x48] sm:$0xff]
      %v6877 = vld [vmem:[#allocation4 + $0x50] sm:$0xff]
      %v6878 = vld [vmem:[#allocation4 + $0x58] sm:$0xff]
      %v6879 = vld [vmem:[#allocation4 + $0x60] sm:$0xff]
      %v6880 = vld [vmem:[#allocation4 + $0x68] sm:$0xff]
      %v6881 = vld [vmem:[#allocation4 + $0x70] sm:$0xff]
      %v6882 = vld [vmem:[#allocation4 + $0x78] sm:$0xff]
      %v6883 = vld [vmem:[#allocation4 + $0x80] sm:$0xff]
      %v6884 = vld [vmem:[#allocation4 + $0x88] sm:$0xff]
      %v6885 = vld [vmem:[#allocation4 + $0x90] sm:$0xff]
      %v6886 = vld [vmem:[#allocation4 + $0x98] sm:$0xff]
      %v6887 = vld [vmem:[#allocation4 + $0xa0] sm:$0xff]
      %v6888 = vld [vmem:[#allocation4 + $0xa8] sm:$0xff]
      %v6889 = vld [vmem:[#allocation4 + $0xb0] sm:$0xff]
      %v6890 = vld [vmem:[#allocation4 + $0xb8] sm:$0xff]
      %v6891 = vld [vmem:[#allocation4 + $0xc0] sm:$0xff]
      %v6892 = vld [vmem:[#allocation4 + $0xc8] sm:$0xff]
      %v6893 = vld [vmem:[#allocation4 + $0xd0] sm:$0xff]
      %v6894 = vld [vmem:[#allocation4 + $0xd8] sm:$0xff]
      %v6895 = vld [vmem:[#allocation4 + $0xe0] sm:$0xff]
      %v6896 = vld [vmem:[#allocation4 + $0xe8] sm:$0xff]
      %v6897 = vld [vmem:[#allocation4 + $0xf0] sm:$0xff]
      %v6898 = vld [vmem:[#allocation4 + $0xf8] sm:$0xff]
      %v6899 = vld [vmem:[#allocation4 + $0x100] sm:$0xff]
      %v6900 = vld [vmem:[#allocation4 + $0x108] sm:$0xff]
      %v6901 = vld [vmem:[#allocation4 + $0x110] sm:$0xff]
      %v6902 = vld [vmem:[#allocation4 + $0x118] sm:$0xff]
      %v6903 = vld [vmem:[#allocation4 + $0x120] sm:$0xff]
      %v6904 = vld [vmem:[#allocation4 + $0x128] sm:$0xff]
      %v6905 = vld [vmem:[#allocation4 + $0x130] sm:$0xff]
      %v6906 = vld [vmem:[#allocation4 + $0x138] sm:$0xff]
      %v6907 = vld [vmem:[#allocation4 + $0x140] sm:$0xff]
      %v6908 = vld [vmem:[#allocation4 + $0x148] sm:$0xff]
      %v6909 = vld [vmem:[#allocation4 + $0x150] sm:$0xff]
      %v6910 = vld [vmem:[#allocation4 + $0x158] sm:$0xff]
      %v6911 = vld [vmem:[#allocation4 + $0x160] sm:$0xff]
      %v6912 = vld [vmem:[#allocation4 + $0x168] sm:$0xff]
      %v6913 = vld [vmem:[#allocation4 + $0x170] sm:$0xff]
      %v6914 = vld [vmem:[#allocation4 + $0x178] sm:$0xff]
      %v6915 = vld [vmem:[#allocation4 + $0x180] sm:$0xff]
      %v6916 = vld [vmem:[#allocation4 + $0x188] sm:$0xff]
      %v6917 = vld [vmem:[#allocation4 + $0x190] sm:$0xff]
      %v6918 = vld [vmem:[#allocation4 + $0x198] sm:$0xff]
      %v6919 = vld [vmem:[#allocation4 + $0x1a0] sm:$0xff]
      %v6920 = vld [vmem:[#allocation4 + $0x1a8] sm:$0xff]
      %v6921 = vld [vmem:[#allocation4 + $0x1b0] sm:$0xff]
      %v6922 = vld [vmem:[#allocation4 + $0x1b8] sm:$0xff]
      %v6923 = vld [vmem:[#allocation4 + $0x1c0] sm:$0xff]
      %v6924 = vld [vmem:[#allocation4 + $0x1c8] sm:$0xff]
      %v6925 = vld [vmem:[#allocation4 + $0x1d0] sm:$0xff]
      %v6926 = vld [vmem:[#allocation4 + $0x1d8] sm:$0xff]
      %v6927 = vld [vmem:[#allocation4 + $0x1e0] sm:$0xff]
      %v6928 = vld [vmem:[#allocation4 + $0x1e8] sm:$0xff]
      %v6929 = vld [vmem:[#allocation4 + $0x1f0] sm:$0xff]
      %v6930 = vld [vmem:[#allocation4 + $0x1f8] sm:$0xff]
      %v6931 = vld [vmem:[#allocation14] sm:$0x1]
      %v6933 = vlaneseq
      %v6934 = vshrl.u32 %v6933, 7
      %v6935 = vsub.s32 0, %v6934
      %v6936 = vrot.slane %v6931, %v6935
      %6938 = vmatprep.subr.bf16.mxu0 0
      %6939 = vmatpush1.bf16.msra.mxu0 %v6867
      %6940 = vmatprep.subr.bf16.mxu0 0
      %6941 = vmatpush1.bf16.msra.mxu0 %v6868
      %6942 = vmatprep.subr.bf16.mxu0 0
      %6943 = vmatpush1.bf16.msra.mxu0 %v6869
      %6944 = vmatprep.subr.bf16.mxu0 0
      %6945 = vmatpush1.bf16.msra.mxu0 %v6870
      %6946 = vmatprep.subr.bf16.mxu0 0
      %6947 = vmatpush1.bf16.msra.mxu0 %v6871
      %6948 = vmatprep.subr.bf16.mxu0 0
      %6949 = vmatpush1.bf16.msra.mxu0 %v6872
      %6950 = vmatprep.subr.bf16.mxu0 0
      %6951 = vmatpush1.bf16.msra.mxu0 %v6873
      %6952 = vmatprep.subr.bf16.mxu0 0
      %6953 = vmatpush1.bf16.msra.mxu0 %v6874
      %6954 = vmatprep.subr.bf16.mxu0 0
      %6955 = vmatpush1.bf16.msra.mxu0 %v6875
      %6956 = vmatprep.subr.bf16.mxu0 0
      %6957 = vmatpush1.bf16.msra.mxu0 %v6876
      %6958 = vmatprep.subr.bf16.mxu0 0
      %6959 = vmatpush1.bf16.msra.mxu0 %v6877
      %6960 = vmatprep.subr.bf16.mxu0 0
      %6961 = vmatpush1.bf16.msra.mxu0 %v6878
      %6962 = vmatprep.subr.bf16.mxu0 0
      %6963 = vmatpush1.bf16.msra.mxu0 %v6879
      %6964 = vmatprep.subr.bf16.mxu0 0
      %6965 = vmatpush1.bf16.msra.mxu0 %v6880
      %6966 = vmatprep.subr.bf16.mxu0 0
      %6967 = vmatpush1.bf16.msra.mxu0 %v6881
      %6968 = vmatprep.subr.bf16.mxu0 0
      %6969 = vmatpush1.bf16.msra.mxu0 %v6882
      %6970 = vmatprep.mubr.bf16.mxu0 %v6860
      %6971 = vmatmul.mubr.bf16.gmra.mrb[0].mxu0 %v6859
      %v6972 = vpop.f32.mrb[0].mxu0
      %v6973 = vadd.f32 %v6936, %v6972
      %v6974 = vpop.f32.mrb[0].mxu0
      %v6975 = vpop.f32.mrb[0].mxu0
      %v6976 = vpop.f32.mrb[0].mxu0
      %6977 = vdwg.mxu0
      %6978 = vmatprep.subr.bf16.mxu0 0
      %6979 = vmatpush1.bf16.msra.mxu0 %v6883
      %6980 = vmatprep.subr.bf16.mxu0 0
      %6981 = vmatpush1.bf16.msra.mxu0 %v6884
      %6982 = vmatprep.subr.bf16.mxu0 0
      %6983 = vmatpush1.bf16.msra.mxu0 %v6885
      %6984 = vmatprep.subr.bf16.mxu0 0
      %6985 = vmatpush1.bf16.msra.mxu0 %v6886
      %6986 = vmatprep.subr.bf16.mxu0 0
      %6987 = vmatpush1.bf16.msra.mxu0 %v6887
      %6988 = vmatprep.subr.bf16.mxu0 0
      %6989 = vmatpush1.bf16.msra.mxu0 %v6888
      %6990 = vmatprep.subr.bf16.mxu0 0
      %6991 = vmatpush1.bf16.msra.mxu0 %v6889
      %6992 = vmatprep.subr.bf16.mxu0 0
      %6993 = vmatpush1.bf16.msra.mxu0 %v6890
      %6994 = vmatprep.subr.bf16.mxu0 0
      %6995 = vmatpush1.bf16.msra.mxu0 %v6891
      %6996 = vmatprep.subr.bf16.mxu0 0
      %6997 = vmatpush1.bf16.msra.mxu0 %v6892
      %6998 = vmatprep.subr.bf16.mxu0 0
      %6999 = vmatpush1.bf16.msra.mxu0 %v6893
      %7000 = vmatprep.subr.bf16.mxu0 0
      %7001 = vmatpush1.bf16.msra.mxu0 %v6894
      %7002 = vmatprep.subr.bf16.mxu0 0
      %7003 = vmatpush1.bf16.msra.mxu0 %v6895
      %7004 = vmatprep.subr.bf16.mxu0 0
      %7005 = vmatpush1.bf16.msra.mxu0 %v6896
      %7006 = vmatprep.subr.bf16.mxu0 0
      %7007 = vmatpush1.bf16.msra.mxu0 %v6897
      %7008 = vmatprep.subr.bf16.mxu0 0
      %7009 = vmatpush1.bf16.msra.mxu0 %v6898
      %7010 = vmatprep.mubr.bf16.mxu0 %v6862
      %7011 = vmatmul.mubr.bf16.gmra.mrb[0].mxu0 %v6861
      %v7012 = vpop.f32.mrb[0].mxu0
      %v7013 = vadd.f32 %v6973, %v7012
      %v7014 = vpop.f32.mrb[0].mxu0
      %v7015 = vpop.f32.mrb[0].mxu0
      %v7016 = vpop.f32.mrb[0].mxu0
      %7017 = vdwg.mxu0
      %7018 = vmatprep.subr.bf16.mxu0 0
      %7019 = vmatpush1.bf16.msra.mxu0 %v6899
      %7020 = vmatprep.subr.bf16.mxu0 0
      %7021 = vmatpush1.bf16.msra.mxu0 %v6900
      %7022 = vmatprep.subr.bf16.mxu0 0
      %7023 = vmatpush1.bf16.msra.mxu0 %v6901
      %7024 = vmatprep.subr.bf16.mxu0 0
      %7025 = vmatpush1.bf16.msra.mxu0 %v6902
      %7026 = vmatprep.subr.bf16.mxu0 0
      %7027 = vmatpush1.bf16.msra.mxu0 %v6903
      %7028 = vmatprep.subr.bf16.mxu0 0
      %7029 = vmatpush1.bf16.msra.mxu0 %v6904
      %7030 = vmatprep.subr.bf16.mxu0 0
      %7031 = vmatpush1.bf16.msra.mxu0 %v6905
      %7032 = vmatprep.subr.bf16.mxu0 0
      %7033 = vmatpush1.bf16.msra.mxu0 %v6906
      %7034 = vmatprep.subr.bf16.mxu0 0
      %7035 = vmatpush1.bf16.msra.mxu0 %v6907
      %7036 = vmatprep.subr.bf16.mxu0 0
      %7037 = vmatpush1.bf16.msra.mxu0 %v6908
      %7038 = vmatprep.subr.bf16.mxu0 0
      %7039 = vmatpush1.bf16.msra.mxu0 %v6909
      %7040 = vmatprep.subr.bf16.mxu0 0
      %7041 = vmatpush1.bf16.msra.mxu0 %v6910
      %7042 = vmatprep.subr.bf16.mxu0 0
      %7043 = vmatpush1.bf16.msra.mxu0 %v6911
      %7044 = vmatprep.subr.bf16.mxu0 0
      %7045 = vmatpush1.bf16.msra.mxu0 %v6912
      %7046 = vmatprep.subr.bf16.mxu0 0
      %7047 = vmatpush1.bf16.msra.mxu0 %v6913
      %7048 = vmatprep.subr.bf16.mxu0 0
      %7049 = vmatpush1.bf16.msra.mxu0 %v6914
      %7050 = vmatprep.mubr.bf16.mxu0 %v6864
      %7051 = vmatmul.mubr.bf16.gmra.mrb[0].mxu0 %v6863
      %v7052 = vpop.f32.mrb[0].mxu0
      %v7053 = vadd.f32 %v7013, %v7052
      %v7054 = vpop.f32.mrb[0].mxu0
      %v7055 = vpop.f32.mrb[0].mxu0
      %v7056 = vpop.f32.mrb[0].mxu0
      %7057 = vdwg.mxu0
      %7058 = vmatprep.subr.bf16.mxu0 0
      %7059 = vmatpush1.bf16.msra.mxu0 %v6915
      %7060 = vmatprep.subr.bf16.mxu0 0
      %7061 = vmatpush1.bf16.msra.mxu0 %v6916
      %7062 = vmatprep.subr.bf16.mxu0 0
      %7063 = vmatpush1.bf16.msra.mxu0 %v6917
      %7064 = vmatprep.subr.bf16.mxu0 0
      %7065 = vmatpush1.bf16.msra.mxu0 %v6918
      %7066 = vmatprep.subr.bf16.mxu0 0
      %7067 = vmatpush1.bf16.msra.mxu0 %v6919
      %7068 = vmatprep.subr.bf16.mxu0 0
      %7069 = vmatpush1.bf16.msra.mxu0 %v6920
      %7070 = vmatprep.subr.bf16.mxu0 0
      %7071 = vmatpush1.bf16.msra.mxu0 %v6921
      %7072 = vmatprep.subr.bf16.mxu0 0
      %7073 = vmatpush1.bf16.msra.mxu0 %v6922
      %7074 = vmatprep.subr.bf16.mxu0 0
      %7075 = vmatpush1.bf16.msra.mxu0 %v6923
      %7076 = vmatprep.subr.bf16.mxu0 0
      %7077 = vmatpush1.bf16.msra.mxu0 %v6924
      %7078 = vmatprep.subr.bf16.mxu0 0
      %7079 = vmatpush1.bf16.msra.mxu0 %v6925
      %7080 = vmatprep.subr.bf16.mxu0 0
      %7081 = vmatpush1.bf16.msra.mxu0 %v6926
      %7082 = vmatprep.subr.bf16.mxu0 0
      %7083 = vmatpush1.bf16.msra.mxu0 %v6927
      %7084 = vmatprep.subr.bf16.mxu0 0
      %7085 = vmatpush1.bf16.msra.mxu0 %v6928
      %7086 = vmatprep.subr.bf16.mxu0 0
      %7087 = vmatpush1.bf16.msra.mxu0 %v6929
      %7088 = vmatprep.subr.bf16.mxu0 0
      %7089 = vmatpush1.bf16.msra.mxu0 %v6930
      %7090 = vmatprep.mubr.bf16.mxu0 %v6866
      %7091 = vmatmul.mubr.bf16.gmra.mrb[0].mxu0 %v6865
      %v7092 = vpop.f32.mrb[0].mxu0
      %v7093 = vadd.f32 %v7053, %v7092
      %v7094 = vpop.f32.mrb[0].mxu0
      %v7095 = vpop.f32.mrb[0].mxu0
      %v7096 = vpop.f32.mrb[0].mxu0
      %7097 = vdwg.mxu0
      %7098 = vst [vmem:[#allocation15] sm:$0x3] %v7093
    $region57: #{tpu_custom_call.1} parent=1 // pred_fallthru
      _
    // Predicated region
    $region58: #{tpu_custom_call.1} parent=1 // pred_check
      _
    $region59: #{tpu_custom_call.1} parent=1 // pred_check_branch
      %7100 = sbr.rel (0) target = $region61
    $region60: #{tpu_custom_call.1} parent=1 // pred_region
      %s7102 = ssub.s32 32, 32
      %7103 = vsyncadd [#allocation8], %s7102
      %s7105 = sshll.u32 [#allocation15], 4
      %s7106 = int_to_ptr.vmem [resolvable:$true] %s7105
      %7108 = dma.vmem_to_hbm [thread:$0]  %s7106, 32, %s8, [#allocation8]
    $region61: #{tpu_custom_call.1} parent=1 // pred_fallthru
      _
    // Predicated region
    $region62: #{tpu_custom_call.1} parent=1 // pred_check
      _
    $region63: #{tpu_custom_call.1} parent=1 // pred_check_branch
      %7110 = sbr.rel (0) target = $region65
    $region64: #{tpu_custom_call.1} parent=1 // pred_region
      %7111 = dma.done [#allocation8], 32
    $region65: #{tpu_custom_call.1} parent=1 // pred_fallthru
      _
    %7112 = vsyncpa [#allocation7], 1
    %7113 = vsyncpa [#allocation10], 1
    %7114 = vsyncpa [#allocation13], 1
    %7115 = vsyncpa [#allocation8], 1
  %7116 = vsyncmov [#allocation5]
  %s7117 = vpop.sfrf %7116
  %p7118 = scmp.eq.s32.totalorder %s7117, 0
  %p7119 = pneg %p7118
  %7121 = shalt.err (%p7119)
  %s7122 = scalar_lea.sflag [#allocation5], 1
  %7123 = vsyncmov %s7122
  %s7124 = vpop.sfrf %7123
  %p7125 = scmp.eq.s32.totalorder %s7124, 0
  %p7126 = pneg %p7125
  %7128 = shalt.err (%p7126)

</llo_original>
